<compile_context>
chip_gen: v5e
topology: v5e:2x2
jax: 0.10.0
libtpu: 0.0.40
codegen_flags: <defaults>
</compile_context>

<pallas_src>
import functools

import jax
import jax.numpy as jnp
from jax import lax
from jax.experimental import pallas as pl
from jax.experimental.pallas import tpu as pltpu

LANE = 128      # pad channel / feature dims to multiples of this
SUBLANE = 8     # pad the FC batch (M) dim to multiples of this


def _vmem():
    return pl.BlockSpec(memory_space=pltpu.MemorySpace.VMEM)


def _rup(n, m):
    return ((n + m - 1) // m) * m


def _pad_last(a, n):
    pad = n - a.shape[-1]
    if pad == 0:
        return a
    cfg = [(0, 0)] * (a.ndim - 1) + [(0, pad)]
    return jnp.pad(a, cfg)


# ----------------------------- Pallas kernels ------------------------------ #

def _conv_pool_kernel(p_ref, w_ref, b_ref, o_ref):
    """Fused Conv(5x5) + bias + ReLU + MaxPool(2x2).

    p_ref: (4, M, K) bf16 im2col patches, one slab per pool quadrant
    w_ref: (K, 128) bf16   b_ref: (1, 128) f32   o_ref: (M, 128) bf16
    """
    w = w_ref[...]
    b = b_ref[...]

    def conv_q(q):
        z = jnp.dot(p_ref[q], w, preferred_element_type=jnp.float32) + b
        return jnp.maximum(z, 0.0)

    z = jnp.maximum(jnp.maximum(conv_q(0), conv_q(1)),
                    jnp.maximum(conv_q(2), conv_q(3)))
    o_ref[...] = z.astype(o_ref.dtype)


def _conv_kernel(p_ref, w_ref, b_ref, o_ref):
    """Fused Conv(5x5) + bias + ReLU (no pool)."""
    z = jnp.dot(p_ref[...], w_ref[...],
                preferred_element_type=jnp.float32) + b_ref[...]
    o_ref[...] = jnp.maximum(z, 0.0).astype(o_ref.dtype)


def _fc_head_kernel(x_ref, w1_ref, b1_ref, w2_ref, b2_ref,
                    w3_ref, b3_ref, w4_ref, b4_ref, o_ref, *, out_dim):
    """linear1->ReLU->linear2->ReLU->linear3->ReLU->outlayer->log_softmax."""

    def dense(h, w_ref, b_ref):
        return jnp.dot(h, w_ref[...],
                       preferred_element_type=jnp.float32) + b_ref[...]

    h = jnp.maximum(dense(x_ref[...], w1_ref, b1_ref), 0.0).astype(jnp.bfloat16)
    h = jnp.maximum(dense(h, w2_ref, b2_ref), 0.0).astype(jnp.bfloat16)
    h = jnp.maximum(dense(h, w3_ref, b3_ref), 0.0).astype(jnp.bfloat16)
    z = dense(h, w4_ref, b4_ref)                        # (M, 128) f32 logits

    # log_softmax over the real classes only (lanes >= out_dim are padding)
    lanes = lax.broadcasted_iota(jnp.int32, z.shape, 1)
    z = jnp.where(lanes < out_dim, z, jnp.float32(-1e30))
    m = jnp.max(z, axis=-1, keepdims=True)
    s = z - m
    lse = jnp.log(jnp.sum(jnp.exp(s), axis=-1, keepdims=True))
    o_ref[...] = s - lse


# ------------------------------ layer wrappers ------------------------------ #

def _im2col(x, k=5, pad=2):
    """NHWC, stride 1, 'same' padding -> (B, H, W, k*k*C); column order (kh,kw,C)."""
    B, H, W, C = x.shape
    xp = jnp.pad(x, ((0, 0), (pad, pad), (pad, pad), (0, 0)))
    cols = [xp[:, di:di + H, dj:dj + W, :] for di in range(k) for dj in range(k)]
    return jnp.concatenate(cols, axis=-1)


def conv5x5_relu_pool(x, w_mat, b):
    """Conv2d(5, pad=2) + ReLU + MaxPool2d(2,2) in one pallas_call. x: NHWC bf16."""
    B, H, W, _ = x.shape
    K = w_mat.shape[0]
    Ho, Wo = H // 2, W // 2
    P = _pad_last(_im2col(x), K)                               # (B, H, W, K)
    quads = [P[:, qi::2, qj::2, :].reshape(B * Ho * Wo, K)
             for qi in range(2) for qj in range(2)]
    p4 = jnp.stack(quads, axis=0)                              # (4, M, K) bf16
    out = pl.pallas_call(
        _conv_pool_kernel,
        out_shape=jax.ShapeDtypeStruct((B * Ho * Wo, LANE), jnp.bfloat16),
        in_specs=[_vmem()] * 3,
        out_specs=_vmem(),
    )(p4, w_mat, b)
    return out.reshape(B, Ho, Wo, LANE)


def conv5x5_relu(x, w_mat, b):
    """Conv2d(5, pad=2) + ReLU in one pallas_call. x: NHWC bf16."""
    B, H, W, _ = x.shape
    K = w_mat.shape[0]
    P = _pad_last(_im2col(x), K).reshape(B * H * W, K)
    out = pl.pallas_call(
        _conv_kernel,
        out_shape=jax.ShapeDtypeStruct((B * H * W, LANE), jnp.bfloat16),
        in_specs=[_vmem()] * 3,
        out_specs=_vmem(),
    )(P, w_mat, b)
    return out.reshape(B, H, W, LANE)


def fc_head(x, pp, out_dim):
    M = x.shape[0]
    kern = functools.partial(_fc_head_kernel, out_dim=out_dim)
    return pl.pallas_call(
        kern,
        out_shape=jax.ShapeDtypeStruct((M, LANE), jnp.float32),
        in_specs=[_vmem()] * 9,
        out_specs=_vmem(),
    )(x, pp["lin1_w"], pp["lin1_b"], pp["lin2_w"], pp["lin2_b"],
      pp["lin3_w"], pp["lin3_b"], pp["out_w"], pp["out_b"])


# --------------------------- parameter preparation -------------------------- #

def init_params(key, in_dim, out_dim):
    hf = in_dim // 8
    flat = hf * hf * 25
    shapes = {
        "conv1_w": (25, 1, 5, 5),   "conv1_b": (25,),
        "conv2_w": (50, 25, 5, 5),  "conv2_b": (50,),
        "conv3_w": (50, 50, 5, 5),  "conv3_b": (50,),
        "conv4_w": (25, 50, 5, 5),  "conv4_b": (25,),
        "conv5_w": (25, 25, 5, 5),  "conv5_b": (25,),
        "lin1_w": (flat, 1000),     "lin1_b": (1000,),
        "lin2_w": (1000, 500),      "lin2_b": (500,),
        "lin3_w": (500, 200),       "lin3_b": (200,),
        "out_w": (200, out_dim),    "out_b": (out_dim,),
    }
    names = sorted(shapes)
    keys = jax.random.split(key, len(names))
    return {n: jax.random.normal(k, shapes[n], jnp.float32) * 0.05
            for n, k in zip(names, keys)}


def _prep_conv(w, b, cin_pad):
    """(Cout,Cin,5,5) -> (K_pad, 128) bf16 matmul weight + (1,128) f32 bias."""
    cout, cin, kh, kw = w.shape
    wt = jnp.transpose(w, (2, 3, 1, 0))                       # (kh,kw,cin,cout)
    wt = jnp.pad(wt, ((0, 0), (0, 0), (0, cin_pad - cin), (0, LANE - cout)))
    w_mat = wt.reshape(kh * kw * cin_pad, LANE)
    k_pad = _rup(w_mat.shape[0], LANE)
    w_mat = jnp.pad(w_mat, ((0, k_pad - w_mat.shape[0]), (0, 0)))
    b_row = jnp.pad(b, (0, LANE - cout)).reshape(1, LANE)
    return w_mat.astype(jnp.bfloat16), b_row.astype(jnp.float32)


def _prep_lin(w, b, n_in_pad, n_out_pad):
    n_in, n_out = w.shape
    wp = jnp.pad(w, ((0, n_in_pad - n_in), (0, n_out_pad - n_out)))
    bp = jnp.pad(b, (0, n_out_pad - n_out)).reshape(1, n_out_pad)
    return wp.astype(jnp.bfloat16), bp.astype(jnp.float32)


def prepare_params(p, in_dim):
    hf = in_dim // 8
    pp = {}
    pp["conv1_w"], pp["conv1_b"] = _prep_conv(p["conv1_w"], p["conv1_b"], cin_pad=1)
    pp["conv2_w"], pp["conv2_b"] = _prep_conv(p["conv2_w"], p["conv2_b"], cin_pad=LANE)
    pp["conv3_w"], pp["conv3_b"] = _prep_conv(p["conv3_w"], p["conv3_b"], cin_pad=LANE)
    pp["conv4_w"], pp["conv4_b"] = _prep_conv(p["conv4_w"], p["conv4_b"], cin_pad=LANE)
    pp["conv5_w"], pp["conv5_b"] = _prep_conv(p["conv5_w"], p["conv5_b"], cin_pad=LANE)

    # linear1: fold the NCHW flatten permutation into the weight rows and pad
    # the channel axis to 128 so the NHWC activation flattens directly.
    w1 = p["lin1_w"].reshape(25, hf, hf, 1000)                # [c, h, w, n]
    w1 = jnp.transpose(w1, (1, 2, 0, 3))                      # [h, w, c, n]
    w1 = jnp.pad(w1, ((0, 0), (0, 0), (0, LANE - 25), (0, 1024 - 1000)))
    pp["lin1_w"] = w1.reshape(hf * hf * LANE, 1024).astype(jnp.bfloat16)
    pp["lin1_b"] = jnp.pad(p["lin1_b"], (0, 1024 - 1000)).reshape(1, 1024).astype(jnp.float32)

    pp["lin2_w"], pp["lin2_b"] = _prep_lin(p["lin2_w"], p["lin2_b"], 1024, 512)
    pp["lin3_w"], pp["lin3_b"] = _prep_lin(p["lin3_w"], p["lin3_b"], 512, 256)
    pp["out_w"], pp["out_b"] = _prep_lin(p["out_w"], p["out_b"], 256, LANE)
    return pp


# --------------------------------- forward ---------------------------------- #

def lenet_enhanced2_forward(x_nchw, pp, *, out_dim):
    B = x_nchw.shape[0]
    # NCHW -> NHWC, bf16 matmul operands (f32 accumulation inside kernels)
    x = jnp.transpose(x_nchw, (0, 2, 3, 1)).astype(jnp.bfloat16)

    y = conv5x5_relu_pool(x, pp["conv1_w"], pp["conv1_b"])   # (B, H/2, W/2, 128)
    y = conv5x5_relu_pool(y, pp["conv2_w"], pp["conv2_b"])   # (B, H/4, W/4, 128)
    y = conv5x5_relu_pool(y, pp["conv3_w"], pp["conv3_b"])   # (B, H/8, W/8, 128)
    y = conv5x5_relu(y, pp["conv4_w"], pp["conv4_b"])
    y = conv5x5_relu(y, pp["conv5_w"], pp["conv5_b"])

    # NHWC flatten; the NCHW permutation is already folded into lin1_w rows.
    # note: dropout is defined in __init__ but never used in forward.
    yf = y.reshape(B, -1)                                     # (B, hf*hf*128)
    mp = _rup(max(B, SUBLANE), SUBLANE)
    yf = jnp.pad(yf, ((0, mp - B), (0, 0)))                   # fill sublanes

    logp = fc_head(yf, pp, out_dim)                           # (mp, 128) f32
    return logp[:B, :out_dim]


if __name__ == "__main__":
    batch, in_dim, out_dim = 2, 16, 10      # inDim must be divisible by 8
    key = jax.random.PRNGKey(0)
    kx, kp = jax.random.split(key)
    x = jax.random.normal(kx, (batch, 1, in_dim, in_dim), jnp.float32)

    params = init_params(kp, in_dim, out_dim)
    pp = prepare_params(params, in_dim)     # one-time padded/bf16 param prep

    fwd = jax.jit(functools.partial(lenet_enhanced2_forward, out_dim=out_dim))
    out = jax.block_until_ready(fwd(x, pp))
    assert out.shape == (batch, out_dim)
    print("KERNEL_OK")
</pallas_src>

<mosaic_0001>
module attributes {stable_mosaic.version = 11 : i64} {
  func.func @_conv_pool_kernel(%arg0: memref<4x128x128xbf16, #tpu.memory_space<vmem>>, %arg1: memref<128x128xbf16, #tpu.memory_space<vmem>>, %arg2: memref<1x128xf32, #tpu.memory_space<vmem>>, %arg3: memref<128x128xbf16, #tpu.memory_space<vmem>>) attributes {dimension_semantics = [], scalar_prefetch = 0 : i64, scratch_operands = 0 : i64, tpu.core_type = #tpu.core_type<tc>} {
    %c0 = arith.constant 0 : index
    %c0_0 = arith.constant 0 : index
    %0 = vector.load %arg1[%c0, %c0_0] : memref<128x128xbf16, #tpu.memory_space<vmem>>, vector<128x128xbf16>
    %c0_1 = arith.constant 0 : index
    %c0_2 = arith.constant 0 : index
    %1 = vector.load %arg2[%c0_1, %c0_2] : memref<1x128xf32, #tpu.memory_space<vmem>>, vector<1x128xf32>
    %c0_3 = arith.constant 0 : index
    %c0_4 = arith.constant 0 : index
    %c0_5 = arith.constant 0 : index
    %2 = vector.load %arg0[%c0_3, %c0_4, %c0_5] : memref<4x128x128xbf16, #tpu.memory_space<vmem>>, vector<1x128x128xbf16>
    %3 = vector.shape_cast %2 : vector<1x128x128xbf16> to vector<128x128xbf16>
    %cst = arith.constant dense<0.000000e+00> : vector<128x128xf32>
    %4 = tpu.matmul %3, %0, %cst {dimension_numbers = #tpu.dot_dimension_numbers<[1], [0], [0], [1], [0, 0, 1, 1], [], []>} : vector<128x128xbf16>, vector<128x128xbf16>, vector<128x128xf32> -> vector<128x128xf32>
    %5 = vector.broadcast %1 : vector<1x128xf32> to vector<128x128xf32>
    %6 = arith.addf %4, %5 : vector<128x128xf32>
    %cst_6 = arith.constant 0.000000e+00 : f32
    %7 = vector.broadcast %cst_6 : f32 to vector<128x128xf32>
    %8 = arith.maximumf %6, %7 : vector<128x128xf32>
    %c1 = arith.constant 1 : index
    %c0_7 = arith.constant 0 : index
    %c0_8 = arith.constant 0 : index
    %9 = vector.load %arg0[%c1, %c0_7, %c0_8] : memref<4x128x128xbf16, #tpu.memory_space<vmem>>, vector<1x128x128xbf16>
    %10 = vector.shape_cast %9 : vector<1x128x128xbf16> to vector<128x128xbf16>
    %cst_9 = arith.constant dense<0.000000e+00> : vector<128x128xf32>
    %11 = tpu.matmul %10, %0, %cst_9 {dimension_numbers = #tpu.dot_dimension_numbers<[1], [0], [0], [1], [0, 0, 1, 1], [], []>} : vector<128x128xbf16>, vector<128x128xbf16>, vector<128x128xf32> -> vector<128x128xf32>
    %12 = vector.broadcast %1 : vector<1x128xf32> to vector<128x128xf32>
    %13 = arith.addf %11, %12 : vector<128x128xf32>
    %cst_10 = arith.constant 0.000000e+00 : f32
    %14 = vector.broadcast %cst_10 : f32 to vector<128x128xf32>
    %15 = arith.maximumf %13, %14 : vector<128x128xf32>
    %16 = arith.maximumf %8, %15 : vector<128x128xf32>
    %c2 = arith.constant 2 : index
    %c0_11 = arith.constant 0 : index
    %c0_12 = arith.constant 0 : index
    %17 = vector.load %arg0[%c2, %c0_11, %c0_12] : memref<4x128x128xbf16, #tpu.memory_space<vmem>>, vector<1x128x128xbf16>
    %18 = vector.shape_cast %17 : vector<1x128x128xbf16> to vector<128x128xbf16>
    %cst_13 = arith.constant dense<0.000000e+00> : vector<128x128xf32>
    %19 = tpu.matmul %18, %0, %cst_13 {dimension_numbers = #tpu.dot_dimension_numbers<[1], [0], [0], [1], [0, 0, 1, 1], [], []>} : vector<128x128xbf16>, vector<128x128xbf16>, vector<128x128xf32> -> vector<128x128xf32>
    %20 = vector.broadcast %1 : vector<1x128xf32> to vector<128x128xf32>
    %21 = arith.addf %19, %20 : vector<128x128xf32>
    %cst_14 = arith.constant 0.000000e+00 : f32
    %22 = vector.broadcast %cst_14 : f32 to vector<128x128xf32>
    %23 = arith.maximumf %21, %22 : vector<128x128xf32>
    %c3 = arith.constant 3 : index
    %c0_15 = arith.constant 0 : index
    %c0_16 = arith.constant 0 : index
    %24 = vector.load %arg0[%c3, %c0_15, %c0_16] : memref<4x128x128xbf16, #tpu.memory_space<vmem>>, vector<1x128x128xbf16>
    %25 = vector.shape_cast %24 : vector<1x128x128xbf16> to vector<128x128xbf16>
    %cst_17 = arith.constant dense<0.000000e+00> : vector<128x128xf32>
    %26 = tpu.matmul %25, %0, %cst_17 {dimension_numbers = #tpu.dot_dimension_numbers<[1], [0], [0], [1], [0, 0, 1, 1], [], []>} : vector<128x128xbf16>, vector<128x128xbf16>, vector<128x128xf32> -> vector<128x128xf32>
    %27 = vector.broadcast %1 : vector<1x128xf32> to vector<128x128xf32>
    %28 = arith.addf %26, %27 : vector<128x128xf32>
    %cst_18 = arith.constant 0.000000e+00 : f32
    %29 = vector.broadcast %cst_18 : f32 to vector<128x128xf32>
    %30 = arith.maximumf %28, %29 : vector<128x128xf32>
    %31 = arith.maximumf %23, %30 : vector<128x128xf32>
    %32 = arith.maximumf %16, %31 : vector<128x128xf32>
    %33 = arith.truncf %32 : vector<128x128xf32> to vector<128x128xbf16>
    %c0_19 = arith.constant 0 : index
    %c0_20 = arith.constant 0 : index
    %34 = vector.load %arg3[%c0_19, %c0_20] : memref<128x128xbf16, #tpu.memory_space<vmem>>, vector<128x128xbf16>
    tpu.vector_store %arg3[%c0_19, %c0_20], %33 {strides = array<i32>} : memref<128x128xbf16, #tpu.memory_space<vmem>>, vector<128x128xbf16>,
    return
  }
}

module attributes {stable_mosaic.version = 11 : i64} {
  func.func @_conv_pool_kernel(%arg0: memref<4x32x3200xbf16, #tpu.memory_space<vmem>>, %arg1: memref<3200x128xbf16, #tpu.memory_space<vmem>>, %arg2: memref<1x128xf32, #tpu.memory_space<vmem>>, %arg3: memref<32x128xbf16, #tpu.memory_space<vmem>>) attributes {dimension_semantics = [], scalar_prefetch = 0 : i64, scratch_operands = 0 : i64, tpu.core_type = #tpu.core_type<tc>} {
    %c0 = arith.constant 0 : index
    %c0_0 = arith.constant 0 : index
    %0 = vector.load %arg1[%c0, %c0_0] : memref<3200x128xbf16, #tpu.memory_space<vmem>>, vector<3200x128xbf16>
    %c0_1 = arith.constant 0 : index
    %c0_2 = arith.constant 0 : index
    %1 = vector.load %arg2[%c0_1, %c0_2] : memref<1x128xf32, #tpu.memory_space<vmem>>, vector<1x128xf32>
    %c0_3 = arith.constant 0 : index
    %c0_4 = arith.constant 0 : index
    %c0_5 = arith.constant 0 : index
    %2 = vector.load %arg0[%c0_3, %c0_4, %c0_5] : memref<4x32x3200xbf16, #tpu.memory_space<vmem>>, vector<1x32x3200xbf16>
    %3 = vector.shape_cast %2 : vector<1x32x3200xbf16> to vector<32x3200xbf16>
    %cst = arith.constant dense<0.000000e+00> : vector<32x128xf32>
    %4 = tpu.matmul %3, %0, %cst {dimension_numbers = #tpu.dot_dimension_numbers<[1], [0], [0], [1], [0, 0, 1, 1], [], []>} : vector<32x3200xbf16>, vector<3200x128xbf16>, vector<32x128xf32> -> vector<32x128xf32>
    %5 = vector.broadcast %1 : vector<1x128xf32> to vector<32x128xf32>
    %6 = arith.addf %4, %5 : vector<32x128xf32>
    %cst_6 = arith.constant 0.000000e+00 : f32
    %7 = vector.broadcast %cst_6 : f32 to vector<32x128xf32>
    %8 = arith.maximumf %6, %7 : vector<32x128xf32>
    %c1 = arith.constant 1 : index
    %c0_7 = arith.constant 0 : index
    %c0_8 = arith.constant 0 : index
    %9 = vector.load %arg0[%c1, %c0_7, %c0_8] : memref<4x32x3200xbf16, #tpu.memory_space<vmem>>, vector<1x32x3200xbf16>
    %10 = vector.shape_cast %9 : vector<1x32x3200xbf16> to vector<32x3200xbf16>
    %cst_9 = arith.constant dense<0.000000e+00> : vector<32x128xf32>
    %11 = tpu.matmul %10, %0, %cst_9 {dimension_numbers = #tpu.dot_dimension_numbers<[1], [0], [0], [1], [0, 0, 1, 1], [], []>} : vector<32x3200xbf16>, vector<3200x128xbf16>, vector<32x128xf32> -> vector<32x128xf32>
    %12 = vector.broadcast %1 : vector<1x128xf32> to vector<32x128xf32>
    %13 = arith.addf %11, %12 : vector<32x128xf32>
    %cst_10 = arith.constant 0.000000e+00 : f32
    %14 = vector.broadcast %cst_10 : f32 to vector<32x128xf32>
    %15 = arith.maximumf %13, %14 : vector<32x128xf32>
    %16 = arith.maximumf %8, %15 : vector<32x128xf32>
    %c2 = arith.constant 2 : index
    %c0_11 = arith.constant 0 : index
    %c0_12 = arith.constant 0 : index
    %17 = vector.load %arg0[%c2, %c0_11, %c0_12] : memref<4x32x3200xbf16, #tpu.memory_space<vmem>>, vector<1x32x3200xbf16>
    %18 = vector.shape_cast %17 : vector<1x32x3200xbf16> to vector<32x3200xbf16>
    %cst_13 = arith.constant dense<0.000000e+00> : vector<32x128xf32>
    %19 = tpu.matmul %18, %0, %cst_13 {dimension_numbers = #tpu.dot_dimension_numbers<[1], [0], [0], [1], [0, 0, 1, 1], [], []>} : vector<32x3200xbf16>, vector<3200x128xbf16>, vector<32x128xf32> -> vector<32x128xf32>
    %20 = vector.broadcast %1 : vector<1x128xf32> to vector<32x128xf32>
    %21 = arith.addf %19, %20 : vector<32x128xf32>
    %cst_14 = arith.constant 0.000000e+00 : f32
    %22 = vector.broadcast %cst_14 : f32 to vector<32x128xf32>
    %23 = arith.maximumf %21, %22 : vector<32x128xf32>
    %c3 = arith.constant 3 : index
    %c0_15 = arith.constant 0 : index
    %c0_16 = arith.constant 0 : index
    %24 = vector.load %arg0[%c3, %c0_15, %c0_16] : memref<4x32x3200xbf16, #tpu.memory_space<vmem>>, vector<1x32x3200xbf16>
    %25 = vector.shape_cast %24 : vector<1x32x3200xbf16> to vector<32x3200xbf16>
    %cst_17 = arith.constant dense<0.000000e+00> : vector<32x128xf32>
    %26 = tpu.matmul %25, %0, %cst_17 {dimension_numbers = #tpu.dot_dimension_numbers<[1], [0], [0], [1], [0, 0, 1, 1], [], []>} : vector<32x3200xbf16>, vector<3200x128xbf16>, vector<32x128xf32> -> vector<32x128xf32>
    %27 = vector.broadcast %1 : vector<1x128xf32> to vector<32x128xf32>
    %28 = arith.addf %26, %27 : vector<32x128xf32>
    %cst_18 = arith.constant 0.000000e+00 : f32
    %29 = vector.broadcast %cst_18 : f32 to vector<32x128xf32>
    %30 = arith.maximumf %28, %29 : vector<32x128xf32>
    %31 = arith.maximumf %23, %30 : vector<32x128xf32>
    %32 = arith.maximumf %16, %31 : vector<32x128xf32>
    %33 = arith.truncf %32 : vector<32x128xf32> to vector<32x128xbf16>
    %c0_19 = arith.constant 0 : index
    %c0_20 = arith.constant 0 : index
    %34 = vector.load %arg3[%c0_19, %c0_20] : memref<32x128xbf16, #tpu.memory_space<vmem>>, vector<32x128xbf16>
    tpu.vector_store %arg3[%c0_19, %c0_20], %33 {strides = array<i32>} : memref<32x128xbf16, #tpu.memory_space<vmem>>, vector<32x128xbf16>,
    return
  }
}

module attributes {stable_mosaic.version = 11 : i64} {
  func.func @_conv_pool_kernel(%arg0: memref<4x8x3200xbf16, #tpu.memory_space<vmem>>, %arg1: memref<3200x128xbf16, #tpu.memory_space<vmem>>, %arg2: memref<1x128xf32, #tpu.memory_space<vmem>>, %arg3: memref<8x128xbf16, #tpu.memory_space<vmem>>) attributes {dimension_semantics = [], scalar_prefetch = 0 : i64, scratch_operands = 0 : i64, tpu.core_type = #tpu.core_type<tc>} {
    %c0 = arith.constant 0 : index
    %c0_0 = arith.constant 0 : index
    %0 = vector.load %arg1[%c0, %c0_0] : memref<3200x128xbf16, #tpu.memory_space<vmem>>, vector<3200x128xbf16>
    %c0_1 = arith.constant 0 : index
    %c0_2 = arith.constant 0 : index
    %1 = vector.load %arg2[%c0_1, %c0_2] : memref<1x128xf32, #tpu.memory_space<vmem>>, vector<1x128xf32>
    %c0_3 = arith.constant 0 : index
    %c0_4 = arith.constant 0 : index
    %c0_5 = arith.constant 0 : index
    %2 = vector.load %arg0[%c0_3, %c0_4, %c0_5] : memref<4x8x3200xbf16, #tpu.memory_space<vmem>>, vector<1x8x3200xbf16>
    %3 = vector.shape_cast %2 : vector<1x8x3200xbf16> to vector<8x3200xbf16>
    %cst = arith.constant dense<0.000000e+00> : vector<8x128xf32>
    %4 = tpu.matmul %3, %0, %cst {dimension_numbers = #tpu.dot_dimension_numbers<[1], [0], [0], [1], [0, 0, 1, 1], [], []>} : vector<8x3200xbf16>, vector<3200x128xbf16>, vector<8x128xf32> -> vector<8x128xf32>
    %5 = vector.broadcast %1 : vector<1x128xf32> to vector<8x128xf32>
    %6 = arith.addf %4, %5 : vector<8x128xf32>
    %cst_6 = arith.constant 0.000000e+00 : f32
    %7 = vector.broadcast %cst_6 : f32 to vector<8x128xf32>
    %8 = arith.maximumf %6, %7 : vector<8x128xf32>
    %c1 = arith.constant 1 : index
    %c0_7 = arith.constant 0 : index
    %c0_8 = arith.constant 0 : index
    %9 = vector.load %arg0[%c1, %c0_7, %c0_8] : memref<4x8x3200xbf16, #tpu.memory_space<vmem>>, vector<1x8x3200xbf16>
    %10 = vector.shape_cast %9 : vector<1x8x3200xbf16> to vector<8x3200xbf16>
    %cst_9 = arith.constant dense<0.000000e+00> : vector<8x128xf32>
    %11 = tpu.matmul %10, %0, %cst_9 {dimension_numbers = #tpu.dot_dimension_numbers<[1], [0], [0], [1], [0, 0, 1, 1], [], []>} : vector<8x3200xbf16>, vector<3200x128xbf16>, vector<8x128xf32> -> vector<8x128xf32>
    %12 = vector.broadcast %1 : vector<1x128xf32> to vector<8x128xf32>
    %13 = arith.addf %11, %12 : vector<8x128xf32>
    %cst_10 = arith.constant 0.000000e+00 : f32
    %14 = vector.broadcast %cst_10 : f32 to vector<8x128xf32>
    %15 = arith.maximumf %13, %14 : vector<8x128xf32>
    %16 = arith.maximumf %8, %15 : vector<8x128xf32>
    %c2 = arith.constant 2 : index
    %c0_11 = arith.constant 0 : index
    %c0_12 = arith.constant 0 : index
    %17 = vector.load %arg0[%c2, %c0_11, %c0_12] : memref<4x8x3200xbf16, #tpu.memory_space<vmem>>, vector<1x8x3200xbf16>
    %18 = vector.shape_cast %17 : vector<1x8x3200xbf16> to vector<8x3200xbf16>
    %cst_13 = arith.constant dense<0.000000e+00> : vector<8x128xf32>
    %19 = tpu.matmul %18, %0, %cst_13 {dimension_numbers = #tpu.dot_dimension_numbers<[1], [0], [0], [1], [0, 0, 1, 1], [], []>} : vector<8x3200xbf16>, vector<3200x128xbf16>, vector<8x128xf32> -> vector<8x128xf32>
    %20 = vector.broadcast %1 : vector<1x128xf32> to vector<8x128xf32>
    %21 = arith.addf %19, %20 : vector<8x128xf32>
    %cst_14 = arith.constant 0.000000e+00 : f32
    %22 = vector.broadcast %cst_14 : f32 to vector<8x128xf32>
    %23 = arith.maximumf %21, %22 : vector<8x128xf32>
    %c3 = arith.constant 3 : index
    %c0_15 = arith.constant 0 : index
    %c0_16 = arith.constant 0 : index
    %24 = vector.load %arg0[%c3, %c0_15, %c0_16] : memref<4x8x3200xbf16, #tpu.memory_space<vmem>>, vector<1x8x3200xbf16>
    %25 = vector.shape_cast %24 : vector<1x8x3200xbf16> to vector<8x3200xbf16>
    %cst_17 = arith.constant dense<0.000000e+00> : vector<8x128xf32>
    %26 = tpu.matmul %25, %0, %cst_17 {dimension_numbers = #tpu.dot_dimension_numbers<[1], [0], [0], [1], [0, 0, 1, 1], [], []>} : vector<8x3200xbf16>, vector<3200x128xbf16>, vector<8x128xf32> -> vector<8x128xf32>
    %27 = vector.broadcast %1 : vector<1x128xf32> to vector<8x128xf32>
    %28 = arith.addf %26, %27 : vector<8x128xf32>
    %cst_18 = arith.constant 0.000000e+00 : f32
    %29 = vector.broadcast %cst_18 : f32 to vector<8x128xf32>
    %30 = arith.maximumf %28, %29 : vector<8x128xf32>
    %31 = arith.maximumf %23, %30 : vector<8x128xf32>
    %32 = arith.maximumf %16, %31 : vector<8x128xf32>
    %33 = arith.truncf %32 : vector<8x128xf32> to vector<8x128xbf16>
    %c0_19 = arith.constant 0 : index
    %c0_20 = arith.constant 0 : index
    %34 = vector.load %arg3[%c0_19, %c0_20] : memref<8x128xbf16, #tpu.memory_space<vmem>>, vector<8x128xbf16>
    tpu.vector_store %arg3[%c0_19, %c0_20], %33 {strides = array<i32>} : memref<8x128xbf16, #tpu.memory_space<vmem>>, vector<8x128xbf16>,
    return
  }
}

module attributes {stable_mosaic.version = 11 : i64} {
  func.func @_fc_head_kernel(%arg0: memref<8x512xbf16, #tpu.memory_space<vmem>>, %arg1: memref<512x1024xbf16, #tpu.memory_space<vmem>>, %arg2: memref<1x1024xf32, #tpu.memory_space<vmem>>, %arg3: memref<1024x512xbf16, #tpu.memory_space<vmem>>, %arg4: memref<1x512xf32, #tpu.memory_space<vmem>>, %arg5: memref<512x256xbf16, #tpu.memory_space<vmem>>, %arg6: memref<1x256xf32, #tpu.memory_space<vmem>>, %arg7: memref<256x128xbf16, #tpu.memory_space<vmem>>, %arg8: memref<1x128xf32, #tpu.memory_space<vmem>>, %arg9: memref<8x128xf32, #tpu.memory_space<vmem>>) attributes {dimension_semantics = [], scalar_prefetch = 0 : i64, scratch_operands = 0 : i64, tpu.core_type = #tpu.core_type<tc>} {
    %c0 = arith.constant 0 : index
    %c0_0 = arith.constant 0 : index
    %0 = vector.load %arg0[%c0, %c0_0] : memref<8x512xbf16, #tpu.memory_space<vmem>>, vector<8x512xbf16>
    %c0_1 = arith.constant 0 : index
    %c0_2 = arith.constant 0 : index
    %1 = vector.load %arg1[%c0_1, %c0_2] : memref<512x1024xbf16, #tpu.memory_space<vmem>>, vector<512x1024xbf16>
    %cst = arith.constant dense<0.000000e+00> : vector<8x1024xf32>
    %2 = tpu.matmul %0, %1, %cst {dimension_numbers = #tpu.dot_dimension_numbers<[1], [0], [0], [1], [0, 0, 1, 1], [], []>} : vector<8x512xbf16>, vector<512x1024xbf16>, vector<8x1024xf32> -> vector<8x1024xf32>
    %c0_3 = arith.constant 0 : index
    %c0_4 = arith.constant 0 : index
    %3 = vector.load %arg2[%c0_3, %c0_4] : memref<1x1024xf32, #tpu.memory_space<vmem>>, vector<1x1024xf32>
    %4 = vector.broadcast %3 : vector<1x1024xf32> to vector<8x1024xf32>
    %5 = arith.addf %2, %4 : vector<8x1024xf32>
    %cst_5 = arith.constant 0.000000e+00 : f32
    %6 = vector.broadcast %cst_5 : f32 to vector<8x1024xf32>
    %7 = arith.maximumf %5, %6 : vector<8x1024xf32>
    %8 = arith.truncf %7 : vector<8x1024xf32> to vector<8x1024xbf16>
    %c0_6 = arith.constant 0 : index
    %c0_7 = arith.constant 0 : index
    %9 = vector.load %arg3[%c0_6, %c0_7] : memref<1024x512xbf16, #tpu.memory_space<vmem>>, vector<1024x512xbf16>
    %cst_8 = arith.constant dense<0.000000e+00> : vector<8x512xf32>
    %10 = tpu.matmul %8, %9, %cst_8 {dimension_numbers = #tpu.dot_dimension_numbers<[1], [0], [0], [1], [0, 0, 1, 1], [], []>} : vector<8x1024xbf16>, vector<1024x512xbf16>, vector<8x512xf32> -> vector<8x512xf32>
    %c0_9 = arith.constant 0 : index
    %c0_10 = arith.constant 0 : index
    %11 = vector.load %arg4[%c0_9, %c0_10] : memref<1x512xf32, #tpu.memory_space<vmem>>, vector<1x512xf32>
    %12 = vector.broadcast %11 : vector<1x512xf32> to vector<8x512xf32>
    %13 = arith.addf %10, %12 : vector<8x512xf32>
    %cst_11 = arith.constant 0.000000e+00 : f32
    %14 = vector.broadcast %cst_11 : f32 to vector<8x512xf32>
    %15 = arith.maximumf %13, %14 : vector<8x512xf32>
    %16 = arith.truncf %15 : vector<8x512xf32> to vector<8x512xbf16>
    %c0_12 = arith.constant 0 : index
    %c0_13 = arith.constant 0 : index
    %17 = vector.load %arg5[%c0_12, %c0_13] : memref<512x256xbf16, #tpu.memory_space<vmem>>, vector<512x256xbf16>
    %cst_14 = arith.constant dense<0.000000e+00> : vector<8x256xf32>
    %18 = tpu.matmul %16, %17, %cst_14 {dimension_numbers = #tpu.dot_dimension_numbers<[1], [0], [0], [1], [0, 0, 1, 1], [], []>} : vector<8x512xbf16>, vector<512x256xbf16>, vector<8x256xf32> -> vector<8x256xf32>
    %c0_15 = arith.constant 0 : index
    %c0_16 = arith.constant 0 : index
    %19 = vector.load %arg6[%c0_15, %c0_16] : memref<1x256xf32, #tpu.memory_space<vmem>>, vector<1x256xf32>
    %20 = vector.broadcast %19 : vector<1x256xf32> to vector<8x256xf32>
    %21 = arith.addf %18, %20 : vector<8x256xf32>
    %cst_17 = arith.constant 0.000000e+00 : f32
    %22 = vector.broadcast %cst_17 : f32 to vector<8x256xf32>
    %23 = arith.maximumf %21, %22 : vector<8x256xf32>
    %24 = arith.truncf %23 : vector<8x256xf32> to vector<8x256xbf16>
    %c0_18 = arith.constant 0 : index
    %c0_19 = arith.constant 0 : index
    %25 = vector.load %arg7[%c0_18, %c0_19] : memref<256x128xbf16, #tpu.memory_space<vmem>>, vector<256x128xbf16>
    %cst_20 = arith.constant dense<0.000000e+00> : vector<8x128xf32>
    %26 = tpu.matmul %24, %25, %cst_20 {dimension_numbers = #tpu.dot_dimension_numbers<[1], [0], [0], [1], [0, 0, 1, 1], [], []>} : vector<8x256xbf16>, vector<256x128xbf16>, vector<8x128xf32> -> vector<8x128xf32>
    %c0_21 = arith.constant 0 : index
    %c0_22 = arith.constant 0 : index
    %27 = vector.load %arg8[%c0_21, %c0_22] : memref<1x128xf32, #tpu.memory_space<vmem>>, vector<1x128xf32>
    %28 = vector.broadcast %27 : vector<1x128xf32> to vector<8x128xf32>
    %29 = arith.addf %26, %28 : vector<8x128xf32>
    %30 = tpu.iota {dimensions = array<i32: 1>} : vector<8x128xi32>
    %c10_i32 = arith.constant 10 : i32
    %31 = vector.broadcast %c10_i32 : i32 to vector<8x128xi32>
    %32 = arith.cmpi slt, %30, %31 : vector<8x128xi32>
    %cst_23 = arith.constant -1.000000e+30 : f32
    %33 = vector.broadcast %cst_23 : f32 to vector<8x128xf32>
    %34 = arith.select %32, %29, %33 : vector<8x128xi1>, vector<8x128xf32>
    %cst_24 = arith.constant dense<0xFF800000> : vector<8xf32>
    %35 = vector.multi_reduction <maximumf>, %34, %cst_24 [1] : vector<8x128xf32> to vector<8xf32>
    %36 = vector.shape_cast %35 : vector<8xf32> to vector<8x1xf32>
    %37 = vector.broadcast %36 : vector<8x1xf32> to vector<8x128xf32>
    %38 = arith.subf %34, %37 : vector<8x128xf32>
    %39 = math.exp %38 : vector<8x128xf32>
    %cst_25 = arith.constant dense<0.000000e+00> : vector<8xf32>
    %40 = vector.multi_reduction <add>, %39, %cst_25 [1] : vector<8x128xf32> to vector<8xf32>
    %41 = vector.shape_cast %40 : vector<8xf32> to vector<8x1xf32>
    %42 = math.log %41 : vector<8x1xf32>
    %43 = vector.broadcast %42 : vector<8x1xf32> to vector<8x128xf32>
    %44 = arith.subf %38, %43 : vector<8x128xf32>
    %c0_26 = arith.constant 0 : index
    %c0_27 = arith.constant 0 : index
    %45 = vector.load %arg9[%c0_26, %c0_27] : memref<8x128xf32, #tpu.memory_space<vmem>>, vector<8x128xf32>
    tpu.vector_store %arg9[%c0_26, %c0_27], %44 {strides = array<i32>} : memref<8x128xf32, #tpu.memory_space<vmem>>, vector<8x128xf32>,
    return
  }
}

module attributes {stable_mosaic.version = 11 : i64} {
  func.func @_conv_kernel(%arg0: memref<8x3200xbf16, #tpu.memory_space<vmem>>, %arg1: memref<3200x128xbf16, #tpu.memory_space<vmem>>, %arg2: memref<1x128xf32, #tpu.memory_space<vmem>>, %arg3: memref<8x128xbf16, #tpu.memory_space<vmem>>) attributes {dimension_semantics = [], scalar_prefetch = 0 : i64, scratch_operands = 0 : i64, tpu.core_type = #tpu.core_type<tc>} {
    %c0 = arith.constant 0 : index
    %c0_0 = arith.constant 0 : index
    %0 = vector.load %arg0[%c0, %c0_0] : memref<8x3200xbf16, #tpu.memory_space<vmem>>, vector<8x3200xbf16>
    %c0_1 = arith.constant 0 : index
    %c0_2 = arith.constant 0 : index
    %1 = vector.load %arg1[%c0_1, %c0_2] : memref<3200x128xbf16, #tpu.memory_space<vmem>>, vector<3200x128xbf16>
    %cst = arith.constant dense<0.000000e+00> : vector<8x128xf32>
    %2 = tpu.matmul %0, %1, %cst {dimension_numbers = #tpu.dot_dimension_numbers<[1], [0], [0], [1], [0, 0, 1, 1], [], []>} : vector<8x3200xbf16>, vector<3200x128xbf16>, vector<8x128xf32> -> vector<8x128xf32>
    %c0_3 = arith.constant 0 : index
    %c0_4 = arith.constant 0 : index
    %3 = vector.load %arg2[%c0_3, %c0_4] : memref<1x128xf32, #tpu.memory_space<vmem>>, vector<1x128xf32>
    %4 = vector.broadcast %3 : vector<1x128xf32> to vector<8x128xf32>
    %5 = arith.addf %2, %4 : vector<8x128xf32>
    %cst_5 = arith.constant 0.000000e+00 : f32
    %6 = vector.broadcast %cst_5 : f32 to vector<8x128xf32>
    %7 = arith.maximumf %5, %6 : vector<8x128xf32>
    %8 = arith.truncf %7 : vector<8x128xf32> to vector<8x128xbf16>
    %c0_6 = arith.constant 0 : index
    %c0_7 = arith.constant 0 : index
    %9 = vector.load %arg3[%c0_6, %c0_7] : memref<8x128xbf16, #tpu.memory_space<vmem>>, vector<8x128xbf16>
    tpu.vector_store %arg3[%c0_6, %c0_7], %8 {strides = array<i32>} : memref<8x128xbf16, #tpu.memory_space<vmem>>, vector<8x128xbf16>,
    return
  }
}

</mosaic_0001>

<llo_original>
// kernel: lenet_enhanced2_forward.6
$region0: #{lenet_enhanced2_forward.6}
  #allocation0 [shape = 'u32[]', space=smem, size = 0x4, offset = 0x4, fixed_abs, tag = 'smem constant byte address 0x4 - core index']
  #allocation1 [shape = 'u32[72,128]{1,0:T(1,128)}', space=vmem, size = 0x9000, scoped, tag = 'internal scratch']
  %s0 = inlined_call_operand.vmem [shape: bf16[4,128,128], index: 0, kind: input, shape index: {}]
  %s1 = inlined_call_operand.vmem [shape: bf16[128,128], index: 1, kind: input, shape index: {}]
  %s2 = inlined_call_operand.vmem [shape: f32[1,128], index: 2, kind: input, shape index: {}]
  %s3 = inlined_call_operand.vmem [shape: bf16[128,128], index: 3, kind: output, shape index: {}]
  %s4 = sld [smem:[#allocation0]]
  $region22: #{lenet_enhanced2_forward.6} parent=0
    _
  %s6 = ssub.s32 1, %s4
  %s7 = scalar_select 0, %s6, %s4
  // Predicated region
  $region2: #{lenet_enhanced2_forward.6} parent=0 // pred_check
    _
  $region3: #{lenet_enhanced2_forward.6} parent=0 // pred_check_branch
    %9 = sbr.rel (0) target = $region5
  $region4: #{lenet_enhanced2_forward.6} parent=0 // pred_region
    _
  $region5: #{lenet_enhanced2_forward.6} parent=0 // pred_fallthru
    _
  // Predicated region
  $region6: #{lenet_enhanced2_forward.6} parent=0 // pred_check
    _
  $region7: #{lenet_enhanced2_forward.6} parent=0 // pred_check_branch
    %11 = sbr.rel (0) target = $region9
  $region8: #{lenet_enhanced2_forward.6} parent=0 // pred_region
    _
  $region9: #{lenet_enhanced2_forward.6} parent=0 // pred_fallthru
    _
  // Predicated region
  $region10: #{lenet_enhanced2_forward.6} parent=0 // pred_check
    _
  $region11: #{lenet_enhanced2_forward.6} parent=0 // pred_check_branch
    %13 = sbr.rel (0) target = $region13
  $region12: #{lenet_enhanced2_forward.6} parent=0 // pred_region
    _
  $region13: #{lenet_enhanced2_forward.6} parent=0 // pred_fallthru
    _
  %v14 = vld [vmem:[%s1] sm:$0xf]
  %v15 = vld [vmem:[%s1 + $0x4] sm:$0xf]
  %v16 = vld [vmem:[%s1 + $0x8] sm:$0xf]
  %v17 = vld [vmem:[%s1 + $0xc] sm:$0xf]
  %v18 = vld [vmem:[%s1 + $0x10] sm:$0xf]
  %v19 = vld [vmem:[%s1 + $0x14] sm:$0xf]
  %v20 = vld [vmem:[%s1 + $0x18] sm:$0xf]
  %v21 = vld [vmem:[%s1 + $0x1c] sm:$0xf]
  %v22 = vld [vmem:[%s1 + $0x20] sm:$0xf]
  %v23 = vld [vmem:[%s1 + $0x24] sm:$0xf]
  %v24 = vld [vmem:[%s1 + $0x28] sm:$0xf]
  %v25 = vld [vmem:[%s1 + $0x2c] sm:$0xf]
  %v26 = vld [vmem:[%s1 + $0x30] sm:$0xf]
  %v27 = vld [vmem:[%s1 + $0x34] sm:$0xf]
  %v28 = vld [vmem:[%s1 + $0x38] sm:$0xf]
  %v29 = vld [vmem:[%s1 + $0x3c] sm:$0xf]
  %v30 = vld [vmem:[%s2] sm:$0x1]
  %v31 = vld [vmem:[%s0] sm:$0xf]
  %v32 = vld [vmem:[%s0 + $0x4] sm:$0xf]
  %v33 = vld [vmem:[%s0 + $0x8] sm:$0xf]
  %v34 = vld [vmem:[%s0 + $0xc] sm:$0xf]
  %v35 = vld [vmem:[%s0 + $0x10] sm:$0xf]
  %v36 = vld [vmem:[%s0 + $0x14] sm:$0xf]
  %v37 = vld [vmem:[%s0 + $0x18] sm:$0xf]
  %v38 = vld [vmem:[%s0 + $0x1c] sm:$0xf]
  %v39 = vld [vmem:[%s0 + $0x20] sm:$0xf]
  %v40 = vld [vmem:[%s0 + $0x24] sm:$0xf]
  %v41 = vld [vmem:[%s0 + $0x28] sm:$0xf]
  %v42 = vld [vmem:[%s0 + $0x2c] sm:$0xf]
  %v43 = vld [vmem:[%s0 + $0x30] sm:$0xf]
  %v44 = vld [vmem:[%s0 + $0x34] sm:$0xf]
  %v45 = vld [vmem:[%s0 + $0x38] sm:$0xf]
  %v46 = vld [vmem:[%s0 + $0x3c] sm:$0xf]
  %v48 = vperm.slane %v30, 0
  %v66 = vunpack.c.l.b16 %v31
  %v67 = vunpack.c.l.b16 %v32
  %v68 = vunpack.c.l.b16 %v33
  %v69 = vunpack.c.l.b16 %v34
  %v70 = vunpack.c.l.b16 %v35
  %v71 = vunpack.c.l.b16 %v36
  %v72 = vunpack.c.l.b16 %v37
  %v73 = vunpack.c.l.b16 %v38
  %v74 = vunpack.c.l.b16 %v39
  %v75 = vunpack.c.l.b16 %v40
  %v76 = vunpack.c.l.b16 %v41
  %v77 = vunpack.c.l.b16 %v42
  %v78 = vunpack.c.l.b16 %v43
  %v79 = vunpack.c.l.b16 %v44
  %v80 = vunpack.c.l.b16 %v45
  %v81 = vunpack.c.l.b16 %v46
  %v82 = vpack.c.b16 %v67, %v66
  %v83 = vpack.c.b16 %v69, %v68
  %v84 = vpack.c.b16 %v71, %v70
  %v85 = vpack.c.b16 %v73, %v72
  %v86 = vpack.c.b16 %v75, %v74
  %v87 = vpack.c.b16 %v77, %v76
  %v88 = vpack.c.b16 %v79, %v78
  %v89 = vpack.c.b16 %v81, %v80
  %v114 = vunpack.c.l.b16 %v14
  %v115 = vunpack.c.l.b16 %v15
  %v116 = vunpack.c.l.b16 %v16
  %v117 = vunpack.c.l.b16 %v17
  %v118 = vunpack.c.l.b16 %v18
  %v119 = vunpack.c.l.b16 %v19
  %v120 = vunpack.c.l.b16 %v20
  %v121 = vunpack.c.l.b16 %v21
  %v122 = vunpack.c.l.b16 %v22
  %v123 = vunpack.c.l.b16 %v23
  %v124 = vunpack.c.l.b16 %v24
  %v125 = vunpack.c.l.b16 %v25
  %v126 = vunpack.c.l.b16 %v26
  %v127 = vunpack.c.l.b16 %v27
  %v128 = vunpack.c.l.b16 %v28
  %v129 = vunpack.c.l.b16 %v29
  %v130 = vpack.c.b16 %v115, %v114
  %v131 = vpack.c.b16 %v117, %v116
  %v132 = vpack.c.b16 %v119, %v118
  %v133 = vpack.c.b16 %v121, %v120
  %v134 = vpack.c.b16 %v123, %v122
  %v135 = vpack.c.b16 %v125, %v124
  %v136 = vpack.c.b16 %v127, %v126
  %v137 = vpack.c.b16 %v129, %v128
  %146 = vmatpush.bf16.msra.mxu0 %v137
  %147 = vmatpush.bf16.msra.mxu0 %v136
  %148 = vmatpush.bf16.msra.mxu0 %v135
  %149 = vmatpush.bf16.msra.mxu0 %v134
  %150 = vmatpush.bf16.msra.mxu0 %v133
  %151 = vmatpush.bf16.msra.mxu0 %v132
  %152 = vmatpush.bf16.msra.mxu0 %v131
  %153 = vmatpush.bf16.msra.mxu0 %v130
  %154 = vmatmul.bf16.gmra.mxu0 %v82
  %v155 = vpop.f32.mrf.mxu0
  %v156 = vadd.f32 %v48, %v155
  %v157 = vpop.f32.mrf.mxu0
  %v158 = vadd.f32 %v48, %v157
  %159 = vmatmul.bf16.gmra.mxu0 %v83
  %v160 = vpop.f32.mrf.mxu0
  %v161 = vadd.f32 %v48, %v160
  %v162 = vpop.f32.mrf.mxu0
  %v163 = vadd.f32 %v48, %v162
  %164 = vmatmul.bf16.gmra.mxu0 %v84
  %v165 = vpop.f32.mrf.mxu0
  %v166 = vadd.f32 %v48, %v165
  %v167 = vpop.f32.mrf.mxu0
  %v168 = vadd.f32 %v48, %v167
  %169 = vmatmul.bf16.gmra.mxu0 %v85
  %v170 = vpop.f32.mrf.mxu0
  %v171 = vadd.f32 %v48, %v170
  %v172 = vpop.f32.mrf.mxu0
  %v173 = vadd.f32 %v48, %v172
  %174 = vmatmul.bf16.gmra.mxu0 %v86
  %v175 = vpop.f32.mrf.mxu0
  %v176 = vadd.f32 %v48, %v175
  %v177 = vpop.f32.mrf.mxu0
  %v178 = vadd.f32 %v48, %v177
  %179 = vmatmul.bf16.gmra.mxu0 %v87
  %v180 = vpop.f32.mrf.mxu0
  %v181 = vadd.f32 %v48, %v180
  %v182 = vpop.f32.mrf.mxu0
  %v183 = vadd.f32 %v48, %v182
  %184 = vmatmul.bf16.gmra.mxu0 %v88
  %v185 = vpop.f32.mrf.mxu0
  %v186 = vadd.f32 %v48, %v185
  %v187 = vpop.f32.mrf.mxu0
  %v188 = vadd.f32 %v48, %v187
  %189 = vmatmul.bf16.gmra.mxu0 %v89
  %v190 = vpop.f32.mrf.mxu0
  %v191 = vadd.f32 %v48, %v190
  %v192 = vpop.f32.mrf.mxu0
  %v193 = vadd.f32 %v48, %v192
  %194 = vdwg.mxu0
  %v195 = vmax.f32 %v156, 0.0
  %v196 = vmax.f32 %v158, 0.0
  %v197 = vmax.f32 %v161, 0.0
  %v198 = vmax.f32 %v163, 0.0
  %v199 = vmax.f32 %v166, 0.0
  %v200 = vmax.f32 %v168, 0.0
  %v201 = vmax.f32 %v171, 0.0
  %v202 = vmax.f32 %v173, 0.0
  %v203 = vmax.f32 %v176, 0.0
  %v204 = vmax.f32 %v178, 0.0
  %v205 = vmax.f32 %v181, 0.0
  %v206 = vmax.f32 %v183, 0.0
  %v207 = vmax.f32 %v186, 0.0
  %v208 = vmax.f32 %v188, 0.0
  %v209 = vmax.f32 %v191, 0.0
  %v210 = vmax.f32 %v193, 0.0
  %s211 = scalar_lea.vmem %s0, 64
  %v212 = vld [vmem:[%s211] sm:$0xf]
  %v213 = vld [vmem:[%s211 + $0x4] sm:$0xf]
  %v214 = vld [vmem:[%s211 + $0x8] sm:$0xf]
  %v215 = vld [vmem:[%s211 + $0xc] sm:$0xf]
  %v216 = vld [vmem:[%s211 + $0x10] sm:$0xf]
  %v217 = vld [vmem:[%s211 + $0x14] sm:$0xf]
  %v218 = vld [vmem:[%s211 + $0x18] sm:$0xf]
  %v219 = vld [vmem:[%s211 + $0x1c] sm:$0xf]
  %v220 = vld [vmem:[%s211 + $0x20] sm:$0xf]
  %v221 = vld [vmem:[%s211 + $0x24] sm:$0xf]
  %v222 = vld [vmem:[%s211 + $0x28] sm:$0xf]
  %v223 = vld [vmem:[%s211 + $0x2c] sm:$0xf]
  %v224 = vld [vmem:[%s211 + $0x30] sm:$0xf]
  %v225 = vld [vmem:[%s211 + $0x34] sm:$0xf]
  %v226 = vld [vmem:[%s211 + $0x38] sm:$0xf]
  %v227 = vld [vmem:[%s211 + $0x3c] sm:$0xf]
  %v244 = vunpack.c.l.b16 %v212
  %v245 = vunpack.c.l.b16 %v213
  %v246 = vunpack.c.l.b16 %v214
  %v247 = vunpack.c.l.b16 %v215
  %v248 = vunpack.c.l.b16 %v216
  %v249 = vunpack.c.l.b16 %v217
  %v250 = vunpack.c.l.b16 %v218
  %v251 = vunpack.c.l.b16 %v219
  %v252 = vunpack.c.l.b16 %v220
  %v253 = vunpack.c.l.b16 %v221
  %v254 = vunpack.c.l.b16 %v222
  %v255 = vunpack.c.l.b16 %v223
  %v256 = vunpack.c.l.b16 %v224
  %v257 = vunpack.c.l.b16 %v225
  %v258 = vunpack.c.l.b16 %v226
  %v259 = vunpack.c.l.b16 %v227
  %v260 = vpack.c.b16 %v245, %v244
  %v261 = vpack.c.b16 %v247, %v246
  %v262 = vpack.c.b16 %v249, %v248
  %v263 = vpack.c.b16 %v251, %v250
  %v264 = vpack.c.b16 %v253, %v252
  %v265 = vpack.c.b16 %v255, %v254
  %v266 = vpack.c.b16 %v257, %v256
  %v267 = vpack.c.b16 %v259, %v258
  %276 = vmatpush.bf16.msra.mxu0 %v137
  %277 = vmatpush.bf16.msra.mxu0 %v136
  %278 = vmatpush.bf16.msra.mxu0 %v135
  %279 = vmatpush.bf16.msra.mxu0 %v134
  %280 = vmatpush.bf16.msra.mxu0 %v133
  %281 = vmatpush.bf16.msra.mxu0 %v132
  %282 = vmatpush.bf16.msra.mxu0 %v131
  %283 = vmatpush.bf16.msra.mxu0 %v130
  %284 = vmatmul.bf16.gmra.mxu0 %v260
  %v285 = vpop.f32.mrf.mxu0
  %v286 = vadd.f32 %v48, %v285
  %v287 = vpop.f32.mrf.mxu0
  %v288 = vadd.f32 %v48, %v287
  %289 = vmatmul.bf16.gmra.mxu0 %v261
  %v290 = vpop.f32.mrf.mxu0
  %v291 = vadd.f32 %v48, %v290
  %v292 = vpop.f32.mrf.mxu0
  %v293 = vadd.f32 %v48, %v292
  %294 = vmatmul.bf16.gmra.mxu0 %v262
  %v295 = vpop.f32.mrf.mxu0
  %v296 = vadd.f32 %v48, %v295
  %v297 = vpop.f32.mrf.mxu0
  %v298 = vadd.f32 %v48, %v297
  %299 = vmatmul.bf16.gmra.mxu0 %v263
  %v300 = vpop.f32.mrf.mxu0
  %v301 = vadd.f32 %v48, %v300
  %v302 = vpop.f32.mrf.mxu0
  %v303 = vadd.f32 %v48, %v302
  %304 = vmatmul.bf16.gmra.mxu0 %v264
  %v305 = vpop.f32.mrf.mxu0
  %v306 = vadd.f32 %v48, %v305
  %v307 = vpop.f32.mrf.mxu0
  %v308 = vadd.f32 %v48, %v307
  %309 = vmatmul.bf16.gmra.mxu0 %v265
  %v310 = vpop.f32.mrf.mxu0
  %v311 = vadd.f32 %v48, %v310
  %v312 = vpop.f32.mrf.mxu0
  %v313 = vadd.f32 %v48, %v312
  %314 = vmatmul.bf16.gmra.mxu0 %v266
  %v315 = vpop.f32.mrf.mxu0
  %v316 = vadd.f32 %v48, %v315
  %v317 = vpop.f32.mrf.mxu0
  %v318 = vadd.f32 %v48, %v317
  %319 = vmatmul.bf16.gmra.mxu0 %v267
  %v320 = vpop.f32.mrf.mxu0
  %v321 = vadd.f32 %v48, %v320
  %v322 = vpop.f32.mrf.mxu0
  %v323 = vadd.f32 %v48, %v322
  %324 = vdwg.mxu0
  %v325 = vmax.f32 %v286, 0.0
  %v326 = vmax.f32 %v288, 0.0
  %v327 = vmax.f32 %v291, 0.0
  %v328 = vmax.f32 %v293, 0.0
  %v329 = vmax.f32 %v296, 0.0
  %v330 = vmax.f32 %v298, 0.0
  %v331 = vmax.f32 %v301, 0.0
  %v332 = vmax.f32 %v303, 0.0
  %v333 = vmax.f32 %v306, 0.0
  %v334 = vmax.f32 %v308, 0.0
  %v335 = vmax.f32 %v311, 0.0
  %v336 = vmax.f32 %v313, 0.0
  %v337 = vmax.f32 %v316, 0.0
  %v338 = vmax.f32 %v318, 0.0
  %v339 = vmax.f32 %v321, 0.0
  %v340 = vmax.f32 %v323, 0.0
  %v341 = vmax.f32 %v195, %v325
  %v342 = vmax.f32 %v196, %v326
  %v343 = vmax.f32 %v197, %v327
  %v344 = vmax.f32 %v198, %v328
  %v345 = vmax.f32 %v199, %v329
  %v346 = vmax.f32 %v200, %v330
  %v347 = vmax.f32 %v201, %v331
  %v348 = vmax.f32 %v202, %v332
  %v349 = vmax.f32 %v203, %v333
  %v350 = vmax.f32 %v204, %v334
  %v351 = vmax.f32 %v205, %v335
  %v352 = vmax.f32 %v206, %v336
  %v353 = vmax.f32 %v207, %v337
  %v354 = vmax.f32 %v208, %v338
  %v355 = vmax.f32 %v209, %v339
  %v356 = vmax.f32 %v210, %v340
  %s357 = scalar_lea.vmem %s0, 128
  %v358 = vld [vmem:[%s357] sm:$0xf]
  %v359 = vld [vmem:[%s357 + $0x4] sm:$0xf]
  %v360 = vld [vmem:[%s357 + $0x8] sm:$0xf]
  %v361 = vld [vmem:[%s357 + $0xc] sm:$0xf]
  %v362 = vld [vmem:[%s357 + $0x10] sm:$0xf]
  %v363 = vld [vmem:[%s357 + $0x14] sm:$0xf]
  %v364 = vld [vmem:[%s357 + $0x18] sm:$0xf]
  %v365 = vld [vmem:[%s357 + $0x1c] sm:$0xf]
  %v366 = vld [vmem:[%s357 + $0x20] sm:$0xf]
  %v367 = vld [vmem:[%s357 + $0x24] sm:$0xf]
  %v368 = vld [vmem:[%s357 + $0x28] sm:$0xf]
  %v369 = vld [vmem:[%s357 + $0x2c] sm:$0xf]
  %v370 = vld [vmem:[%s357 + $0x30] sm:$0xf]
  %v371 = vld [vmem:[%s357 + $0x34] sm:$0xf]
  %v372 = vld [vmem:[%s357 + $0x38] sm:$0xf]
  %v373 = vld [vmem:[%s357 + $0x3c] sm:$0xf]
  %v390 = vunpack.c.l.b16 %v358
  %v391 = vunpack.c.l.b16 %v359
  %v392 = vunpack.c.l.b16 %v360
  %v393 = vunpack.c.l.b16 %v361
  %v394 = vunpack.c.l.b16 %v362
  %v395 = vunpack.c.l.b16 %v363
  %v396 = vunpack.c.l.b16 %v364
  %v397 = vunpack.c.l.b16 %v365
  %v398 = vunpack.c.l.b16 %v366
  %v399 = vunpack.c.l.b16 %v367
  %v400 = vunpack.c.l.b16 %v368
  %v401 = vunpack.c.l.b16 %v369
  %v402 = vunpack.c.l.b16 %v370
  %v403 = vunpack.c.l.b16 %v371
  %v404 = vunpack.c.l.b16 %v372
  %v405 = vunpack.c.l.b16 %v373
  %v406 = vpack.c.b16 %v391, %v390
  %v407 = vpack.c.b16 %v393, %v392
  %v408 = vpack.c.b16 %v395, %v394
  %v409 = vpack.c.b16 %v397, %v396
  %v410 = vpack.c.b16 %v399, %v398
  %v411 = vpack.c.b16 %v401, %v400
  %v412 = vpack.c.b16 %v403, %v402
  %v413 = vpack.c.b16 %v405, %v404
  %422 = vmatpush.bf16.msra.mxu0 %v137
  %423 = vmatpush.bf16.msra.mxu0 %v136
  %424 = vmatpush.bf16.msra.mxu0 %v135
  %425 = vmatpush.bf16.msra.mxu0 %v134
  %426 = vmatpush.bf16.msra.mxu0 %v133
  %427 = vmatpush.bf16.msra.mxu0 %v132
  %428 = vmatpush.bf16.msra.mxu0 %v131
  %429 = vmatpush.bf16.msra.mxu0 %v130
  %430 = vmatmul.bf16.gmra.mxu0 %v406
  %v431 = vpop.f32.mrf.mxu0
  %v432 = vadd.f32 %v48, %v431
  %v433 = vpop.f32.mrf.mxu0
  %v434 = vadd.f32 %v48, %v433
  %435 = vmatmul.bf16.gmra.mxu0 %v407
  %v436 = vpop.f32.mrf.mxu0
  %v437 = vadd.f32 %v48, %v436
  %v438 = vpop.f32.mrf.mxu0
  %v439 = vadd.f32 %v48, %v438
  %440 = vmatmul.bf16.gmra.mxu0 %v408
  %v441 = vpop.f32.mrf.mxu0
  %v442 = vadd.f32 %v48, %v441
  %v443 = vpop.f32.mrf.mxu0
  %v444 = vadd.f32 %v48, %v443
  %445 = vmatmul.bf16.gmra.mxu0 %v409
  %v446 = vpop.f32.mrf.mxu0
  %v447 = vadd.f32 %v48, %v446
  %v448 = vpop.f32.mrf.mxu0
  %v449 = vadd.f32 %v48, %v448
  %450 = vmatmul.bf16.gmra.mxu0 %v410
  %v451 = vpop.f32.mrf.mxu0
  %v452 = vadd.f32 %v48, %v451
  %v453 = vpop.f32.mrf.mxu0
  %v454 = vadd.f32 %v48, %v453
  %455 = vmatmul.bf16.gmra.mxu0 %v411
  %v456 = vpop.f32.mrf.mxu0
  %v457 = vadd.f32 %v48, %v456
  %v458 = vpop.f32.mrf.mxu0
  %v459 = vadd.f32 %v48, %v458
  %460 = vmatmul.bf16.gmra.mxu0 %v412
  %v461 = vpop.f32.mrf.mxu0
  %v462 = vadd.f32 %v48, %v461
  %v463 = vpop.f32.mrf.mxu0
  %v464 = vadd.f32 %v48, %v463
  %465 = vmatmul.bf16.gmra.mxu0 %v413
  %v466 = vpop.f32.mrf.mxu0
  %v467 = vadd.f32 %v48, %v466
  %v468 = vpop.f32.mrf.mxu0
  %v469 = vadd.f32 %v48, %v468
  %470 = vdwg.mxu0
  %v471 = vmax.f32 %v432, 0.0
  %v472 = vmax.f32 %v434, 0.0
  %v473 = vmax.f32 %v437, 0.0
  %v474 = vmax.f32 %v439, 0.0
  %v475 = vmax.f32 %v442, 0.0
  %v476 = vmax.f32 %v444, 0.0
  %v477 = vmax.f32 %v447, 0.0
  %v478 = vmax.f32 %v449, 0.0
  %v479 = vmax.f32 %v452, 0.0
  %v480 = vmax.f32 %v454, 0.0
  %v481 = vmax.f32 %v457, 0.0
  %v482 = vmax.f32 %v459, 0.0
  %v483 = vmax.f32 %v462, 0.0
  %v484 = vmax.f32 %v464, 0.0
  %v485 = vmax.f32 %v467, 0.0
  %v486 = vmax.f32 %v469, 0.0
  %s487 = scalar_lea.vmem %s0, 192
  %v488 = vld [vmem:[%s487] sm:$0xf]
  %v489 = vld [vmem:[%s487 + $0x4] sm:$0xf]
  %v490 = vld [vmem:[%s487 + $0x8] sm:$0xf]
  %v491 = vld [vmem:[%s487 + $0xc] sm:$0xf]
  %v492 = vld [vmem:[%s487 + $0x10] sm:$0xf]
  %v493 = vld [vmem:[%s487 + $0x14] sm:$0xf]
  %v494 = vld [vmem:[%s487 + $0x18] sm:$0xf]
  %v495 = vld [vmem:[%s487 + $0x1c] sm:$0xf]
  %v496 = vld [vmem:[%s487 + $0x20] sm:$0xf]
  %v497 = vld [vmem:[%s487 + $0x24] sm:$0xf]
  %v498 = vld [vmem:[%s487 + $0x28] sm:$0xf]
  %v499 = vld [vmem:[%s487 + $0x2c] sm:$0xf]
  %v500 = vld [vmem:[%s487 + $0x30] sm:$0xf]
  %v501 = vld [vmem:[%s487 + $0x34] sm:$0xf]
  %v502 = vld [vmem:[%s487 + $0x38] sm:$0xf]
  %v503 = vld [vmem:[%s487 + $0x3c] sm:$0xf]
  %v520 = vunpack.c.l.b16 %v488
  %v521 = vunpack.c.l.b16 %v489
  %v522 = vunpack.c.l.b16 %v490
  %v523 = vunpack.c.l.b16 %v491
  %v524 = vunpack.c.l.b16 %v492
  %v525 = vunpack.c.l.b16 %v493
  %v526 = vunpack.c.l.b16 %v494
  %v527 = vunpack.c.l.b16 %v495
  %v528 = vunpack.c.l.b16 %v496
  %v529 = vunpack.c.l.b16 %v497
  %v530 = vunpack.c.l.b16 %v498
  %v531 = vunpack.c.l.b16 %v499
  %v532 = vunpack.c.l.b16 %v500
  %v533 = vunpack.c.l.b16 %v501
  %v534 = vunpack.c.l.b16 %v502
  %v535 = vunpack.c.l.b16 %v503
  %v536 = vpack.c.b16 %v521, %v520
  %v537 = vpack.c.b16 %v523, %v522
  %v538 = vpack.c.b16 %v525, %v524
  %v539 = vpack.c.b16 %v527, %v526
  %v540 = vpack.c.b16 %v529, %v528
  %v541 = vpack.c.b16 %v531, %v530
  %v542 = vpack.c.b16 %v533, %v532
  %v543 = vpack.c.b16 %v535, %v534
  %552 = vmatpush.bf16.msra.mxu0 %v137
  %553 = vmatpush.bf16.msra.mxu0 %v136
  %554 = vmatpush.bf16.msra.mxu0 %v135
  %555 = vmatpush.bf16.msra.mxu0 %v134
  %556 = vmatpush.bf16.msra.mxu0 %v133
  %557 = vmatpush.bf16.msra.mxu0 %v132
  %558 = vmatpush.bf16.msra.mxu0 %v131
  %559 = vmatpush.bf16.msra.mxu0 %v130
  %560 = vmatmul.bf16.gmra.mxu0 %v536
  %v561 = vpop.f32.mrf.mxu0
  %v562 = vadd.f32 %v48, %v561
  %v563 = vpop.f32.mrf.mxu0
  %v564 = vadd.f32 %v48, %v563
  %565 = vmatmul.bf16.gmra.mxu0 %v537
  %v566 = vpop.f32.mrf.mxu0
  %v567 = vadd.f32 %v48, %v566
  %v568 = vpop.f32.mrf.mxu0
  %v569 = vadd.f32 %v48, %v568
  %570 = vmatmul.bf16.gmra.mxu0 %v538
  %v571 = vpop.f32.mrf.mxu0
  %v572 = vadd.f32 %v48, %v571
  %v573 = vpop.f32.mrf.mxu0
  %v574 = vadd.f32 %v48, %v573
  %575 = vmatmul.bf16.gmra.mxu0 %v539
  %v576 = vpop.f32.mrf.mxu0
  %v577 = vadd.f32 %v48, %v576
  %v578 = vpop.f32.mrf.mxu0
  %v579 = vadd.f32 %v48, %v578
  %580 = vmatmul.bf16.gmra.mxu0 %v540
  %v581 = vpop.f32.mrf.mxu0
  %v582 = vadd.f32 %v48, %v581
  %v583 = vpop.f32.mrf.mxu0
  %v584 = vadd.f32 %v48, %v583
  %585 = vmatmul.bf16.gmra.mxu0 %v541
  %v586 = vpop.f32.mrf.mxu0
  %v587 = vadd.f32 %v48, %v586
  %v588 = vpop.f32.mrf.mxu0
  %v589 = vadd.f32 %v48, %v588
  %590 = vmatmul.bf16.gmra.mxu0 %v542
  %v591 = vpop.f32.mrf.mxu0
  %v592 = vadd.f32 %v48, %v591
  %v593 = vpop.f32.mrf.mxu0
  %v594 = vadd.f32 %v48, %v593
  %595 = vmatmul.bf16.gmra.mxu0 %v543
  %v596 = vpop.f32.mrf.mxu0
  %v597 = vadd.f32 %v48, %v596
  %v598 = vpop.f32.mrf.mxu0
  %v599 = vadd.f32 %v48, %v598
  %600 = vdwg.mxu0
  %v601 = vmax.f32 %v562, 0.0
  %v602 = vmax.f32 %v564, 0.0
  %v603 = vmax.f32 %v567, 0.0
  %v604 = vmax.f32 %v569, 0.0
  %v605 = vmax.f32 %v572, 0.0
  %v606 = vmax.f32 %v574, 0.0
  %v607 = vmax.f32 %v577, 0.0
  %v608 = vmax.f32 %v579, 0.0
  %v609 = vmax.f32 %v582, 0.0
  %v610 = vmax.f32 %v584, 0.0
  %v611 = vmax.f32 %v587, 0.0
  %v612 = vmax.f32 %v589, 0.0
  %v613 = vmax.f32 %v592, 0.0
  %v614 = vmax.f32 %v594, 0.0
  %v615 = vmax.f32 %v597, 0.0
  %v616 = vmax.f32 %v599, 0.0
  %v617 = vmax.f32 %v471, %v601
  %v618 = vmax.f32 %v472, %v602
  %v619 = vmax.f32 %v473, %v603
  %v620 = vmax.f32 %v474, %v604
  %v621 = vmax.f32 %v475, %v605
  %v622 = vmax.f32 %v476, %v606
  %v623 = vmax.f32 %v477, %v607
  %v624 = vmax.f32 %v478, %v608
  %v625 = vmax.f32 %v479, %v609
  %v626 = vmax.f32 %v480, %v610
  %v627 = vmax.f32 %v481, %v611
  %v628 = vmax.f32 %v482, %v612
  %v629 = vmax.f32 %v483, %v613
  %v630 = vmax.f32 %v484, %v614
  %v631 = vmax.f32 %v485, %v615
  %v632 = vmax.f32 %v486, %v616
  %v633 = vmax.f32 %v341, %v617
  %v634 = vmax.f32 %v342, %v618
  %v635 = vmax.f32 %v343, %v619
  %v636 = vmax.f32 %v344, %v620
  %v637 = vmax.f32 %v345, %v621
  %v638 = vmax.f32 %v346, %v622
  %v639 = vmax.f32 %v347, %v623
  %v640 = vmax.f32 %v348, %v624
  %v641 = vmax.f32 %v349, %v625
  %v642 = vmax.f32 %v350, %v626
  %v643 = vmax.f32 %v351, %v627
  %v644 = vmax.f32 %v352, %v628
  %v645 = vmax.f32 %v353, %v629
  %v646 = vmax.f32 %v354, %v630
  %v647 = vmax.f32 %v355, %v631
  %v648 = vmax.f32 %v356, %v632
  %v649 = vpack.c.bf16 %v633, %v633
  %v650 = vpack.c.bf16 %v634, %v634
  %v651 = vpack.c.bf16 %v635, %v635
  %v652 = vpack.c.bf16 %v636, %v636
  %v653 = vpack.c.bf16 %v637, %v637
  %v654 = vpack.c.bf16 %v638, %v638
  %v655 = vpack.c.bf16 %v639, %v639
  %v656 = vpack.c.bf16 %v640, %v640
  %v657 = vpack.c.bf16 %v641, %v641
  %v658 = vpack.c.bf16 %v642, %v642
  %v659 = vpack.c.bf16 %v643, %v643
  %v660 = vpack.c.bf16 %v644, %v644
  %v661 = vpack.c.bf16 %v645, %v645
  %v662 = vpack.c.bf16 %v646, %v646
  %v663 = vpack.c.bf16 %v647, %v647
  %v664 = vpack.c.bf16 %v648, %v648
  %665 = vst [vmem:[%s3] sm:$0xf] %v649
  %666 = vst [vmem:[%s3 + $0x4] sm:$0xf] %v650
  %667 = vst [vmem:[%s3 + $0x8] sm:$0xf] %v651
  %668 = vst [vmem:[%s3 + $0xc] sm:$0xf] %v652
  %669 = vst [vmem:[%s3 + $0x10] sm:$0xf] %v653
  %670 = vst [vmem:[%s3 + $0x14] sm:$0xf] %v654
  %671 = vst [vmem:[%s3 + $0x18] sm:$0xf] %v655
  %672 = vst [vmem:[%s3 + $0x1c] sm:$0xf] %v656
  %673 = vst [vmem:[%s3 + $0x20] sm:$0xf] %v657
  %674 = vst [vmem:[%s3 + $0x24] sm:$0xf] %v658
  %675 = vst [vmem:[%s3 + $0x28] sm:$0xf] %v659
  %676 = vst [vmem:[%s3 + $0x2c] sm:$0xf] %v660
  %677 = vst [vmem:[%s3 + $0x30] sm:$0xf] %v661
  %678 = vst [vmem:[%s3 + $0x34] sm:$0xf] %v662
  %679 = vst [vmem:[%s3 + $0x38] sm:$0xf] %v663
  %680 = vst [vmem:[%s3 + $0x3c] sm:$0xf] %v664
  // Predicated region
  $region14: #{lenet_enhanced2_forward.6} parent=0 // pred_check
    _
  $region15: #{lenet_enhanced2_forward.6} parent=0 // pred_check_branch
    %682 = sbr.rel (0) target = $region17
  $region16: #{lenet_enhanced2_forward.6} parent=0 // pred_region
    _
  $region17: #{lenet_enhanced2_forward.6} parent=0 // pred_fallthru
    _
  // Predicated region
  $region18: #{lenet_enhanced2_forward.6} parent=0 // pred_check
    _
  $region19: #{lenet_enhanced2_forward.6} parent=0 // pred_check_branch
    %684 = sbr.rel (0) target = $region21
  $region20: #{lenet_enhanced2_forward.6} parent=0 // pred_region
    _
  $region21: #{lenet_enhanced2_forward.6} parent=0 // pred_fallthru
    _

// kernel: lenet_enhanced2_forward.7
$region0: #{lenet_enhanced2_forward.7}
  #allocation0 [shape = 'u32[]', space=smem, size = 0x4, offset = 0x4, fixed_abs, tag = 'smem constant byte address 0x4 - core index']
  #allocation1 [shape = 'u32[72,128]{1,0:T(1,128)}', space=vmem, size = 0x9000, scoped, tag = 'internal scratch']
  %s0 = inlined_call_operand.vmem [shape: bf16[4,32,3200], index: 0, kind: input, shape index: {}]
  %s1 = inlined_call_operand.vmem [shape: bf16[3200,128], index: 1, kind: input, shape index: {}]
  %s2 = inlined_call_operand.vmem [shape: f32[1,128], index: 2, kind: input, shape index: {}]
  %s3 = inlined_call_operand.vmem [shape: bf16[32,128], index: 3, kind: output, shape index: {}]
  %s4 = sld [smem:[#allocation0]]
  $region22: #{lenet_enhanced2_forward.7} parent=0
    _
  %s6 = ssub.s32 1, %s4
  %s7 = scalar_select 0, %s6, %s4
  // Predicated region
  $region2: #{lenet_enhanced2_forward.7} parent=0 // pred_check
    _
  $region3: #{lenet_enhanced2_forward.7} parent=0 // pred_check_branch
    %9 = sbr.rel (0) target = $region5
  $region4: #{lenet_enhanced2_forward.7} parent=0 // pred_region
    _
  $region5: #{lenet_enhanced2_forward.7} parent=0 // pred_fallthru
    _
  // Predicated region
  $region6: #{lenet_enhanced2_forward.7} parent=0 // pred_check
    _
  $region7: #{lenet_enhanced2_forward.7} parent=0 // pred_check_branch
    %11 = sbr.rel (0) target = $region9
  $region8: #{lenet_enhanced2_forward.7} parent=0 // pred_region
    _
  $region9: #{lenet_enhanced2_forward.7} parent=0 // pred_fallthru
    _
  // Predicated region
  $region10: #{lenet_enhanced2_forward.7} parent=0 // pred_check
    _
  $region11: #{lenet_enhanced2_forward.7} parent=0 // pred_check_branch
    %13 = sbr.rel (0) target = $region13
  $region12: #{lenet_enhanced2_forward.7} parent=0 // pred_region
    _
  $region13: #{lenet_enhanced2_forward.7} parent=0 // pred_fallthru
    _
  %v14 = vld [vmem:[%s1] sm:$0xf]
  %v15 = vld [vmem:[%s1 + $0x4] sm:$0xf]
  %v16 = vld [vmem:[%s1 + $0x8] sm:$0xf]
  %v17 = vld [vmem:[%s1 + $0xc] sm:$0xf]
  %v18 = vld [vmem:[%s1 + $0x10] sm:$0xf]
  %v19 = vld [vmem:[%s1 + $0x14] sm:$0xf]
  %v20 = vld [vmem:[%s1 + $0x18] sm:$0xf]
  %v21 = vld [vmem:[%s1 + $0x1c] sm:$0xf]
  %v22 = vld [vmem:[%s1 + $0x20] sm:$0xf]
  %v23 = vld [vmem:[%s1 + $0x24] sm:$0xf]
  %v24 = vld [vmem:[%s1 + $0x28] sm:$0xf]
  %v25 = vld [vmem:[%s1 + $0x2c] sm:$0xf]
  %v26 = vld [vmem:[%s1 + $0x30] sm:$0xf]
  %v27 = vld [vmem:[%s1 + $0x34] sm:$0xf]
  %v28 = vld [vmem:[%s1 + $0x38] sm:$0xf]
  %v29 = vld [vmem:[%s1 + $0x3c] sm:$0xf]
  %v30 = vld [vmem:[%s1 + $0x40] sm:$0xf]
  %v31 = vld [vmem:[%s1 + $0x44] sm:$0xf]
  %v32 = vld [vmem:[%s1 + $0x48] sm:$0xf]
  %v33 = vld [vmem:[%s1 + $0x4c] sm:$0xf]
  %v34 = vld [vmem:[%s1 + $0x50] sm:$0xf]
  %v35 = vld [vmem:[%s1 + $0x54] sm:$0xf]
  %v36 = vld [vmem:[%s1 + $0x58] sm:$0xf]
  %v37 = vld [vmem:[%s1 + $0x5c] sm:$0xf]
  %v38 = vld [vmem:[%s1 + $0x60] sm:$0xf]
  %v39 = vld [vmem:[%s1 + $0x64] sm:$0xf]
  %v40 = vld [vmem:[%s1 + $0x68] sm:$0xf]
  %v41 = vld [vmem:[%s1 + $0x6c] sm:$0xf]
  %v42 = vld [vmem:[%s1 + $0x70] sm:$0xf]
  %v43 = vld [vmem:[%s1 + $0x74] sm:$0xf]
  %v44 = vld [vmem:[%s1 + $0x78] sm:$0xf]
  %v45 = vld [vmem:[%s1 + $0x7c] sm:$0xf]
  %v46 = vld [vmem:[%s1 + $0x80] sm:$0xf]
  %v47 = vld [vmem:[%s1 + $0x84] sm:$0xf]
  %v48 = vld [vmem:[%s1 + $0x88] sm:$0xf]
  %v49 = vld [vmem:[%s1 + $0x8c] sm:$0xf]
  %v50 = vld [vmem:[%s1 + $0x90] sm:$0xf]
  %v51 = vld [vmem:[%s1 + $0x94] sm:$0xf]
  %v52 = vld [vmem:[%s1 + $0x98] sm:$0xf]
  %v53 = vld [vmem:[%s1 + $0x9c] sm:$0xf]
  %v54 = vld [vmem:[%s1 + $0xa0] sm:$0xf]
  %v55 = vld [vmem:[%s1 + $0xa4] sm:$0xf]
  %v56 = vld [vmem:[%s1 + $0xa8] sm:$0xf]
  %v57 = vld [vmem:[%s1 + $0xac] sm:$0xf]
  %v58 = vld [vmem:[%s1 + $0xb0] sm:$0xf]
  %v59 = vld [vmem:[%s1 + $0xb4] sm:$0xf]
  %v60 = vld [vmem:[%s1 + $0xb8] sm:$0xf]
  %v61 = vld [vmem:[%s1 + $0xbc] sm:$0xf]
  %v62 = vld [vmem:[%s1 + $0xc0] sm:$0xf]
  %v63 = vld [vmem:[%s1 + $0xc4] sm:$0xf]
  %v64 = vld [vmem:[%s1 + $0xc8] sm:$0xf]
  %v65 = vld [vmem:[%s1 + $0xcc] sm:$0xf]
  %v66 = vld [vmem:[%s1 + $0xd0] sm:$0xf]
  %v67 = vld [vmem:[%s1 + $0xd4] sm:$0xf]
  %v68 = vld [vmem:[%s1 + $0xd8] sm:$0xf]
  %v69 = vld [vmem:[%s1 + $0xdc] sm:$0xf]
  %v70 = vld [vmem:[%s1 + $0xe0] sm:$0xf]
  %v71 = vld [vmem:[%s1 + $0xe4] sm:$0xf]
  %v72 = vld [vmem:[%s1 + $0xe8] sm:$0xf]
  %v73 = vld [vmem:[%s1 + $0xec] sm:$0xf]
  %v74 = vld [vmem:[%s1 + $0xf0] sm:$0xf]
  %v75 = vld [vmem:[%s1 + $0xf4] sm:$0xf]
  %v76 = vld [vmem:[%s1 + $0xf8] sm:$0xf]
  %v77 = vld [vmem:[%s1 + $0xfc] sm:$0xf]
  %v78 = vld [vmem:[%s1 + $0x100] sm:$0xf]
  %v79 = vld [vmem:[%s1 + $0x104] sm:$0xf]
  %v80 = vld [vmem:[%s1 + $0x108] sm:$0xf]
  %v81 = vld [vmem:[%s1 + $0x10c] sm:$0xf]
  %v82 = vld [vmem:[%s1 + $0x110] sm:$0xf]
  %v83 = vld [vmem:[%s1 + $0x114] sm:$0xf]
  %v84 = vld [vmem:[%s1 + $0x118] sm:$0xf]
  %v85 = vld [vmem:[%s1 + $0x11c] sm:$0xf]
  %v86 = vld [vmem:[%s1 + $0x120] sm:$0xf]
  %v87 = vld [vmem:[%s1 + $0x124] sm:$0xf]
  %v88 = vld [vmem:[%s1 + $0x128] sm:$0xf]
  %v89 = vld [vmem:[%s1 + $0x12c] sm:$0xf]
  %v90 = vld [vmem:[%s1 + $0x130] sm:$0xf]
  %v91 = vld [vmem:[%s1 + $0x134] sm:$0xf]
  %v92 = vld [vmem:[%s1 + $0x138] sm:$0xf]
  %v93 = vld [vmem:[%s1 + $0x13c] sm:$0xf]
  %v94 = vld [vmem:[%s1 + $0x140] sm:$0xf]
  %v95 = vld [vmem:[%s1 + $0x144] sm:$0xf]
  %v96 = vld [vmem:[%s1 + $0x148] sm:$0xf]
  %v97 = vld [vmem:[%s1 + $0x14c] sm:$0xf]
  %v98 = vld [vmem:[%s1 + $0x150] sm:$0xf]
  %v99 = vld [vmem:[%s1 + $0x154] sm:$0xf]
  %v100 = vld [vmem:[%s1 + $0x158] sm:$0xf]
  %v101 = vld [vmem:[%s1 + $0x15c] sm:$0xf]
  %v102 = vld [vmem:[%s1 + $0x160] sm:$0xf]
  %v103 = vld [vmem:[%s1 + $0x164] sm:$0xf]
  %v104 = vld [vmem:[%s1 + $0x168] sm:$0xf]
  %v105 = vld [vmem:[%s1 + $0x16c] sm:$0xf]
  %v106 = vld [vmem:[%s1 + $0x170] sm:$0xf]
  %v107 = vld [vmem:[%s1 + $0x174] sm:$0xf]
  %v108 = vld [vmem:[%s1 + $0x178] sm:$0xf]
  %v109 = vld [vmem:[%s1 + $0x17c] sm:$0xf]
  %v110 = vld [vmem:[%s1 + $0x180] sm:$0xf]
  %v111 = vld [vmem:[%s1 + $0x184] sm:$0xf]
  %v112 = vld [vmem:[%s1 + $0x188] sm:$0xf]
  %v113 = vld [vmem:[%s1 + $0x18c] sm:$0xf]
  %v114 = vld [vmem:[%s1 + $0x190] sm:$0xf]
  %v115 = vld [vmem:[%s1 + $0x194] sm:$0xf]
  %v116 = vld [vmem:[%s1 + $0x198] sm:$0xf]
  %v117 = vld [vmem:[%s1 + $0x19c] sm:$0xf]
  %v118 = vld [vmem:[%s1 + $0x1a0] sm:$0xf]
  %v119 = vld [vmem:[%s1 + $0x1a4] sm:$0xf]
  %v120 = vld [vmem:[%s1 + $0x1a8] sm:$0xf]
  %v121 = vld [vmem:[%s1 + $0x1ac] sm:$0xf]
  %v122 = vld [vmem:[%s1 + $0x1b0] sm:$0xf]
  %v123 = vld [vmem:[%s1 + $0x1b4] sm:$0xf]
  %v124 = vld [vmem:[%s1 + $0x1b8] sm:$0xf]
  %v125 = vld [vmem:[%s1 + $0x1bc] sm:$0xf]
  %v126 = vld [vmem:[%s1 + $0x1c0] sm:$0xf]
  %v127 = vld [vmem:[%s1 + $0x1c4] sm:$0xf]
  %v128 = vld [vmem:[%s1 + $0x1c8] sm:$0xf]
  %v129 = vld [vmem:[%s1 + $0x1cc] sm:$0xf]
  %v130 = vld [vmem:[%s1 + $0x1d0] sm:$0xf]
  %v131 = vld [vmem:[%s1 + $0x1d4] sm:$0xf]
  %v132 = vld [vmem:[%s1 + $0x1d8] sm:$0xf]
  %v133 = vld [vmem:[%s1 + $0x1dc] sm:$0xf]
  %v134 = vld [vmem:[%s1 + $0x1e0] sm:$0xf]
  %v135 = vld [vmem:[%s1 + $0x1e4] sm:$0xf]
  %v136 = vld [vmem:[%s1 + $0x1e8] sm:$0xf]
  %v137 = vld [vmem:[%s1 + $0x1ec] sm:$0xf]
  %v138 = vld [vmem:[%s1 + $0x1f0] sm:$0xf]
  %v139 = vld [vmem:[%s1 + $0x1f4] sm:$0xf]
  %v140 = vld [vmem:[%s1 + $0x1f8] sm:$0xf]
  %v141 = vld [vmem:[%s1 + $0x1fc] sm:$0xf]
  %v142 = vld [vmem:[%s1 + $0x200] sm:$0xf]
  %v143 = vld [vmem:[%s1 + $0x204] sm:$0xf]
  %v144 = vld [vmem:[%s1 + $0x208] sm:$0xf]
  %v145 = vld [vmem:[%s1 + $0x20c] sm:$0xf]
  %v146 = vld [vmem:[%s1 + $0x210] sm:$0xf]
  %v147 = vld [vmem:[%s1 + $0x214] sm:$0xf]
  %v148 = vld [vmem:[%s1 + $0x218] sm:$0xf]
  %v149 = vld [vmem:[%s1 + $0x21c] sm:$0xf]
  %v150 = vld [vmem:[%s1 + $0x220] sm:$0xf]
  %v151 = vld [vmem:[%s1 + $0x224] sm:$0xf]
  %v152 = vld [vmem:[%s1 + $0x228] sm:$0xf]
  %v153 = vld [vmem:[%s1 + $0x22c] sm:$0xf]
  %v154 = vld [vmem:[%s1 + $0x230] sm:$0xf]
  %v155 = vld [vmem:[%s1 + $0x234] sm:$0xf]
  %v156 = vld [vmem:[%s1 + $0x238] sm:$0xf]
  %v157 = vld [vmem:[%s1 + $0x23c] sm:$0xf]
  %v158 = vld [vmem:[%s1 + $0x240] sm:$0xf]
  %v159 = vld [vmem:[%s1 + $0x244] sm:$0xf]
  %v160 = vld [vmem:[%s1 + $0x248] sm:$0xf]
  %v161 = vld [vmem:[%s1 + $0x24c] sm:$0xf]
  %v162 = vld [vmem:[%s1 + $0x250] sm:$0xf]
  %v163 = vld [vmem:[%s1 + $0x254] sm:$0xf]
  %v164 = vld [vmem:[%s1 + $0x258] sm:$0xf]
  %v165 = vld [vmem:[%s1 + $0x25c] sm:$0xf]
  %v166 = vld [vmem:[%s1 + $0x260] sm:$0xf]
  %v167 = vld [vmem:[%s1 + $0x264] sm:$0xf]
  %v168 = vld [vmem:[%s1 + $0x268] sm:$0xf]
  %v169 = vld [vmem:[%s1 + $0x26c] sm:$0xf]
  %v170 = vld [vmem:[%s1 + $0x270] sm:$0xf]
  %v171 = vld [vmem:[%s1 + $0x274] sm:$0xf]
  %v172 = vld [vmem:[%s1 + $0x278] sm:$0xf]
  %v173 = vld [vmem:[%s1 + $0x27c] sm:$0xf]
  %v174 = vld [vmem:[%s1 + $0x280] sm:$0xf]
  %v175 = vld [vmem:[%s1 + $0x284] sm:$0xf]
  %v176 = vld [vmem:[%s1 + $0x288] sm:$0xf]
  %v177 = vld [vmem:[%s1 + $0x28c] sm:$0xf]
  %v178 = vld [vmem:[%s1 + $0x290] sm:$0xf]
  %v179 = vld [vmem:[%s1 + $0x294] sm:$0xf]
  %v180 = vld [vmem:[%s1 + $0x298] sm:$0xf]
  %v181 = vld [vmem:[%s1 + $0x29c] sm:$0xf]
  %v182 = vld [vmem:[%s1 + $0x2a0] sm:$0xf]
  %v183 = vld [vmem:[%s1 + $0x2a4] sm:$0xf]
  %v184 = vld [vmem:[%s1 + $0x2a8] sm:$0xf]
  %v185 = vld [vmem:[%s1 + $0x2ac] sm:$0xf]
  %v186 = vld [vmem:[%s1 + $0x2b0] sm:$0xf]
  %v187 = vld [vmem:[%s1 + $0x2b4] sm:$0xf]
  %v188 = vld [vmem:[%s1 + $0x2b8] sm:$0xf]
  %v189 = vld [vmem:[%s1 + $0x2bc] sm:$0xf]
  %v190 = vld [vmem:[%s1 + $0x2c0] sm:$0xf]
  %v191 = vld [vmem:[%s1 + $0x2c4] sm:$0xf]
  %v192 = vld [vmem:[%s1 + $0x2c8] sm:$0xf]
  %v193 = vld [vmem:[%s1 + $0x2cc] sm:$0xf]
  %v194 = vld [vmem:[%s1 + $0x2d0] sm:$0xf]
  %v195 = vld [vmem:[%s1 + $0x2d4] sm:$0xf]
  %v196 = vld [vmem:[%s1 + $0x2d8] sm:$0xf]
  %v197 = vld [vmem:[%s1 + $0x2dc] sm:$0xf]
  %v198 = vld [vmem:[%s1 + $0x2e0] sm:$0xf]
  %v199 = vld [vmem:[%s1 + $0x2e4] sm:$0xf]
  %v200 = vld [vmem:[%s1 + $0x2e8] sm:$0xf]
  %v201 = vld [vmem:[%s1 + $0x2ec] sm:$0xf]
  %v202 = vld [vmem:[%s1 + $0x2f0] sm:$0xf]
  %v203 = vld [vmem:[%s1 + $0x2f4] sm:$0xf]
  %v204 = vld [vmem:[%s1 + $0x2f8] sm:$0xf]
  %v205 = vld [vmem:[%s1 + $0x2fc] sm:$0xf]
  %v206 = vld [vmem:[%s1 + $0x300] sm:$0xf]
  %v207 = vld [vmem:[%s1 + $0x304] sm:$0xf]
  %v208 = vld [vmem:[%s1 + $0x308] sm:$0xf]
  %v209 = vld [vmem:[%s1 + $0x30c] sm:$0xf]
  %v210 = vld [vmem:[%s1 + $0x310] sm:$0xf]
  %v211 = vld [vmem:[%s1 + $0x314] sm:$0xf]
  %v212 = vld [vmem:[%s1 + $0x318] sm:$0xf]
  %v213 = vld [vmem:[%s1 + $0x31c] sm:$0xf]
  %v214 = vld [vmem:[%s1 + $0x320] sm:$0xf]
  %v215 = vld [vmem:[%s1 + $0x324] sm:$0xf]
  %v216 = vld [vmem:[%s1 + $0x328] sm:$0xf]
  %v217 = vld [vmem:[%s1 + $0x32c] sm:$0xf]
  %v218 = vld [vmem:[%s1 + $0x330] sm:$0xf]
  %v219 = vld [vmem:[%s1 + $0x334] sm:$0xf]
  %v220 = vld [vmem:[%s1 + $0x338] sm:$0xf]
  %v221 = vld [vmem:[%s1 + $0x33c] sm:$0xf]
  %v222 = vld [vmem:[%s1 + $0x340] sm:$0xf]
  %v223 = vld [vmem:[%s1 + $0x344] sm:$0xf]
  %v224 = vld [vmem:[%s1 + $0x348] sm:$0xf]
  %v225 = vld [vmem:[%s1 + $0x34c] sm:$0xf]
  %v226 = vld [vmem:[%s1 + $0x350] sm:$0xf]
  %v227 = vld [vmem:[%s1 + $0x354] sm:$0xf]
  %v228 = vld [vmem:[%s1 + $0x358] sm:$0xf]
  %v229 = vld [vmem:[%s1 + $0x35c] sm:$0xf]
  %v230 = vld [vmem:[%s1 + $0x360] sm:$0xf]
  %v231 = vld [vmem:[%s1 + $0x364] sm:$0xf]
  %v232 = vld [vmem:[%s1 + $0x368] sm:$0xf]
  %v233 = vld [vmem:[%s1 + $0x36c] sm:$0xf]
  %v234 = vld [vmem:[%s1 + $0x370] sm:$0xf]
  %v235 = vld [vmem:[%s1 + $0x374] sm:$0xf]
  %v236 = vld [vmem:[%s1 + $0x378] sm:$0xf]
  %v237 = vld [vmem:[%s1 + $0x37c] sm:$0xf]
  %v238 = vld [vmem:[%s1 + $0x380] sm:$0xf]
  %v239 = vld [vmem:[%s1 + $0x384] sm:$0xf]
  %v240 = vld [vmem:[%s1 + $0x388] sm:$0xf]
  %v241 = vld [vmem:[%s1 + $0x38c] sm:$0xf]
  %v242 = vld [vmem:[%s1 + $0x390] sm:$0xf]
  %v243 = vld [vmem:[%s1 + $0x394] sm:$0xf]
  %v244 = vld [vmem:[%s1 + $0x398] sm:$0xf]
  %v245 = vld [vmem:[%s1 + $0x39c] sm:$0xf]
  %v246 = vld [vmem:[%s1 + $0x3a0] sm:$0xf]
  %v247 = vld [vmem:[%s1 + $0x3a4] sm:$0xf]
  %v248 = vld [vmem:[%s1 + $0x3a8] sm:$0xf]
  %v249 = vld [vmem:[%s1 + $0x3ac] sm:$0xf]
  %v250 = vld [vmem:[%s1 + $0x3b0] sm:$0xf]
  %v251 = vld [vmem:[%s1 + $0x3b4] sm:$0xf]
  %v252 = vld [vmem:[%s1 + $0x3b8] sm:$0xf]
  %v253 = vld [vmem:[%s1 + $0x3bc] sm:$0xf]
  %v254 = vld [vmem:[%s1 + $0x3c0] sm:$0xf]
  %v255 = vld [vmem:[%s1 + $0x3c4] sm:$0xf]
  %v256 = vld [vmem:[%s1 + $0x3c8] sm:$0xf]
  %v257 = vld [vmem:[%s1 + $0x3cc] sm:$0xf]
  %v258 = vld [vmem:[%s1 + $0x3d0] sm:$0xf]
  %v259 = vld [vmem:[%s1 + $0x3d4] sm:$0xf]
  %v260 = vld [vmem:[%s1 + $0x3d8] sm:$0xf]
  %v261 = vld [vmem:[%s1 + $0x3dc] sm:$0xf]
  %v262 = vld [vmem:[%s1 + $0x3e0] sm:$0xf]
  %v263 = vld [vmem:[%s1 + $0x3e4] sm:$0xf]
  %v264 = vld [vmem:[%s1 + $0x3e8] sm:$0xf]
  %v265 = vld [vmem:[%s1 + $0x3ec] sm:$0xf]
  %v266 = vld [vmem:[%s1 + $0x3f0] sm:$0xf]
  %v267 = vld [vmem:[%s1 + $0x3f4] sm:$0xf]
  %v268 = vld [vmem:[%s1 + $0x3f8] sm:$0xf]
  %v269 = vld [vmem:[%s1 + $0x3fc] sm:$0xf]
  %v270 = vld [vmem:[%s1 + $0x400] sm:$0xf]
  %v271 = vld [vmem:[%s1 + $0x404] sm:$0xf]
  %v272 = vld [vmem:[%s1 + $0x408] sm:$0xf]
  %v273 = vld [vmem:[%s1 + $0x40c] sm:$0xf]
  %v274 = vld [vmem:[%s1 + $0x410] sm:$0xf]
  %v275 = vld [vmem:[%s1 + $0x414] sm:$0xf]
  %v276 = vld [vmem:[%s1 + $0x418] sm:$0xf]
  %v277 = vld [vmem:[%s1 + $0x41c] sm:$0xf]
  %v278 = vld [vmem:[%s1 + $0x420] sm:$0xf]
  %v279 = vld [vmem:[%s1 + $0x424] sm:$0xf]
  %v280 = vld [vmem:[%s1 + $0x428] sm:$0xf]
  %v281 = vld [vmem:[%s1 + $0x42c] sm:$0xf]
  %v282 = vld [vmem:[%s1 + $0x430] sm:$0xf]
  %v283 = vld [vmem:[%s1 + $0x434] sm:$0xf]
  %v284 = vld [vmem:[%s1 + $0x438] sm:$0xf]
  %v285 = vld [vmem:[%s1 + $0x43c] sm:$0xf]
  %v286 = vld [vmem:[%s1 + $0x440] sm:$0xf]
  %v287 = vld [vmem:[%s1 + $0x444] sm:$0xf]
  %v288 = vld [vmem:[%s1 + $0x448] sm:$0xf]
  %v289 = vld [vmem:[%s1 + $0x44c] sm:$0xf]
  %v290 = vld [vmem:[%s1 + $0x450] sm:$0xf]
  %v291 = vld [vmem:[%s1 + $0x454] sm:$0xf]
  %v292 = vld [vmem:[%s1 + $0x458] sm:$0xf]
  %v293 = vld [vmem:[%s1 + $0x45c] sm:$0xf]
  %v294 = vld [vmem:[%s1 + $0x460] sm:$0xf]
  %v295 = vld [vmem:[%s1 + $0x464] sm:$0xf]
  %v296 = vld [vmem:[%s1 + $0x468] sm:$0xf]
  %v297 = vld [vmem:[%s1 + $0x46c] sm:$0xf]
  %v298 = vld [vmem:[%s1 + $0x470] sm:$0xf]
  %v299 = vld [vmem:[%s1 + $0x474] sm:$0xf]
  %v300 = vld [vmem:[%s1 + $0x478] sm:$0xf]
  %v301 = vld [vmem:[%s1 + $0x47c] sm:$0xf]
  %v302 = vld [vmem:[%s1 + $0x480] sm:$0xf]
  %v303 = vld [vmem:[%s1 + $0x484] sm:$0xf]
  %v304 = vld [vmem:[%s1 + $0x488] sm:$0xf]
  %v305 = vld [vmem:[%s1 + $0x48c] sm:$0xf]
  %v306 = vld [vmem:[%s1 + $0x490] sm:$0xf]
  %v307 = vld [vmem:[%s1 + $0x494] sm:$0xf]
  %v308 = vld [vmem:[%s1 + $0x498] sm:$0xf]
  %v309 = vld [vmem:[%s1 + $0x49c] sm:$0xf]
  %v310 = vld [vmem:[%s1 + $0x4a0] sm:$0xf]
  %v311 = vld [vmem:[%s1 + $0x4a4] sm:$0xf]
  %v312 = vld [vmem:[%s1 + $0x4a8] sm:$0xf]
  %v313 = vld [vmem:[%s1 + $0x4ac] sm:$0xf]
  %v314 = vld [vmem:[%s1 + $0x4b0] sm:$0xf]
  %v315 = vld [vmem:[%s1 + $0x4b4] sm:$0xf]
  %v316 = vld [vmem:[%s1 + $0x4b8] sm:$0xf]
  %v317 = vld [vmem:[%s1 + $0x4bc] sm:$0xf]
  %v318 = vld [vmem:[%s1 + $0x4c0] sm:$0xf]
  %v319 = vld [vmem:[%s1 + $0x4c4] sm:$0xf]
  %v320 = vld [vmem:[%s1 + $0x4c8] sm:$0xf]
  %v321 = vld [vmem:[%s1 + $0x4cc] sm:$0xf]
  %v322 = vld [vmem:[%s1 + $0x4d0] sm:$0xf]
  %v323 = vld [vmem:[%s1 + $0x4d4] sm:$0xf]
  %v324 = vld [vmem:[%s1 + $0x4d8] sm:$0xf]
  %v325 = vld [vmem:[%s1 + $0x4dc] sm:$0xf]
  %v326 = vld [vmem:[%s1 + $0x4e0] sm:$0xf]
  %v327 = vld [vmem:[%s1 + $0x4e4] sm:$0xf]
  %v328 = vld [vmem:[%s1 + $0x4e8] sm:$0xf]
  %v329 = vld [vmem:[%s1 + $0x4ec] sm:$0xf]
  %v330 = vld [vmem:[%s1 + $0x4f0] sm:$0xf]
  %v331 = vld [vmem:[%s1 + $0x4f4] sm:$0xf]
  %v332 = vld [vmem:[%s1 + $0x4f8] sm:$0xf]
  %v333 = vld [vmem:[%s1 + $0x4fc] sm:$0xf]
  %v334 = vld [vmem:[%s1 + $0x500] sm:$0xf]
  %v335 = vld [vmem:[%s1 + $0x504] sm:$0xf]
  %v336 = vld [vmem:[%s1 + $0x508] sm:$0xf]
  %v337 = vld [vmem:[%s1 + $0x50c] sm:$0xf]
  %v338 = vld [vmem:[%s1 + $0x510] sm:$0xf]
  %v339 = vld [vmem:[%s1 + $0x514] sm:$0xf]
  %v340 = vld [vmem:[%s1 + $0x518] sm:$0xf]
  %v341 = vld [vmem:[%s1 + $0x51c] sm:$0xf]
  %v342 = vld [vmem:[%s1 + $0x520] sm:$0xf]
  %v343 = vld [vmem:[%s1 + $0x524] sm:$0xf]
  %v344 = vld [vmem:[%s1 + $0x528] sm:$0xf]
  %v345 = vld [vmem:[%s1 + $0x52c] sm:$0xf]
  %v346 = vld [vmem:[%s1 + $0x530] sm:$0xf]
  %v347 = vld [vmem:[%s1 + $0x534] sm:$0xf]
  %v348 = vld [vmem:[%s1 + $0x538] sm:$0xf]
  %v349 = vld [vmem:[%s1 + $0x53c] sm:$0xf]
  %v350 = vld [vmem:[%s1 + $0x540] sm:$0xf]
  %v351 = vld [vmem:[%s1 + $0x544] sm:$0xf]
  %v352 = vld [vmem:[%s1 + $0x548] sm:$0xf]
  %v353 = vld [vmem:[%s1 + $0x54c] sm:$0xf]
  %v354 = vld [vmem:[%s1 + $0x550] sm:$0xf]
  %v355 = vld [vmem:[%s1 + $0x554] sm:$0xf]
  %v356 = vld [vmem:[%s1 + $0x558] sm:$0xf]
  %v357 = vld [vmem:[%s1 + $0x55c] sm:$0xf]
  %v358 = vld [vmem:[%s1 + $0x560] sm:$0xf]
  %v359 = vld [vmem:[%s1 + $0x564] sm:$0xf]
  %v360 = vld [vmem:[%s1 + $0x568] sm:$0xf]
  %v361 = vld [vmem:[%s1 + $0x56c] sm:$0xf]
  %v362 = vld [vmem:[%s1 + $0x570] sm:$0xf]
  %v363 = vld [vmem:[%s1 + $0x574] sm:$0xf]
  %v364 = vld [vmem:[%s1 + $0x578] sm:$0xf]
  %v365 = vld [vmem:[%s1 + $0x57c] sm:$0xf]
  %v366 = vld [vmem:[%s1 + $0x580] sm:$0xf]
  %v367 = vld [vmem:[%s1 + $0x584] sm:$0xf]
  %v368 = vld [vmem:[%s1 + $0x588] sm:$0xf]
  %v369 = vld [vmem:[%s1 + $0x58c] sm:$0xf]
  %v370 = vld [vmem:[%s1 + $0x590] sm:$0xf]
  %v371 = vld [vmem:[%s1 + $0x594] sm:$0xf]
  %v372 = vld [vmem:[%s1 + $0x598] sm:$0xf]
  %v373 = vld [vmem:[%s1 + $0x59c] sm:$0xf]
  %v374 = vld [vmem:[%s1 + $0x5a0] sm:$0xf]
  %v375 = vld [vmem:[%s1 + $0x5a4] sm:$0xf]
  %v376 = vld [vmem:[%s1 + $0x5a8] sm:$0xf]
  %v377 = vld [vmem:[%s1 + $0x5ac] sm:$0xf]
  %v378 = vld [vmem:[%s1 + $0x5b0] sm:$0xf]
  %v379 = vld [vmem:[%s1 + $0x5b4] sm:$0xf]
  %v380 = vld [vmem:[%s1 + $0x5b8] sm:$0xf]
  %v381 = vld [vmem:[%s1 + $0x5bc] sm:$0xf]
  %v382 = vld [vmem:[%s1 + $0x5c0] sm:$0xf]
  %v383 = vld [vmem:[%s1 + $0x5c4] sm:$0xf]
  %v384 = vld [vmem:[%s1 + $0x5c8] sm:$0xf]
  %v385 = vld [vmem:[%s1 + $0x5cc] sm:$0xf]
  %v386 = vld [vmem:[%s1 + $0x5d0] sm:$0xf]
  %v387 = vld [vmem:[%s1 + $0x5d4] sm:$0xf]
  %v388 = vld [vmem:[%s1 + $0x5d8] sm:$0xf]
  %v389 = vld [vmem:[%s1 + $0x5dc] sm:$0xf]
  %v390 = vld [vmem:[%s1 + $0x5e0] sm:$0xf]
  %v391 = vld [vmem:[%s1 + $0x5e4] sm:$0xf]
  %v392 = vld [vmem:[%s1 + $0x5e8] sm:$0xf]
  %v393 = vld [vmem:[%s1 + $0x5ec] sm:$0xf]
  %v394 = vld [vmem:[%s1 + $0x5f0] sm:$0xf]
  %v395 = vld [vmem:[%s1 + $0x5f4] sm:$0xf]
  %v396 = vld [vmem:[%s1 + $0x5f8] sm:$0xf]
  %v397 = vld [vmem:[%s1 + $0x5fc] sm:$0xf]
  %v398 = vld [vmem:[%s1 + $0x600] sm:$0xf]
  %v399 = vld [vmem:[%s1 + $0x604] sm:$0xf]
  %v400 = vld [vmem:[%s1 + $0x608] sm:$0xf]
  %v401 = vld [vmem:[%s1 + $0x60c] sm:$0xf]
  %v402 = vld [vmem:[%s1 + $0x610] sm:$0xf]
  %v403 = vld [vmem:[%s1 + $0x614] sm:$0xf]
  %v404 = vld [vmem:[%s1 + $0x618] sm:$0xf]
  %v405 = vld [vmem:[%s1 + $0x61c] sm:$0xf]
  %v406 = vld [vmem:[%s1 + $0x620] sm:$0xf]
  %v407 = vld [vmem:[%s1 + $0x624] sm:$0xf]
  %v408 = vld [vmem:[%s1 + $0x628] sm:$0xf]
  %v409 = vld [vmem:[%s1 + $0x62c] sm:$0xf]
  %v410 = vld [vmem:[%s1 + $0x630] sm:$0xf]
  %v411 = vld [vmem:[%s1 + $0x634] sm:$0xf]
  %v412 = vld [vmem:[%s1 + $0x638] sm:$0xf]
  %v413 = vld [vmem:[%s1 + $0x63c] sm:$0xf]
  %v414 = vld [vmem:[%s2] sm:$0x1]
  %v415 = vld [vmem:[%s0] sm:$0xff]
  %v416 = vld [vmem:[%s0 + $0x8] sm:$0xff]
  %v417 = vld [vmem:[%s0 + $0x10] sm:$0xff]
  %v418 = vld [vmem:[%s0 + $0x18] sm:$0xff]
  %v419 = vld [vmem:[%s0 + $0x20] sm:$0xff]
  %v420 = vld [vmem:[%s0 + $0x28] sm:$0xff]
  %v421 = vld [vmem:[%s0 + $0x30] sm:$0xff]
  %v422 = vld [vmem:[%s0 + $0x38] sm:$0xff]
  %v423 = vld [vmem:[%s0 + $0x40] sm:$0xff]
  %v424 = vld [vmem:[%s0 + $0x48] sm:$0xff]
  %v425 = vld [vmem:[%s0 + $0x50] sm:$0xff]
  %v426 = vld [vmem:[%s0 + $0x58] sm:$0xff]
  %v427 = vld [vmem:[%s0 + $0x60] sm:$0xf]
  %v428 = vld [vmem:[%s0 + $0x64] sm:$0xff]
  %v429 = vld [vmem:[%s0 + $0x6c] sm:$0xff]
  %v430 = vld [vmem:[%s0 + $0x74] sm:$0xff]
  %v431 = vld [vmem:[%s0 + $0x7c] sm:$0xff]
  %v432 = vld [vmem:[%s0 + $0x84] sm:$0xff]
  %v433 = vld [vmem:[%s0 + $0x8c] sm:$0xff]
  %v434 = vld [vmem:[%s0 + $0x94] sm:$0xff]
  %v435 = vld [vmem:[%s0 + $0x9c] sm:$0xff]
  %v436 = vld [vmem:[%s0 + $0xa4] sm:$0xff]
  %v437 = vld [vmem:[%s0 + $0xac] sm:$0xff]
  %v438 = vld [vmem:[%s0 + $0xb4] sm:$0xff]
  %v439 = vld [vmem:[%s0 + $0xbc] sm:$0xff]
  %v440 = vld [vmem:[%s0 + $0xc4] sm:$0xf]
  %v441 = vld [vmem:[%s0 + $0xc8] sm:$0xff]
  %v442 = vld [vmem:[%s0 + $0xd0] sm:$0xff]
  %v443 = vld [vmem:[%s0 + $0xd8] sm:$0xff]
  %v444 = vld [vmem:[%s0 + $0xe0] sm:$0xff]
  %v445 = vld [vmem:[%s0 + $0xe8] sm:$0xff]
  %v446 = vld [vmem:[%s0 + $0xf0] sm:$0xff]
  %v447 = vld [vmem:[%s0 + $0xf8] sm:$0xff]
  %v448 = vld [vmem:[%s0 + $0x100] sm:$0xff]
  %v449 = vld [vmem:[%s0 + $0x108] sm:$0xff]
  %v450 = vld [vmem:[%s0 + $0x110] sm:$0xff]
  %v451 = vld [vmem:[%s0 + $0x118] sm:$0xff]
  %v452 = vld [vmem:[%s0 + $0x120] sm:$0xff]
  %v453 = vld [vmem:[%s0 + $0x128] sm:$0xf]
  %v454 = vld [vmem:[%s0 + $0x12c] sm:$0xff]
  %v455 = vld [vmem:[%s0 + $0x134] sm:$0xff]
  %v456 = vld [vmem:[%s0 + $0x13c] sm:$0xff]
  %v457 = vld [vmem:[%s0 + $0x144] sm:$0xff]
  %v458 = vld [vmem:[%s0 + $0x14c] sm:$0xff]
  %v459 = vld [vmem:[%s0 + $0x154] sm:$0xff]
  %v460 = vld [vmem:[%s0 + $0x15c] sm:$0xff]
  %v461 = vld [vmem:[%s0 + $0x164] sm:$0xff]
  %v462 = vld [vmem:[%s0 + $0x16c] sm:$0xff]
  %v463 = vld [vmem:[%s0 + $0x174] sm:$0xff]
  %v464 = vld [vmem:[%s0 + $0x17c] sm:$0xff]
  %v465 = vld [vmem:[%s0 + $0x184] sm:$0xff]
  %v466 = vld [vmem:[%s0 + $0x18c] sm:$0xf]
  %v468 = vperm.slane %v414, 0
  %v522 = vunpack.c.l.b16 %v415
  %v523 = vunpack.c.h.b16 %v415
  %v524 = vunpack.c.l.b16 %v416
  %v525 = vunpack.c.h.b16 %v416
  %v526 = vunpack.c.l.b16 %v417
  %v527 = vunpack.c.h.b16 %v417
  %v528 = vunpack.c.l.b16 %v418
  %v529 = vunpack.c.h.b16 %v418
  %v530 = vunpack.c.l.b16 %v419
  %v531 = vunpack.c.h.b16 %v419
  %v532 = vunpack.c.l.b16 %v420
  %v533 = vunpack.c.h.b16 %v420
  %v534 = vunpack.c.l.b16 %v421
  %v535 = vunpack.c.h.b16 %v421
  %v536 = vunpack.c.l.b16 %v422
  %v537 = vunpack.c.h.b16 %v422
  %v538 = vunpack.c.l.b16 %v423
  %v539 = vunpack.c.h.b16 %v423
  %v540 = vunpack.c.l.b16 %v424
  %v541 = vunpack.c.h.b16 %v424
  %v542 = vunpack.c.l.b16 %v425
  %v543 = vunpack.c.h.b16 %v425
  %v544 = vunpack.c.l.b16 %v426
  %v545 = vunpack.c.h.b16 %v426
  %v546 = vunpack.c.l.b16 %v427
  %v547 = vunpack.c.l.b16 %v428
  %v548 = vunpack.c.h.b16 %v428
  %v549 = vunpack.c.l.b16 %v429
  %v550 = vunpack.c.h.b16 %v429
  %v551 = vunpack.c.l.b16 %v430
  %v552 = vunpack.c.h.b16 %v430
  %v553 = vunpack.c.l.b16 %v431
  %v554 = vunpack.c.h.b16 %v431
  %v555 = vunpack.c.l.b16 %v432
  %v556 = vunpack.c.h.b16 %v432
  %v557 = vunpack.c.l.b16 %v433
  %v558 = vunpack.c.h.b16 %v433
  %v559 = vunpack.c.l.b16 %v434
  %v560 = vunpack.c.h.b16 %v434
  %v561 = vunpack.c.l.b16 %v435
  %v562 = vunpack.c.h.b16 %v435
  %v563 = vunpack.c.l.b16 %v436
  %v564 = vunpack.c.h.b16 %v436
  %v565 = vunpack.c.l.b16 %v437
  %v566 = vunpack.c.h.b16 %v437
  %v567 = vunpack.c.l.b16 %v438
  %v568 = vunpack.c.h.b16 %v438
  %v569 = vunpack.c.l.b16 %v439
  %v570 = vunpack.c.h.b16 %v439
  %v571 = vunpack.c.l.b16 %v440
  %v572 = vunpack.c.l.b16 %v441
  %v573 = vunpack.c.h.b16 %v441
  %v574 = vunpack.c.l.b16 %v442
  %v575 = vunpack.c.h.b16 %v442
  %v576 = vunpack.c.l.b16 %v443
  %v577 = vunpack.c.h.b16 %v443
  %v578 = vunpack.c.l.b16 %v444
  %v579 = vunpack.c.h.b16 %v444
  %v580 = vunpack.c.l.b16 %v445
  %v581 = vunpack.c.h.b16 %v445
  %v582 = vunpack.c.l.b16 %v446
  %v583 = vunpack.c.h.b16 %v446
  %v584 = vunpack.c.l.b16 %v447
  %v585 = vunpack.c.h.b16 %v447
  %v586 = vunpack.c.l.b16 %v448
  %v587 = vunpack.c.h.b16 %v448
  %v588 = vunpack.c.l.b16 %v449
  %v589 = vunpack.c.h.b16 %v449
  %v590 = vunpack.c.l.b16 %v450
  %v591 = vunpack.c.h.b16 %v450
  %v592 = vunpack.c.l.b16 %v451
  %v593 = vunpack.c.h.b16 %v451
  %v594 = vunpack.c.l.b16 %v452
  %v595 = vunpack.c.h.b16 %v452
  %v596 = vunpack.c.l.b16 %v453
  %v597 = vunpack.c.l.b16 %v454
  %v598 = vunpack.c.h.b16 %v454
  %v599 = vunpack.c.l.b16 %v455
  %v600 = vunpack.c.h.b16 %v455
  %v601 = vunpack.c.l.b16 %v456
  %v602 = vunpack.c.h.b16 %v456
  %v603 = vunpack.c.l.b16 %v457
  %v604 = vunpack.c.h.b16 %v457
  %v605 = vunpack.c.l.b16 %v458
  %v606 = vunpack.c.h.b16 %v458
  %v607 = vunpack.c.l.b16 %v459
  %v608 = vunpack.c.h.b16 %v459
  %v609 = vunpack.c.l.b16 %v460
  %v610 = vunpack.c.h.b16 %v460
  %v611 = vunpack.c.l.b16 %v461
  %v612 = vunpack.c.h.b16 %v461
  %v613 = vunpack.c.l.b16 %v462
  %v614 = vunpack.c.h.b16 %v462
  %v615 = vunpack.c.l.b16 %v463
  %v616 = vunpack.c.h.b16 %v463
  %v617 = vunpack.c.l.b16 %v464
  %v618 = vunpack.c.h.b16 %v464
  %v619 = vunpack.c.l.b16 %v465
  %v620 = vunpack.c.h.b16 %v465
  %v621 = vunpack.c.l.b16 %v466
  %v622 = vpack.c.b16 %v547, %v522
  %v623 = vpack.c.b16 %v548, %v523
  %v624 = vpack.c.b16 %v549, %v524
  %v625 = vpack.c.b16 %v550, %v525
  %v626 = vpack.c.b16 %v551, %v526
  %v627 = vpack.c.b16 %v552, %v527
  %v628 = vpack.c.b16 %v553, %v528
  %v629 = vpack.c.b16 %v554, %v529
  %v630 = vpack.c.b16 %v555, %v530
  %v631 = vpack.c.b16 %v556, %v531
  %v632 = vpack.c.b16 %v557, %v532
  %v633 = vpack.c.b16 %v558, %v533
  %v634 = vpack.c.b16 %v559, %v534
  %v635 = vpack.c.b16 %v560, %v535
  %v636 = vpack.c.b16 %v561, %v536
  %v637 = vpack.c.b16 %v562, %v537
  %v638 = vpack.c.b16 %v563, %v538
  %v639 = vpack.c.b16 %v564, %v539
  %v640 = vpack.c.b16 %v565, %v540
  %v641 = vpack.c.b16 %v566, %v541
  %v642 = vpack.c.b16 %v567, %v542
  %v643 = vpack.c.b16 %v568, %v543
  %v644 = vpack.c.b16 %v569, %v544
  %v645 = vpack.c.b16 %v570, %v545
  %v646 = vpack.c.b16 %v571, %v546
  %v647 = vpack.c.b16 %v597, %v572
  %v648 = vpack.c.b16 %v598, %v573
  %v649 = vpack.c.b16 %v599, %v574
  %v650 = vpack.c.b16 %v600, %v575
  %v651 = vpack.c.b16 %v601, %v576
  %v652 = vpack.c.b16 %v602, %v577
  %v653 = vpack.c.b16 %v603, %v578
  %v654 = vpack.c.b16 %v604, %v579
  %v655 = vpack.c.b16 %v605, %v580
  %v656 = vpack.c.b16 %v606, %v581
  %v657 = vpack.c.b16 %v607, %v582
  %v658 = vpack.c.b16 %v608, %v583
  %v659 = vpack.c.b16 %v609, %v584
  %v660 = vpack.c.b16 %v610, %v585
  %v661 = vpack.c.b16 %v611, %v586
  %v662 = vpack.c.b16 %v612, %v587
  %v663 = vpack.c.b16 %v613, %v588
  %v664 = vpack.c.b16 %v614, %v589
  %v665 = vpack.c.b16 %v615, %v590
  %v666 = vpack.c.b16 %v616, %v591
  %v667 = vpack.c.b16 %v617, %v592
  %v668 = vpack.c.b16 %v618, %v593
  %v669 = vpack.c.b16 %v619, %v594
  %v670 = vpack.c.b16 %v620, %v595
  %v671 = vpack.c.b16 %v621, %v596
  %v1122 = vunpack.c.l.b16 %v14
  %v1123 = vunpack.c.l.b16 %v15
  %v1124 = vunpack.c.l.b16 %v16
  %v1125 = vunpack.c.l.b16 %v17
  %v1126 = vunpack.c.l.b16 %v18
  %v1127 = vunpack.c.l.b16 %v19
  %v1128 = vunpack.c.l.b16 %v20
  %v1129 = vunpack.c.l.b16 %v21
  %v1130 = vunpack.c.l.b16 %v22
  %v1131 = vunpack.c.l.b16 %v23
  %v1132 = vunpack.c.l.b16 %v24
  %v1133 = vunpack.c.l.b16 %v25
  %v1134 = vunpack.c.l.b16 %v26
  %v1135 = vunpack.c.l.b16 %v27
  %v1136 = vunpack.c.l.b16 %v28
  %v1137 = vunpack.c.l.b16 %v29
  %v1138 = vunpack.c.l.b16 %v30
  %v1139 = vunpack.c.l.b16 %v31
  %v1140 = vunpack.c.l.b16 %v32
  %v1141 = vunpack.c.l.b16 %v33
  %v1142 = vunpack.c.l.b16 %v34
  %v1143 = vunpack.c.l.b16 %v35
  %v1144 = vunpack.c.l.b16 %v36
  %v1145 = vunpack.c.l.b16 %v37
  %v1146 = vunpack.c.l.b16 %v38
  %v1147 = vunpack.c.l.b16 %v39
  %v1148 = vunpack.c.l.b16 %v40
  %v1149 = vunpack.c.l.b16 %v41
  %v1150 = vunpack.c.l.b16 %v42
  %v1151 = vunpack.c.l.b16 %v43
  %v1152 = vunpack.c.l.b16 %v44
  %v1153 = vunpack.c.l.b16 %v45
  %v1154 = vunpack.c.l.b16 %v46
  %v1155 = vunpack.c.l.b16 %v47
  %v1156 = vunpack.c.l.b16 %v48
  %v1157 = vunpack.c.l.b16 %v49
  %v1158 = vunpack.c.l.b16 %v50
  %v1159 = vunpack.c.l.b16 %v51
  %v1160 = vunpack.c.l.b16 %v52
  %v1161 = vunpack.c.l.b16 %v53
  %v1162 = vunpack.c.l.b16 %v54
  %v1163 = vunpack.c.l.b16 %v55
  %v1164 = vunpack.c.l.b16 %v56
  %v1165 = vunpack.c.l.b16 %v57
  %v1166 = vunpack.c.l.b16 %v58
  %v1167 = vunpack.c.l.b16 %v59
  %v1168 = vunpack.c.l.b16 %v60
  %v1169 = vunpack.c.l.b16 %v61
  %v1170 = vunpack.c.l.b16 %v62
  %v1171 = vunpack.c.l.b16 %v63
  %v1172 = vunpack.c.l.b16 %v64
  %v1173 = vunpack.c.l.b16 %v65
  %v1174 = vunpack.c.l.b16 %v66
  %v1175 = vunpack.c.l.b16 %v67
  %v1176 = vunpack.c.l.b16 %v68
  %v1177 = vunpack.c.l.b16 %v69
  %v1178 = vunpack.c.l.b16 %v70
  %v1179 = vunpack.c.l.b16 %v71
  %v1180 = vunpack.c.l.b16 %v72
  %v1181 = vunpack.c.l.b16 %v73
  %v1182 = vunpack.c.l.b16 %v74
  %v1183 = vunpack.c.l.b16 %v75
  %v1184 = vunpack.c.l.b16 %v76
  %v1185 = vunpack.c.l.b16 %v77
  %v1186 = vunpack.c.l.b16 %v78
  %v1187 = vunpack.c.l.b16 %v79
  %v1188 = vunpack.c.l.b16 %v80
  %v1189 = vunpack.c.l.b16 %v81
  %v1190 = vunpack.c.l.b16 %v82
  %v1191 = vunpack.c.l.b16 %v83
  %v1192 = vunpack.c.l.b16 %v84
  %v1193 = vunpack.c.l.b16 %v85
  %v1194 = vunpack.c.l.b16 %v86
  %v1195 = vunpack.c.l.b16 %v87
  %v1196 = vunpack.c.l.b16 %v88
  %v1197 = vunpack.c.l.b16 %v89
  %v1198 = vunpack.c.l.b16 %v90
  %v1199 = vunpack.c.l.b16 %v91
  %v1200 = vunpack.c.l.b16 %v92
  %v1201 = vunpack.c.l.b16 %v93
  %v1202 = vunpack.c.l.b16 %v94
  %v1203 = vunpack.c.l.b16 %v95
  %v1204 = vunpack.c.l.b16 %v96
  %v1205 = vunpack.c.l.b16 %v97
  %v1206 = vunpack.c.l.b16 %v98
  %v1207 = vunpack.c.l.b16 %v99
  %v1208 = vunpack.c.l.b16 %v100
  %v1209 = vunpack.c.l.b16 %v101
  %v1210 = vunpack.c.l.b16 %v102
  %v1211 = vunpack.c.l.b16 %v103
  %v1212 = vunpack.c.l.b16 %v104
  %v1213 = vunpack.c.l.b16 %v105
  %v1214 = vunpack.c.l.b16 %v106
  %v1215 = vunpack.c.l.b16 %v107
  %v1216 = vunpack.c.l.b16 %v108
  %v1217 = vunpack.c.l.b16 %v109
  %v1218 = vunpack.c.l.b16 %v110
  %v1219 = vunpack.c.l.b16 %v111
  %v1220 = vunpack.c.l.b16 %v112
  %v1221 = vunpack.c.l.b16 %v113
  %v1222 = vunpack.c.l.b16 %v114
  %v1223 = vunpack.c.l.b16 %v115
  %v1224 = vunpack.c.l.b16 %v116
  %v1225 = vunpack.c.l.b16 %v117
  %v1226 = vunpack.c.l.b16 %v118
  %v1227 = vunpack.c.l.b16 %v119
  %v1228 = vunpack.c.l.b16 %v120
  %v1229 = vunpack.c.l.b16 %v121
  %v1230 = vunpack.c.l.b16 %v122
  %v1231 = vunpack.c.l.b16 %v123
  %v1232 = vunpack.c.l.b16 %v124
  %v1233 = vunpack.c.l.b16 %v125
  %v1234 = vunpack.c.l.b16 %v126
  %v1235 = vunpack.c.l.b16 %v127
  %v1236 = vunpack.c.l.b16 %v128
  %v1237 = vunpack.c.l.b16 %v129
  %v1238 = vunpack.c.l.b16 %v130
  %v1239 = vunpack.c.l.b16 %v131
  %v1240 = vunpack.c.l.b16 %v132
  %v1241 = vunpack.c.l.b16 %v133
  %v1242 = vunpack.c.l.b16 %v134
  %v1243 = vunpack.c.l.b16 %v135
  %v1244 = vunpack.c.l.b16 %v136
  %v1245 = vunpack.c.l.b16 %v137
  %v1246 = vunpack.c.l.b16 %v138
  %v1247 = vunpack.c.l.b16 %v139
  %v1248 = vunpack.c.l.b16 %v140
  %v1249 = vunpack.c.l.b16 %v141
  %v1250 = vunpack.c.l.b16 %v142
  %v1251 = vunpack.c.l.b16 %v143
  %v1252 = vunpack.c.l.b16 %v144
  %v1253 = vunpack.c.l.b16 %v145
  %v1254 = vunpack.c.l.b16 %v146
  %v1255 = vunpack.c.l.b16 %v147
  %v1256 = vunpack.c.l.b16 %v148
  %v1257 = vunpack.c.l.b16 %v149
  %v1258 = vunpack.c.l.b16 %v150
  %v1259 = vunpack.c.l.b16 %v151
  %v1260 = vunpack.c.l.b16 %v152
  %v1261 = vunpack.c.l.b16 %v153
  %v1262 = vunpack.c.l.b16 %v154
  %v1263 = vunpack.c.l.b16 %v155
  %v1264 = vunpack.c.l.b16 %v156
  %v1265 = vunpack.c.l.b16 %v157
  %v1266 = vunpack.c.l.b16 %v158
  %v1267 = vunpack.c.l.b16 %v159
  %v1268 = vunpack.c.l.b16 %v160
  %v1269 = vunpack.c.l.b16 %v161
  %v1270 = vunpack.c.l.b16 %v162
  %v1271 = vunpack.c.l.b16 %v163
  %v1272 = vunpack.c.l.b16 %v164
  %v1273 = vunpack.c.l.b16 %v165
  %v1274 = vunpack.c.l.b16 %v166
  %v1275 = vunpack.c.l.b16 %v167
  %v1276 = vunpack.c.l.b16 %v168
  %v1277 = vunpack.c.l.b16 %v169
  %v1278 = vunpack.c.l.b16 %v170
  %v1279 = vunpack.c.l.b16 %v171
  %v1280 = vunpack.c.l.b16 %v172
  %v1281 = vunpack.c.l.b16 %v173
  %v1282 = vunpack.c.l.b16 %v174
  %v1283 = vunpack.c.l.b16 %v175
  %v1284 = vunpack.c.l.b16 %v176
  %v1285 = vunpack.c.l.b16 %v177
  %v1286 = vunpack.c.l.b16 %v178
  %v1287 = vunpack.c.l.b16 %v179
  %v1288 = vunpack.c.l.b16 %v180
  %v1289 = vunpack.c.l.b16 %v181
  %v1290 = vunpack.c.l.b16 %v182
  %v1291 = vunpack.c.l.b16 %v183
  %v1292 = vunpack.c.l.b16 %v184
  %v1293 = vunpack.c.l.b16 %v185
  %v1294 = vunpack.c.l.b16 %v186
  %v1295 = vunpack.c.l.b16 %v187
  %v1296 = vunpack.c.l.b16 %v188
  %v1297 = vunpack.c.l.b16 %v189
  %v1298 = vunpack.c.l.b16 %v190
  %v1299 = vunpack.c.l.b16 %v191
  %v1300 = vunpack.c.l.b16 %v192
  %v1301 = vunpack.c.l.b16 %v193
  %v1302 = vunpack.c.l.b16 %v194
  %v1303 = vunpack.c.l.b16 %v195
  %v1304 = vunpack.c.l.b16 %v196
  %v1305 = vunpack.c.l.b16 %v197
  %v1306 = vunpack.c.l.b16 %v198
  %v1307 = vunpack.c.l.b16 %v199
  %v1308 = vunpack.c.l.b16 %v200
  %v1309 = vunpack.c.l.b16 %v201
  %v1310 = vunpack.c.l.b16 %v202
  %v1311 = vunpack.c.l.b16 %v203
  %v1312 = vunpack.c.l.b16 %v204
  %v1313 = vunpack.c.l.b16 %v205
  %v1314 = vunpack.c.l.b16 %v206
  %v1315 = vunpack.c.l.b16 %v207
  %v1316 = vunpack.c.l.b16 %v208
  %v1317 = vunpack.c.l.b16 %v209
  %v1318 = vunpack.c.l.b16 %v210
  %v1319 = vunpack.c.l.b16 %v211
  %v1320 = vunpack.c.l.b16 %v212
  %v1321 = vunpack.c.l.b16 %v213
  %v1322 = vunpack.c.l.b16 %v214
  %v1323 = vunpack.c.l.b16 %v215
  %v1324 = vunpack.c.l.b16 %v216
  %v1325 = vunpack.c.l.b16 %v217
  %v1326 = vunpack.c.l.b16 %v218
  %v1327 = vunpack.c.l.b16 %v219
  %v1328 = vunpack.c.l.b16 %v220
  %v1329 = vunpack.c.l.b16 %v221
  %v1330 = vunpack.c.l.b16 %v222
  %v1331 = vunpack.c.l.b16 %v223
  %v1332 = vunpack.c.l.b16 %v224
  %v1333 = vunpack.c.l.b16 %v225
  %v1334 = vunpack.c.l.b16 %v226
  %v1335 = vunpack.c.l.b16 %v227
  %v1336 = vunpack.c.l.b16 %v228
  %v1337 = vunpack.c.l.b16 %v229
  %v1338 = vunpack.c.l.b16 %v230
  %v1339 = vunpack.c.l.b16 %v231
  %v1340 = vunpack.c.l.b16 %v232
  %v1341 = vunpack.c.l.b16 %v233
  %v1342 = vunpack.c.l.b16 %v234
  %v1343 = vunpack.c.l.b16 %v235
  %v1344 = vunpack.c.l.b16 %v236
  %v1345 = vunpack.c.l.b16 %v237
  %v1346 = vunpack.c.l.b16 %v238
  %v1347 = vunpack.c.l.b16 %v239
  %v1348 = vunpack.c.l.b16 %v240
  %v1349 = vunpack.c.l.b16 %v241
  %v1350 = vunpack.c.l.b16 %v242
  %v1351 = vunpack.c.l.b16 %v243
  %v1352 = vunpack.c.l.b16 %v244
  %v1353 = vunpack.c.l.b16 %v245
  %v1354 = vunpack.c.l.b16 %v246
  %v1355 = vunpack.c.l.b16 %v247
  %v1356 = vunpack.c.l.b16 %v248
  %v1357 = vunpack.c.l.b16 %v249
  %v1358 = vunpack.c.l.b16 %v250
  %v1359 = vunpack.c.l.b16 %v251
  %v1360 = vunpack.c.l.b16 %v252
  %v1361 = vunpack.c.l.b16 %v253
  %v1362 = vunpack.c.l.b16 %v254
  %v1363 = vunpack.c.l.b16 %v255
  %v1364 = vunpack.c.l.b16 %v256
  %v1365 = vunpack.c.l.b16 %v257
  %v1366 = vunpack.c.l.b16 %v258
  %v1367 = vunpack.c.l.b16 %v259
  %v1368 = vunpack.c.l.b16 %v260
  %v1369 = vunpack.c.l.b16 %v261
  %v1370 = vunpack.c.l.b16 %v262
  %v1371 = vunpack.c.l.b16 %v263
  %v1372 = vunpack.c.l.b16 %v264
  %v1373 = vunpack.c.l.b16 %v265
  %v1374 = vunpack.c.l.b16 %v266
  %v1375 = vunpack.c.l.b16 %v267
  %v1376 = vunpack.c.l.b16 %v268
  %v1377 = vunpack.c.l.b16 %v269
  %v1378 = vunpack.c.l.b16 %v270
  %v1379 = vunpack.c.l.b16 %v271
  %v1380 = vunpack.c.l.b16 %v272
  %v1381 = vunpack.c.l.b16 %v273
  %v1382 = vunpack.c.l.b16 %v274
  %v1383 = vunpack.c.l.b16 %v275
  %v1384 = vunpack.c.l.b16 %v276
  %v1385 = vunpack.c.l.b16 %v277
  %v1386 = vunpack.c.l.b16 %v278
  %v1387 = vunpack.c.l.b16 %v279
  %v1388 = vunpack.c.l.b16 %v280
  %v1389 = vunpack.c.l.b16 %v281
  %v1390 = vunpack.c.l.b16 %v282
  %v1391 = vunpack.c.l.b16 %v283
  %v1392 = vunpack.c.l.b16 %v284
  %v1393 = vunpack.c.l.b16 %v285
  %v1394 = vunpack.c.l.b16 %v286
  %v1395 = vunpack.c.l.b16 %v287
  %v1396 = vunpack.c.l.b16 %v288
  %v1397 = vunpack.c.l.b16 %v289
  %v1398 = vunpack.c.l.b16 %v290
  %v1399 = vunpack.c.l.b16 %v291
  %v1400 = vunpack.c.l.b16 %v292
  %v1401 = vunpack.c.l.b16 %v293
  %v1402 = vunpack.c.l.b16 %v294
  %v1403 = vunpack.c.l.b16 %v295
  %v1404 = vunpack.c.l.b16 %v296
  %v1405 = vunpack.c.l.b16 %v297
  %v1406 = vunpack.c.l.b16 %v298
  %v1407 = vunpack.c.l.b16 %v299
  %v1408 = vunpack.c.l.b16 %v300
  %v1409 = vunpack.c.l.b16 %v301
  %v1410 = vunpack.c.l.b16 %v302
  %v1411 = vunpack.c.l.b16 %v303
  %v1412 = vunpack.c.l.b16 %v304
  %v1413 = vunpack.c.l.b16 %v305
  %v1414 = vunpack.c.l.b16 %v306
  %v1415 = vunpack.c.l.b16 %v307
  %v1416 = vunpack.c.l.b16 %v308
  %v1417 = vunpack.c.l.b16 %v309
  %v1418 = vunpack.c.l.b16 %v310
  %v1419 = vunpack.c.l.b16 %v311
  %v1420 = vunpack.c.l.b16 %v312
  %v1421 = vunpack.c.l.b16 %v313
  %v1422 = vunpack.c.l.b16 %v314
  %v1423 = vunpack.c.l.b16 %v315
  %v1424 = vunpack.c.l.b16 %v316
  %v1425 = vunpack.c.l.b16 %v317
  %v1426 = vunpack.c.l.b16 %v318
  %v1427 = vunpack.c.l.b16 %v319
  %v1428 = vunpack.c.l.b16 %v320
  %v1429 = vunpack.c.l.b16 %v321
  %v1430 = vunpack.c.l.b16 %v322
  %v1431 = vunpack.c.l.b16 %v323
  %v1432 = vunpack.c.l.b16 %v324
  %v1433 = vunpack.c.l.b16 %v325
  %v1434 = vunpack.c.l.b16 %v326
  %v1435 = vunpack.c.l.b16 %v327
  %v1436 = vunpack.c.l.b16 %v328
  %v1437 = vunpack.c.l.b16 %v329
  %v1438 = vunpack.c.l.b16 %v330
  %v1439 = vunpack.c.l.b16 %v331
  %v1440 = vunpack.c.l.b16 %v332
  %v1441 = vunpack.c.l.b16 %v333
  %v1442 = vunpack.c.l.b16 %v334
  %v1443 = vunpack.c.l.b16 %v335
  %v1444 = vunpack.c.l.b16 %v336
  %v1445 = vunpack.c.l.b16 %v337
  %v1446 = vunpack.c.l.b16 %v338
  %v1447 = vunpack.c.l.b16 %v339
  %v1448 = vunpack.c.l.b16 %v340
  %v1449 = vunpack.c.l.b16 %v341
  %v1450 = vunpack.c.l.b16 %v342
  %v1451 = vunpack.c.l.b16 %v343
  %v1452 = vunpack.c.l.b16 %v344
  %v1453 = vunpack.c.l.b16 %v345
  %v1454 = vunpack.c.l.b16 %v346
  %v1455 = vunpack.c.l.b16 %v347
  %v1456 = vunpack.c.l.b16 %v348
  %v1457 = vunpack.c.l.b16 %v349
  %v1458 = vunpack.c.l.b16 %v350
  %v1459 = vunpack.c.l.b16 %v351
  %v1460 = vunpack.c.l.b16 %v352
  %v1461 = vunpack.c.l.b16 %v353
  %v1462 = vunpack.c.l.b16 %v354
  %v1463 = vunpack.c.l.b16 %v355
  %v1464 = vunpack.c.l.b16 %v356
  %v1465 = vunpack.c.l.b16 %v357
  %v1466 = vunpack.c.l.b16 %v358
  %v1467 = vunpack.c.l.b16 %v359
  %v1468 = vunpack.c.l.b16 %v360
  %v1469 = vunpack.c.l.b16 %v361
  %v1470 = vunpack.c.l.b16 %v362
  %v1471 = vunpack.c.l.b16 %v363
  %v1472 = vunpack.c.l.b16 %v364
  %v1473 = vunpack.c.l.b16 %v365
  %v1474 = vunpack.c.l.b16 %v366
  %v1475 = vunpack.c.l.b16 %v367
  %v1476 = vunpack.c.l.b16 %v368
  %v1477 = vunpack.c.l.b16 %v369
  %v1478 = vunpack.c.l.b16 %v370
  %v1479 = vunpack.c.l.b16 %v371
  %v1480 = vunpack.c.l.b16 %v372
  %v1481 = vunpack.c.l.b16 %v373
  %v1482 = vunpack.c.l.b16 %v374
  %v1483 = vunpack.c.l.b16 %v375
  %v1484 = vunpack.c.l.b16 %v376
  %v1485 = vunpack.c.l.b16 %v377
  %v1486 = vunpack.c.l.b16 %v378
  %v1487 = vunpack.c.l.b16 %v379
  %v1488 = vunpack.c.l.b16 %v380
  %v1489 = vunpack.c.l.b16 %v381
  %v1490 = vunpack.c.l.b16 %v382
  %v1491 = vunpack.c.l.b16 %v383
  %v1492 = vunpack.c.l.b16 %v384
  %v1493 = vunpack.c.l.b16 %v385
  %v1494 = vunpack.c.l.b16 %v386
  %v1495 = vunpack.c.l.b16 %v387
  %v1496 = vunpack.c.l.b16 %v388
  %v1497 = vunpack.c.l.b16 %v389
  %v1498 = vunpack.c.l.b16 %v390
  %v1499 = vunpack.c.l.b16 %v391
  %v1500 = vunpack.c.l.b16 %v392
  %v1501 = vunpack.c.l.b16 %v393
  %v1502 = vunpack.c.l.b16 %v394
  %v1503 = vunpack.c.l.b16 %v395
  %v1504 = vunpack.c.l.b16 %v396
  %v1505 = vunpack.c.l.b16 %v397
  %v1506 = vunpack.c.l.b16 %v398
  %v1507 = vunpack.c.l.b16 %v399
  %v1508 = vunpack.c.l.b16 %v400
  %v1509 = vunpack.c.l.b16 %v401
  %v1510 = vunpack.c.l.b16 %v402
  %v1511 = vunpack.c.l.b16 %v403
  %v1512 = vunpack.c.l.b16 %v404
  %v1513 = vunpack.c.l.b16 %v405
  %v1514 = vunpack.c.l.b16 %v406
  %v1515 = vunpack.c.l.b16 %v407
  %v1516 = vunpack.c.l.b16 %v408
  %v1517 = vunpack.c.l.b16 %v409
  %v1518 = vunpack.c.l.b16 %v410
  %v1519 = vunpack.c.l.b16 %v411
  %v1520 = vunpack.c.l.b16 %v412
  %v1521 = vunpack.c.l.b16 %v413
  %v1522 = vpack.c.b16 %v1123, %v1122
  %v1523 = vpack.c.b16 %v1125, %v1124
  %v1524 = vpack.c.b16 %v1127, %v1126
  %v1525 = vpack.c.b16 %v1129, %v1128
  %v1526 = vpack.c.b16 %v1131, %v1130
  %v1527 = vpack.c.b16 %v1133, %v1132
  %v1528 = vpack.c.b16 %v1135, %v1134
  %v1529 = vpack.c.b16 %v1137, %v1136
  %v1530 = vpack.c.b16 %v1139, %v1138
  %v1531 = vpack.c.b16 %v1141, %v1140
  %v1532 = vpack.c.b16 %v1143, %v1142
  %v1533 = vpack.c.b16 %v1145, %v1144
  %v1534 = vpack.c.b16 %v1147, %v1146
  %v1535 = vpack.c.b16 %v1149, %v1148
  %v1536 = vpack.c.b16 %v1151, %v1150
  %v1537 = vpack.c.b16 %v1153, %v1152
  %v1538 = vpack.c.b16 %v1155, %v1154
  %v1539 = vpack.c.b16 %v1157, %v1156
  %v1540 = vpack.c.b16 %v1159, %v1158
  %v1541 = vpack.c.b16 %v1161, %v1160
  %v1542 = vpack.c.b16 %v1163, %v1162
  %v1543 = vpack.c.b16 %v1165, %v1164
  %v1544 = vpack.c.b16 %v1167, %v1166
  %v1545 = vpack.c.b16 %v1169, %v1168
  %v1546 = vpack.c.b16 %v1171, %v1170
  %v1547 = vpack.c.b16 %v1173, %v1172
  %v1548 = vpack.c.b16 %v1175, %v1174
  %v1549 = vpack.c.b16 %v1177, %v1176
  %v1550 = vpack.c.b16 %v1179, %v1178
  %v1551 = vpack.c.b16 %v1181, %v1180
  %v1552 = vpack.c.b16 %v1183, %v1182
  %v1553 = vpack.c.b16 %v1185, %v1184
  %v1554 = vpack.c.b16 %v1187, %v1186
  %v1555 = vpack.c.b16 %v1189, %v1188
  %v1556 = vpack.c.b16 %v1191, %v1190
  %v1557 = vpack.c.b16 %v1193, %v1192
  %v1558 = vpack.c.b16 %v1195, %v1194
  %v1559 = vpack.c.b16 %v1197, %v1196
  %v1560 = vpack.c.b16 %v1199, %v1198
  %v1561 = vpack.c.b16 %v1201, %v1200
  %v1562 = vpack.c.b16 %v1203, %v1202
  %v1563 = vpack.c.b16 %v1205, %v1204
  %v1564 = vpack.c.b16 %v1207, %v1206
  %v1565 = vpack.c.b16 %v1209, %v1208
  %v1566 = vpack.c.b16 %v1211, %v1210
  %v1567 = vpack.c.b16 %v1213, %v1212
  %v1568 = vpack.c.b16 %v1215, %v1214
  %v1569 = vpack.c.b16 %v1217, %v1216
  %v1570 = vpack.c.b16 %v1219, %v1218
  %v1571 = vpack.c.b16 %v1221, %v1220
  %v1572 = vpack.c.b16 %v1223, %v1222
  %v1573 = vpack.c.b16 %v1225, %v1224
  %v1574 = vpack.c.b16 %v1227, %v1226
  %v1575 = vpack.c.b16 %v1229, %v1228
  %v1576 = vpack.c.b16 %v1231, %v1230
  %v1577 = vpack.c.b16 %v1233, %v1232
  %v1578 = vpack.c.b16 %v1235, %v1234
  %v1579 = vpack.c.b16 %v1237, %v1236
  %v1580 = vpack.c.b16 %v1239, %v1238
  %v1581 = vpack.c.b16 %v1241, %v1240
  %v1582 = vpack.c.b16 %v1243, %v1242
  %v1583 = vpack.c.b16 %v1245, %v1244
  %v1584 = vpack.c.b16 %v1247, %v1246
  %v1585 = vpack.c.b16 %v1249, %v1248
  %v1586 = vpack.c.b16 %v1251, %v1250
  %v1587 = vpack.c.b16 %v1253, %v1252
  %v1588 = vpack.c.b16 %v1255, %v1254
  %v1589 = vpack.c.b16 %v1257, %v1256
  %v1590 = vpack.c.b16 %v1259, %v1258
  %v1591 = vpack.c.b16 %v1261, %v1260
  %v1592 = vpack.c.b16 %v1263, %v1262
  %v1593 = vpack.c.b16 %v1265, %v1264
  %v1594 = vpack.c.b16 %v1267, %v1266
  %v1595 = vpack.c.b16 %v1269, %v1268
  %v1596 = vpack.c.b16 %v1271, %v1270
  %v1597 = vpack.c.b16 %v1273, %v1272
  %v1598 = vpack.c.b16 %v1275, %v1274
  %v1599 = vpack.c.b16 %v1277, %v1276
  %v1600 = vpack.c.b16 %v1279, %v1278
  %v1601 = vpack.c.b16 %v1281, %v1280
  %v1602 = vpack.c.b16 %v1283, %v1282
  %v1603 = vpack.c.b16 %v1285, %v1284
  %v1604 = vpack.c.b16 %v1287, %v1286
  %v1605 = vpack.c.b16 %v1289, %v1288
  %v1606 = vpack.c.b16 %v1291, %v1290
  %v1607 = vpack.c.b16 %v1293, %v1292
  %v1608 = vpack.c.b16 %v1295, %v1294
  %v1609 = vpack.c.b16 %v1297, %v1296
  %v1610 = vpack.c.b16 %v1299, %v1298
  %v1611 = vpack.c.b16 %v1301, %v1300
  %v1612 = vpack.c.b16 %v1303, %v1302
  %v1613 = vpack.c.b16 %v1305, %v1304
  %v1614 = vpack.c.b16 %v1307, %v1306
  %v1615 = vpack.c.b16 %v1309, %v1308
  %v1616 = vpack.c.b16 %v1311, %v1310
  %v1617 = vpack.c.b16 %v1313, %v1312
  %v1618 = vpack.c.b16 %v1315, %v1314
  %v1619 = vpack.c.b16 %v1317, %v1316
  %v1620 = vpack.c.b16 %v1319, %v1318
  %v1621 = vpack.c.b16 %v1321, %v1320
  %v1622 = vpack.c.b16 %v1323, %v1322
  %v1623 = vpack.c.b16 %v1325, %v1324
  %v1624 = vpack.c.b16 %v1327, %v1326
  %v1625 = vpack.c.b16 %v1329, %v1328
  %v1626 = vpack.c.b16 %v1331, %v1330
  %v1627 = vpack.c.b16 %v1333, %v1332
  %v1628 = vpack.c.b16 %v1335, %v1334
  %v1629 = vpack.c.b16 %v1337, %v1336
  %v1630 = vpack.c.b16 %v1339, %v1338
  %v1631 = vpack.c.b16 %v1341, %v1340
  %v1632 = vpack.c.b16 %v1343, %v1342
  %v1633 = vpack.c.b16 %v1345, %v1344
  %v1634 = vpack.c.b16 %v1347, %v1346
  %v1635 = vpack.c.b16 %v1349, %v1348
  %v1636 = vpack.c.b16 %v1351, %v1350
  %v1637 = vpack.c.b16 %v1353, %v1352
  %v1638 = vpack.c.b16 %v1355, %v1354
  %v1639 = vpack.c.b16 %v1357, %v1356
  %v1640 = vpack.c.b16 %v1359, %v1358
  %v1641 = vpack.c.b16 %v1361, %v1360
  %v1642 = vpack.c.b16 %v1363, %v1362
  %v1643 = vpack.c.b16 %v1365, %v1364
  %v1644 = vpack.c.b16 %v1367, %v1366
  %v1645 = vpack.c.b16 %v1369, %v1368
  %v1646 = vpack.c.b16 %v1371, %v1370
  %v1647 = vpack.c.b16 %v1373, %v1372
  %v1648 = vpack.c.b16 %v1375, %v1374
  %v1649 = vpack.c.b16 %v1377, %v1376
  %v1650 = vpack.c.b16 %v1379, %v1378
  %v1651 = vpack.c.b16 %v1381, %v1380
  %v1652 = vpack.c.b16 %v1383, %v1382
  %v1653 = vpack.c.b16 %v1385, %v1384
  %v1654 = vpack.c.b16 %v1387, %v1386
  %v1655 = vpack.c.b16 %v1389, %v1388
  %v1656 = vpack.c.b16 %v1391, %v1390
  %v1657 = vpack.c.b16 %v1393, %v1392
  %v1658 = vpack.c.b16 %v1395, %v1394
  %v1659 = vpack.c.b16 %v1397, %v1396
  %v1660 = vpack.c.b16 %v1399, %v1398
  %v1661 = vpack.c.b16 %v1401, %v1400
  %v1662 = vpack.c.b16 %v1403, %v1402
  %v1663 = vpack.c.b16 %v1405, %v1404
  %v1664 = vpack.c.b16 %v1407, %v1406
  %v1665 = vpack.c.b16 %v1409, %v1408
  %v1666 = vpack.c.b16 %v1411, %v1410
  %v1667 = vpack.c.b16 %v1413, %v1412
  %v1668 = vpack.c.b16 %v1415, %v1414
  %v1669 = vpack.c.b16 %v1417, %v1416
  %v1670 = vpack.c.b16 %v1419, %v1418
  %v1671 = vpack.c.b16 %v1421, %v1420
  %v1672 = vpack.c.b16 %v1423, %v1422
  %v1673 = vpack.c.b16 %v1425, %v1424
  %v1674 = vpack.c.b16 %v1427, %v1426
  %v1675 = vpack.c.b16 %v1429, %v1428
  %v1676 = vpack.c.b16 %v1431, %v1430
  %v1677 = vpack.c.b16 %v1433, %v1432
  %v1678 = vpack.c.b16 %v1435, %v1434
  %v1679 = vpack.c.b16 %v1437, %v1436
  %v1680 = vpack.c.b16 %v1439, %v1438
  %v1681 = vpack.c.b16 %v1441, %v1440
  %v1682 = vpack.c.b16 %v1443, %v1442
  %v1683 = vpack.c.b16 %v1445, %v1444
  %v1684 = vpack.c.b16 %v1447, %v1446
  %v1685 = vpack.c.b16 %v1449, %v1448
  %v1686 = vpack.c.b16 %v1451, %v1450
  %v1687 = vpack.c.b16 %v1453, %v1452
  %v1688 = vpack.c.b16 %v1455, %v1454
  %v1689 = vpack.c.b16 %v1457, %v1456
  %v1690 = vpack.c.b16 %v1459, %v1458
  %v1691 = vpack.c.b16 %v1461, %v1460
  %v1692 = vpack.c.b16 %v1463, %v1462
  %v1693 = vpack.c.b16 %v1465, %v1464
  %v1694 = vpack.c.b16 %v1467, %v1466
  %v1695 = vpack.c.b16 %v1469, %v1468
  %v1696 = vpack.c.b16 %v1471, %v1470
  %v1697 = vpack.c.b16 %v1473, %v1472
  %v1698 = vpack.c.b16 %v1475, %v1474
  %v1699 = vpack.c.b16 %v1477, %v1476
  %v1700 = vpack.c.b16 %v1479, %v1478
  %v1701 = vpack.c.b16 %v1481, %v1480
  %v1702 = vpack.c.b16 %v1483, %v1482
  %v1703 = vpack.c.b16 %v1485, %v1484
  %v1704 = vpack.c.b16 %v1487, %v1486
  %v1705 = vpack.c.b16 %v1489, %v1488
  %v1706 = vpack.c.b16 %v1491, %v1490
  %v1707 = vpack.c.b16 %v1493, %v1492
  %v1708 = vpack.c.b16 %v1495, %v1494
  %v1709 = vpack.c.b16 %v1497, %v1496
  %v1710 = vpack.c.b16 %v1499, %v1498
  %v1711 = vpack.c.b16 %v1501, %v1500
  %v1712 = vpack.c.b16 %v1503, %v1502
  %v1713 = vpack.c.b16 %v1505, %v1504
  %v1714 = vpack.c.b16 %v1507, %v1506
  %v1715 = vpack.c.b16 %v1509, %v1508
  %v1716 = vpack.c.b16 %v1511, %v1510
  %v1717 = vpack.c.b16 %v1513, %v1512
  %v1718 = vpack.c.b16 %v1515, %v1514
  %v1719 = vpack.c.b16 %v1517, %v1516
  %v1720 = vpack.c.b16 %v1519, %v1518
  %v1721 = vpack.c.b16 %v1521, %v1520
  %1922 = vmatpush.bf16.msra.mxu0 %v1529
  %1923 = vmatpush.bf16.msra.mxu0 %v1528
  %1924 = vmatpush.bf16.msra.mxu0 %v1527
  %1925 = vmatpush.bf16.msra.mxu0 %v1526
  %1926 = vmatpush.bf16.msra.mxu0 %v1525
  %1927 = vmatpush.bf16.msra.mxu0 %v1524
  %1928 = vmatpush.bf16.msra.mxu0 %v1523
  %1929 = vmatpush.bf16.msra.mxu0 %v1522
  %1930 = vmatmul.bf16.gmra.mxu0 %v622
  %v1931 = vpop.f32.mrf.mxu0
  %v1932 = vadd.f32 %v468, %v1931
  %v1933 = vpop.f32.mrf.mxu0
  %v1934 = vadd.f32 %v468, %v1933
  %1935 = vmatmul.bf16.gmra.mxu0 %v647
  %v1936 = vpop.f32.mrf.mxu0
  %v1937 = vadd.f32 %v468, %v1936
  %v1938 = vpop.f32.mrf.mxu0
  %v1939 = vadd.f32 %v468, %v1938
  %1940 = vdwg.mxu0
  %1941 = vmatpush.bf16.msra.mxu0 %v1537
  %1942 = vmatpush.bf16.msra.mxu0 %v1536
  %1943 = vmatpush.bf16.msra.mxu0 %v1535
  %1944 = vmatpush.bf16.msra.mxu0 %v1534
  %1945 = vmatpush.bf16.msra.mxu0 %v1533
  %1946 = vmatpush.bf16.msra.mxu0 %v1532
  %1947 = vmatpush.bf16.msra.mxu0 %v1531
  %1948 = vmatpush.bf16.msra.mxu0 %v1530
  %1949 = vmatmul.bf16.gmra.mxu0 %v623
  %v1950 = vpop.f32.mrf.mxu0
  %v1951 = vadd.f32 %v1932, %v1950
  %v1952 = vpop.f32.mrf.mxu0
  %v1953 = vadd.f32 %v1934, %v1952
  %1954 = vmatmul.bf16.gmra.mxu0 %v648
  %v1955 = vpop.f32.mrf.mxu0
  %v1956 = vadd.f32 %v1937, %v1955
  %v1957 = vpop.f32.mrf.mxu0
  %v1958 = vadd.f32 %v1939, %v1957
  %1959 = vdwg.mxu0
  %1960 = vmatpush.bf16.msra.mxu0 %v1545
  %1961 = vmatpush.bf16.msra.mxu0 %v1544
  %1962 = vmatpush.bf16.msra.mxu0 %v1543
  %1963 = vmatpush.bf16.msra.mxu0 %v1542
  %1964 = vmatpush.bf16.msra.mxu0 %v1541
  %1965 = vmatpush.bf16.msra.mxu0 %v1540
  %1966 = vmatpush.bf16.msra.mxu0 %v1539
  %1967 = vmatpush.bf16.msra.mxu0 %v1538
  %1968 = vmatmul.bf16.gmra.mxu0 %v624
  %v1969 = vpop.f32.mrf.mxu0
  %v1970 = vadd.f32 %v1951, %v1969
  %v1971 = vpop.f32.mrf.mxu0
  %v1972 = vadd.f32 %v1953, %v1971
  %1973 = vmatmul.bf16.gmra.mxu0 %v649
  %v1974 = vpop.f32.mrf.mxu0
  %v1975 = vadd.f32 %v1956, %v1974
  %v1976 = vpop.f32.mrf.mxu0
  %v1977 = vadd.f32 %v1958, %v1976
  %1978 = vdwg.mxu0
  %1979 = vmatpush.bf16.msra.mxu0 %v1553
  %1980 = vmatpush.bf16.msra.mxu0 %v1552
  %1981 = vmatpush.bf16.msra.mxu0 %v1551
  %1982 = vmatpush.bf16.msra.mxu0 %v1550
  %1983 = vmatpush.bf16.msra.mxu0 %v1549
  %1984 = vmatpush.bf16.msra.mxu0 %v1548
  %1985 = vmatpush.bf16.msra.mxu0 %v1547
  %1986 = vmatpush.bf16.msra.mxu0 %v1546
  %1987 = vmatmul.bf16.gmra.mxu0 %v625
  %v1988 = vpop.f32.mrf.mxu0
  %v1989 = vadd.f32 %v1970, %v1988
  %v1990 = vpop.f32.mrf.mxu0
  %v1991 = vadd.f32 %v1972, %v1990
  %1992 = vmatmul.bf16.gmra.mxu0 %v650
  %v1993 = vpop.f32.mrf.mxu0
  %v1994 = vadd.f32 %v1975, %v1993
  %v1995 = vpop.f32.mrf.mxu0
  %v1996 = vadd.f32 %v1977, %v1995
  %1997 = vdwg.mxu0
  %1998 = vmatpush.bf16.msra.mxu0 %v1561
  %1999 = vmatpush.bf16.msra.mxu0 %v1560
  %2000 = vmatpush.bf16.msra.mxu0 %v1559
  %2001 = vmatpush.bf16.msra.mxu0 %v1558
  %2002 = vmatpush.bf16.msra.mxu0 %v1557
  %2003 = vmatpush.bf16.msra.mxu0 %v1556
  %2004 = vmatpush.bf16.msra.mxu0 %v1555
  %2005 = vmatpush.bf16.msra.mxu0 %v1554
  %2006 = vmatmul.bf16.gmra.mxu0 %v626
  %v2007 = vpop.f32.mrf.mxu0
  %v2008 = vadd.f32 %v1989, %v2007
  %v2009 = vpop.f32.mrf.mxu0
  %v2010 = vadd.f32 %v1991, %v2009
  %2011 = vmatmul.bf16.gmra.mxu0 %v651
  %v2012 = vpop.f32.mrf.mxu0
  %v2013 = vadd.f32 %v1994, %v2012
  %v2014 = vpop.f32.mrf.mxu0
  %v2015 = vadd.f32 %v1996, %v2014
  %2016 = vdwg.mxu0
  %2017 = vmatpush.bf16.msra.mxu0 %v1569
  %2018 = vmatpush.bf16.msra.mxu0 %v1568
  %2019 = vmatpush.bf16.msra.mxu0 %v1567
  %2020 = vmatpush.bf16.msra.mxu0 %v1566
  %2021 = vmatpush.bf16.msra.mxu0 %v1565
  %2022 = vmatpush.bf16.msra.mxu0 %v1564
  %2023 = vmatpush.bf16.msra.mxu0 %v1563
  %2024 = vmatpush.bf16.msra.mxu0 %v1562
  %2025 = vmatmul.bf16.gmra.mxu0 %v627
  %v2026 = vpop.f32.mrf.mxu0
  %v2027 = vadd.f32 %v2008, %v2026
  %v2028 = vpop.f32.mrf.mxu0
  %v2029 = vadd.f32 %v2010, %v2028
  %2030 = vmatmul.bf16.gmra.mxu0 %v652
  %v2031 = vpop.f32.mrf.mxu0
  %v2032 = vadd.f32 %v2013, %v2031
  %v2033 = vpop.f32.mrf.mxu0
  %v2034 = vadd.f32 %v2015, %v2033
  %2035 = vdwg.mxu0
  %2036 = vmatpush.bf16.msra.mxu0 %v1577
  %2037 = vmatpush.bf16.msra.mxu0 %v1576
  %2038 = vmatpush.bf16.msra.mxu0 %v1575
  %2039 = vmatpush.bf16.msra.mxu0 %v1574
  %2040 = vmatpush.bf16.msra.mxu0 %v1573
  %2041 = vmatpush.bf16.msra.mxu0 %v1572
  %2042 = vmatpush.bf16.msra.mxu0 %v1571
  %2043 = vmatpush.bf16.msra.mxu0 %v1570
  %2044 = vmatmul.bf16.gmra.mxu0 %v628
  %v2045 = vpop.f32.mrf.mxu0
  %v2046 = vadd.f32 %v2027, %v2045
  %v2047 = vpop.f32.mrf.mxu0
  %v2048 = vadd.f32 %v2029, %v2047
  %2049 = vmatmul.bf16.gmra.mxu0 %v653
  %v2050 = vpop.f32.mrf.mxu0
  %v2051 = vadd.f32 %v2032, %v2050
  %v2052 = vpop.f32.mrf.mxu0
  %v2053 = vadd.f32 %v2034, %v2052
  %2054 = vdwg.mxu0
  %2055 = vmatpush.bf16.msra.mxu0 %v1585
  %2056 = vmatpush.bf16.msra.mxu0 %v1584
  %2057 = vmatpush.bf16.msra.mxu0 %v1583
  %2058 = vmatpush.bf16.msra.mxu0 %v1582
  %2059 = vmatpush.bf16.msra.mxu0 %v1581
  %2060 = vmatpush.bf16.msra.mxu0 %v1580
  %2061 = vmatpush.bf16.msra.mxu0 %v1579
  %2062 = vmatpush.bf16.msra.mxu0 %v1578
  %2063 = vmatmul.bf16.gmra.mxu0 %v629
  %v2064 = vpop.f32.mrf.mxu0
  %v2065 = vadd.f32 %v2046, %v2064
  %v2066 = vpop.f32.mrf.mxu0
  %v2067 = vadd.f32 %v2048, %v2066
  %2068 = vmatmul.bf16.gmra.mxu0 %v654
  %v2069 = vpop.f32.mrf.mxu0
  %v2070 = vadd.f32 %v2051, %v2069
  %v2071 = vpop.f32.mrf.mxu0
  %v2072 = vadd.f32 %v2053, %v2071
  %2073 = vdwg.mxu0
  %2074 = vmatpush.bf16.msra.mxu0 %v1593
  %2075 = vmatpush.bf16.msra.mxu0 %v1592
  %2076 = vmatpush.bf16.msra.mxu0 %v1591
  %2077 = vmatpush.bf16.msra.mxu0 %v1590
  %2078 = vmatpush.bf16.msra.mxu0 %v1589
  %2079 = vmatpush.bf16.msra.mxu0 %v1588
  %2080 = vmatpush.bf16.msra.mxu0 %v1587
  %2081 = vmatpush.bf16.msra.mxu0 %v1586
  %2082 = vmatmul.bf16.gmra.mxu0 %v630
  %v2083 = vpop.f32.mrf.mxu0
  %v2084 = vadd.f32 %v2065, %v2083
  %v2085 = vpop.f32.mrf.mxu0
  %v2086 = vadd.f32 %v2067, %v2085
  %2087 = vmatmul.bf16.gmra.mxu0 %v655
  %v2088 = vpop.f32.mrf.mxu0
  %v2089 = vadd.f32 %v2070, %v2088
  %v2090 = vpop.f32.mrf.mxu0
  %v2091 = vadd.f32 %v2072, %v2090
  %2092 = vdwg.mxu0
  %2093 = vmatpush.bf16.msra.mxu0 %v1601
  %2094 = vmatpush.bf16.msra.mxu0 %v1600
  %2095 = vmatpush.bf16.msra.mxu0 %v1599
  %2096 = vmatpush.bf16.msra.mxu0 %v1598
  %2097 = vmatpush.bf16.msra.mxu0 %v1597
  %2098 = vmatpush.bf16.msra.mxu0 %v1596
  %2099 = vmatpush.bf16.msra.mxu0 %v1595
  %2100 = vmatpush.bf16.msra.mxu0 %v1594
  %2101 = vmatmul.bf16.gmra.mxu0 %v631
  %v2102 = vpop.f32.mrf.mxu0
  %v2103 = vadd.f32 %v2084, %v2102
  %v2104 = vpop.f32.mrf.mxu0
  %v2105 = vadd.f32 %v2086, %v2104
  %2106 = vmatmul.bf16.gmra.mxu0 %v656
  %v2107 = vpop.f32.mrf.mxu0
  %v2108 = vadd.f32 %v2089, %v2107
  %v2109 = vpop.f32.mrf.mxu0
  %v2110 = vadd.f32 %v2091, %v2109
  %2111 = vdwg.mxu0
  %2112 = vmatpush.bf16.msra.mxu0 %v1609
  %2113 = vmatpush.bf16.msra.mxu0 %v1608
  %2114 = vmatpush.bf16.msra.mxu0 %v1607
  %2115 = vmatpush.bf16.msra.mxu0 %v1606
  %2116 = vmatpush.bf16.msra.mxu0 %v1605
  %2117 = vmatpush.bf16.msra.mxu0 %v1604
  %2118 = vmatpush.bf16.msra.mxu0 %v1603
  %2119 = vmatpush.bf16.msra.mxu0 %v1602
  %2120 = vmatmul.bf16.gmra.mxu0 %v632
  %v2121 = vpop.f32.mrf.mxu0
  %v2122 = vadd.f32 %v2103, %v2121
  %v2123 = vpop.f32.mrf.mxu0
  %v2124 = vadd.f32 %v2105, %v2123
  %2125 = vmatmul.bf16.gmra.mxu0 %v657
  %v2126 = vpop.f32.mrf.mxu0
  %v2127 = vadd.f32 %v2108, %v2126
  %v2128 = vpop.f32.mrf.mxu0
  %v2129 = vadd.f32 %v2110, %v2128
  %2130 = vdwg.mxu0
  %2131 = vmatpush.bf16.msra.mxu0 %v1617
  %2132 = vmatpush.bf16.msra.mxu0 %v1616
  %2133 = vmatpush.bf16.msra.mxu0 %v1615
  %2134 = vmatpush.bf16.msra.mxu0 %v1614
  %2135 = vmatpush.bf16.msra.mxu0 %v1613
  %2136 = vmatpush.bf16.msra.mxu0 %v1612
  %2137 = vmatpush.bf16.msra.mxu0 %v1611
  %2138 = vmatpush.bf16.msra.mxu0 %v1610
  %2139 = vmatmul.bf16.gmra.mxu0 %v633
  %v2140 = vpop.f32.mrf.mxu0
  %v2141 = vadd.f32 %v2122, %v2140
  %v2142 = vpop.f32.mrf.mxu0
  %v2143 = vadd.f32 %v2124, %v2142
  %2144 = vmatmul.bf16.gmra.mxu0 %v658
  %v2145 = vpop.f32.mrf.mxu0
  %v2146 = vadd.f32 %v2127, %v2145
  %v2147 = vpop.f32.mrf.mxu0
  %v2148 = vadd.f32 %v2129, %v2147
  %2149 = vdwg.mxu0
  %2150 = vmatpush.bf16.msra.mxu0 %v1625
  %2151 = vmatpush.bf16.msra.mxu0 %v1624
  %2152 = vmatpush.bf16.msra.mxu0 %v1623
  %2153 = vmatpush.bf16.msra.mxu0 %v1622
  %2154 = vmatpush.bf16.msra.mxu0 %v1621
  %2155 = vmatpush.bf16.msra.mxu0 %v1620
  %2156 = vmatpush.bf16.msra.mxu0 %v1619
  %2157 = vmatpush.bf16.msra.mxu0 %v1618
  %2158 = vmatmul.bf16.gmra.mxu0 %v634
  %v2159 = vpop.f32.mrf.mxu0
  %v2160 = vadd.f32 %v2141, %v2159
  %v2161 = vpop.f32.mrf.mxu0
  %v2162 = vadd.f32 %v2143, %v2161
  %2163 = vmatmul.bf16.gmra.mxu0 %v659
  %v2164 = vpop.f32.mrf.mxu0
  %v2165 = vadd.f32 %v2146, %v2164
  %v2166 = vpop.f32.mrf.mxu0
  %v2167 = vadd.f32 %v2148, %v2166
  %2168 = vdwg.mxu0
  %2169 = vmatpush.bf16.msra.mxu0 %v1633
  %2170 = vmatpush.bf16.msra.mxu0 %v1632
  %2171 = vmatpush.bf16.msra.mxu0 %v1631
  %2172 = vmatpush.bf16.msra.mxu0 %v1630
  %2173 = vmatpush.bf16.msra.mxu0 %v1629
  %2174 = vmatpush.bf16.msra.mxu0 %v1628
  %2175 = vmatpush.bf16.msra.mxu0 %v1627
  %2176 = vmatpush.bf16.msra.mxu0 %v1626
  %2177 = vmatmul.bf16.gmra.mxu0 %v635
  %v2178 = vpop.f32.mrf.mxu0
  %v2179 = vadd.f32 %v2160, %v2178
  %v2180 = vpop.f32.mrf.mxu0
  %v2181 = vadd.f32 %v2162, %v2180
  %2182 = vmatmul.bf16.gmra.mxu0 %v660
  %v2183 = vpop.f32.mrf.mxu0
  %v2184 = vadd.f32 %v2165, %v2183
  %v2185 = vpop.f32.mrf.mxu0
  %v2186 = vadd.f32 %v2167, %v2185
  %2187 = vdwg.mxu0
  %2188 = vmatpush.bf16.msra.mxu0 %v1641
  %2189 = vmatpush.bf16.msra.mxu0 %v1640
  %2190 = vmatpush.bf16.msra.mxu0 %v1639
  %2191 = vmatpush.bf16.msra.mxu0 %v1638
  %2192 = vmatpush.bf16.msra.mxu0 %v1637
  %2193 = vmatpush.bf16.msra.mxu0 %v1636
  %2194 = vmatpush.bf16.msra.mxu0 %v1635
  %2195 = vmatpush.bf16.msra.mxu0 %v1634
  %2196 = vmatmul.bf16.gmra.mxu0 %v636
  %v2197 = vpop.f32.mrf.mxu0
  %v2198 = vadd.f32 %v2179, %v2197
  %v2199 = vpop.f32.mrf.mxu0
  %v2200 = vadd.f32 %v2181, %v2199
  %2201 = vmatmul.bf16.gmra.mxu0 %v661
  %v2202 = vpop.f32.mrf.mxu0
  %v2203 = vadd.f32 %v2184, %v2202
  %v2204 = vpop.f32.mrf.mxu0
  %v2205 = vadd.f32 %v2186, %v2204
  %2206 = vdwg.mxu0
  %2207 = vmatpush.bf16.msra.mxu0 %v1649
  %2208 = vmatpush.bf16.msra.mxu0 %v1648
  %2209 = vmatpush.bf16.msra.mxu0 %v1647
  %2210 = vmatpush.bf16.msra.mxu0 %v1646
  %2211 = vmatpush.bf16.msra.mxu0 %v1645
  %2212 = vmatpush.bf16.msra.mxu0 %v1644
  %2213 = vmatpush.bf16.msra.mxu0 %v1643
  %2214 = vmatpush.bf16.msra.mxu0 %v1642
  %2215 = vmatmul.bf16.gmra.mxu0 %v637
  %v2216 = vpop.f32.mrf.mxu0
  %v2217 = vadd.f32 %v2198, %v2216
  %v2218 = vpop.f32.mrf.mxu0
  %v2219 = vadd.f32 %v2200, %v2218
  %2220 = vmatmul.bf16.gmra.mxu0 %v662
  %v2221 = vpop.f32.mrf.mxu0
  %v2222 = vadd.f32 %v2203, %v2221
  %v2223 = vpop.f32.mrf.mxu0
  %v2224 = vadd.f32 %v2205, %v2223
  %2225 = vdwg.mxu0
  %2226 = vmatpush.bf16.msra.mxu0 %v1657
  %2227 = vmatpush.bf16.msra.mxu0 %v1656
  %2228 = vmatpush.bf16.msra.mxu0 %v1655
  %2229 = vmatpush.bf16.msra.mxu0 %v1654
  %2230 = vmatpush.bf16.msra.mxu0 %v1653
  %2231 = vmatpush.bf16.msra.mxu0 %v1652
  %2232 = vmatpush.bf16.msra.mxu0 %v1651
  %2233 = vmatpush.bf16.msra.mxu0 %v1650
  %2234 = vmatmul.bf16.gmra.mxu0 %v638
  %v2235 = vpop.f32.mrf.mxu0
  %v2236 = vadd.f32 %v2217, %v2235
  %v2237 = vpop.f32.mrf.mxu0
  %v2238 = vadd.f32 %v2219, %v2237
  %2239 = vmatmul.bf16.gmra.mxu0 %v663
  %v2240 = vpop.f32.mrf.mxu0
  %v2241 = vadd.f32 %v2222, %v2240
  %v2242 = vpop.f32.mrf.mxu0
  %v2243 = vadd.f32 %v2224, %v2242
  %2244 = vdwg.mxu0
  %2245 = vmatpush.bf16.msra.mxu0 %v1665
  %2246 = vmatpush.bf16.msra.mxu0 %v1664
  %2247 = vmatpush.bf16.msra.mxu0 %v1663
  %2248 = vmatpush.bf16.msra.mxu0 %v1662
  %2249 = vmatpush.bf16.msra.mxu0 %v1661
  %2250 = vmatpush.bf16.msra.mxu0 %v1660
  %2251 = vmatpush.bf16.msra.mxu0 %v1659
  %2252 = vmatpush.bf16.msra.mxu0 %v1658
  %2253 = vmatmul.bf16.gmra.mxu0 %v639
  %v2254 = vpop.f32.mrf.mxu0
  %v2255 = vadd.f32 %v2236, %v2254
  %v2256 = vpop.f32.mrf.mxu0
  %v2257 = vadd.f32 %v2238, %v2256
  %2258 = vmatmul.bf16.gmra.mxu0 %v664
  %v2259 = vpop.f32.mrf.mxu0
  %v2260 = vadd.f32 %v2241, %v2259
  %v2261 = vpop.f32.mrf.mxu0
  %v2262 = vadd.f32 %v2243, %v2261
  %2263 = vdwg.mxu0
  %2264 = vmatpush.bf16.msra.mxu0 %v1673
  %2265 = vmatpush.bf16.msra.mxu0 %v1672
  %2266 = vmatpush.bf16.msra.mxu0 %v1671
  %2267 = vmatpush.bf16.msra.mxu0 %v1670
  %2268 = vmatpush.bf16.msra.mxu0 %v1669
  %2269 = vmatpush.bf16.msra.mxu0 %v1668
  %2270 = vmatpush.bf16.msra.mxu0 %v1667
  %2271 = vmatpush.bf16.msra.mxu0 %v1666
  %2272 = vmatmul.bf16.gmra.mxu0 %v640
  %v2273 = vpop.f32.mrf.mxu0
  %v2274 = vadd.f32 %v2255, %v2273
  %v2275 = vpop.f32.mrf.mxu0
  %v2276 = vadd.f32 %v2257, %v2275
  %2277 = vmatmul.bf16.gmra.mxu0 %v665
  %v2278 = vpop.f32.mrf.mxu0
  %v2279 = vadd.f32 %v2260, %v2278
  %v2280 = vpop.f32.mrf.mxu0
  %v2281 = vadd.f32 %v2262, %v2280
  %2282 = vdwg.mxu0
  %2283 = vmatpush.bf16.msra.mxu0 %v1681
  %2284 = vmatpush.bf16.msra.mxu0 %v1680
  %2285 = vmatpush.bf16.msra.mxu0 %v1679
  %2286 = vmatpush.bf16.msra.mxu0 %v1678
  %2287 = vmatpush.bf16.msra.mxu0 %v1677
  %2288 = vmatpush.bf16.msra.mxu0 %v1676
  %2289 = vmatpush.bf16.msra.mxu0 %v1675
  %2290 = vmatpush.bf16.msra.mxu0 %v1674
  %2291 = vmatmul.bf16.gmra.mxu0 %v641
  %v2292 = vpop.f32.mrf.mxu0
  %v2293 = vadd.f32 %v2274, %v2292
  %v2294 = vpop.f32.mrf.mxu0
  %v2295 = vadd.f32 %v2276, %v2294
  %2296 = vmatmul.bf16.gmra.mxu0 %v666
  %v2297 = vpop.f32.mrf.mxu0
  %v2298 = vadd.f32 %v2279, %v2297
  %v2299 = vpop.f32.mrf.mxu0
  %v2300 = vadd.f32 %v2281, %v2299
  %2301 = vdwg.mxu0
  %2302 = vmatpush.bf16.msra.mxu0 %v1689
  %2303 = vmatpush.bf16.msra.mxu0 %v1688
  %2304 = vmatpush.bf16.msra.mxu0 %v1687
  %2305 = vmatpush.bf16.msra.mxu0 %v1686
  %2306 = vmatpush.bf16.msra.mxu0 %v1685
  %2307 = vmatpush.bf16.msra.mxu0 %v1684
  %2308 = vmatpush.bf16.msra.mxu0 %v1683
  %2309 = vmatpush.bf16.msra.mxu0 %v1682
  %2310 = vmatmul.bf16.gmra.mxu0 %v642
  %v2311 = vpop.f32.mrf.mxu0
  %v2312 = vadd.f32 %v2293, %v2311
  %v2313 = vpop.f32.mrf.mxu0
  %v2314 = vadd.f32 %v2295, %v2313
  %2315 = vmatmul.bf16.gmra.mxu0 %v667
  %v2316 = vpop.f32.mrf.mxu0
  %v2317 = vadd.f32 %v2298, %v2316
  %v2318 = vpop.f32.mrf.mxu0
  %v2319 = vadd.f32 %v2300, %v2318
  %2320 = vdwg.mxu0
  %2321 = vmatpush.bf16.msra.mxu0 %v1697
  %2322 = vmatpush.bf16.msra.mxu0 %v1696
  %2323 = vmatpush.bf16.msra.mxu0 %v1695
  %2324 = vmatpush.bf16.msra.mxu0 %v1694
  %2325 = vmatpush.bf16.msra.mxu0 %v1693
  %2326 = vmatpush.bf16.msra.mxu0 %v1692
  %2327 = vmatpush.bf16.msra.mxu0 %v1691
  %2328 = vmatpush.bf16.msra.mxu0 %v1690
  %2329 = vmatmul.bf16.gmra.mxu0 %v643
  %v2330 = vpop.f32.mrf.mxu0
  %v2331 = vadd.f32 %v2312, %v2330
  %v2332 = vpop.f32.mrf.mxu0
  %v2333 = vadd.f32 %v2314, %v2332
  %2334 = vmatmul.bf16.gmra.mxu0 %v668
  %v2335 = vpop.f32.mrf.mxu0
  %v2336 = vadd.f32 %v2317, %v2335
  %v2337 = vpop.f32.mrf.mxu0
  %v2338 = vadd.f32 %v2319, %v2337
  %2339 = vdwg.mxu0
  %2340 = vmatpush.bf16.msra.mxu0 %v1705
  %2341 = vmatpush.bf16.msra.mxu0 %v1704
  %2342 = vmatpush.bf16.msra.mxu0 %v1703
  %2343 = vmatpush.bf16.msra.mxu0 %v1702
  %2344 = vmatpush.bf16.msra.mxu0 %v1701
  %2345 = vmatpush.bf16.msra.mxu0 %v1700
  %2346 = vmatpush.bf16.msra.mxu0 %v1699
  %2347 = vmatpush.bf16.msra.mxu0 %v1698
  %2348 = vmatmul.bf16.gmra.mxu0 %v644
  %v2349 = vpop.f32.mrf.mxu0
  %v2350 = vadd.f32 %v2331, %v2349
  %v2351 = vpop.f32.mrf.mxu0
  %v2352 = vadd.f32 %v2333, %v2351
  %2353 = vmatmul.bf16.gmra.mxu0 %v669
  %v2354 = vpop.f32.mrf.mxu0
  %v2355 = vadd.f32 %v2336, %v2354
  %v2356 = vpop.f32.mrf.mxu0
  %v2357 = vadd.f32 %v2338, %v2356
  %2358 = vdwg.mxu0
  %2359 = vmatpush.bf16.msra.mxu0 %v1713
  %2360 = vmatpush.bf16.msra.mxu0 %v1712
  %2361 = vmatpush.bf16.msra.mxu0 %v1711
  %2362 = vmatpush.bf16.msra.mxu0 %v1710
  %2363 = vmatpush.bf16.msra.mxu0 %v1709
  %2364 = vmatpush.bf16.msra.mxu0 %v1708
  %2365 = vmatpush.bf16.msra.mxu0 %v1707
  %2366 = vmatpush.bf16.msra.mxu0 %v1706
  %2367 = vmatmul.bf16.gmra.mxu0 %v645
  %v2368 = vpop.f32.mrf.mxu0
  %v2369 = vadd.f32 %v2350, %v2368
  %v2370 = vpop.f32.mrf.mxu0
  %v2371 = vadd.f32 %v2352, %v2370
  %2372 = vmatmul.bf16.gmra.mxu0 %v670
  %v2373 = vpop.f32.mrf.mxu0
  %v2374 = vadd.f32 %v2355, %v2373
  %v2375 = vpop.f32.mrf.mxu0
  %v2376 = vadd.f32 %v2357, %v2375
  %2377 = vdwg.mxu0
  %2378 = vmatpush.bf16.msra.mxu0 %v1721
  %2379 = vmatpush.bf16.msra.mxu0 %v1720
  %2380 = vmatpush.bf16.msra.mxu0 %v1719
  %2381 = vmatpush.bf16.msra.mxu0 %v1718
  %2382 = vmatpush.bf16.msra.mxu0 %v1717
  %2383 = vmatpush.bf16.msra.mxu0 %v1716
  %2384 = vmatpush.bf16.msra.mxu0 %v1715
  %2385 = vmatpush.bf16.msra.mxu0 %v1714
  %2386 = vmatmul.bf16.gmra.mxu0 %v646
  %v2387 = vpop.f32.mrf.mxu0
  %v2388 = vadd.f32 %v2369, %v2387
  %v2389 = vpop.f32.mrf.mxu0
  %v2390 = vadd.f32 %v2371, %v2389
  %2391 = vmatmul.bf16.gmra.mxu0 %v671
  %v2392 = vpop.f32.mrf.mxu0
  %v2393 = vadd.f32 %v2374, %v2392
  %v2394 = vpop.f32.mrf.mxu0
  %v2395 = vadd.f32 %v2376, %v2394
  %2396 = vdwg.mxu0
  %v2397 = vmax.f32 %v2388, 0.0
  %v2398 = vmax.f32 %v2390, 0.0
  %v2399 = vmax.f32 %v2393, 0.0
  %v2400 = vmax.f32 %v2395, 0.0
  %s2401 = scalar_lea.vmem %s0, 400
  %v2402 = vld [vmem:[%s2401] sm:$0xff]
  %v2403 = vld [vmem:[%s2401 + $0x8] sm:$0xff]
  %v2404 = vld [vmem:[%s2401 + $0x10] sm:$0xff]
  %v2405 = vld [vmem:[%s2401 + $0x18] sm:$0xff]
  %v2406 = vld [vmem:[%s2401 + $0x20] sm:$0xff]
  %v2407 = vld [vmem:[%s2401 + $0x28] sm:$0xff]
  %v2408 = vld [vmem:[%s2401 + $0x30] sm:$0xff]
  %v2409 = vld [vmem:[%s2401 + $0x38] sm:$0xff]
  %v2410 = vld [vmem:[%s2401 + $0x40] sm:$0xff]
  %v2411 = vld [vmem:[%s2401 + $0x48] sm:$0xff]
  %v2412 = vld [vmem:[%s2401 + $0x50] sm:$0xff]
  %v2413 = vld [vmem:[%s2401 + $0x58] sm:$0xff]
  %v2414 = vld [vmem:[%s2401 + $0x60] sm:$0xf]
  %v2415 = vld [vmem:[%s2401 + $0x64] sm:$0xff]
  %v2416 = vld [vmem:[%s2401 + $0x6c] sm:$0xff]
  %v2417 = vld [vmem:[%s2401 + $0x74] sm:$0xff]
  %v2418 = vld [vmem:[%s2401 + $0x7c] sm:$0xff]
  %v2419 = vld [vmem:[%s2401 + $0x84] sm:$0xff]
  %v2420 = vld [vmem:[%s2401 + $0x8c] sm:$0xff]
  %v2421 = vld [vmem:[%s2401 + $0x94] sm:$0xff]
  %v2422 = vld [vmem:[%s2401 + $0x9c] sm:$0xff]
  %v2423 = vld [vmem:[%s2401 + $0xa4] sm:$0xff]
  %v2424 = vld [vmem:[%s2401 + $0xac] sm:$0xff]
  %v2425 = vld [vmem:[%s2401 + $0xb4] sm:$0xff]
  %v2426 = vld [vmem:[%s2401 + $0xbc] sm:$0xff]
  %v2427 = vld [vmem:[%s2401 + $0xc4] sm:$0xf]
  %v2428 = vld [vmem:[%s2401 + $0xc8] sm:$0xff]
  %v2429 = vld [vmem:[%s2401 + $0xd0] sm:$0xff]
  %v2430 = vld [vmem:[%s2401 + $0xd8] sm:$0xff]
  %v2431 = vld [vmem:[%s2401 + $0xe0] sm:$0xff]
  %v2432 = vld [vmem:[%s2401 + $0xe8] sm:$0xff]
  %v2433 = vld [vmem:[%s2401 + $0xf0] sm:$0xff]
  %v2434 = vld [vmem:[%s2401 + $0xf8] sm:$0xff]
  %v2435 = vld [vmem:[%s2401 + $0x100] sm:$0xff]
  %v2436 = vld [vmem:[%s2401 + $0x108] sm:$0xff]
  %v2437 = vld [vmem:[%s2401 + $0x110] sm:$0xff]
  %v2438 = vld [vmem:[%s2401 + $0x118] sm:$0xff]
  %v2439 = vld [vmem:[%s2401 + $0x120] sm:$0xff]
  %v2440 = vld [vmem:[%s2401 + $0x128] sm:$0xf]
  %v2441 = vld [vmem:[%s2401 + $0x12c] sm:$0xff]
  %v2442 = vld [vmem:[%s2401 + $0x134] sm:$0xff]
  %v2443 = vld [vmem:[%s2401 + $0x13c] sm:$0xff]
  %v2444 = vld [vmem:[%s2401 + $0x144] sm:$0xff]
  %v2445 = vld [vmem:[%s2401 + $0x14c] sm:$0xff]
  %v2446 = vld [vmem:[%s2401 + $0x154] sm:$0xff]
  %v2447 = vld [vmem:[%s2401 + $0x15c] sm:$0xff]
  %v2448 = vld [vmem:[%s2401 + $0x164] sm:$0xff]
  %v2449 = vld [vmem:[%s2401 + $0x16c] sm:$0xff]
  %v2450 = vld [vmem:[%s2401 + $0x174] sm:$0xff]
  %v2451 = vld [vmem:[%s2401 + $0x17c] sm:$0xff]
  %v2452 = vld [vmem:[%s2401 + $0x184] sm:$0xff]
  %v2453 = vld [vmem:[%s2401 + $0x18c] sm:$0xf]
  %v2506 = vunpack.c.l.b16 %v2402
  %v2507 = vunpack.c.h.b16 %v2402
  %v2508 = vunpack.c.l.b16 %v2403
  %v2509 = vunpack.c.h.b16 %v2403
  %v2510 = vunpack.c.l.b16 %v2404
  %v2511 = vunpack.c.h.b16 %v2404
  %v2512 = vunpack.c.l.b16 %v2405
  %v2513 = vunpack.c.h.b16 %v2405
  %v2514 = vunpack.c.l.b16 %v2406
  %v2515 = vunpack.c.h.b16 %v2406
  %v2516 = vunpack.c.l.b16 %v2407
  %v2517 = vunpack.c.h.b16 %v2407
  %v2518 = vunpack.c.l.b16 %v2408
  %v2519 = vunpack.c.h.b16 %v2408
  %v2520 = vunpack.c.l.b16 %v2409
  %v2521 = vunpack.c.h.b16 %v2409
  %v2522 = vunpack.c.l.b16 %v2410
  %v2523 = vunpack.c.h.b16 %v2410
  %v2524 = vunpack.c.l.b16 %v2411
  %v2525 = vunpack.c.h.b16 %v2411
  %v2526 = vunpack.c.l.b16 %v2412
  %v2527 = vunpack.c.h.b16 %v2412
  %v2528 = vunpack.c.l.b16 %v2413
  %v2529 = vunpack.c.h.b16 %v2413
  %v2530 = vunpack.c.l.b16 %v2414
  %v2531 = vunpack.c.l.b16 %v2415
  %v2532 = vunpack.c.h.b16 %v2415
  %v2533 = vunpack.c.l.b16 %v2416
  %v2534 = vunpack.c.h.b16 %v2416
  %v2535 = vunpack.c.l.b16 %v2417
  %v2536 = vunpack.c.h.b16 %v2417
  %v2537 = vunpack.c.l.b16 %v2418
  %v2538 = vunpack.c.h.b16 %v2418
  %v2539 = vunpack.c.l.b16 %v2419
  %v2540 = vunpack.c.h.b16 %v2419
  %v2541 = vunpack.c.l.b16 %v2420
  %v2542 = vunpack.c.h.b16 %v2420
  %v2543 = vunpack.c.l.b16 %v2421
  %v2544 = vunpack.c.h.b16 %v2421
  %v2545 = vunpack.c.l.b16 %v2422
  %v2546 = vunpack.c.h.b16 %v2422
  %v2547 = vunpack.c.l.b16 %v2423
  %v2548 = vunpack.c.h.b16 %v2423
  %v2549 = vunpack.c.l.b16 %v2424
  %v2550 = vunpack.c.h.b16 %v2424
  %v2551 = vunpack.c.l.b16 %v2425
  %v2552 = vunpack.c.h.b16 %v2425
  %v2553 = vunpack.c.l.b16 %v2426
  %v2554 = vunpack.c.h.b16 %v2426
  %v2555 = vunpack.c.l.b16 %v2427
  %v2556 = vunpack.c.l.b16 %v2428
  %v2557 = vunpack.c.h.b16 %v2428
  %v2558 = vunpack.c.l.b16 %v2429
  %v2559 = vunpack.c.h.b16 %v2429
  %v2560 = vunpack.c.l.b16 %v2430
  %v2561 = vunpack.c.h.b16 %v2430
  %v2562 = vunpack.c.l.b16 %v2431
  %v2563 = vunpack.c.h.b16 %v2431
  %v2564 = vunpack.c.l.b16 %v2432
  %v2565 = vunpack.c.h.b16 %v2432
  %v2566 = vunpack.c.l.b16 %v2433
  %v2567 = vunpack.c.h.b16 %v2433
  %v2568 = vunpack.c.l.b16 %v2434
  %v2569 = vunpack.c.h.b16 %v2434
  %v2570 = vunpack.c.l.b16 %v2435
  %v2571 = vunpack.c.h.b16 %v2435
  %v2572 = vunpack.c.l.b16 %v2436
  %v2573 = vunpack.c.h.b16 %v2436
  %v2574 = vunpack.c.l.b16 %v2437
  %v2575 = vunpack.c.h.b16 %v2437
  %v2576 = vunpack.c.l.b16 %v2438
  %v2577 = vunpack.c.h.b16 %v2438
  %v2578 = vunpack.c.l.b16 %v2439
  %v2579 = vunpack.c.h.b16 %v2439
  %v2580 = vunpack.c.l.b16 %v2440
  %v2581 = vunpack.c.l.b16 %v2441
  %v2582 = vunpack.c.h.b16 %v2441
  %v2583 = vunpack.c.l.b16 %v2442
  %v2584 = vunpack.c.h.b16 %v2442
  %v2585 = vunpack.c.l.b16 %v2443
  %v2586 = vunpack.c.h.b16 %v2443
  %v2587 = vunpack.c.l.b16 %v2444
  %v2588 = vunpack.c.h.b16 %v2444
  %v2589 = vunpack.c.l.b16 %v2445
  %v2590 = vunpack.c.h.b16 %v2445
  %v2591 = vunpack.c.l.b16 %v2446
  %v2592 = vunpack.c.h.b16 %v2446
  %v2593 = vunpack.c.l.b16 %v2447
  %v2594 = vunpack.c.h.b16 %v2447
  %v2595 = vunpack.c.l.b16 %v2448
  %v2596 = vunpack.c.h.b16 %v2448
  %v2597 = vunpack.c.l.b16 %v2449
  %v2598 = vunpack.c.h.b16 %v2449
  %v2599 = vunpack.c.l.b16 %v2450
  %v2600 = vunpack.c.h.b16 %v2450
  %v2601 = vunpack.c.l.b16 %v2451
  %v2602 = vunpack.c.h.b16 %v2451
  %v2603 = vunpack.c.l.b16 %v2452
  %v2604 = vunpack.c.h.b16 %v2452
  %v2605 = vunpack.c.l.b16 %v2453
  %v2606 = vpack.c.b16 %v2531, %v2506
  %v2607 = vpack.c.b16 %v2532, %v2507
  %v2608 = vpack.c.b16 %v2533, %v2508
  %v2609 = vpack.c.b16 %v2534, %v2509
  %v2610 = vpack.c.b16 %v2535, %v2510
  %v2611 = vpack.c.b16 %v2536, %v2511
  %v2612 = vpack.c.b16 %v2537, %v2512
  %v2613 = vpack.c.b16 %v2538, %v2513
  %v2614 = vpack.c.b16 %v2539, %v2514
  %v2615 = vpack.c.b16 %v2540, %v2515
  %v2616 = vpack.c.b16 %v2541, %v2516
  %v2617 = vpack.c.b16 %v2542, %v2517
  %v2618 = vpack.c.b16 %v2543, %v2518
  %v2619 = vpack.c.b16 %v2544, %v2519
  %v2620 = vpack.c.b16 %v2545, %v2520
  %v2621 = vpack.c.b16 %v2546, %v2521
  %v2622 = vpack.c.b16 %v2547, %v2522
  %v2623 = vpack.c.b16 %v2548, %v2523
  %v2624 = vpack.c.b16 %v2549, %v2524
  %v2625 = vpack.c.b16 %v2550, %v2525
  %v2626 = vpack.c.b16 %v2551, %v2526
  %v2627 = vpack.c.b16 %v2552, %v2527
  %v2628 = vpack.c.b16 %v2553, %v2528
  %v2629 = vpack.c.b16 %v2554, %v2529
  %v2630 = vpack.c.b16 %v2555, %v2530
  %v2631 = vpack.c.b16 %v2581, %v2556
  %v2632 = vpack.c.b16 %v2582, %v2557
  %v2633 = vpack.c.b16 %v2583, %v2558
  %v2634 = vpack.c.b16 %v2584, %v2559
  %v2635 = vpack.c.b16 %v2585, %v2560
  %v2636 = vpack.c.b16 %v2586, %v2561
  %v2637 = vpack.c.b16 %v2587, %v2562
  %v2638 = vpack.c.b16 %v2588, %v2563
  %v2639 = vpack.c.b16 %v2589, %v2564
  %v2640 = vpack.c.b16 %v2590, %v2565
  %v2641 = vpack.c.b16 %v2591, %v2566
  %v2642 = vpack.c.b16 %v2592, %v2567
  %v2643 = vpack.c.b16 %v2593, %v2568
  %v2644 = vpack.c.b16 %v2594, %v2569
  %v2645 = vpack.c.b16 %v2595, %v2570
  %v2646 = vpack.c.b16 %v2596, %v2571
  %v2647 = vpack.c.b16 %v2597, %v2572
  %v2648 = vpack.c.b16 %v2598, %v2573
  %v2649 = vpack.c.b16 %v2599, %v2574
  %v2650 = vpack.c.b16 %v2600, %v2575
  %v2651 = vpack.c.b16 %v2601, %v2576
  %v2652 = vpack.c.b16 %v2602, %v2577
  %v2653 = vpack.c.b16 %v2603, %v2578
  %v2654 = vpack.c.b16 %v2604, %v2579
  %v2655 = vpack.c.b16 %v2605, %v2580
  %2706 = vmatpush.bf16.msra.mxu0 %v1529
  %2707 = vmatpush.bf16.msra.mxu0 %v1528
  %2708 = vmatpush.bf16.msra.mxu0 %v1527
  %2709 = vmatpush.bf16.msra.mxu0 %v1526
  %2710 = vmatpush.bf16.msra.mxu0 %v1525
  %2711 = vmatpush.bf16.msra.mxu0 %v1524
  %2712 = vmatpush.bf16.msra.mxu0 %v1523
  %2713 = vmatpush.bf16.msra.mxu0 %v1522
  %2714 = vmatmul.bf16.gmra.mxu0 %v2606
  %v2715 = vpop.f32.mrf.mxu0
  %v2716 = vadd.f32 %v468, %v2715
  %v2717 = vpop.f32.mrf.mxu0
  %v2718 = vadd.f32 %v468, %v2717
  %2719 = vmatmul.bf16.gmra.mxu0 %v2631
  %v2720 = vpop.f32.mrf.mxu0
  %v2721 = vadd.f32 %v468, %v2720
  %v2722 = vpop.f32.mrf.mxu0
  %v2723 = vadd.f32 %v468, %v2722
  %2724 = vdwg.mxu0
  %2725 = vmatpush.bf16.msra.mxu0 %v1537
  %2726 = vmatpush.bf16.msra.mxu0 %v1536
  %2727 = vmatpush.bf16.msra.mxu0 %v1535
  %2728 = vmatpush.bf16.msra.mxu0 %v1534
  %2729 = vmatpush.bf16.msra.mxu0 %v1533
  %2730 = vmatpush.bf16.msra.mxu0 %v1532
  %2731 = vmatpush.bf16.msra.mxu0 %v1531
  %2732 = vmatpush.bf16.msra.mxu0 %v1530
  %2733 = vmatmul.bf16.gmra.mxu0 %v2607
  %v2734 = vpop.f32.mrf.mxu0
  %v2735 = vadd.f32 %v2716, %v2734
  %v2736 = vpop.f32.mrf.mxu0
  %v2737 = vadd.f32 %v2718, %v2736
  %2738 = vmatmul.bf16.gmra.mxu0 %v2632
  %v2739 = vpop.f32.mrf.mxu0
  %v2740 = vadd.f32 %v2721, %v2739
  %v2741 = vpop.f32.mrf.mxu0
  %v2742 = vadd.f32 %v2723, %v2741
  %2743 = vdwg.mxu0
  %2744 = vmatpush.bf16.msra.mxu0 %v1545
  %2745 = vmatpush.bf16.msra.mxu0 %v1544
  %2746 = vmatpush.bf16.msra.mxu0 %v1543
  %2747 = vmatpush.bf16.msra.mxu0 %v1542
  %2748 = vmatpush.bf16.msra.mxu0 %v1541
  %2749 = vmatpush.bf16.msra.mxu0 %v1540
  %2750 = vmatpush.bf16.msra.mxu0 %v1539
  %2751 = vmatpush.bf16.msra.mxu0 %v1538
  %2752 = vmatmul.bf16.gmra.mxu0 %v2608
  %v2753 = vpop.f32.mrf.mxu0
  %v2754 = vadd.f32 %v2735, %v2753
  %v2755 = vpop.f32.mrf.mxu0
  %v2756 = vadd.f32 %v2737, %v2755
  %2757 = vmatmul.bf16.gmra.mxu0 %v2633
  %v2758 = vpop.f32.mrf.mxu0
  %v2759 = vadd.f32 %v2740, %v2758
  %v2760 = vpop.f32.mrf.mxu0
  %v2761 = vadd.f32 %v2742, %v2760
  %2762 = vdwg.mxu0
  %2763 = vmatpush.bf16.msra.mxu0 %v1553
  %2764 = vmatpush.bf16.msra.mxu0 %v1552
  %2765 = vmatpush.bf16.msra.mxu0 %v1551
  %2766 = vmatpush.bf16.msra.mxu0 %v1550
  %2767 = vmatpush.bf16.msra.mxu0 %v1549
  %2768 = vmatpush.bf16.msra.mxu0 %v1548
  %2769 = vmatpush.bf16.msra.mxu0 %v1547
  %2770 = vmatpush.bf16.msra.mxu0 %v1546
  %2771 = vmatmul.bf16.gmra.mxu0 %v2609
  %v2772 = vpop.f32.mrf.mxu0
  %v2773 = vadd.f32 %v2754, %v2772
  %v2774 = vpop.f32.mrf.mxu0
  %v2775 = vadd.f32 %v2756, %v2774
  %2776 = vmatmul.bf16.gmra.mxu0 %v2634
  %v2777 = vpop.f32.mrf.mxu0
  %v2778 = vadd.f32 %v2759, %v2777
  %v2779 = vpop.f32.mrf.mxu0
  %v2780 = vadd.f32 %v2761, %v2779
  %2781 = vdwg.mxu0
  %2782 = vmatpush.bf16.msra.mxu0 %v1561
  %2783 = vmatpush.bf16.msra.mxu0 %v1560
  %2784 = vmatpush.bf16.msra.mxu0 %v1559
  %2785 = vmatpush.bf16.msra.mxu0 %v1558
  %2786 = vmatpush.bf16.msra.mxu0 %v1557
  %2787 = vmatpush.bf16.msra.mxu0 %v1556
  %2788 = vmatpush.bf16.msra.mxu0 %v1555
  %2789 = vmatpush.bf16.msra.mxu0 %v1554
  %2790 = vmatmul.bf16.gmra.mxu0 %v2610
  %v2791 = vpop.f32.mrf.mxu0
  %v2792 = vadd.f32 %v2773, %v2791
  %v2793 = vpop.f32.mrf.mxu0
  %v2794 = vadd.f32 %v2775, %v2793
  %2795 = vmatmul.bf16.gmra.mxu0 %v2635
  %v2796 = vpop.f32.mrf.mxu0
  %v2797 = vadd.f32 %v2778, %v2796
  %v2798 = vpop.f32.mrf.mxu0
  %v2799 = vadd.f32 %v2780, %v2798
  %2800 = vdwg.mxu0
  %2801 = vmatpush.bf16.msra.mxu0 %v1569
  %2802 = vmatpush.bf16.msra.mxu0 %v1568
  %2803 = vmatpush.bf16.msra.mxu0 %v1567
  %2804 = vmatpush.bf16.msra.mxu0 %v1566
  %2805 = vmatpush.bf16.msra.mxu0 %v1565
  %2806 = vmatpush.bf16.msra.mxu0 %v1564
  %2807 = vmatpush.bf16.msra.mxu0 %v1563
  %2808 = vmatpush.bf16.msra.mxu0 %v1562
  %2809 = vmatmul.bf16.gmra.mxu0 %v2611
  %v2810 = vpop.f32.mrf.mxu0
  %v2811 = vadd.f32 %v2792, %v2810
  %v2812 = vpop.f32.mrf.mxu0
  %v2813 = vadd.f32 %v2794, %v2812
  %2814 = vmatmul.bf16.gmra.mxu0 %v2636
  %v2815 = vpop.f32.mrf.mxu0
  %v2816 = vadd.f32 %v2797, %v2815
  %v2817 = vpop.f32.mrf.mxu0
  %v2818 = vadd.f32 %v2799, %v2817
  %2819 = vdwg.mxu0
  %2820 = vmatpush.bf16.msra.mxu0 %v1577
  %2821 = vmatpush.bf16.msra.mxu0 %v1576
  %2822 = vmatpush.bf16.msra.mxu0 %v1575
  %2823 = vmatpush.bf16.msra.mxu0 %v1574
  %2824 = vmatpush.bf16.msra.mxu0 %v1573
  %2825 = vmatpush.bf16.msra.mxu0 %v1572
  %2826 = vmatpush.bf16.msra.mxu0 %v1571
  %2827 = vmatpush.bf16.msra.mxu0 %v1570
  %2828 = vmatmul.bf16.gmra.mxu0 %v2612
  %v2829 = vpop.f32.mrf.mxu0
  %v2830 = vadd.f32 %v2811, %v2829
  %v2831 = vpop.f32.mrf.mxu0
  %v2832 = vadd.f32 %v2813, %v2831
  %2833 = vmatmul.bf16.gmra.mxu0 %v2637
  %v2834 = vpop.f32.mrf.mxu0
  %v2835 = vadd.f32 %v2816, %v2834
  %v2836 = vpop.f32.mrf.mxu0
  %v2837 = vadd.f32 %v2818, %v2836
  %2838 = vdwg.mxu0
  %2839 = vmatpush.bf16.msra.mxu0 %v1585
  %2840 = vmatpush.bf16.msra.mxu0 %v1584
  %2841 = vmatpush.bf16.msra.mxu0 %v1583
  %2842 = vmatpush.bf16.msra.mxu0 %v1582
  %2843 = vmatpush.bf16.msra.mxu0 %v1581
  %2844 = vmatpush.bf16.msra.mxu0 %v1580
  %2845 = vmatpush.bf16.msra.mxu0 %v1579
  %2846 = vmatpush.bf16.msra.mxu0 %v1578
  %2847 = vmatmul.bf16.gmra.mxu0 %v2613
  %v2848 = vpop.f32.mrf.mxu0
  %v2849 = vadd.f32 %v2830, %v2848
  %v2850 = vpop.f32.mrf.mxu0
  %v2851 = vadd.f32 %v2832, %v2850
  %2852 = vmatmul.bf16.gmra.mxu0 %v2638
  %v2853 = vpop.f32.mrf.mxu0
  %v2854 = vadd.f32 %v2835, %v2853
  %v2855 = vpop.f32.mrf.mxu0
  %v2856 = vadd.f32 %v2837, %v2855
  %2857 = vdwg.mxu0
  %2858 = vmatpush.bf16.msra.mxu0 %v1593
  %2859 = vmatpush.bf16.msra.mxu0 %v1592
  %2860 = vmatpush.bf16.msra.mxu0 %v1591
  %2861 = vmatpush.bf16.msra.mxu0 %v1590
  %2862 = vmatpush.bf16.msra.mxu0 %v1589
  %2863 = vmatpush.bf16.msra.mxu0 %v1588
  %2864 = vmatpush.bf16.msra.mxu0 %v1587
  %2865 = vmatpush.bf16.msra.mxu0 %v1586
  %2866 = vmatmul.bf16.gmra.mxu0 %v2614
  %v2867 = vpop.f32.mrf.mxu0
  %v2868 = vadd.f32 %v2849, %v2867
  %v2869 = vpop.f32.mrf.mxu0
  %v2870 = vadd.f32 %v2851, %v2869
  %2871 = vmatmul.bf16.gmra.mxu0 %v2639
  %v2872 = vpop.f32.mrf.mxu0
  %v2873 = vadd.f32 %v2854, %v2872
  %v2874 = vpop.f32.mrf.mxu0
  %v2875 = vadd.f32 %v2856, %v2874
  %2876 = vdwg.mxu0
  %2877 = vmatpush.bf16.msra.mxu0 %v1601
  %2878 = vmatpush.bf16.msra.mxu0 %v1600
  %2879 = vmatpush.bf16.msra.mxu0 %v1599
  %2880 = vmatpush.bf16.msra.mxu0 %v1598
  %2881 = vmatpush.bf16.msra.mxu0 %v1597
  %2882 = vmatpush.bf16.msra.mxu0 %v1596
  %2883 = vmatpush.bf16.msra.mxu0 %v1595
  %2884 = vmatpush.bf16.msra.mxu0 %v1594
  %2885 = vmatmul.bf16.gmra.mxu0 %v2615
  %v2886 = vpop.f32.mrf.mxu0
  %v2887 = vadd.f32 %v2868, %v2886
  %v2888 = vpop.f32.mrf.mxu0
  %v2889 = vadd.f32 %v2870, %v2888
  %2890 = vmatmul.bf16.gmra.mxu0 %v2640
  %v2891 = vpop.f32.mrf.mxu0
  %v2892 = vadd.f32 %v2873, %v2891
  %v2893 = vpop.f32.mrf.mxu0
  %v2894 = vadd.f32 %v2875, %v2893
  %2895 = vdwg.mxu0
  %2896 = vmatpush.bf16.msra.mxu0 %v1609
  %2897 = vmatpush.bf16.msra.mxu0 %v1608
  %2898 = vmatpush.bf16.msra.mxu0 %v1607
  %2899 = vmatpush.bf16.msra.mxu0 %v1606
  %2900 = vmatpush.bf16.msra.mxu0 %v1605
  %2901 = vmatpush.bf16.msra.mxu0 %v1604
  %2902 = vmatpush.bf16.msra.mxu0 %v1603
  %2903 = vmatpush.bf16.msra.mxu0 %v1602
  %2904 = vmatmul.bf16.gmra.mxu0 %v2616
  %v2905 = vpop.f32.mrf.mxu0
  %v2906 = vadd.f32 %v2887, %v2905
  %v2907 = vpop.f32.mrf.mxu0
  %v2908 = vadd.f32 %v2889, %v2907
  %2909 = vmatmul.bf16.gmra.mxu0 %v2641
  %v2910 = vpop.f32.mrf.mxu0
  %v2911 = vadd.f32 %v2892, %v2910
  %v2912 = vpop.f32.mrf.mxu0
  %v2913 = vadd.f32 %v2894, %v2912
  %2914 = vdwg.mxu0
  %2915 = vmatpush.bf16.msra.mxu0 %v1617
  %2916 = vmatpush.bf16.msra.mxu0 %v1616
  %2917 = vmatpush.bf16.msra.mxu0 %v1615
  %2918 = vmatpush.bf16.msra.mxu0 %v1614
  %2919 = vmatpush.bf16.msra.mxu0 %v1613
  %2920 = vmatpush.bf16.msra.mxu0 %v1612
  %2921 = vmatpush.bf16.msra.mxu0 %v1611
  %2922 = vmatpush.bf16.msra.mxu0 %v1610
  %2923 = vmatmul.bf16.gmra.mxu0 %v2617
  %v2924 = vpop.f32.mrf.mxu0
  %v2925 = vadd.f32 %v2906, %v2924
  %v2926 = vpop.f32.mrf.mxu0
  %v2927 = vadd.f32 %v2908, %v2926
  %2928 = vmatmul.bf16.gmra.mxu0 %v2642
  %v2929 = vpop.f32.mrf.mxu0
  %v2930 = vadd.f32 %v2911, %v2929
  %v2931 = vpop.f32.mrf.mxu0
  %v2932 = vadd.f32 %v2913, %v2931
  %2933 = vdwg.mxu0
  %2934 = vmatpush.bf16.msra.mxu0 %v1625
  %2935 = vmatpush.bf16.msra.mxu0 %v1624
  %2936 = vmatpush.bf16.msra.mxu0 %v1623
  %2937 = vmatpush.bf16.msra.mxu0 %v1622
  %2938 = vmatpush.bf16.msra.mxu0 %v1621
  %2939 = vmatpush.bf16.msra.mxu0 %v1620
  %2940 = vmatpush.bf16.msra.mxu0 %v1619
  %2941 = vmatpush.bf16.msra.mxu0 %v1618
  %2942 = vmatmul.bf16.gmra.mxu0 %v2618
  %v2943 = vpop.f32.mrf.mxu0
  %v2944 = vadd.f32 %v2925, %v2943
  %v2945 = vpop.f32.mrf.mxu0
  %v2946 = vadd.f32 %v2927, %v2945
  %2947 = vmatmul.bf16.gmra.mxu0 %v2643
  %v2948 = vpop.f32.mrf.mxu0
  %v2949 = vadd.f32 %v2930, %v2948
  %v2950 = vpop.f32.mrf.mxu0
  %v2951 = vadd.f32 %v2932, %v2950
  %2952 = vdwg.mxu0
  %2953 = vmatpush.bf16.msra.mxu0 %v1633
  %2954 = vmatpush.bf16.msra.mxu0 %v1632
  %2955 = vmatpush.bf16.msra.mxu0 %v1631
  %2956 = vmatpush.bf16.msra.mxu0 %v1630
  %2957 = vmatpush.bf16.msra.mxu0 %v1629
  %2958 = vmatpush.bf16.msra.mxu0 %v1628
  %2959 = vmatpush.bf16.msra.mxu0 %v1627
  %2960 = vmatpush.bf16.msra.mxu0 %v1626
  %2961 = vmatmul.bf16.gmra.mxu0 %v2619
  %v2962 = vpop.f32.mrf.mxu0
  %v2963 = vadd.f32 %v2944, %v2962
  %v2964 = vpop.f32.mrf.mxu0
  %v2965 = vadd.f32 %v2946, %v2964
  %2966 = vmatmul.bf16.gmra.mxu0 %v2644
  %v2967 = vpop.f32.mrf.mxu0
  %v2968 = vadd.f32 %v2949, %v2967
  %v2969 = vpop.f32.mrf.mxu0
  %v2970 = vadd.f32 %v2951, %v2969
  %2971 = vdwg.mxu0
  %2972 = vmatpush.bf16.msra.mxu0 %v1641
  %2973 = vmatpush.bf16.msra.mxu0 %v1640
  %2974 = vmatpush.bf16.msra.mxu0 %v1639
  %2975 = vmatpush.bf16.msra.mxu0 %v1638
  %2976 = vmatpush.bf16.msra.mxu0 %v1637
  %2977 = vmatpush.bf16.msra.mxu0 %v1636
  %2978 = vmatpush.bf16.msra.mxu0 %v1635
  %2979 = vmatpush.bf16.msra.mxu0 %v1634
  %2980 = vmatmul.bf16.gmra.mxu0 %v2620
  %v2981 = vpop.f32.mrf.mxu0
  %v2982 = vadd.f32 %v2963, %v2981
  %v2983 = vpop.f32.mrf.mxu0
  %v2984 = vadd.f32 %v2965, %v2983
  %2985 = vmatmul.bf16.gmra.mxu0 %v2645
  %v2986 = vpop.f32.mrf.mxu0
  %v2987 = vadd.f32 %v2968, %v2986
  %v2988 = vpop.f32.mrf.mxu0
  %v2989 = vadd.f32 %v2970, %v2988
  %2990 = vdwg.mxu0
  %2991 = vmatpush.bf16.msra.mxu0 %v1649
  %2992 = vmatpush.bf16.msra.mxu0 %v1648
  %2993 = vmatpush.bf16.msra.mxu0 %v1647
  %2994 = vmatpush.bf16.msra.mxu0 %v1646
  %2995 = vmatpush.bf16.msra.mxu0 %v1645
  %2996 = vmatpush.bf16.msra.mxu0 %v1644
  %2997 = vmatpush.bf16.msra.mxu0 %v1643
  %2998 = vmatpush.bf16.msra.mxu0 %v1642
  %2999 = vmatmul.bf16.gmra.mxu0 %v2621
  %v3000 = vpop.f32.mrf.mxu0
  %v3001 = vadd.f32 %v2982, %v3000
  %v3002 = vpop.f32.mrf.mxu0
  %v3003 = vadd.f32 %v2984, %v3002
  %3004 = vmatmul.bf16.gmra.mxu0 %v2646
  %v3005 = vpop.f32.mrf.mxu0
  %v3006 = vadd.f32 %v2987, %v3005
  %v3007 = vpop.f32.mrf.mxu0
  %v3008 = vadd.f32 %v2989, %v3007
  %3009 = vdwg.mxu0
  %3010 = vmatpush.bf16.msra.mxu0 %v1657
  %3011 = vmatpush.bf16.msra.mxu0 %v1656
  %3012 = vmatpush.bf16.msra.mxu0 %v1655
  %3013 = vmatpush.bf16.msra.mxu0 %v1654
  %3014 = vmatpush.bf16.msra.mxu0 %v1653
  %3015 = vmatpush.bf16.msra.mxu0 %v1652
  %3016 = vmatpush.bf16.msra.mxu0 %v1651
  %3017 = vmatpush.bf16.msra.mxu0 %v1650
  %3018 = vmatmul.bf16.gmra.mxu0 %v2622
  %v3019 = vpop.f32.mrf.mxu0
  %v3020 = vadd.f32 %v3001, %v3019
  %v3021 = vpop.f32.mrf.mxu0
  %v3022 = vadd.f32 %v3003, %v3021
  %3023 = vmatmul.bf16.gmra.mxu0 %v2647
  %v3024 = vpop.f32.mrf.mxu0
  %v3025 = vadd.f32 %v3006, %v3024
  %v3026 = vpop.f32.mrf.mxu0
  %v3027 = vadd.f32 %v3008, %v3026
  %3028 = vdwg.mxu0
  %3029 = vmatpush.bf16.msra.mxu0 %v1665
  %3030 = vmatpush.bf16.msra.mxu0 %v1664
  %3031 = vmatpush.bf16.msra.mxu0 %v1663
  %3032 = vmatpush.bf16.msra.mxu0 %v1662
  %3033 = vmatpush.bf16.msra.mxu0 %v1661
  %3034 = vmatpush.bf16.msra.mxu0 %v1660
  %3035 = vmatpush.bf16.msra.mxu0 %v1659
  %3036 = vmatpush.bf16.msra.mxu0 %v1658
  %3037 = vmatmul.bf16.gmra.mxu0 %v2623
  %v3038 = vpop.f32.mrf.mxu0
  %v3039 = vadd.f32 %v3020, %v3038
  %v3040 = vpop.f32.mrf.mxu0
  %v3041 = vadd.f32 %v3022, %v3040
  %3042 = vmatmul.bf16.gmra.mxu0 %v2648
  %v3043 = vpop.f32.mrf.mxu0
  %v3044 = vadd.f32 %v3025, %v3043
  %v3045 = vpop.f32.mrf.mxu0
  %v3046 = vadd.f32 %v3027, %v3045
  %3047 = vdwg.mxu0
  %3048 = vmatpush.bf16.msra.mxu0 %v1673
  %3049 = vmatpush.bf16.msra.mxu0 %v1672
  %3050 = vmatpush.bf16.msra.mxu0 %v1671
  %3051 = vmatpush.bf16.msra.mxu0 %v1670
  %3052 = vmatpush.bf16.msra.mxu0 %v1669
  %3053 = vmatpush.bf16.msra.mxu0 %v1668
  %3054 = vmatpush.bf16.msra.mxu0 %v1667
  %3055 = vmatpush.bf16.msra.mxu0 %v1666
  %3056 = vmatmul.bf16.gmra.mxu0 %v2624
  %v3057 = vpop.f32.mrf.mxu0
  %v3058 = vadd.f32 %v3039, %v3057
  %v3059 = vpop.f32.mrf.mxu0
  %v3060 = vadd.f32 %v3041, %v3059
  %3061 = vmatmul.bf16.gmra.mxu0 %v2649
  %v3062 = vpop.f32.mrf.mxu0
  %v3063 = vadd.f32 %v3044, %v3062
  %v3064 = vpop.f32.mrf.mxu0
  %v3065 = vadd.f32 %v3046, %v3064
  %3066 = vdwg.mxu0
  %3067 = vmatpush.bf16.msra.mxu0 %v1681
  %3068 = vmatpush.bf16.msra.mxu0 %v1680
  %3069 = vmatpush.bf16.msra.mxu0 %v1679
  %3070 = vmatpush.bf16.msra.mxu0 %v1678
  %3071 = vmatpush.bf16.msra.mxu0 %v1677
  %3072 = vmatpush.bf16.msra.mxu0 %v1676
  %3073 = vmatpush.bf16.msra.mxu0 %v1675
  %3074 = vmatpush.bf16.msra.mxu0 %v1674
  %3075 = vmatmul.bf16.gmra.mxu0 %v2625
  %v3076 = vpop.f32.mrf.mxu0
  %v3077 = vadd.f32 %v3058, %v3076
  %v3078 = vpop.f32.mrf.mxu0
  %v3079 = vadd.f32 %v3060, %v3078
  %3080 = vmatmul.bf16.gmra.mxu0 %v2650
  %v3081 = vpop.f32.mrf.mxu0
  %v3082 = vadd.f32 %v3063, %v3081
  %v3083 = vpop.f32.mrf.mxu0
  %v3084 = vadd.f32 %v3065, %v3083
  %3085 = vdwg.mxu0
  %3086 = vmatpush.bf16.msra.mxu0 %v1689
  %3087 = vmatpush.bf16.msra.mxu0 %v1688
  %3088 = vmatpush.bf16.msra.mxu0 %v1687
  %3089 = vmatpush.bf16.msra.mxu0 %v1686
  %3090 = vmatpush.bf16.msra.mxu0 %v1685
  %3091 = vmatpush.bf16.msra.mxu0 %v1684
  %3092 = vmatpush.bf16.msra.mxu0 %v1683
  %3093 = vmatpush.bf16.msra.mxu0 %v1682
  %3094 = vmatmul.bf16.gmra.mxu0 %v2626
  %v3095 = vpop.f32.mrf.mxu0
  %v3096 = vadd.f32 %v3077, %v3095
  %v3097 = vpop.f32.mrf.mxu0
  %v3098 = vadd.f32 %v3079, %v3097
  %3099 = vmatmul.bf16.gmra.mxu0 %v2651
  %v3100 = vpop.f32.mrf.mxu0
  %v3101 = vadd.f32 %v3082, %v3100
  %v3102 = vpop.f32.mrf.mxu0
  %v3103 = vadd.f32 %v3084, %v3102
  %3104 = vdwg.mxu0
  %3105 = vmatpush.bf16.msra.mxu0 %v1697
  %3106 = vmatpush.bf16.msra.mxu0 %v1696
  %3107 = vmatpush.bf16.msra.mxu0 %v1695
  %3108 = vmatpush.bf16.msra.mxu0 %v1694
  %3109 = vmatpush.bf16.msra.mxu0 %v1693
  %3110 = vmatpush.bf16.msra.mxu0 %v1692
  %3111 = vmatpush.bf16.msra.mxu0 %v1691
  %3112 = vmatpush.bf16.msra.mxu0 %v1690
  %3113 = vmatmul.bf16.gmra.mxu0 %v2627
  %v3114 = vpop.f32.mrf.mxu0
  %v3115 = vadd.f32 %v3096, %v3114
  %v3116 = vpop.f32.mrf.mxu0
  %v3117 = vadd.f32 %v3098, %v3116
  %3118 = vmatmul.bf16.gmra.mxu0 %v2652
  %v3119 = vpop.f32.mrf.mxu0
  %v3120 = vadd.f32 %v3101, %v3119
  %v3121 = vpop.f32.mrf.mxu0
  %v3122 = vadd.f32 %v3103, %v3121
  %3123 = vdwg.mxu0
  %3124 = vmatpush.bf16.msra.mxu0 %v1705
  %3125 = vmatpush.bf16.msra.mxu0 %v1704
  %3126 = vmatpush.bf16.msra.mxu0 %v1703
  %3127 = vmatpush.bf16.msra.mxu0 %v1702
  %3128 = vmatpush.bf16.msra.mxu0 %v1701
  %3129 = vmatpush.bf16.msra.mxu0 %v1700
  %3130 = vmatpush.bf16.msra.mxu0 %v1699
  %3131 = vmatpush.bf16.msra.mxu0 %v1698
  %3132 = vmatmul.bf16.gmra.mxu0 %v2628
  %v3133 = vpop.f32.mrf.mxu0
  %v3134 = vadd.f32 %v3115, %v3133
  %v3135 = vpop.f32.mrf.mxu0
  %v3136 = vadd.f32 %v3117, %v3135
  %3137 = vmatmul.bf16.gmra.mxu0 %v2653
  %v3138 = vpop.f32.mrf.mxu0
  %v3139 = vadd.f32 %v3120, %v3138
  %v3140 = vpop.f32.mrf.mxu0
  %v3141 = vadd.f32 %v3122, %v3140
  %3142 = vdwg.mxu0
  %3143 = vmatpush.bf16.msra.mxu0 %v1713
  %3144 = vmatpush.bf16.msra.mxu0 %v1712
  %3145 = vmatpush.bf16.msra.mxu0 %v1711
  %3146 = vmatpush.bf16.msra.mxu0 %v1710
  %3147 = vmatpush.bf16.msra.mxu0 %v1709
  %3148 = vmatpush.bf16.msra.mxu0 %v1708
  %3149 = vmatpush.bf16.msra.mxu0 %v1707
  %3150 = vmatpush.bf16.msra.mxu0 %v1706
  %3151 = vmatmul.bf16.gmra.mxu0 %v2629
  %v3152 = vpop.f32.mrf.mxu0
  %v3153 = vadd.f32 %v3134, %v3152
  %v3154 = vpop.f32.mrf.mxu0
  %v3155 = vadd.f32 %v3136, %v3154
  %3156 = vmatmul.bf16.gmra.mxu0 %v2654
  %v3157 = vpop.f32.mrf.mxu0
  %v3158 = vadd.f32 %v3139, %v3157
  %v3159 = vpop.f32.mrf.mxu0
  %v3160 = vadd.f32 %v3141, %v3159
  %3161 = vdwg.mxu0
  %3162 = vmatpush.bf16.msra.mxu0 %v1721
  %3163 = vmatpush.bf16.msra.mxu0 %v1720
  %3164 = vmatpush.bf16.msra.mxu0 %v1719
  %3165 = vmatpush.bf16.msra.mxu0 %v1718
  %3166 = vmatpush.bf16.msra.mxu0 %v1717
  %3167 = vmatpush.bf16.msra.mxu0 %v1716
  %3168 = vmatpush.bf16.msra.mxu0 %v1715
  %3169 = vmatpush.bf16.msra.mxu0 %v1714
  %3170 = vmatmul.bf16.gmra.mxu0 %v2630
  %v3171 = vpop.f32.mrf.mxu0
  %v3172 = vadd.f32 %v3153, %v3171
  %v3173 = vpop.f32.mrf.mxu0
  %v3174 = vadd.f32 %v3155, %v3173
  %3175 = vmatmul.bf16.gmra.mxu0 %v2655
  %v3176 = vpop.f32.mrf.mxu0
  %v3177 = vadd.f32 %v3158, %v3176
  %v3178 = vpop.f32.mrf.mxu0
  %v3179 = vadd.f32 %v3160, %v3178
  %3180 = vdwg.mxu0
  %v3181 = vmax.f32 %v3172, 0.0
  %v3182 = vmax.f32 %v3174, 0.0
  %v3183 = vmax.f32 %v3177, 0.0
  %v3184 = vmax.f32 %v3179, 0.0
  %v3185 = vmax.f32 %v2397, %v3181
  %v3186 = vmax.f32 %v2398, %v3182
  %v3187 = vmax.f32 %v2399, %v3183
  %v3188 = vmax.f32 %v2400, %v3184
  %s3189 = scalar_lea.vmem %s0, 800
  %v3190 = vld [vmem:[%s3189] sm:$0xff]
  %v3191 = vld [vmem:[%s3189 + $0x8] sm:$0xff]
  %v3192 = vld [vmem:[%s3189 + $0x10] sm:$0xff]
  %v3193 = vld [vmem:[%s3189 + $0x18] sm:$0xff]
  %v3194 = vld [vmem:[%s3189 + $0x20] sm:$0xff]
  %v3195 = vld [vmem:[%s3189 + $0x28] sm:$0xff]
  %v3196 = vld [vmem:[%s3189 + $0x30] sm:$0xff]
  %v3197 = vld [vmem:[%s3189 + $0x38] sm:$0xff]
  %v3198 = vld [vmem:[%s3189 + $0x40] sm:$0xff]
  %v3199 = vld [vmem:[%s3189 + $0x48] sm:$0xff]
  %v3200 = vld [vmem:[%s3189 + $0x50] sm:$0xff]
  %v3201 = vld [vmem:[%s3189 + $0x58] sm:$0xff]
  %v3202 = vld [vmem:[%s3189 + $0x60] sm:$0xf]
  %v3203 = vld [vmem:[%s3189 + $0x64] sm:$0xff]
  %v3204 = vld [vmem:[%s3189 + $0x6c] sm:$0xff]
  %v3205 = vld [vmem:[%s3189 + $0x74] sm:$0xff]
  %v3206 = vld [vmem:[%s3189 + $0x7c] sm:$0xff]
  %v3207 = vld [vmem:[%s3189 + $0x84] sm:$0xff]
  %v3208 = vld [vmem:[%s3189 + $0x8c] sm:$0xff]
  %v3209 = vld [vmem:[%s3189 + $0x94] sm:$0xff]
  %v3210 = vld [vmem:[%s3189 + $0x9c] sm:$0xff]
  %v3211 = vld [vmem:[%s3189 + $0xa4] sm:$0xff]
  %v3212 = vld [vmem:[%s3189 + $0xac] sm:$0xff]
  %v3213 = vld [vmem:[%s3189 + $0xb4] sm:$0xff]
  %v3214 = vld [vmem:[%s3189 + $0xbc] sm:$0xff]
  %v3215 = vld [vmem:[%s3189 + $0xc4] sm:$0xf]
  %v3216 = vld [vmem:[%s3189 + $0xc8] sm:$0xff]
  %v3217 = vld [vmem:[%s3189 + $0xd0] sm:$0xff]
  %v3218 = vld [vmem:[%s3189 + $0xd8] sm:$0xff]
  %v3219 = vld [vmem:[%s3189 + $0xe0] sm:$0xff]
  %v3220 = vld [vmem:[%s3189 + $0xe8] sm:$0xff]
  %v3221 = vld [vmem:[%s3189 + $0xf0] sm:$0xff]
  %v3222 = vld [vmem:[%s3189 + $0xf8] sm:$0xff]
  %v3223 = vld [vmem:[%s3189 + $0x100] sm:$0xff]
  %v3224 = vld [vmem:[%s3189 + $0x108] sm:$0xff]
  %v3225 = vld [vmem:[%s3189 + $0x110] sm:$0xff]
  %v3226 = vld [vmem:[%s3189 + $0x118] sm:$0xff]
  %v3227 = vld [vmem:[%s3189 + $0x120] sm:$0xff]
  %v3228 = vld [vmem:[%s3189 + $0x128] sm:$0xf]
  %v3229 = vld [vmem:[%s3189 + $0x12c] sm:$0xff]
  %v3230 = vld [vmem:[%s3189 + $0x134] sm:$0xff]
  %v3231 = vld [vmem:[%s3189 + $0x13c] sm:$0xff]
  %v3232 = vld [vmem:[%s3189 + $0x144] sm:$0xff]
  %v3233 = vld [vmem:[%s3189 + $0x14c] sm:$0xff]
  %v3234 = vld [vmem:[%s3189 + $0x154] sm:$0xff]
  %v3235 = vld [vmem:[%s3189 + $0x15c] sm:$0xff]
  %v3236 = vld [vmem:[%s3189 + $0x164] sm:$0xff]
  %v3237 = vld [vmem:[%s3189 + $0x16c] sm:$0xff]
  %v3238 = vld [vmem:[%s3189 + $0x174] sm:$0xff]
  %v3239 = vld [vmem:[%s3189 + $0x17c] sm:$0xff]
  %v3240 = vld [vmem:[%s3189 + $0x184] sm:$0xff]
  %v3241 = vld [vmem:[%s3189 + $0x18c] sm:$0xf]
  %v3294 = vunpack.c.l.b16 %v3190
  %v3295 = vunpack.c.h.b16 %v3190
  %v3296 = vunpack.c.l.b16 %v3191
  %v3297 = vunpack.c.h.b16 %v3191
  %v3298 = vunpack.c.l.b16 %v3192
  %v3299 = vunpack.c.h.b16 %v3192
  %v3300 = vunpack.c.l.b16 %v3193
  %v3301 = vunpack.c.h.b16 %v3193
  %v3302 = vunpack.c.l.b16 %v3194
  %v3303 = vunpack.c.h.b16 %v3194
  %v3304 = vunpack.c.l.b16 %v3195
  %v3305 = vunpack.c.h.b16 %v3195
  %v3306 = vunpack.c.l.b16 %v3196
  %v3307 = vunpack.c.h.b16 %v3196
  %v3308 = vunpack.c.l.b16 %v3197
  %v3309 = vunpack.c.h.b16 %v3197
  %v3310 = vunpack.c.l.b16 %v3198
  %v3311 = vunpack.c.h.b16 %v3198
  %v3312 = vunpack.c.l.b16 %v3199
  %v3313 = vunpack.c.h.b16 %v3199
  %v3314 = vunpack.c.l.b16 %v3200
  %v3315 = vunpack.c.h.b16 %v3200
  %v3316 = vunpack.c.l.b16 %v3201
  %v3317 = vunpack.c.h.b16 %v3201
  %v3318 = vunpack.c.l.b16 %v3202
  %v3319 = vunpack.c.l.b16 %v3203
  %v3320 = vunpack.c.h.b16 %v3203
  %v3321 = vunpack.c.l.b16 %v3204
  %v3322 = vunpack.c.h.b16 %v3204
  %v3323 = vunpack.c.l.b16 %v3205
  %v3324 = vunpack.c.h.b16 %v3205
  %v3325 = vunpack.c.l.b16 %v3206
  %v3326 = vunpack.c.h.b16 %v3206
  %v3327 = vunpack.c.l.b16 %v3207
  %v3328 = vunpack.c.h.b16 %v3207
  %v3329 = vunpack.c.l.b16 %v3208
  %v3330 = vunpack.c.h.b16 %v3208
  %v3331 = vunpack.c.l.b16 %v3209
  %v3332 = vunpack.c.h.b16 %v3209
  %v3333 = vunpack.c.l.b16 %v3210
  %v3334 = vunpack.c.h.b16 %v3210
  %v3335 = vunpack.c.l.b16 %v3211
  %v3336 = vunpack.c.h.b16 %v3211
  %v3337 = vunpack.c.l.b16 %v3212
  %v3338 = vunpack.c.h.b16 %v3212
  %v3339 = vunpack.c.l.b16 %v3213
  %v3340 = vunpack.c.h.b16 %v3213
  %v3341 = vunpack.c.l.b16 %v3214
  %v3342 = vunpack.c.h.b16 %v3214
  %v3343 = vunpack.c.l.b16 %v3215
  %v3344 = vunpack.c.l.b16 %v3216
  %v3345 = vunpack.c.h.b16 %v3216
  %v3346 = vunpack.c.l.b16 %v3217
  %v3347 = vunpack.c.h.b16 %v3217
  %v3348 = vunpack.c.l.b16 %v3218
  %v3349 = vunpack.c.h.b16 %v3218
  %v3350 = vunpack.c.l.b16 %v3219
  %v3351 = vunpack.c.h.b16 %v3219
  %v3352 = vunpack.c.l.b16 %v3220
  %v3353 = vunpack.c.h.b16 %v3220
  %v3354 = vunpack.c.l.b16 %v3221
  %v3355 = vunpack.c.h.b16 %v3221
  %v3356 = vunpack.c.l.b16 %v3222
  %v3357 = vunpack.c.h.b16 %v3222
  %v3358 = vunpack.c.l.b16 %v3223
  %v3359 = vunpack.c.h.b16 %v3223
  %v3360 = vunpack.c.l.b16 %v3224
  %v3361 = vunpack.c.h.b16 %v3224
  %v3362 = vunpack.c.l.b16 %v3225
  %v3363 = vunpack.c.h.b16 %v3225
  %v3364 = vunpack.c.l.b16 %v3226
  %v3365 = vunpack.c.h.b16 %v3226
  %v3366 = vunpack.c.l.b16 %v3227
  %v3367 = vunpack.c.h.b16 %v3227
  %v3368 = vunpack.c.l.b16 %v3228
  %v3369 = vunpack.c.l.b16 %v3229
  %v3370 = vunpack.c.h.b16 %v3229
  %v3371 = vunpack.c.l.b16 %v3230
  %v3372 = vunpack.c.h.b16 %v3230
  %v3373 = vunpack.c.l.b16 %v3231
  %v3374 = vunpack.c.h.b16 %v3231
  %v3375 = vunpack.c.l.b16 %v3232
  %v3376 = vunpack.c.h.b16 %v3232
  %v3377 = vunpack.c.l.b16 %v3233
  %v3378 = vunpack.c.h.b16 %v3233
  %v3379 = vunpack.c.l.b16 %v3234
  %v3380 = vunpack.c.h.b16 %v3234
  %v3381 = vunpack.c.l.b16 %v3235
  %v3382 = vunpack.c.h.b16 %v3235
  %v3383 = vunpack.c.l.b16 %v3236
  %v3384 = vunpack.c.h.b16 %v3236
  %v3385 = vunpack.c.l.b16 %v3237
  %v3386 = vunpack.c.h.b16 %v3237
  %v3387 = vunpack.c.l.b16 %v3238
  %v3388 = vunpack.c.h.b16 %v3238
  %v3389 = vunpack.c.l.b16 %v3239
  %v3390 = vunpack.c.h.b16 %v3239
  %v3391 = vunpack.c.l.b16 %v3240
  %v3392 = vunpack.c.h.b16 %v3240
  %v3393 = vunpack.c.l.b16 %v3241
  %v3394 = vpack.c.b16 %v3319, %v3294
  %v3395 = vpack.c.b16 %v3320, %v3295
  %v3396 = vpack.c.b16 %v3321, %v3296
  %v3397 = vpack.c.b16 %v3322, %v3297
  %v3398 = vpack.c.b16 %v3323, %v3298
  %v3399 = vpack.c.b16 %v3324, %v3299
  %v3400 = vpack.c.b16 %v3325, %v3300
  %v3401 = vpack.c.b16 %v3326, %v3301
  %v3402 = vpack.c.b16 %v3327, %v3302
  %v3403 = vpack.c.b16 %v3328, %v3303
  %v3404 = vpack.c.b16 %v3329, %v3304
  %v3405 = vpack.c.b16 %v3330, %v3305
  %v3406 = vpack.c.b16 %v3331, %v3306
  %v3407 = vpack.c.b16 %v3332, %v3307
  %v3408 = vpack.c.b16 %v3333, %v3308
  %v3409 = vpack.c.b16 %v3334, %v3309
  %v3410 = vpack.c.b16 %v3335, %v3310
  %v3411 = vpack.c.b16 %v3336, %v3311
  %v3412 = vpack.c.b16 %v3337, %v3312
  %v3413 = vpack.c.b16 %v3338, %v3313
  %v3414 = vpack.c.b16 %v3339, %v3314
  %v3415 = vpack.c.b16 %v3340, %v3315
  %v3416 = vpack.c.b16 %v3341, %v3316
  %v3417 = vpack.c.b16 %v3342, %v3317
  %v3418 = vpack.c.b16 %v3343, %v3318
  %v3419 = vpack.c.b16 %v3369, %v3344
  %v3420 = vpack.c.b16 %v3370, %v3345
  %v3421 = vpack.c.b16 %v3371, %v3346
  %v3422 = vpack.c.b16 %v3372, %v3347
  %v3423 = vpack.c.b16 %v3373, %v3348
  %v3424 = vpack.c.b16 %v3374, %v3349
  %v3425 = vpack.c.b16 %v3375, %v3350
  %v3426 = vpack.c.b16 %v3376, %v3351
  %v3427 = vpack.c.b16 %v3377, %v3352
  %v3428 = vpack.c.b16 %v3378, %v3353
  %v3429 = vpack.c.b16 %v3379, %v3354
  %v3430 = vpack.c.b16 %v3380, %v3355
  %v3431 = vpack.c.b16 %v3381, %v3356
  %v3432 = vpack.c.b16 %v3382, %v3357
  %v3433 = vpack.c.b16 %v3383, %v3358
  %v3434 = vpack.c.b16 %v3384, %v3359
  %v3435 = vpack.c.b16 %v3385, %v3360
  %v3436 = vpack.c.b16 %v3386, %v3361
  %v3437 = vpack.c.b16 %v3387, %v3362
  %v3438 = vpack.c.b16 %v3388, %v3363
  %v3439 = vpack.c.b16 %v3389, %v3364
  %v3440 = vpack.c.b16 %v3390, %v3365
  %v3441 = vpack.c.b16 %v3391, %v3366
  %v3442 = vpack.c.b16 %v3392, %v3367
  %v3443 = vpack.c.b16 %v3393, %v3368
  %3494 = vmatpush.bf16.msra.mxu0 %v1529
  %3495 = vmatpush.bf16.msra.mxu0 %v1528
  %3496 = vmatpush.bf16.msra.mxu0 %v1527
  %3497 = vmatpush.bf16.msra.mxu0 %v1526
  %3498 = vmatpush.bf16.msra.mxu0 %v1525
  %3499 = vmatpush.bf16.msra.mxu0 %v1524
  %3500 = vmatpush.bf16.msra.mxu0 %v1523
  %3501 = vmatpush.bf16.msra.mxu0 %v1522
  %3502 = vmatmul.bf16.gmra.mxu0 %v3394
  %v3503 = vpop.f32.mrf.mxu0
  %v3504 = vadd.f32 %v468, %v3503
  %v3505 = vpop.f32.mrf.mxu0
  %v3506 = vadd.f32 %v468, %v3505
  %3507 = vmatmul.bf16.gmra.mxu0 %v3419
  %v3508 = vpop.f32.mrf.mxu0
  %v3509 = vadd.f32 %v468, %v3508
  %v3510 = vpop.f32.mrf.mxu0
  %v3511 = vadd.f32 %v468, %v3510
  %3512 = vdwg.mxu0
  %3513 = vmatpush.bf16.msra.mxu0 %v1537
  %3514 = vmatpush.bf16.msra.mxu0 %v1536
  %3515 = vmatpush.bf16.msra.mxu0 %v1535
  %3516 = vmatpush.bf16.msra.mxu0 %v1534
  %3517 = vmatpush.bf16.msra.mxu0 %v1533
  %3518 = vmatpush.bf16.msra.mxu0 %v1532
  %3519 = vmatpush.bf16.msra.mxu0 %v1531
  %3520 = vmatpush.bf16.msra.mxu0 %v1530
  %3521 = vmatmul.bf16.gmra.mxu0 %v3395
  %v3522 = vpop.f32.mrf.mxu0
  %v3523 = vadd.f32 %v3504, %v3522
  %v3524 = vpop.f32.mrf.mxu0
  %v3525 = vadd.f32 %v3506, %v3524
  %3526 = vmatmul.bf16.gmra.mxu0 %v3420
  %v3527 = vpop.f32.mrf.mxu0
  %v3528 = vadd.f32 %v3509, %v3527
  %v3529 = vpop.f32.mrf.mxu0
  %v3530 = vadd.f32 %v3511, %v3529
  %3531 = vdwg.mxu0
  %3532 = vmatpush.bf16.msra.mxu0 %v1545
  %3533 = vmatpush.bf16.msra.mxu0 %v1544
  %3534 = vmatpush.bf16.msra.mxu0 %v1543
  %3535 = vmatpush.bf16.msra.mxu0 %v1542
  %3536 = vmatpush.bf16.msra.mxu0 %v1541
  %3537 = vmatpush.bf16.msra.mxu0 %v1540
  %3538 = vmatpush.bf16.msra.mxu0 %v1539
  %3539 = vmatpush.bf16.msra.mxu0 %v1538
  %3540 = vmatmul.bf16.gmra.mxu0 %v3396
  %v3541 = vpop.f32.mrf.mxu0
  %v3542 = vadd.f32 %v3523, %v3541
  %v3543 = vpop.f32.mrf.mxu0
  %v3544 = vadd.f32 %v3525, %v3543
  %3545 = vmatmul.bf16.gmra.mxu0 %v3421
  %v3546 = vpop.f32.mrf.mxu0
  %v3547 = vadd.f32 %v3528, %v3546
  %v3548 = vpop.f32.mrf.mxu0
  %v3549 = vadd.f32 %v3530, %v3548
  %3550 = vdwg.mxu0
  %3551 = vmatpush.bf16.msra.mxu0 %v1553
  %3552 = vmatpush.bf16.msra.mxu0 %v1552
  %3553 = vmatpush.bf16.msra.mxu0 %v1551
  %3554 = vmatpush.bf16.msra.mxu0 %v1550
  %3555 = vmatpush.bf16.msra.mxu0 %v1549
  %3556 = vmatpush.bf16.msra.mxu0 %v1548
  %3557 = vmatpush.bf16.msra.mxu0 %v1547
  %3558 = vmatpush.bf16.msra.mxu0 %v1546
  %3559 = vmatmul.bf16.gmra.mxu0 %v3397
  %v3560 = vpop.f32.mrf.mxu0
  %v3561 = vadd.f32 %v3542, %v3560
  %v3562 = vpop.f32.mrf.mxu0
  %v3563 = vadd.f32 %v3544, %v3562
  %3564 = vmatmul.bf16.gmra.mxu0 %v3422
  %v3565 = vpop.f32.mrf.mxu0
  %v3566 = vadd.f32 %v3547, %v3565
  %v3567 = vpop.f32.mrf.mxu0
  %v3568 = vadd.f32 %v3549, %v3567
  %3569 = vdwg.mxu0
  %3570 = vmatpush.bf16.msra.mxu0 %v1561
  %3571 = vmatpush.bf16.msra.mxu0 %v1560
  %3572 = vmatpush.bf16.msra.mxu0 %v1559
  %3573 = vmatpush.bf16.msra.mxu0 %v1558
  %3574 = vmatpush.bf16.msra.mxu0 %v1557
  %3575 = vmatpush.bf16.msra.mxu0 %v1556
  %3576 = vmatpush.bf16.msra.mxu0 %v1555
  %3577 = vmatpush.bf16.msra.mxu0 %v1554
  %3578 = vmatmul.bf16.gmra.mxu0 %v3398
  %v3579 = vpop.f32.mrf.mxu0
  %v3580 = vadd.f32 %v3561, %v3579
  %v3581 = vpop.f32.mrf.mxu0
  %v3582 = vadd.f32 %v3563, %v3581
  %3583 = vmatmul.bf16.gmra.mxu0 %v3423
  %v3584 = vpop.f32.mrf.mxu0
  %v3585 = vadd.f32 %v3566, %v3584
  %v3586 = vpop.f32.mrf.mxu0
  %v3587 = vadd.f32 %v3568, %v3586
  %3588 = vdwg.mxu0
  %3589 = vmatpush.bf16.msra.mxu0 %v1569
  %3590 = vmatpush.bf16.msra.mxu0 %v1568
  %3591 = vmatpush.bf16.msra.mxu0 %v1567
  %3592 = vmatpush.bf16.msra.mxu0 %v1566
  %3593 = vmatpush.bf16.msra.mxu0 %v1565
  %3594 = vmatpush.bf16.msra.mxu0 %v1564
  %3595 = vmatpush.bf16.msra.mxu0 %v1563
  %3596 = vmatpush.bf16.msra.mxu0 %v1562
  %3597 = vmatmul.bf16.gmra.mxu0 %v3399
  %v3598 = vpop.f32.mrf.mxu0
  %v3599 = vadd.f32 %v3580, %v3598
  %v3600 = vpop.f32.mrf.mxu0
  %v3601 = vadd.f32 %v3582, %v3600
  %3602 = vmatmul.bf16.gmra.mxu0 %v3424
  %v3603 = vpop.f32.mrf.mxu0
  %v3604 = vadd.f32 %v3585, %v3603
  %v3605 = vpop.f32.mrf.mxu0
  %v3606 = vadd.f32 %v3587, %v3605
  %3607 = vdwg.mxu0
  %3608 = vmatpush.bf16.msra.mxu0 %v1577
  %3609 = vmatpush.bf16.msra.mxu0 %v1576
  %3610 = vmatpush.bf16.msra.mxu0 %v1575
  %3611 = vmatpush.bf16.msra.mxu0 %v1574
  %3612 = vmatpush.bf16.msra.mxu0 %v1573
  %3613 = vmatpush.bf16.msra.mxu0 %v1572
  %3614 = vmatpush.bf16.msra.mxu0 %v1571
  %3615 = vmatpush.bf16.msra.mxu0 %v1570
  %3616 = vmatmul.bf16.gmra.mxu0 %v3400
  %v3617 = vpop.f32.mrf.mxu0
  %v3618 = vadd.f32 %v3599, %v3617
  %v3619 = vpop.f32.mrf.mxu0
  %v3620 = vadd.f32 %v3601, %v3619
  %3621 = vmatmul.bf16.gmra.mxu0 %v3425
  %v3622 = vpop.f32.mrf.mxu0
  %v3623 = vadd.f32 %v3604, %v3622
  %v3624 = vpop.f32.mrf.mxu0
  %v3625 = vadd.f32 %v3606, %v3624
  %3626 = vdwg.mxu0
  %3627 = vmatpush.bf16.msra.mxu0 %v1585
  %3628 = vmatpush.bf16.msra.mxu0 %v1584
  %3629 = vmatpush.bf16.msra.mxu0 %v1583
  %3630 = vmatpush.bf16.msra.mxu0 %v1582
  %3631 = vmatpush.bf16.msra.mxu0 %v1581
  %3632 = vmatpush.bf16.msra.mxu0 %v1580
  %3633 = vmatpush.bf16.msra.mxu0 %v1579
  %3634 = vmatpush.bf16.msra.mxu0 %v1578
  %3635 = vmatmul.bf16.gmra.mxu0 %v3401
  %v3636 = vpop.f32.mrf.mxu0
  %v3637 = vadd.f32 %v3618, %v3636
  %v3638 = vpop.f32.mrf.mxu0
  %v3639 = vadd.f32 %v3620, %v3638
  %3640 = vmatmul.bf16.gmra.mxu0 %v3426
  %v3641 = vpop.f32.mrf.mxu0
  %v3642 = vadd.f32 %v3623, %v3641
  %v3643 = vpop.f32.mrf.mxu0
  %v3644 = vadd.f32 %v3625, %v3643
  %3645 = vdwg.mxu0
  %3646 = vmatpush.bf16.msra.mxu0 %v1593
  %3647 = vmatpush.bf16.msra.mxu0 %v1592
  %3648 = vmatpush.bf16.msra.mxu0 %v1591
  %3649 = vmatpush.bf16.msra.mxu0 %v1590
  %3650 = vmatpush.bf16.msra.mxu0 %v1589
  %3651 = vmatpush.bf16.msra.mxu0 %v1588
  %3652 = vmatpush.bf16.msra.mxu0 %v1587
  %3653 = vmatpush.bf16.msra.mxu0 %v1586
  %3654 = vmatmul.bf16.gmra.mxu0 %v3402
  %v3655 = vpop.f32.mrf.mxu0
  %v3656 = vadd.f32 %v3637, %v3655
  %v3657 = vpop.f32.mrf.mxu0
  %v3658 = vadd.f32 %v3639, %v3657
  %3659 = vmatmul.bf16.gmra.mxu0 %v3427
  %v3660 = vpop.f32.mrf.mxu0
  %v3661 = vadd.f32 %v3642, %v3660
  %v3662 = vpop.f32.mrf.mxu0
  %v3663 = vadd.f32 %v3644, %v3662
  %3664 = vdwg.mxu0
  %3665 = vmatpush.bf16.msra.mxu0 %v1601
  %3666 = vmatpush.bf16.msra.mxu0 %v1600
  %3667 = vmatpush.bf16.msra.mxu0 %v1599
  %3668 = vmatpush.bf16.msra.mxu0 %v1598
  %3669 = vmatpush.bf16.msra.mxu0 %v1597
  %3670 = vmatpush.bf16.msra.mxu0 %v1596
  %3671 = vmatpush.bf16.msra.mxu0 %v1595
  %3672 = vmatpush.bf16.msra.mxu0 %v1594
  %3673 = vmatmul.bf16.gmra.mxu0 %v3403
  %v3674 = vpop.f32.mrf.mxu0
  %v3675 = vadd.f32 %v3656, %v3674
  %v3676 = vpop.f32.mrf.mxu0
  %v3677 = vadd.f32 %v3658, %v3676
  %3678 = vmatmul.bf16.gmra.mxu0 %v3428
  %v3679 = vpop.f32.mrf.mxu0
  %v3680 = vadd.f32 %v3661, %v3679
  %v3681 = vpop.f32.mrf.mxu0
  %v3682 = vadd.f32 %v3663, %v3681
  %3683 = vdwg.mxu0
  %3684 = vmatpush.bf16.msra.mxu0 %v1609
  %3685 = vmatpush.bf16.msra.mxu0 %v1608
  %3686 = vmatpush.bf16.msra.mxu0 %v1607
  %3687 = vmatpush.bf16.msra.mxu0 %v1606
  %3688 = vmatpush.bf16.msra.mxu0 %v1605
  %3689 = vmatpush.bf16.msra.mxu0 %v1604
  %3690 = vmatpush.bf16.msra.mxu0 %v1603
  %3691 = vmatpush.bf16.msra.mxu0 %v1602
  %3692 = vmatmul.bf16.gmra.mxu0 %v3404
  %v3693 = vpop.f32.mrf.mxu0
  %v3694 = vadd.f32 %v3675, %v3693
  %v3695 = vpop.f32.mrf.mxu0
  %v3696 = vadd.f32 %v3677, %v3695
  %3697 = vmatmul.bf16.gmra.mxu0 %v3429
  %v3698 = vpop.f32.mrf.mxu0
  %v3699 = vadd.f32 %v3680, %v3698
  %v3700 = vpop.f32.mrf.mxu0
  %v3701 = vadd.f32 %v3682, %v3700
  %3702 = vdwg.mxu0
  %3703 = vmatpush.bf16.msra.mxu0 %v1617
  %3704 = vmatpush.bf16.msra.mxu0 %v1616
  %3705 = vmatpush.bf16.msra.mxu0 %v1615
  %3706 = vmatpush.bf16.msra.mxu0 %v1614
  %3707 = vmatpush.bf16.msra.mxu0 %v1613
  %3708 = vmatpush.bf16.msra.mxu0 %v1612
  %3709 = vmatpush.bf16.msra.mxu0 %v1611
  %3710 = vmatpush.bf16.msra.mxu0 %v1610
  %3711 = vmatmul.bf16.gmra.mxu0 %v3405
  %v3712 = vpop.f32.mrf.mxu0
  %v3713 = vadd.f32 %v3694, %v3712
  %v3714 = vpop.f32.mrf.mxu0
  %v3715 = vadd.f32 %v3696, %v3714
  %3716 = vmatmul.bf16.gmra.mxu0 %v3430
  %v3717 = vpop.f32.mrf.mxu0
  %v3718 = vadd.f32 %v3699, %v3717
  %v3719 = vpop.f32.mrf.mxu0
  %v3720 = vadd.f32 %v3701, %v3719
  %3721 = vdwg.mxu0
  %3722 = vmatpush.bf16.msra.mxu0 %v1625
  %3723 = vmatpush.bf16.msra.mxu0 %v1624
  %3724 = vmatpush.bf16.msra.mxu0 %v1623
  %3725 = vmatpush.bf16.msra.mxu0 %v1622
  %3726 = vmatpush.bf16.msra.mxu0 %v1621
  %3727 = vmatpush.bf16.msra.mxu0 %v1620
  %3728 = vmatpush.bf16.msra.mxu0 %v1619
  %3729 = vmatpush.bf16.msra.mxu0 %v1618
  %3730 = vmatmul.bf16.gmra.mxu0 %v3406
  %v3731 = vpop.f32.mrf.mxu0
  %v3732 = vadd.f32 %v3713, %v3731
  %v3733 = vpop.f32.mrf.mxu0
  %v3734 = vadd.f32 %v3715, %v3733
  %3735 = vmatmul.bf16.gmra.mxu0 %v3431
  %v3736 = vpop.f32.mrf.mxu0
  %v3737 = vadd.f32 %v3718, %v3736
  %v3738 = vpop.f32.mrf.mxu0
  %v3739 = vadd.f32 %v3720, %v3738
  %3740 = vdwg.mxu0
  %3741 = vmatpush.bf16.msra.mxu0 %v1633
  %3742 = vmatpush.bf16.msra.mxu0 %v1632
  %3743 = vmatpush.bf16.msra.mxu0 %v1631
  %3744 = vmatpush.bf16.msra.mxu0 %v1630
  %3745 = vmatpush.bf16.msra.mxu0 %v1629
  %3746 = vmatpush.bf16.msra.mxu0 %v1628
  %3747 = vmatpush.bf16.msra.mxu0 %v1627
  %3748 = vmatpush.bf16.msra.mxu0 %v1626
  %3749 = vmatmul.bf16.gmra.mxu0 %v3407
  %v3750 = vpop.f32.mrf.mxu0
  %v3751 = vadd.f32 %v3732, %v3750
  %v3752 = vpop.f32.mrf.mxu0
  %v3753 = vadd.f32 %v3734, %v3752
  %3754 = vmatmul.bf16.gmra.mxu0 %v3432
  %v3755 = vpop.f32.mrf.mxu0
  %v3756 = vadd.f32 %v3737, %v3755
  %v3757 = vpop.f32.mrf.mxu0
  %v3758 = vadd.f32 %v3739, %v3757
  %3759 = vdwg.mxu0
  %3760 = vmatpush.bf16.msra.mxu0 %v1641
  %3761 = vmatpush.bf16.msra.mxu0 %v1640
  %3762 = vmatpush.bf16.msra.mxu0 %v1639
  %3763 = vmatpush.bf16.msra.mxu0 %v1638
  %3764 = vmatpush.bf16.msra.mxu0 %v1637
  %3765 = vmatpush.bf16.msra.mxu0 %v1636
  %3766 = vmatpush.bf16.msra.mxu0 %v1635
  %3767 = vmatpush.bf16.msra.mxu0 %v1634
  %3768 = vmatmul.bf16.gmra.mxu0 %v3408
  %v3769 = vpop.f32.mrf.mxu0
  %v3770 = vadd.f32 %v3751, %v3769
  %v3771 = vpop.f32.mrf.mxu0
  %v3772 = vadd.f32 %v3753, %v3771
  %3773 = vmatmul.bf16.gmra.mxu0 %v3433
  %v3774 = vpop.f32.mrf.mxu0
  %v3775 = vadd.f32 %v3756, %v3774
  %v3776 = vpop.f32.mrf.mxu0
  %v3777 = vadd.f32 %v3758, %v3776
  %3778 = vdwg.mxu0
  %3779 = vmatpush.bf16.msra.mxu0 %v1649
  %3780 = vmatpush.bf16.msra.mxu0 %v1648
  %3781 = vmatpush.bf16.msra.mxu0 %v1647
  %3782 = vmatpush.bf16.msra.mxu0 %v1646
  %3783 = vmatpush.bf16.msra.mxu0 %v1645
  %3784 = vmatpush.bf16.msra.mxu0 %v1644
  %3785 = vmatpush.bf16.msra.mxu0 %v1643
  %3786 = vmatpush.bf16.msra.mxu0 %v1642
  %3787 = vmatmul.bf16.gmra.mxu0 %v3409
  %v3788 = vpop.f32.mrf.mxu0
  %v3789 = vadd.f32 %v3770, %v3788
  %v3790 = vpop.f32.mrf.mxu0
  %v3791 = vadd.f32 %v3772, %v3790
  %3792 = vmatmul.bf16.gmra.mxu0 %v3434
  %v3793 = vpop.f32.mrf.mxu0
  %v3794 = vadd.f32 %v3775, %v3793
  %v3795 = vpop.f32.mrf.mxu0
  %v3796 = vadd.f32 %v3777, %v3795
  %3797 = vdwg.mxu0
  %3798 = vmatpush.bf16.msra.mxu0 %v1657
  %3799 = vmatpush.bf16.msra.mxu0 %v1656
  %3800 = vmatpush.bf16.msra.mxu0 %v1655
  %3801 = vmatpush.bf16.msra.mxu0 %v1654
  %3802 = vmatpush.bf16.msra.mxu0 %v1653
  %3803 = vmatpush.bf16.msra.mxu0 %v1652
  %3804 = vmatpush.bf16.msra.mxu0 %v1651
  %3805 = vmatpush.bf16.msra.mxu0 %v1650
  %3806 = vmatmul.bf16.gmra.mxu0 %v3410
  %v3807 = vpop.f32.mrf.mxu0
  %v3808 = vadd.f32 %v3789, %v3807
  %v3809 = vpop.f32.mrf.mxu0
  %v3810 = vadd.f32 %v3791, %v3809
  %3811 = vmatmul.bf16.gmra.mxu0 %v3435
  %v3812 = vpop.f32.mrf.mxu0
  %v3813 = vadd.f32 %v3794, %v3812
  %v3814 = vpop.f32.mrf.mxu0
  %v3815 = vadd.f32 %v3796, %v3814
  %3816 = vdwg.mxu0
  %3817 = vmatpush.bf16.msra.mxu0 %v1665
  %3818 = vmatpush.bf16.msra.mxu0 %v1664
  %3819 = vmatpush.bf16.msra.mxu0 %v1663
  %3820 = vmatpush.bf16.msra.mxu0 %v1662
  %3821 = vmatpush.bf16.msra.mxu0 %v1661
  %3822 = vmatpush.bf16.msra.mxu0 %v1660
  %3823 = vmatpush.bf16.msra.mxu0 %v1659
  %3824 = vmatpush.bf16.msra.mxu0 %v1658
  %3825 = vmatmul.bf16.gmra.mxu0 %v3411
  %v3826 = vpop.f32.mrf.mxu0
  %v3827 = vadd.f32 %v3808, %v3826
  %v3828 = vpop.f32.mrf.mxu0
  %v3829 = vadd.f32 %v3810, %v3828
  %3830 = vmatmul.bf16.gmra.mxu0 %v3436
  %v3831 = vpop.f32.mrf.mxu0
  %v3832 = vadd.f32 %v3813, %v3831
  %v3833 = vpop.f32.mrf.mxu0
  %v3834 = vadd.f32 %v3815, %v3833
  %3835 = vdwg.mxu0
  %3836 = vmatpush.bf16.msra.mxu0 %v1673
  %3837 = vmatpush.bf16.msra.mxu0 %v1672
  %3838 = vmatpush.bf16.msra.mxu0 %v1671
  %3839 = vmatpush.bf16.msra.mxu0 %v1670
  %3840 = vmatpush.bf16.msra.mxu0 %v1669
  %3841 = vmatpush.bf16.msra.mxu0 %v1668
  %3842 = vmatpush.bf16.msra.mxu0 %v1667
  %3843 = vmatpush.bf16.msra.mxu0 %v1666
  %3844 = vmatmul.bf16.gmra.mxu0 %v3412
  %v3845 = vpop.f32.mrf.mxu0
  %v3846 = vadd.f32 %v3827, %v3845
  %v3847 = vpop.f32.mrf.mxu0
  %v3848 = vadd.f32 %v3829, %v3847
  %3849 = vmatmul.bf16.gmra.mxu0 %v3437
  %v3850 = vpop.f32.mrf.mxu0
  %v3851 = vadd.f32 %v3832, %v3850
  %v3852 = vpop.f32.mrf.mxu0
  %v3853 = vadd.f32 %v3834, %v3852
  %3854 = vdwg.mxu0
  %3855 = vmatpush.bf16.msra.mxu0 %v1681
  %3856 = vmatpush.bf16.msra.mxu0 %v1680
  %3857 = vmatpush.bf16.msra.mxu0 %v1679
  %3858 = vmatpush.bf16.msra.mxu0 %v1678
  %3859 = vmatpush.bf16.msra.mxu0 %v1677
  %3860 = vmatpush.bf16.msra.mxu0 %v1676
  %3861 = vmatpush.bf16.msra.mxu0 %v1675
  %3862 = vmatpush.bf16.msra.mxu0 %v1674
  %3863 = vmatmul.bf16.gmra.mxu0 %v3413
  %v3864 = vpop.f32.mrf.mxu0
  %v3865 = vadd.f32 %v3846, %v3864
  %v3866 = vpop.f32.mrf.mxu0
  %v3867 = vadd.f32 %v3848, %v3866
  %3868 = vmatmul.bf16.gmra.mxu0 %v3438
  %v3869 = vpop.f32.mrf.mxu0
  %v3870 = vadd.f32 %v3851, %v3869
  %v3871 = vpop.f32.mrf.mxu0
  %v3872 = vadd.f32 %v3853, %v3871
  %3873 = vdwg.mxu0
  %3874 = vmatpush.bf16.msra.mxu0 %v1689
  %3875 = vmatpush.bf16.msra.mxu0 %v1688
  %3876 = vmatpush.bf16.msra.mxu0 %v1687
  %3877 = vmatpush.bf16.msra.mxu0 %v1686
  %3878 = vmatpush.bf16.msra.mxu0 %v1685
  %3879 = vmatpush.bf16.msra.mxu0 %v1684
  %3880 = vmatpush.bf16.msra.mxu0 %v1683
  %3881 = vmatpush.bf16.msra.mxu0 %v1682
  %3882 = vmatmul.bf16.gmra.mxu0 %v3414
  %v3883 = vpop.f32.mrf.mxu0
  %v3884 = vadd.f32 %v3865, %v3883
  %v3885 = vpop.f32.mrf.mxu0
  %v3886 = vadd.f32 %v3867, %v3885
  %3887 = vmatmul.bf16.gmra.mxu0 %v3439
  %v3888 = vpop.f32.mrf.mxu0
  %v3889 = vadd.f32 %v3870, %v3888
  %v3890 = vpop.f32.mrf.mxu0
  %v3891 = vadd.f32 %v3872, %v3890
  %3892 = vdwg.mxu0
  %3893 = vmatpush.bf16.msra.mxu0 %v1697
  %3894 = vmatpush.bf16.msra.mxu0 %v1696
  %3895 = vmatpush.bf16.msra.mxu0 %v1695
  %3896 = vmatpush.bf16.msra.mxu0 %v1694
  %3897 = vmatpush.bf16.msra.mxu0 %v1693
  %3898 = vmatpush.bf16.msra.mxu0 %v1692
  %3899 = vmatpush.bf16.msra.mxu0 %v1691
  %3900 = vmatpush.bf16.msra.mxu0 %v1690
  %3901 = vmatmul.bf16.gmra.mxu0 %v3415
  %v3902 = vpop.f32.mrf.mxu0
  %v3903 = vadd.f32 %v3884, %v3902
  %v3904 = vpop.f32.mrf.mxu0
  %v3905 = vadd.f32 %v3886, %v3904
  %3906 = vmatmul.bf16.gmra.mxu0 %v3440
  %v3907 = vpop.f32.mrf.mxu0
  %v3908 = vadd.f32 %v3889, %v3907
  %v3909 = vpop.f32.mrf.mxu0
  %v3910 = vadd.f32 %v3891, %v3909
  %3911 = vdwg.mxu0
  %3912 = vmatpush.bf16.msra.mxu0 %v1705
  %3913 = vmatpush.bf16.msra.mxu0 %v1704
  %3914 = vmatpush.bf16.msra.mxu0 %v1703
  %3915 = vmatpush.bf16.msra.mxu0 %v1702
  %3916 = vmatpush.bf16.msra.mxu0 %v1701
  %3917 = vmatpush.bf16.msra.mxu0 %v1700
  %3918 = vmatpush.bf16.msra.mxu0 %v1699
  %3919 = vmatpush.bf16.msra.mxu0 %v1698
  %3920 = vmatmul.bf16.gmra.mxu0 %v3416
  %v3921 = vpop.f32.mrf.mxu0
  %v3922 = vadd.f32 %v3903, %v3921
  %v3923 = vpop.f32.mrf.mxu0
  %v3924 = vadd.f32 %v3905, %v3923
  %3925 = vmatmul.bf16.gmra.mxu0 %v3441
  %v3926 = vpop.f32.mrf.mxu0
  %v3927 = vadd.f32 %v3908, %v3926
  %v3928 = vpop.f32.mrf.mxu0
  %v3929 = vadd.f32 %v3910, %v3928
  %3930 = vdwg.mxu0
  %3931 = vmatpush.bf16.msra.mxu0 %v1713
  %3932 = vmatpush.bf16.msra.mxu0 %v1712
  %3933 = vmatpush.bf16.msra.mxu0 %v1711
  %3934 = vmatpush.bf16.msra.mxu0 %v1710
  %3935 = vmatpush.bf16.msra.mxu0 %v1709
  %3936 = vmatpush.bf16.msra.mxu0 %v1708
  %3937 = vmatpush.bf16.msra.mxu0 %v1707
  %3938 = vmatpush.bf16.msra.mxu0 %v1706
  %3939 = vmatmul.bf16.gmra.mxu0 %v3417
  %v3940 = vpop.f32.mrf.mxu0
  %v3941 = vadd.f32 %v3922, %v3940
  %v3942 = vpop.f32.mrf.mxu0
  %v3943 = vadd.f32 %v3924, %v3942
  %3944 = vmatmul.bf16.gmra.mxu0 %v3442
  %v3945 = vpop.f32.mrf.mxu0
  %v3946 = vadd.f32 %v3927, %v3945
  %v3947 = vpop.f32.mrf.mxu0
  %v3948 = vadd.f32 %v3929, %v3947
  %3949 = vdwg.mxu0
  %3950 = vmatpush.bf16.msra.mxu0 %v1721
  %3951 = vmatpush.bf16.msra.mxu0 %v1720
  %3952 = vmatpush.bf16.msra.mxu0 %v1719
  %3953 = vmatpush.bf16.msra.mxu0 %v1718
  %3954 = vmatpush.bf16.msra.mxu0 %v1717
  %3955 = vmatpush.bf16.msra.mxu0 %v1716
  %3956 = vmatpush.bf16.msra.mxu0 %v1715
  %3957 = vmatpush.bf16.msra.mxu0 %v1714
  %3958 = vmatmul.bf16.gmra.mxu0 %v3418
  %v3959 = vpop.f32.mrf.mxu0
  %v3960 = vadd.f32 %v3941, %v3959
  %v3961 = vpop.f32.mrf.mxu0
  %v3962 = vadd.f32 %v3943, %v3961
  %3963 = vmatmul.bf16.gmra.mxu0 %v3443
  %v3964 = vpop.f32.mrf.mxu0
  %v3965 = vadd.f32 %v3946, %v3964
  %v3966 = vpop.f32.mrf.mxu0
  %v3967 = vadd.f32 %v3948, %v3966
  %3968 = vdwg.mxu0
  %v3969 = vmax.f32 %v3960, 0.0
  %v3970 = vmax.f32 %v3962, 0.0
  %v3971 = vmax.f32 %v3965, 0.0
  %v3972 = vmax.f32 %v3967, 0.0
  %s3973 = scalar_lea.vmem %s0, 1200
  %v3974 = vld [vmem:[%s3973] sm:$0xff]
  %v3975 = vld [vmem:[%s3973 + $0x8] sm:$0xff]
  %v3976 = vld [vmem:[%s3973 + $0x10] sm:$0xff]
  %v3977 = vld [vmem:[%s3973 + $0x18] sm:$0xff]
  %v3978 = vld [vmem:[%s3973 + $0x20] sm:$0xff]
  %v3979 = vld [vmem:[%s3973 + $0x28] sm:$0xff]
  %v3980 = vld [vmem:[%s3973 + $0x30] sm:$0xff]
  %v3981 = vld [vmem:[%s3973 + $0x38] sm:$0xff]
  %v3982 = vld [vmem:[%s3973 + $0x40] sm:$0xff]
  %v3983 = vld [vmem:[%s3973 + $0x48] sm:$0xff]
  %v3984 = vld [vmem:[%s3973 + $0x50] sm:$0xff]
  %v3985 = vld [vmem:[%s3973 + $0x58] sm:$0xff]
  %v3986 = vld [vmem:[%s3973 + $0x60] sm:$0xf]
  %v3987 = vld [vmem:[%s3973 + $0x64] sm:$0xff]
  %v3988 = vld [vmem:[%s3973 + $0x6c] sm:$0xff]
  %v3989 = vld [vmem:[%s3973 + $0x74] sm:$0xff]
  %v3990 = vld [vmem:[%s3973 + $0x7c] sm:$0xff]
  %v3991 = vld [vmem:[%s3973 + $0x84] sm:$0xff]
  %v3992 = vld [vmem:[%s3973 + $0x8c] sm:$0xff]
  %v3993 = vld [vmem:[%s3973 + $0x94] sm:$0xff]
  %v3994 = vld [vmem:[%s3973 + $0x9c] sm:$0xff]
  %v3995 = vld [vmem:[%s3973 + $0xa4] sm:$0xff]
  %v3996 = vld [vmem:[%s3973 + $0xac] sm:$0xff]
  %v3997 = vld [vmem:[%s3973 + $0xb4] sm:$0xff]
  %v3998 = vld [vmem:[%s3973 + $0xbc] sm:$0xff]
  %v3999 = vld [vmem:[%s3973 + $0xc4] sm:$0xf]
  %v4000 = vld [vmem:[%s3973 + $0xc8] sm:$0xff]
  %v4001 = vld [vmem:[%s3973 + $0xd0] sm:$0xff]
  %v4002 = vld [vmem:[%s3973 + $0xd8] sm:$0xff]
  %v4003 = vld [vmem:[%s3973 + $0xe0] sm:$0xff]
  %v4004 = vld [vmem:[%s3973 + $0xe8] sm:$0xff]
  %v4005 = vld [vmem:[%s3973 + $0xf0] sm:$0xff]
  %v4006 = vld [vmem:[%s3973 + $0xf8] sm:$0xff]
  %v4007 = vld [vmem:[%s3973 + $0x100] sm:$0xff]
  %v4008 = vld [vmem:[%s3973 + $0x108] sm:$0xff]
  %v4009 = vld [vmem:[%s3973 + $0x110] sm:$0xff]
  %v4010 = vld [vmem:[%s3973 + $0x118] sm:$0xff]
  %v4011 = vld [vmem:[%s3973 + $0x120] sm:$0xff]
  %v4012 = vld [vmem:[%s3973 + $0x128] sm:$0xf]
  %v4013 = vld [vmem:[%s3973 + $0x12c] sm:$0xff]
  %v4014 = vld [vmem:[%s3973 + $0x134] sm:$0xff]
  %v4015 = vld [vmem:[%s3973 + $0x13c] sm:$0xff]
  %v4016 = vld [vmem:[%s3973 + $0x144] sm:$0xff]
  %v4017 = vld [vmem:[%s3973 + $0x14c] sm:$0xff]
  %v4018 = vld [vmem:[%s3973 + $0x154] sm:$0xff]
  %v4019 = vld [vmem:[%s3973 + $0x15c] sm:$0xff]
  %v4020 = vld [vmem:[%s3973 + $0x164] sm:$0xff]
  %v4021 = vld [vmem:[%s3973 + $0x16c] sm:$0xff]
  %v4022 = vld [vmem:[%s3973 + $0x174] sm:$0xff]
  %v4023 = vld [vmem:[%s3973 + $0x17c] sm:$0xff]
  %v4024 = vld [vmem:[%s3973 + $0x184] sm:$0xff]
  %v4025 = vld [vmem:[%s3973 + $0x18c] sm:$0xf]
  %v4078 = vunpack.c.l.b16 %v3974
  %v4079 = vunpack.c.h.b16 %v3974
  %v4080 = vunpack.c.l.b16 %v3975
  %v4081 = vunpack.c.h.b16 %v3975
  %v4082 = vunpack.c.l.b16 %v3976
  %v4083 = vunpack.c.h.b16 %v3976
  %v4084 = vunpack.c.l.b16 %v3977
  %v4085 = vunpack.c.h.b16 %v3977
  %v4086 = vunpack.c.l.b16 %v3978
  %v4087 = vunpack.c.h.b16 %v3978
  %v4088 = vunpack.c.l.b16 %v3979
  %v4089 = vunpack.c.h.b16 %v3979
  %v4090 = vunpack.c.l.b16 %v3980
  %v4091 = vunpack.c.h.b16 %v3980
  %v4092 = vunpack.c.l.b16 %v3981
  %v4093 = vunpack.c.h.b16 %v3981
  %v4094 = vunpack.c.l.b16 %v3982
  %v4095 = vunpack.c.h.b16 %v3982
  %v4096 = vunpack.c.l.b16 %v3983
  %v4097 = vunpack.c.h.b16 %v3983
  %v4098 = vunpack.c.l.b16 %v3984
  %v4099 = vunpack.c.h.b16 %v3984
  %v4100 = vunpack.c.l.b16 %v3985
  %v4101 = vunpack.c.h.b16 %v3985
  %v4102 = vunpack.c.l.b16 %v3986
  %v4103 = vunpack.c.l.b16 %v3987
  %v4104 = vunpack.c.h.b16 %v3987
  %v4105 = vunpack.c.l.b16 %v3988
  %v4106 = vunpack.c.h.b16 %v3988
  %v4107 = vunpack.c.l.b16 %v3989
  %v4108 = vunpack.c.h.b16 %v3989
  %v4109 = vunpack.c.l.b16 %v3990
  %v4110 = vunpack.c.h.b16 %v3990
  %v4111 = vunpack.c.l.b16 %v3991
  %v4112 = vunpack.c.h.b16 %v3991
  %v4113 = vunpack.c.l.b16 %v3992
  %v4114 = vunpack.c.h.b16 %v3992
  %v4115 = vunpack.c.l.b16 %v3993
  %v4116 = vunpack.c.h.b16 %v3993
  %v4117 = vunpack.c.l.b16 %v3994
  %v4118 = vunpack.c.h.b16 %v3994
  %v4119 = vunpack.c.l.b16 %v3995
  %v4120 = vunpack.c.h.b16 %v3995
  %v4121 = vunpack.c.l.b16 %v3996
  %v4122 = vunpack.c.h.b16 %v3996
  %v4123 = vunpack.c.l.b16 %v3997
  %v4124 = vunpack.c.h.b16 %v3997
  %v4125 = vunpack.c.l.b16 %v3998
  %v4126 = vunpack.c.h.b16 %v3998
  %v4127 = vunpack.c.l.b16 %v3999
  %v4128 = vunpack.c.l.b16 %v4000
  %v4129 = vunpack.c.h.b16 %v4000
  %v4130 = vunpack.c.l.b16 %v4001
  %v4131 = vunpack.c.h.b16 %v4001
  %v4132 = vunpack.c.l.b16 %v4002
  %v4133 = vunpack.c.h.b16 %v4002
  %v4134 = vunpack.c.l.b16 %v4003
  %v4135 = vunpack.c.h.b16 %v4003
  %v4136 = vunpack.c.l.b16 %v4004
  %v4137 = vunpack.c.h.b16 %v4004
  %v4138 = vunpack.c.l.b16 %v4005
  %v4139 = vunpack.c.h.b16 %v4005
  %v4140 = vunpack.c.l.b16 %v4006
  %v4141 = vunpack.c.h.b16 %v4006
  %v4142 = vunpack.c.l.b16 %v4007
  %v4143 = vunpack.c.h.b16 %v4007
  %v4144 = vunpack.c.l.b16 %v4008
  %v4145 = vunpack.c.h.b16 %v4008
  %v4146 = vunpack.c.l.b16 %v4009
  %v4147 = vunpack.c.h.b16 %v4009
  %v4148 = vunpack.c.l.b16 %v4010
  %v4149 = vunpack.c.h.b16 %v4010
  %v4150 = vunpack.c.l.b16 %v4011
  %v4151 = vunpack.c.h.b16 %v4011
  %v4152 = vunpack.c.l.b16 %v4012
  %v4153 = vunpack.c.l.b16 %v4013
  %v4154 = vunpack.c.h.b16 %v4013
  %v4155 = vunpack.c.l.b16 %v4014
  %v4156 = vunpack.c.h.b16 %v4014
  %v4157 = vunpack.c.l.b16 %v4015
  %v4158 = vunpack.c.h.b16 %v4015
  %v4159 = vunpack.c.l.b16 %v4016
  %v4160 = vunpack.c.h.b16 %v4016
  %v4161 = vunpack.c.l.b16 %v4017
  %v4162 = vunpack.c.h.b16 %v4017
  %v4163 = vunpack.c.l.b16 %v4018
  %v4164 = vunpack.c.h.b16 %v4018
  %v4165 = vunpack.c.l.b16 %v4019
  %v4166 = vunpack.c.h.b16 %v4019
  %v4167 = vunpack.c.l.b16 %v4020
  %v4168 = vunpack.c.h.b16 %v4020
  %v4169 = vunpack.c.l.b16 %v4021
  %v4170 = vunpack.c.h.b16 %v4021
  %v4171 = vunpack.c.l.b16 %v4022
  %v4172 = vunpack.c.h.b16 %v4022
  %v4173 = vunpack.c.l.b16 %v4023
  %v4174 = vunpack.c.h.b16 %v4023
  %v4175 = vunpack.c.l.b16 %v4024
  %v4176 = vunpack.c.h.b16 %v4024
  %v4177 = vunpack.c.l.b16 %v4025
  %v4178 = vpack.c.b16 %v4103, %v4078
  %v4179 = vpack.c.b16 %v4104, %v4079
  %v4180 = vpack.c.b16 %v4105, %v4080
  %v4181 = vpack.c.b16 %v4106, %v4081
  %v4182 = vpack.c.b16 %v4107, %v4082
  %v4183 = vpack.c.b16 %v4108, %v4083
  %v4184 = vpack.c.b16 %v4109, %v4084
  %v4185 = vpack.c.b16 %v4110, %v4085
  %v4186 = vpack.c.b16 %v4111, %v4086
  %v4187 = vpack.c.b16 %v4112, %v4087
  %v4188 = vpack.c.b16 %v4113, %v4088
  %v4189 = vpack.c.b16 %v4114, %v4089
  %v4190 = vpack.c.b16 %v4115, %v4090
  %v4191 = vpack.c.b16 %v4116, %v4091
  %v4192 = vpack.c.b16 %v4117, %v4092
  %v4193 = vpack.c.b16 %v4118, %v4093
  %v4194 = vpack.c.b16 %v4119, %v4094
  %v4195 = vpack.c.b16 %v4120, %v4095
  %v4196 = vpack.c.b16 %v4121, %v4096
  %v4197 = vpack.c.b16 %v4122, %v4097
  %v4198 = vpack.c.b16 %v4123, %v4098
  %v4199 = vpack.c.b16 %v4124, %v4099
  %v4200 = vpack.c.b16 %v4125, %v4100
  %v4201 = vpack.c.b16 %v4126, %v4101
  %v4202 = vpack.c.b16 %v4127, %v4102
  %v4203 = vpack.c.b16 %v4153, %v4128
  %v4204 = vpack.c.b16 %v4154, %v4129
  %v4205 = vpack.c.b16 %v4155, %v4130
  %v4206 = vpack.c.b16 %v4156, %v4131
  %v4207 = vpack.c.b16 %v4157, %v4132
  %v4208 = vpack.c.b16 %v4158, %v4133
  %v4209 = vpack.c.b16 %v4159, %v4134
  %v4210 = vpack.c.b16 %v4160, %v4135
  %v4211 = vpack.c.b16 %v4161, %v4136
  %v4212 = vpack.c.b16 %v4162, %v4137
  %v4213 = vpack.c.b16 %v4163, %v4138
  %v4214 = vpack.c.b16 %v4164, %v4139
  %v4215 = vpack.c.b16 %v4165, %v4140
  %v4216 = vpack.c.b16 %v4166, %v4141
  %v4217 = vpack.c.b16 %v4167, %v4142
  %v4218 = vpack.c.b16 %v4168, %v4143
  %v4219 = vpack.c.b16 %v4169, %v4144
  %v4220 = vpack.c.b16 %v4170, %v4145
  %v4221 = vpack.c.b16 %v4171, %v4146
  %v4222 = vpack.c.b16 %v4172, %v4147
  %v4223 = vpack.c.b16 %v4173, %v4148
  %v4224 = vpack.c.b16 %v4174, %v4149
  %v4225 = vpack.c.b16 %v4175, %v4150
  %v4226 = vpack.c.b16 %v4176, %v4151
  %v4227 = vpack.c.b16 %v4177, %v4152
  %4278 = vmatpush.bf16.msra.mxu0 %v1529
  %4279 = vmatpush.bf16.msra.mxu0 %v1528
  %4280 = vmatpush.bf16.msra.mxu0 %v1527
  %4281 = vmatpush.bf16.msra.mxu0 %v1526
  %4282 = vmatpush.bf16.msra.mxu0 %v1525
  %4283 = vmatpush.bf16.msra.mxu0 %v1524
  %4284 = vmatpush.bf16.msra.mxu0 %v1523
  %4285 = vmatpush.bf16.msra.mxu0 %v1522
  %4286 = vmatmul.bf16.gmra.mxu0 %v4178
  %v4287 = vpop.f32.mrf.mxu0
  %v4288 = vadd.f32 %v468, %v4287
  %v4289 = vpop.f32.mrf.mxu0
  %v4290 = vadd.f32 %v468, %v4289
  %4291 = vmatmul.bf16.gmra.mxu0 %v4203
  %v4292 = vpop.f32.mrf.mxu0
  %v4293 = vadd.f32 %v468, %v4292
  %v4294 = vpop.f32.mrf.mxu0
  %v4295 = vadd.f32 %v468, %v4294
  %4296 = vdwg.mxu0
  %4297 = vmatpush.bf16.msra.mxu0 %v1537
  %4298 = vmatpush.bf16.msra.mxu0 %v1536
  %4299 = vmatpush.bf16.msra.mxu0 %v1535
  %4300 = vmatpush.bf16.msra.mxu0 %v1534
  %4301 = vmatpush.bf16.msra.mxu0 %v1533
  %4302 = vmatpush.bf16.msra.mxu0 %v1532
  %4303 = vmatpush.bf16.msra.mxu0 %v1531
  %4304 = vmatpush.bf16.msra.mxu0 %v1530
  %4305 = vmatmul.bf16.gmra.mxu0 %v4179
  %v4306 = vpop.f32.mrf.mxu0
  %v4307 = vadd.f32 %v4288, %v4306
  %v4308 = vpop.f32.mrf.mxu0
  %v4309 = vadd.f32 %v4290, %v4308
  %4310 = vmatmul.bf16.gmra.mxu0 %v4204
  %v4311 = vpop.f32.mrf.mxu0
  %v4312 = vadd.f32 %v4293, %v4311
  %v4313 = vpop.f32.mrf.mxu0
  %v4314 = vadd.f32 %v4295, %v4313
  %4315 = vdwg.mxu0
  %4316 = vmatpush.bf16.msra.mxu0 %v1545
  %4317 = vmatpush.bf16.msra.mxu0 %v1544
  %4318 = vmatpush.bf16.msra.mxu0 %v1543
  %4319 = vmatpush.bf16.msra.mxu0 %v1542
  %4320 = vmatpush.bf16.msra.mxu0 %v1541
  %4321 = vmatpush.bf16.msra.mxu0 %v1540
  %4322 = vmatpush.bf16.msra.mxu0 %v1539
  %4323 = vmatpush.bf16.msra.mxu0 %v1538
  %4324 = vmatmul.bf16.gmra.mxu0 %v4180
  %v4325 = vpop.f32.mrf.mxu0
  %v4326 = vadd.f32 %v4307, %v4325
  %v4327 = vpop.f32.mrf.mxu0
  %v4328 = vadd.f32 %v4309, %v4327
  %4329 = vmatmul.bf16.gmra.mxu0 %v4205
  %v4330 = vpop.f32.mrf.mxu0
  %v4331 = vadd.f32 %v4312, %v4330
  %v4332 = vpop.f32.mrf.mxu0
  %v4333 = vadd.f32 %v4314, %v4332
  %4334 = vdwg.mxu0
  %4335 = vmatpush.bf16.msra.mxu0 %v1553
  %4336 = vmatpush.bf16.msra.mxu0 %v1552
  %4337 = vmatpush.bf16.msra.mxu0 %v1551
  %4338 = vmatpush.bf16.msra.mxu0 %v1550
  %4339 = vmatpush.bf16.msra.mxu0 %v1549
  %4340 = vmatpush.bf16.msra.mxu0 %v1548
  %4341 = vmatpush.bf16.msra.mxu0 %v1547
  %4342 = vmatpush.bf16.msra.mxu0 %v1546
  %4343 = vmatmul.bf16.gmra.mxu0 %v4181
  %v4344 = vpop.f32.mrf.mxu0
  %v4345 = vadd.f32 %v4326, %v4344
  %v4346 = vpop.f32.mrf.mxu0
  %v4347 = vadd.f32 %v4328, %v4346
  %4348 = vmatmul.bf16.gmra.mxu0 %v4206
  %v4349 = vpop.f32.mrf.mxu0
  %v4350 = vadd.f32 %v4331, %v4349
  %v4351 = vpop.f32.mrf.mxu0
  %v4352 = vadd.f32 %v4333, %v4351
  %4353 = vdwg.mxu0
  %4354 = vmatpush.bf16.msra.mxu0 %v1561
  %4355 = vmatpush.bf16.msra.mxu0 %v1560
  %4356 = vmatpush.bf16.msra.mxu0 %v1559
  %4357 = vmatpush.bf16.msra.mxu0 %v1558
  %4358 = vmatpush.bf16.msra.mxu0 %v1557
  %4359 = vmatpush.bf16.msra.mxu0 %v1556
  %4360 = vmatpush.bf16.msra.mxu0 %v1555
  %4361 = vmatpush.bf16.msra.mxu0 %v1554
  %4362 = vmatmul.bf16.gmra.mxu0 %v4182
  %v4363 = vpop.f32.mrf.mxu0
  %v4364 = vadd.f32 %v4345, %v4363
  %v4365 = vpop.f32.mrf.mxu0
  %v4366 = vadd.f32 %v4347, %v4365
  %4367 = vmatmul.bf16.gmra.mxu0 %v4207
  %v4368 = vpop.f32.mrf.mxu0
  %v4369 = vadd.f32 %v4350, %v4368
  %v4370 = vpop.f32.mrf.mxu0
  %v4371 = vadd.f32 %v4352, %v4370
  %4372 = vdwg.mxu0
  %4373 = vmatpush.bf16.msra.mxu0 %v1569
  %4374 = vmatpush.bf16.msra.mxu0 %v1568
  %4375 = vmatpush.bf16.msra.mxu0 %v1567
  %4376 = vmatpush.bf16.msra.mxu0 %v1566
  %4377 = vmatpush.bf16.msra.mxu0 %v1565
  %4378 = vmatpush.bf16.msra.mxu0 %v1564
  %4379 = vmatpush.bf16.msra.mxu0 %v1563
  %4380 = vmatpush.bf16.msra.mxu0 %v1562
  %4381 = vmatmul.bf16.gmra.mxu0 %v4183
  %v4382 = vpop.f32.mrf.mxu0
  %v4383 = vadd.f32 %v4364, %v4382
  %v4384 = vpop.f32.mrf.mxu0
  %v4385 = vadd.f32 %v4366, %v4384
  %4386 = vmatmul.bf16.gmra.mxu0 %v4208
  %v4387 = vpop.f32.mrf.mxu0
  %v4388 = vadd.f32 %v4369, %v4387
  %v4389 = vpop.f32.mrf.mxu0
  %v4390 = vadd.f32 %v4371, %v4389
  %4391 = vdwg.mxu0
  %4392 = vmatpush.bf16.msra.mxu0 %v1577
  %4393 = vmatpush.bf16.msra.mxu0 %v1576
  %4394 = vmatpush.bf16.msra.mxu0 %v1575
  %4395 = vmatpush.bf16.msra.mxu0 %v1574
  %4396 = vmatpush.bf16.msra.mxu0 %v1573
  %4397 = vmatpush.bf16.msra.mxu0 %v1572
  %4398 = vmatpush.bf16.msra.mxu0 %v1571
  %4399 = vmatpush.bf16.msra.mxu0 %v1570
  %4400 = vmatmul.bf16.gmra.mxu0 %v4184
  %v4401 = vpop.f32.mrf.mxu0
  %v4402 = vadd.f32 %v4383, %v4401
  %v4403 = vpop.f32.mrf.mxu0
  %v4404 = vadd.f32 %v4385, %v4403
  %4405 = vmatmul.bf16.gmra.mxu0 %v4209
  %v4406 = vpop.f32.mrf.mxu0
  %v4407 = vadd.f32 %v4388, %v4406
  %v4408 = vpop.f32.mrf.mxu0
  %v4409 = vadd.f32 %v4390, %v4408
  %4410 = vdwg.mxu0
  %4411 = vmatpush.bf16.msra.mxu0 %v1585
  %4412 = vmatpush.bf16.msra.mxu0 %v1584
  %4413 = vmatpush.bf16.msra.mxu0 %v1583
  %4414 = vmatpush.bf16.msra.mxu0 %v1582
  %4415 = vmatpush.bf16.msra.mxu0 %v1581
  %4416 = vmatpush.bf16.msra.mxu0 %v1580
  %4417 = vmatpush.bf16.msra.mxu0 %v1579
  %4418 = vmatpush.bf16.msra.mxu0 %v1578
  %4419 = vmatmul.bf16.gmra.mxu0 %v4185
  %v4420 = vpop.f32.mrf.mxu0
  %v4421 = vadd.f32 %v4402, %v4420
  %v4422 = vpop.f32.mrf.mxu0
  %v4423 = vadd.f32 %v4404, %v4422
  %4424 = vmatmul.bf16.gmra.mxu0 %v4210
  %v4425 = vpop.f32.mrf.mxu0
  %v4426 = vadd.f32 %v4407, %v4425
  %v4427 = vpop.f32.mrf.mxu0
  %v4428 = vadd.f32 %v4409, %v4427
  %4429 = vdwg.mxu0
  %4430 = vmatpush.bf16.msra.mxu0 %v1593
  %4431 = vmatpush.bf16.msra.mxu0 %v1592
  %4432 = vmatpush.bf16.msra.mxu0 %v1591
  %4433 = vmatpush.bf16.msra.mxu0 %v1590
  %4434 = vmatpush.bf16.msra.mxu0 %v1589
  %4435 = vmatpush.bf16.msra.mxu0 %v1588
  %4436 = vmatpush.bf16.msra.mxu0 %v1587
  %4437 = vmatpush.bf16.msra.mxu0 %v1586
  %4438 = vmatmul.bf16.gmra.mxu0 %v4186
  %v4439 = vpop.f32.mrf.mxu0
  %v4440 = vadd.f32 %v4421, %v4439
  %v4441 = vpop.f32.mrf.mxu0
  %v4442 = vadd.f32 %v4423, %v4441
  %4443 = vmatmul.bf16.gmra.mxu0 %v4211
  %v4444 = vpop.f32.mrf.mxu0
  %v4445 = vadd.f32 %v4426, %v4444
  %v4446 = vpop.f32.mrf.mxu0
  %v4447 = vadd.f32 %v4428, %v4446
  %4448 = vdwg.mxu0
  %4449 = vmatpush.bf16.msra.mxu0 %v1601
  %4450 = vmatpush.bf16.msra.mxu0 %v1600
  %4451 = vmatpush.bf16.msra.mxu0 %v1599
  %4452 = vmatpush.bf16.msra.mxu0 %v1598
  %4453 = vmatpush.bf16.msra.mxu0 %v1597
  %4454 = vmatpush.bf16.msra.mxu0 %v1596
  %4455 = vmatpush.bf16.msra.mxu0 %v1595
  %4456 = vmatpush.bf16.msra.mxu0 %v1594
  %4457 = vmatmul.bf16.gmra.mxu0 %v4187
  %v4458 = vpop.f32.mrf.mxu0
  %v4459 = vadd.f32 %v4440, %v4458
  %v4460 = vpop.f32.mrf.mxu0
  %v4461 = vadd.f32 %v4442, %v4460
  %4462 = vmatmul.bf16.gmra.mxu0 %v4212
  %v4463 = vpop.f32.mrf.mxu0
  %v4464 = vadd.f32 %v4445, %v4463
  %v4465 = vpop.f32.mrf.mxu0
  %v4466 = vadd.f32 %v4447, %v4465
  %4467 = vdwg.mxu0
  %4468 = vmatpush.bf16.msra.mxu0 %v1609
  %4469 = vmatpush.bf16.msra.mxu0 %v1608
  %4470 = vmatpush.bf16.msra.mxu0 %v1607
  %4471 = vmatpush.bf16.msra.mxu0 %v1606
  %4472 = vmatpush.bf16.msra.mxu0 %v1605
  %4473 = vmatpush.bf16.msra.mxu0 %v1604
  %4474 = vmatpush.bf16.msra.mxu0 %v1603
  %4475 = vmatpush.bf16.msra.mxu0 %v1602
  %4476 = vmatmul.bf16.gmra.mxu0 %v4188
  %v4477 = vpop.f32.mrf.mxu0
  %v4478 = vadd.f32 %v4459, %v4477
  %v4479 = vpop.f32.mrf.mxu0
  %v4480 = vadd.f32 %v4461, %v4479
  %4481 = vmatmul.bf16.gmra.mxu0 %v4213
  %v4482 = vpop.f32.mrf.mxu0
  %v4483 = vadd.f32 %v4464, %v4482
  %v4484 = vpop.f32.mrf.mxu0
  %v4485 = vadd.f32 %v4466, %v4484
  %4486 = vdwg.mxu0
  %4487 = vmatpush.bf16.msra.mxu0 %v1617
  %4488 = vmatpush.bf16.msra.mxu0 %v1616
  %4489 = vmatpush.bf16.msra.mxu0 %v1615
  %4490 = vmatpush.bf16.msra.mxu0 %v1614
  %4491 = vmatpush.bf16.msra.mxu0 %v1613
  %4492 = vmatpush.bf16.msra.mxu0 %v1612
  %4493 = vmatpush.bf16.msra.mxu0 %v1611
  %4494 = vmatpush.bf16.msra.mxu0 %v1610
  %4495 = vmatmul.bf16.gmra.mxu0 %v4189
  %v4496 = vpop.f32.mrf.mxu0
  %v4497 = vadd.f32 %v4478, %v4496
  %v4498 = vpop.f32.mrf.mxu0
  %v4499 = vadd.f32 %v4480, %v4498
  %4500 = vmatmul.bf16.gmra.mxu0 %v4214
  %v4501 = vpop.f32.mrf.mxu0
  %v4502 = vadd.f32 %v4483, %v4501
  %v4503 = vpop.f32.mrf.mxu0
  %v4504 = vadd.f32 %v4485, %v4503
  %4505 = vdwg.mxu0
  %4506 = vmatpush.bf16.msra.mxu0 %v1625
  %4507 = vmatpush.bf16.msra.mxu0 %v1624
  %4508 = vmatpush.bf16.msra.mxu0 %v1623
  %4509 = vmatpush.bf16.msra.mxu0 %v1622
  %4510 = vmatpush.bf16.msra.mxu0 %v1621
  %4511 = vmatpush.bf16.msra.mxu0 %v1620
  %4512 = vmatpush.bf16.msra.mxu0 %v1619
  %4513 = vmatpush.bf16.msra.mxu0 %v1618
  %4514 = vmatmul.bf16.gmra.mxu0 %v4190
  %v4515 = vpop.f32.mrf.mxu0
  %v4516 = vadd.f32 %v4497, %v4515
  %v4517 = vpop.f32.mrf.mxu0
  %v4518 = vadd.f32 %v4499, %v4517
  %4519 = vmatmul.bf16.gmra.mxu0 %v4215
  %v4520 = vpop.f32.mrf.mxu0
  %v4521 = vadd.f32 %v4502, %v4520
  %v4522 = vpop.f32.mrf.mxu0
  %v4523 = vadd.f32 %v4504, %v4522
  %4524 = vdwg.mxu0
  %4525 = vmatpush.bf16.msra.mxu0 %v1633
  %4526 = vmatpush.bf16.msra.mxu0 %v1632
  %4527 = vmatpush.bf16.msra.mxu0 %v1631
  %4528 = vmatpush.bf16.msra.mxu0 %v1630
  %4529 = vmatpush.bf16.msra.mxu0 %v1629
  %4530 = vmatpush.bf16.msra.mxu0 %v1628
  %4531 = vmatpush.bf16.msra.mxu0 %v1627
  %4532 = vmatpush.bf16.msra.mxu0 %v1626
  %4533 = vmatmul.bf16.gmra.mxu0 %v4191
  %v4534 = vpop.f32.mrf.mxu0
  %v4535 = vadd.f32 %v4516, %v4534
  %v4536 = vpop.f32.mrf.mxu0
  %v4537 = vadd.f32 %v4518, %v4536
  %4538 = vmatmul.bf16.gmra.mxu0 %v4216
  %v4539 = vpop.f32.mrf.mxu0
  %v4540 = vadd.f32 %v4521, %v4539
  %v4541 = vpop.f32.mrf.mxu0
  %v4542 = vadd.f32 %v4523, %v4541
  %4543 = vdwg.mxu0
  %4544 = vmatpush.bf16.msra.mxu0 %v1641
  %4545 = vmatpush.bf16.msra.mxu0 %v1640
  %4546 = vmatpush.bf16.msra.mxu0 %v1639
  %4547 = vmatpush.bf16.msra.mxu0 %v1638
  %4548 = vmatpush.bf16.msra.mxu0 %v1637
  %4549 = vmatpush.bf16.msra.mxu0 %v1636
  %4550 = vmatpush.bf16.msra.mxu0 %v1635
  %4551 = vmatpush.bf16.msra.mxu0 %v1634
  %4552 = vmatmul.bf16.gmra.mxu0 %v4192
  %v4553 = vpop.f32.mrf.mxu0
  %v4554 = vadd.f32 %v4535, %v4553
  %v4555 = vpop.f32.mrf.mxu0
  %v4556 = vadd.f32 %v4537, %v4555
  %4557 = vmatmul.bf16.gmra.mxu0 %v4217
  %v4558 = vpop.f32.mrf.mxu0
  %v4559 = vadd.f32 %v4540, %v4558
  %v4560 = vpop.f32.mrf.mxu0
  %v4561 = vadd.f32 %v4542, %v4560
  %4562 = vdwg.mxu0
  %4563 = vmatpush.bf16.msra.mxu0 %v1649
  %4564 = vmatpush.bf16.msra.mxu0 %v1648
  %4565 = vmatpush.bf16.msra.mxu0 %v1647
  %4566 = vmatpush.bf16.msra.mxu0 %v1646
  %4567 = vmatpush.bf16.msra.mxu0 %v1645
  %4568 = vmatpush.bf16.msra.mxu0 %v1644
  %4569 = vmatpush.bf16.msra.mxu0 %v1643
  %4570 = vmatpush.bf16.msra.mxu0 %v1642
  %4571 = vmatmul.bf16.gmra.mxu0 %v4193
  %v4572 = vpop.f32.mrf.mxu0
  %v4573 = vadd.f32 %v4554, %v4572
  %v4574 = vpop.f32.mrf.mxu0
  %v4575 = vadd.f32 %v4556, %v4574
  %4576 = vmatmul.bf16.gmra.mxu0 %v4218
  %v4577 = vpop.f32.mrf.mxu0
  %v4578 = vadd.f32 %v4559, %v4577
  %v4579 = vpop.f32.mrf.mxu0
  %v4580 = vadd.f32 %v4561, %v4579
  %4581 = vdwg.mxu0
  %4582 = vmatpush.bf16.msra.mxu0 %v1657
  %4583 = vmatpush.bf16.msra.mxu0 %v1656
  %4584 = vmatpush.bf16.msra.mxu0 %v1655
  %4585 = vmatpush.bf16.msra.mxu0 %v1654
  %4586 = vmatpush.bf16.msra.mxu0 %v1653
  %4587 = vmatpush.bf16.msra.mxu0 %v1652
  %4588 = vmatpush.bf16.msra.mxu0 %v1651
  %4589 = vmatpush.bf16.msra.mxu0 %v1650
  %4590 = vmatmul.bf16.gmra.mxu0 %v4194
  %v4591 = vpop.f32.mrf.mxu0
  %v4592 = vadd.f32 %v4573, %v4591
  %v4593 = vpop.f32.mrf.mxu0
  %v4594 = vadd.f32 %v4575, %v4593
  %4595 = vmatmul.bf16.gmra.mxu0 %v4219
  %v4596 = vpop.f32.mrf.mxu0
  %v4597 = vadd.f32 %v4578, %v4596
  %v4598 = vpop.f32.mrf.mxu0
  %v4599 = vadd.f32 %v4580, %v4598
  %4600 = vdwg.mxu0
  %4601 = vmatpush.bf16.msra.mxu0 %v1665
  %4602 = vmatpush.bf16.msra.mxu0 %v1664
  %4603 = vmatpush.bf16.msra.mxu0 %v1663
  %4604 = vmatpush.bf16.msra.mxu0 %v1662
  %4605 = vmatpush.bf16.msra.mxu0 %v1661
  %4606 = vmatpush.bf16.msra.mxu0 %v1660
  %4607 = vmatpush.bf16.msra.mxu0 %v1659
  %4608 = vmatpush.bf16.msra.mxu0 %v1658
  %4609 = vmatmul.bf16.gmra.mxu0 %v4195
  %v4610 = vpop.f32.mrf.mxu0
  %v4611 = vadd.f32 %v4592, %v4610
  %v4612 = vpop.f32.mrf.mxu0
  %v4613 = vadd.f32 %v4594, %v4612
  %4614 = vmatmul.bf16.gmra.mxu0 %v4220
  %v4615 = vpop.f32.mrf.mxu0
  %v4616 = vadd.f32 %v4597, %v4615
  %v4617 = vpop.f32.mrf.mxu0
  %v4618 = vadd.f32 %v4599, %v4617
  %4619 = vdwg.mxu0
  %4620 = vmatpush.bf16.msra.mxu0 %v1673
  %4621 = vmatpush.bf16.msra.mxu0 %v1672
  %4622 = vmatpush.bf16.msra.mxu0 %v1671
  %4623 = vmatpush.bf16.msra.mxu0 %v1670
  %4624 = vmatpush.bf16.msra.mxu0 %v1669
  %4625 = vmatpush.bf16.msra.mxu0 %v1668
  %4626 = vmatpush.bf16.msra.mxu0 %v1667
  %4627 = vmatpush.bf16.msra.mxu0 %v1666
  %4628 = vmatmul.bf16.gmra.mxu0 %v4196
  %v4629 = vpop.f32.mrf.mxu0
  %v4630 = vadd.f32 %v4611, %v4629
  %v4631 = vpop.f32.mrf.mxu0
  %v4632 = vadd.f32 %v4613, %v4631
  %4633 = vmatmul.bf16.gmra.mxu0 %v4221
  %v4634 = vpop.f32.mrf.mxu0
  %v4635 = vadd.f32 %v4616, %v4634
  %v4636 = vpop.f32.mrf.mxu0
  %v4637 = vadd.f32 %v4618, %v4636
  %4638 = vdwg.mxu0
  %4639 = vmatpush.bf16.msra.mxu0 %v1681
  %4640 = vmatpush.bf16.msra.mxu0 %v1680
  %4641 = vmatpush.bf16.msra.mxu0 %v1679
  %4642 = vmatpush.bf16.msra.mxu0 %v1678
  %4643 = vmatpush.bf16.msra.mxu0 %v1677
  %4644 = vmatpush.bf16.msra.mxu0 %v1676
  %4645 = vmatpush.bf16.msra.mxu0 %v1675
  %4646 = vmatpush.bf16.msra.mxu0 %v1674
  %4647 = vmatmul.bf16.gmra.mxu0 %v4197
  %v4648 = vpop.f32.mrf.mxu0
  %v4649 = vadd.f32 %v4630, %v4648
  %v4650 = vpop.f32.mrf.mxu0
  %v4651 = vadd.f32 %v4632, %v4650
  %4652 = vmatmul.bf16.gmra.mxu0 %v4222
  %v4653 = vpop.f32.mrf.mxu0
  %v4654 = vadd.f32 %v4635, %v4653
  %v4655 = vpop.f32.mrf.mxu0
  %v4656 = vadd.f32 %v4637, %v4655
  %4657 = vdwg.mxu0
  %4658 = vmatpush.bf16.msra.mxu0 %v1689
  %4659 = vmatpush.bf16.msra.mxu0 %v1688
  %4660 = vmatpush.bf16.msra.mxu0 %v1687
  %4661 = vmatpush.bf16.msra.mxu0 %v1686
  %4662 = vmatpush.bf16.msra.mxu0 %v1685
  %4663 = vmatpush.bf16.msra.mxu0 %v1684
  %4664 = vmatpush.bf16.msra.mxu0 %v1683
  %4665 = vmatpush.bf16.msra.mxu0 %v1682
  %4666 = vmatmul.bf16.gmra.mxu0 %v4198
  %v4667 = vpop.f32.mrf.mxu0
  %v4668 = vadd.f32 %v4649, %v4667
  %v4669 = vpop.f32.mrf.mxu0
  %v4670 = vadd.f32 %v4651, %v4669
  %4671 = vmatmul.bf16.gmra.mxu0 %v4223
  %v4672 = vpop.f32.mrf.mxu0
  %v4673 = vadd.f32 %v4654, %v4672
  %v4674 = vpop.f32.mrf.mxu0
  %v4675 = vadd.f32 %v4656, %v4674
  %4676 = vdwg.mxu0
  %4677 = vmatpush.bf16.msra.mxu0 %v1697
  %4678 = vmatpush.bf16.msra.mxu0 %v1696
  %4679 = vmatpush.bf16.msra.mxu0 %v1695
  %4680 = vmatpush.bf16.msra.mxu0 %v1694
  %4681 = vmatpush.bf16.msra.mxu0 %v1693
  %4682 = vmatpush.bf16.msra.mxu0 %v1692
  %4683 = vmatpush.bf16.msra.mxu0 %v1691
  %4684 = vmatpush.bf16.msra.mxu0 %v1690
  %4685 = vmatmul.bf16.gmra.mxu0 %v4199
  %v4686 = vpop.f32.mrf.mxu0
  %v4687 = vadd.f32 %v4668, %v4686
  %v4688 = vpop.f32.mrf.mxu0
  %v4689 = vadd.f32 %v4670, %v4688
  %4690 = vmatmul.bf16.gmra.mxu0 %v4224
  %v4691 = vpop.f32.mrf.mxu0
  %v4692 = vadd.f32 %v4673, %v4691
  %v4693 = vpop.f32.mrf.mxu0
  %v4694 = vadd.f32 %v4675, %v4693
  %4695 = vdwg.mxu0
  %4696 = vmatpush.bf16.msra.mxu0 %v1705
  %4697 = vmatpush.bf16.msra.mxu0 %v1704
  %4698 = vmatpush.bf16.msra.mxu0 %v1703
  %4699 = vmatpush.bf16.msra.mxu0 %v1702
  %4700 = vmatpush.bf16.msra.mxu0 %v1701
  %4701 = vmatpush.bf16.msra.mxu0 %v1700
  %4702 = vmatpush.bf16.msra.mxu0 %v1699
  %4703 = vmatpush.bf16.msra.mxu0 %v1698
  %4704 = vmatmul.bf16.gmra.mxu0 %v4200
  %v4705 = vpop.f32.mrf.mxu0
  %v4706 = vadd.f32 %v4687, %v4705
  %v4707 = vpop.f32.mrf.mxu0
  %v4708 = vadd.f32 %v4689, %v4707
  %4709 = vmatmul.bf16.gmra.mxu0 %v4225
  %v4710 = vpop.f32.mrf.mxu0
  %v4711 = vadd.f32 %v4692, %v4710
  %v4712 = vpop.f32.mrf.mxu0
  %v4713 = vadd.f32 %v4694, %v4712
  %4714 = vdwg.mxu0
  %4715 = vmatpush.bf16.msra.mxu0 %v1713
  %4716 = vmatpush.bf16.msra.mxu0 %v1712
  %4717 = vmatpush.bf16.msra.mxu0 %v1711
  %4718 = vmatpush.bf16.msra.mxu0 %v1710
  %4719 = vmatpush.bf16.msra.mxu0 %v1709
  %4720 = vmatpush.bf16.msra.mxu0 %v1708
  %4721 = vmatpush.bf16.msra.mxu0 %v1707
  %4722 = vmatpush.bf16.msra.mxu0 %v1706
  %4723 = vmatmul.bf16.gmra.mxu0 %v4201
  %v4724 = vpop.f32.mrf.mxu0
  %v4725 = vadd.f32 %v4706, %v4724
  %v4726 = vpop.f32.mrf.mxu0
  %v4727 = vadd.f32 %v4708, %v4726
  %4728 = vmatmul.bf16.gmra.mxu0 %v4226
  %v4729 = vpop.f32.mrf.mxu0
  %v4730 = vadd.f32 %v4711, %v4729
  %v4731 = vpop.f32.mrf.mxu0
  %v4732 = vadd.f32 %v4713, %v4731
  %4733 = vdwg.mxu0
  %4734 = vmatpush.bf16.msra.mxu0 %v1721
  %4735 = vmatpush.bf16.msra.mxu0 %v1720
  %4736 = vmatpush.bf16.msra.mxu0 %v1719
  %4737 = vmatpush.bf16.msra.mxu0 %v1718
  %4738 = vmatpush.bf16.msra.mxu0 %v1717
  %4739 = vmatpush.bf16.msra.mxu0 %v1716
  %4740 = vmatpush.bf16.msra.mxu0 %v1715
  %4741 = vmatpush.bf16.msra.mxu0 %v1714
  %4742 = vmatmul.bf16.gmra.mxu0 %v4202
  %v4743 = vpop.f32.mrf.mxu0
  %v4744 = vadd.f32 %v4725, %v4743
  %v4745 = vpop.f32.mrf.mxu0
  %v4746 = vadd.f32 %v4727, %v4745
  %4747 = vmatmul.bf16.gmra.mxu0 %v4227
  %v4748 = vpop.f32.mrf.mxu0
  %v4749 = vadd.f32 %v4730, %v4748
  %v4750 = vpop.f32.mrf.mxu0
  %v4751 = vadd.f32 %v4732, %v4750
  %4752 = vdwg.mxu0
  %v4753 = vmax.f32 %v4744, 0.0
  %v4754 = vmax.f32 %v4746, 0.0
  %v4755 = vmax.f32 %v4749, 0.0
  %v4756 = vmax.f32 %v4751, 0.0
  %v4757 = vmax.f32 %v3969, %v4753
  %v4758 = vmax.f32 %v3970, %v4754
  %v4759 = vmax.f32 %v3971, %v4755
  %v4760 = vmax.f32 %v3972, %v4756
  %v4761 = vmax.f32 %v3185, %v4757
  %v4762 = vmax.f32 %v3186, %v4758
  %v4763 = vmax.f32 %v3187, %v4759
  %v4764 = vmax.f32 %v3188, %v4760
  %v4765 = vpack.c.bf16 %v4761, %v4761
  %v4766 = vpack.c.bf16 %v4762, %v4762
  %v4767 = vpack.c.bf16 %v4763, %v4763
  %v4768 = vpack.c.bf16 %v4764, %v4764
  %4769 = vst [vmem:[%s3] sm:$0xf] %v4765
  %4770 = vst [vmem:[%s3 + $0x4] sm:$0xf] %v4766
  %4771 = vst [vmem:[%s3 + $0x8] sm:$0xf] %v4767
  %4772 = vst [vmem:[%s3 + $0xc] sm:$0xf] %v4768
  // Predicated region
  $region14: #{lenet_enhanced2_forward.7} parent=0 // pred_check
    _
  $region15: #{lenet_enhanced2_forward.7} parent=0 // pred_check_branch
    %4774 = sbr.rel (0) target = $region17
  $region16: #{lenet_enhanced2_forward.7} parent=0 // pred_region
    _
  $region17: #{lenet_enhanced2_forward.7} parent=0 // pred_fallthru
    _
  // Predicated region
  $region18: #{lenet_enhanced2_forward.7} parent=0 // pred_check
    _
  $region19: #{lenet_enhanced2_forward.7} parent=0 // pred_check_branch
    %4776 = sbr.rel (0) target = $region21
  $region20: #{lenet_enhanced2_forward.7} parent=0 // pred_region
    _
  $region21: #{lenet_enhanced2_forward.7} parent=0 // pred_fallthru
    _

// kernel: lenet_enhanced2_forward.8
$region0: #{lenet_enhanced2_forward.8}
  #allocation0 [shape = 'u32[]', space=smem, size = 0x4, offset = 0x4, fixed_abs, tag = 'smem constant byte address 0x4 - core index']
  #allocation1 [shape = 'u32[72,128]{1,0:T(1,128)}', space=vmem, size = 0x9000, scoped, tag = 'internal scratch']
  %s0 = inlined_call_operand.vmem [shape: bf16[4,8,3200], index: 0, kind: input, shape index: {}]
  %s1 = inlined_call_operand.vmem [shape: bf16[3200,128], index: 1, kind: input, shape index: {}]
  %s2 = inlined_call_operand.vmem [shape: f32[1,128], index: 2, kind: input, shape index: {}]
  %s3 = inlined_call_operand.vmem [shape: bf16[8,128], index: 3, kind: output, shape index: {}]
  %s4 = sld [smem:[#allocation0]]
  $region22: #{lenet_enhanced2_forward.8} parent=0
    _
  %s6 = ssub.s32 1, %s4
  %s7 = scalar_select 0, %s6, %s4
  // Predicated region
  $region2: #{lenet_enhanced2_forward.8} parent=0 // pred_check
    _
  $region3: #{lenet_enhanced2_forward.8} parent=0 // pred_check_branch
    %9 = sbr.rel (0) target = $region5
  $region4: #{lenet_enhanced2_forward.8} parent=0 // pred_region
    _
  $region5: #{lenet_enhanced2_forward.8} parent=0 // pred_fallthru
    _
  // Predicated region
  $region6: #{lenet_enhanced2_forward.8} parent=0 // pred_check
    _
  $region7: #{lenet_enhanced2_forward.8} parent=0 // pred_check_branch
    %11 = sbr.rel (0) target = $region9
  $region8: #{lenet_enhanced2_forward.8} parent=0 // pred_region
    _
  $region9: #{lenet_enhanced2_forward.8} parent=0 // pred_fallthru
    _
  // Predicated region
  $region10: #{lenet_enhanced2_forward.8} parent=0 // pred_check
    _
  $region11: #{lenet_enhanced2_forward.8} parent=0 // pred_check_branch
    %13 = sbr.rel (0) target = $region13
  $region12: #{lenet_enhanced2_forward.8} parent=0 // pred_region
    _
  $region13: #{lenet_enhanced2_forward.8} parent=0 // pred_fallthru
    _
  %v14 = vld [vmem:[%s1] sm:$0xf]
  %v15 = vld [vmem:[%s1 + $0x4] sm:$0xf]
  %v16 = vld [vmem:[%s1 + $0x8] sm:$0xf]
  %v17 = vld [vmem:[%s1 + $0xc] sm:$0xf]
  %v18 = vld [vmem:[%s1 + $0x10] sm:$0xf]
  %v19 = vld [vmem:[%s1 + $0x14] sm:$0xf]
  %v20 = vld [vmem:[%s1 + $0x18] sm:$0xf]
  %v21 = vld [vmem:[%s1 + $0x1c] sm:$0xf]
  %v22 = vld [vmem:[%s1 + $0x20] sm:$0xf]
  %v23 = vld [vmem:[%s1 + $0x24] sm:$0xf]
  %v24 = vld [vmem:[%s1 + $0x28] sm:$0xf]
  %v25 = vld [vmem:[%s1 + $0x2c] sm:$0xf]
  %v26 = vld [vmem:[%s1 + $0x30] sm:$0xf]
  %v27 = vld [vmem:[%s1 + $0x34] sm:$0xf]
  %v28 = vld [vmem:[%s1 + $0x38] sm:$0xf]
  %v29 = vld [vmem:[%s1 + $0x3c] sm:$0xf]
  %v30 = vld [vmem:[%s1 + $0x40] sm:$0xf]
  %v31 = vld [vmem:[%s1 + $0x44] sm:$0xf]
  %v32 = vld [vmem:[%s1 + $0x48] sm:$0xf]
  %v33 = vld [vmem:[%s1 + $0x4c] sm:$0xf]
  %v34 = vld [vmem:[%s1 + $0x50] sm:$0xf]
  %v35 = vld [vmem:[%s1 + $0x54] sm:$0xf]
  %v36 = vld [vmem:[%s1 + $0x58] sm:$0xf]
  %v37 = vld [vmem:[%s1 + $0x5c] sm:$0xf]
  %v38 = vld [vmem:[%s1 + $0x60] sm:$0xf]
  %v39 = vld [vmem:[%s1 + $0x64] sm:$0xf]
  %v40 = vld [vmem:[%s1 + $0x68] sm:$0xf]
  %v41 = vld [vmem:[%s1 + $0x6c] sm:$0xf]
  %v42 = vld [vmem:[%s1 + $0x70] sm:$0xf]
  %v43 = vld [vmem:[%s1 + $0x74] sm:$0xf]
  %v44 = vld [vmem:[%s1 + $0x78] sm:$0xf]
  %v45 = vld [vmem:[%s1 + $0x7c] sm:$0xf]
  %v46 = vld [vmem:[%s1 + $0x80] sm:$0xf]
  %v47 = vld [vmem:[%s1 + $0x84] sm:$0xf]
  %v48 = vld [vmem:[%s1 + $0x88] sm:$0xf]
  %v49 = vld [vmem:[%s1 + $0x8c] sm:$0xf]
  %v50 = vld [vmem:[%s1 + $0x90] sm:$0xf]
  %v51 = vld [vmem:[%s1 + $0x94] sm:$0xf]
  %v52 = vld [vmem:[%s1 + $0x98] sm:$0xf]
  %v53 = vld [vmem:[%s1 + $0x9c] sm:$0xf]
  %v54 = vld [vmem:[%s1 + $0xa0] sm:$0xf]
  %v55 = vld [vmem:[%s1 + $0xa4] sm:$0xf]
  %v56 = vld [vmem:[%s1 + $0xa8] sm:$0xf]
  %v57 = vld [vmem:[%s1 + $0xac] sm:$0xf]
  %v58 = vld [vmem:[%s1 + $0xb0] sm:$0xf]
  %v59 = vld [vmem:[%s1 + $0xb4] sm:$0xf]
  %v60 = vld [vmem:[%s1 + $0xb8] sm:$0xf]
  %v61 = vld [vmem:[%s1 + $0xbc] sm:$0xf]
  %v62 = vld [vmem:[%s1 + $0xc0] sm:$0xf]
  %v63 = vld [vmem:[%s1 + $0xc4] sm:$0xf]
  %v64 = vld [vmem:[%s1 + $0xc8] sm:$0xf]
  %v65 = vld [vmem:[%s1 + $0xcc] sm:$0xf]
  %v66 = vld [vmem:[%s1 + $0xd0] sm:$0xf]
  %v67 = vld [vmem:[%s1 + $0xd4] sm:$0xf]
  %v68 = vld [vmem:[%s1 + $0xd8] sm:$0xf]
  %v69 = vld [vmem:[%s1 + $0xdc] sm:$0xf]
  %v70 = vld [vmem:[%s1 + $0xe0] sm:$0xf]
  %v71 = vld [vmem:[%s1 + $0xe4] sm:$0xf]
  %v72 = vld [vmem:[%s1 + $0xe8] sm:$0xf]
  %v73 = vld [vmem:[%s1 + $0xec] sm:$0xf]
  %v74 = vld [vmem:[%s1 + $0xf0] sm:$0xf]
  %v75 = vld [vmem:[%s1 + $0xf4] sm:$0xf]
  %v76 = vld [vmem:[%s1 + $0xf8] sm:$0xf]
  %v77 = vld [vmem:[%s1 + $0xfc] sm:$0xf]
  %v78 = vld [vmem:[%s1 + $0x100] sm:$0xf]
  %v79 = vld [vmem:[%s1 + $0x104] sm:$0xf]
  %v80 = vld [vmem:[%s1 + $0x108] sm:$0xf]
  %v81 = vld [vmem:[%s1 + $0x10c] sm:$0xf]
  %v82 = vld [vmem:[%s1 + $0x110] sm:$0xf]
  %v83 = vld [vmem:[%s1 + $0x114] sm:$0xf]
  %v84 = vld [vmem:[%s1 + $0x118] sm:$0xf]
  %v85 = vld [vmem:[%s1 + $0x11c] sm:$0xf]
  %v86 = vld [vmem:[%s1 + $0x120] sm:$0xf]
  %v87 = vld [vmem:[%s1 + $0x124] sm:$0xf]
  %v88 = vld [vmem:[%s1 + $0x128] sm:$0xf]
  %v89 = vld [vmem:[%s1 + $0x12c] sm:$0xf]
  %v90 = vld [vmem:[%s1 + $0x130] sm:$0xf]
  %v91 = vld [vmem:[%s1 + $0x134] sm:$0xf]
  %v92 = vld [vmem:[%s1 + $0x138] sm:$0xf]
  %v93 = vld [vmem:[%s1 + $0x13c] sm:$0xf]
  %v94 = vld [vmem:[%s1 + $0x140] sm:$0xf]
  %v95 = vld [vmem:[%s1 + $0x144] sm:$0xf]
  %v96 = vld [vmem:[%s1 + $0x148] sm:$0xf]
  %v97 = vld [vmem:[%s1 + $0x14c] sm:$0xf]
  %v98 = vld [vmem:[%s1 + $0x150] sm:$0xf]
  %v99 = vld [vmem:[%s1 + $0x154] sm:$0xf]
  %v100 = vld [vmem:[%s1 + $0x158] sm:$0xf]
  %v101 = vld [vmem:[%s1 + $0x15c] sm:$0xf]
  %v102 = vld [vmem:[%s1 + $0x160] sm:$0xf]
  %v103 = vld [vmem:[%s1 + $0x164] sm:$0xf]
  %v104 = vld [vmem:[%s1 + $0x168] sm:$0xf]
  %v105 = vld [vmem:[%s1 + $0x16c] sm:$0xf]
  %v106 = vld [vmem:[%s1 + $0x170] sm:$0xf]
  %v107 = vld [vmem:[%s1 + $0x174] sm:$0xf]
  %v108 = vld [vmem:[%s1 + $0x178] sm:$0xf]
  %v109 = vld [vmem:[%s1 + $0x17c] sm:$0xf]
  %v110 = vld [vmem:[%s1 + $0x180] sm:$0xf]
  %v111 = vld [vmem:[%s1 + $0x184] sm:$0xf]
  %v112 = vld [vmem:[%s1 + $0x188] sm:$0xf]
  %v113 = vld [vmem:[%s1 + $0x18c] sm:$0xf]
  %v114 = vld [vmem:[%s1 + $0x190] sm:$0xf]
  %v115 = vld [vmem:[%s1 + $0x194] sm:$0xf]
  %v116 = vld [vmem:[%s1 + $0x198] sm:$0xf]
  %v117 = vld [vmem:[%s1 + $0x19c] sm:$0xf]
  %v118 = vld [vmem:[%s1 + $0x1a0] sm:$0xf]
  %v119 = vld [vmem:[%s1 + $0x1a4] sm:$0xf]
  %v120 = vld [vmem:[%s1 + $0x1a8] sm:$0xf]
  %v121 = vld [vmem:[%s1 + $0x1ac] sm:$0xf]
  %v122 = vld [vmem:[%s1 + $0x1b0] sm:$0xf]
  %v123 = vld [vmem:[%s1 + $0x1b4] sm:$0xf]
  %v124 = vld [vmem:[%s1 + $0x1b8] sm:$0xf]
  %v125 = vld [vmem:[%s1 + $0x1bc] sm:$0xf]
  %v126 = vld [vmem:[%s1 + $0x1c0] sm:$0xf]
  %v127 = vld [vmem:[%s1 + $0x1c4] sm:$0xf]
  %v128 = vld [vmem:[%s1 + $0x1c8] sm:$0xf]
  %v129 = vld [vmem:[%s1 + $0x1cc] sm:$0xf]
  %v130 = vld [vmem:[%s1 + $0x1d0] sm:$0xf]
  %v131 = vld [vmem:[%s1 + $0x1d4] sm:$0xf]
  %v132 = vld [vmem:[%s1 + $0x1d8] sm:$0xf]
  %v133 = vld [vmem:[%s1 + $0x1dc] sm:$0xf]
  %v134 = vld [vmem:[%s1 + $0x1e0] sm:$0xf]
  %v135 = vld [vmem:[%s1 + $0x1e4] sm:$0xf]
  %v136 = vld [vmem:[%s1 + $0x1e8] sm:$0xf]
  %v137 = vld [vmem:[%s1 + $0x1ec] sm:$0xf]
  %v138 = vld [vmem:[%s1 + $0x1f0] sm:$0xf]
  %v139 = vld [vmem:[%s1 + $0x1f4] sm:$0xf]
  %v140 = vld [vmem:[%s1 + $0x1f8] sm:$0xf]
  %v141 = vld [vmem:[%s1 + $0x1fc] sm:$0xf]
  %v142 = vld [vmem:[%s1 + $0x200] sm:$0xf]
  %v143 = vld [vmem:[%s1 + $0x204] sm:$0xf]
  %v144 = vld [vmem:[%s1 + $0x208] sm:$0xf]
  %v145 = vld [vmem:[%s1 + $0x20c] sm:$0xf]
  %v146 = vld [vmem:[%s1 + $0x210] sm:$0xf]
  %v147 = vld [vmem:[%s1 + $0x214] sm:$0xf]
  %v148 = vld [vmem:[%s1 + $0x218] sm:$0xf]
  %v149 = vld [vmem:[%s1 + $0x21c] sm:$0xf]
  %v150 = vld [vmem:[%s1 + $0x220] sm:$0xf]
  %v151 = vld [vmem:[%s1 + $0x224] sm:$0xf]
  %v152 = vld [vmem:[%s1 + $0x228] sm:$0xf]
  %v153 = vld [vmem:[%s1 + $0x22c] sm:$0xf]
  %v154 = vld [vmem:[%s1 + $0x230] sm:$0xf]
  %v155 = vld [vmem:[%s1 + $0x234] sm:$0xf]
  %v156 = vld [vmem:[%s1 + $0x238] sm:$0xf]
  %v157 = vld [vmem:[%s1 + $0x23c] sm:$0xf]
  %v158 = vld [vmem:[%s1 + $0x240] sm:$0xf]
  %v159 = vld [vmem:[%s1 + $0x244] sm:$0xf]
  %v160 = vld [vmem:[%s1 + $0x248] sm:$0xf]
  %v161 = vld [vmem:[%s1 + $0x24c] sm:$0xf]
  %v162 = vld [vmem:[%s1 + $0x250] sm:$0xf]
  %v163 = vld [vmem:[%s1 + $0x254] sm:$0xf]
  %v164 = vld [vmem:[%s1 + $0x258] sm:$0xf]
  %v165 = vld [vmem:[%s1 + $0x25c] sm:$0xf]
  %v166 = vld [vmem:[%s1 + $0x260] sm:$0xf]
  %v167 = vld [vmem:[%s1 + $0x264] sm:$0xf]
  %v168 = vld [vmem:[%s1 + $0x268] sm:$0xf]
  %v169 = vld [vmem:[%s1 + $0x26c] sm:$0xf]
  %v170 = vld [vmem:[%s1 + $0x270] sm:$0xf]
  %v171 = vld [vmem:[%s1 + $0x274] sm:$0xf]
  %v172 = vld [vmem:[%s1 + $0x278] sm:$0xf]
  %v173 = vld [vmem:[%s1 + $0x27c] sm:$0xf]
  %v174 = vld [vmem:[%s1 + $0x280] sm:$0xf]
  %v175 = vld [vmem:[%s1 + $0x284] sm:$0xf]
  %v176 = vld [vmem:[%s1 + $0x288] sm:$0xf]
  %v177 = vld [vmem:[%s1 + $0x28c] sm:$0xf]
  %v178 = vld [vmem:[%s1 + $0x290] sm:$0xf]
  %v179 = vld [vmem:[%s1 + $0x294] sm:$0xf]
  %v180 = vld [vmem:[%s1 + $0x298] sm:$0xf]
  %v181 = vld [vmem:[%s1 + $0x29c] sm:$0xf]
  %v182 = vld [vmem:[%s1 + $0x2a0] sm:$0xf]
  %v183 = vld [vmem:[%s1 + $0x2a4] sm:$0xf]
  %v184 = vld [vmem:[%s1 + $0x2a8] sm:$0xf]
  %v185 = vld [vmem:[%s1 + $0x2ac] sm:$0xf]
  %v186 = vld [vmem:[%s1 + $0x2b0] sm:$0xf]
  %v187 = vld [vmem:[%s1 + $0x2b4] sm:$0xf]
  %v188 = vld [vmem:[%s1 + $0x2b8] sm:$0xf]
  %v189 = vld [vmem:[%s1 + $0x2bc] sm:$0xf]
  %v190 = vld [vmem:[%s1 + $0x2c0] sm:$0xf]
  %v191 = vld [vmem:[%s1 + $0x2c4] sm:$0xf]
  %v192 = vld [vmem:[%s1 + $0x2c8] sm:$0xf]
  %v193 = vld [vmem:[%s1 + $0x2cc] sm:$0xf]
  %v194 = vld [vmem:[%s1 + $0x2d0] sm:$0xf]
  %v195 = vld [vmem:[%s1 + $0x2d4] sm:$0xf]
  %v196 = vld [vmem:[%s1 + $0x2d8] sm:$0xf]
  %v197 = vld [vmem:[%s1 + $0x2dc] sm:$0xf]
  %v198 = vld [vmem:[%s1 + $0x2e0] sm:$0xf]
  %v199 = vld [vmem:[%s1 + $0x2e4] sm:$0xf]
  %v200 = vld [vmem:[%s1 + $0x2e8] sm:$0xf]
  %v201 = vld [vmem:[%s1 + $0x2ec] sm:$0xf]
  %v202 = vld [vmem:[%s1 + $0x2f0] sm:$0xf]
  %v203 = vld [vmem:[%s1 + $0x2f4] sm:$0xf]
  %v204 = vld [vmem:[%s1 + $0x2f8] sm:$0xf]
  %v205 = vld [vmem:[%s1 + $0x2fc] sm:$0xf]
  %v206 = vld [vmem:[%s1 + $0x300] sm:$0xf]
  %v207 = vld [vmem:[%s1 + $0x304] sm:$0xf]
  %v208 = vld [vmem:[%s1 + $0x308] sm:$0xf]
  %v209 = vld [vmem:[%s1 + $0x30c] sm:$0xf]
  %v210 = vld [vmem:[%s1 + $0x310] sm:$0xf]
  %v211 = vld [vmem:[%s1 + $0x314] sm:$0xf]
  %v212 = vld [vmem:[%s1 + $0x318] sm:$0xf]
  %v213 = vld [vmem:[%s1 + $0x31c] sm:$0xf]
  %v214 = vld [vmem:[%s1 + $0x320] sm:$0xf]
  %v215 = vld [vmem:[%s1 + $0x324] sm:$0xf]
  %v216 = vld [vmem:[%s1 + $0x328] sm:$0xf]
  %v217 = vld [vmem:[%s1 + $0x32c] sm:$0xf]
  %v218 = vld [vmem:[%s1 + $0x330] sm:$0xf]
  %v219 = vld [vmem:[%s1 + $0x334] sm:$0xf]
  %v220 = vld [vmem:[%s1 + $0x338] sm:$0xf]
  %v221 = vld [vmem:[%s1 + $0x33c] sm:$0xf]
  %v222 = vld [vmem:[%s1 + $0x340] sm:$0xf]
  %v223 = vld [vmem:[%s1 + $0x344] sm:$0xf]
  %v224 = vld [vmem:[%s1 + $0x348] sm:$0xf]
  %v225 = vld [vmem:[%s1 + $0x34c] sm:$0xf]
  %v226 = vld [vmem:[%s1 + $0x350] sm:$0xf]
  %v227 = vld [vmem:[%s1 + $0x354] sm:$0xf]
  %v228 = vld [vmem:[%s1 + $0x358] sm:$0xf]
  %v229 = vld [vmem:[%s1 + $0x35c] sm:$0xf]
  %v230 = vld [vmem:[%s1 + $0x360] sm:$0xf]
  %v231 = vld [vmem:[%s1 + $0x364] sm:$0xf]
  %v232 = vld [vmem:[%s1 + $0x368] sm:$0xf]
  %v233 = vld [vmem:[%s1 + $0x36c] sm:$0xf]
  %v234 = vld [vmem:[%s1 + $0x370] sm:$0xf]
  %v235 = vld [vmem:[%s1 + $0x374] sm:$0xf]
  %v236 = vld [vmem:[%s1 + $0x378] sm:$0xf]
  %v237 = vld [vmem:[%s1 + $0x37c] sm:$0xf]
  %v238 = vld [vmem:[%s1 + $0x380] sm:$0xf]
  %v239 = vld [vmem:[%s1 + $0x384] sm:$0xf]
  %v240 = vld [vmem:[%s1 + $0x388] sm:$0xf]
  %v241 = vld [vmem:[%s1 + $0x38c] sm:$0xf]
  %v242 = vld [vmem:[%s1 + $0x390] sm:$0xf]
  %v243 = vld [vmem:[%s1 + $0x394] sm:$0xf]
  %v244 = vld [vmem:[%s1 + $0x398] sm:$0xf]
  %v245 = vld [vmem:[%s1 + $0x39c] sm:$0xf]
  %v246 = vld [vmem:[%s1 + $0x3a0] sm:$0xf]
  %v247 = vld [vmem:[%s1 + $0x3a4] sm:$0xf]
  %v248 = vld [vmem:[%s1 + $0x3a8] sm:$0xf]
  %v249 = vld [vmem:[%s1 + $0x3ac] sm:$0xf]
  %v250 = vld [vmem:[%s1 + $0x3b0] sm:$0xf]
  %v251 = vld [vmem:[%s1 + $0x3b4] sm:$0xf]
  %v252 = vld [vmem:[%s1 + $0x3b8] sm:$0xf]
  %v253 = vld [vmem:[%s1 + $0x3bc] sm:$0xf]
  %v254 = vld [vmem:[%s1 + $0x3c0] sm:$0xf]
  %v255 = vld [vmem:[%s1 + $0x3c4] sm:$0xf]
  %v256 = vld [vmem:[%s1 + $0x3c8] sm:$0xf]
  %v257 = vld [vmem:[%s1 + $0x3cc] sm:$0xf]
  %v258 = vld [vmem:[%s1 + $0x3d0] sm:$0xf]
  %v259 = vld [vmem:[%s1 + $0x3d4] sm:$0xf]
  %v260 = vld [vmem:[%s1 + $0x3d8] sm:$0xf]
  %v261 = vld [vmem:[%s1 + $0x3dc] sm:$0xf]
  %v262 = vld [vmem:[%s1 + $0x3e0] sm:$0xf]
  %v263 = vld [vmem:[%s1 + $0x3e4] sm:$0xf]
  %v264 = vld [vmem:[%s1 + $0x3e8] sm:$0xf]
  %v265 = vld [vmem:[%s1 + $0x3ec] sm:$0xf]
  %v266 = vld [vmem:[%s1 + $0x3f0] sm:$0xf]
  %v267 = vld [vmem:[%s1 + $0x3f4] sm:$0xf]
  %v268 = vld [vmem:[%s1 + $0x3f8] sm:$0xf]
  %v269 = vld [vmem:[%s1 + $0x3fc] sm:$0xf]
  %v270 = vld [vmem:[%s1 + $0x400] sm:$0xf]
  %v271 = vld [vmem:[%s1 + $0x404] sm:$0xf]
  %v272 = vld [vmem:[%s1 + $0x408] sm:$0xf]
  %v273 = vld [vmem:[%s1 + $0x40c] sm:$0xf]
  %v274 = vld [vmem:[%s1 + $0x410] sm:$0xf]
  %v275 = vld [vmem:[%s1 + $0x414] sm:$0xf]
  %v276 = vld [vmem:[%s1 + $0x418] sm:$0xf]
  %v277 = vld [vmem:[%s1 + $0x41c] sm:$0xf]
  %v278 = vld [vmem:[%s1 + $0x420] sm:$0xf]
  %v279 = vld [vmem:[%s1 + $0x424] sm:$0xf]
  %v280 = vld [vmem:[%s1 + $0x428] sm:$0xf]
  %v281 = vld [vmem:[%s1 + $0x42c] sm:$0xf]
  %v282 = vld [vmem:[%s1 + $0x430] sm:$0xf]
  %v283 = vld [vmem:[%s1 + $0x434] sm:$0xf]
  %v284 = vld [vmem:[%s1 + $0x438] sm:$0xf]
  %v285 = vld [vmem:[%s1 + $0x43c] sm:$0xf]
  %v286 = vld [vmem:[%s1 + $0x440] sm:$0xf]
  %v287 = vld [vmem:[%s1 + $0x444] sm:$0xf]
  %v288 = vld [vmem:[%s1 + $0x448] sm:$0xf]
  %v289 = vld [vmem:[%s1 + $0x44c] sm:$0xf]
  %v290 = vld [vmem:[%s1 + $0x450] sm:$0xf]
  %v291 = vld [vmem:[%s1 + $0x454] sm:$0xf]
  %v292 = vld [vmem:[%s1 + $0x458] sm:$0xf]
  %v293 = vld [vmem:[%s1 + $0x45c] sm:$0xf]
  %v294 = vld [vmem:[%s1 + $0x460] sm:$0xf]
  %v295 = vld [vmem:[%s1 + $0x464] sm:$0xf]
  %v296 = vld [vmem:[%s1 + $0x468] sm:$0xf]
  %v297 = vld [vmem:[%s1 + $0x46c] sm:$0xf]
  %v298 = vld [vmem:[%s1 + $0x470] sm:$0xf]
  %v299 = vld [vmem:[%s1 + $0x474] sm:$0xf]
  %v300 = vld [vmem:[%s1 + $0x478] sm:$0xf]
  %v301 = vld [vmem:[%s1 + $0x47c] sm:$0xf]
  %v302 = vld [vmem:[%s1 + $0x480] sm:$0xf]
  %v303 = vld [vmem:[%s1 + $0x484] sm:$0xf]
  %v304 = vld [vmem:[%s1 + $0x488] sm:$0xf]
  %v305 = vld [vmem:[%s1 + $0x48c] sm:$0xf]
  %v306 = vld [vmem:[%s1 + $0x490] sm:$0xf]
  %v307 = vld [vmem:[%s1 + $0x494] sm:$0xf]
  %v308 = vld [vmem:[%s1 + $0x498] sm:$0xf]
  %v309 = vld [vmem:[%s1 + $0x49c] sm:$0xf]
  %v310 = vld [vmem:[%s1 + $0x4a0] sm:$0xf]
  %v311 = vld [vmem:[%s1 + $0x4a4] sm:$0xf]
  %v312 = vld [vmem:[%s1 + $0x4a8] sm:$0xf]
  %v313 = vld [vmem:[%s1 + $0x4ac] sm:$0xf]
  %v314 = vld [vmem:[%s1 + $0x4b0] sm:$0xf]
  %v315 = vld [vmem:[%s1 + $0x4b4] sm:$0xf]
  %v316 = vld [vmem:[%s1 + $0x4b8] sm:$0xf]
  %v317 = vld [vmem:[%s1 + $0x4bc] sm:$0xf]
  %v318 = vld [vmem:[%s1 + $0x4c0] sm:$0xf]
  %v319 = vld [vmem:[%s1 + $0x4c4] sm:$0xf]
  %v320 = vld [vmem:[%s1 + $0x4c8] sm:$0xf]
  %v321 = vld [vmem:[%s1 + $0x4cc] sm:$0xf]
  %v322 = vld [vmem:[%s1 + $0x4d0] sm:$0xf]
  %v323 = vld [vmem:[%s1 + $0x4d4] sm:$0xf]
  %v324 = vld [vmem:[%s1 + $0x4d8] sm:$0xf]
  %v325 = vld [vmem:[%s1 + $0x4dc] sm:$0xf]
  %v326 = vld [vmem:[%s1 + $0x4e0] sm:$0xf]
  %v327 = vld [vmem:[%s1 + $0x4e4] sm:$0xf]
  %v328 = vld [vmem:[%s1 + $0x4e8] sm:$0xf]
  %v329 = vld [vmem:[%s1 + $0x4ec] sm:$0xf]
  %v330 = vld [vmem:[%s1 + $0x4f0] sm:$0xf]
  %v331 = vld [vmem:[%s1 + $0x4f4] sm:$0xf]
  %v332 = vld [vmem:[%s1 + $0x4f8] sm:$0xf]
  %v333 = vld [vmem:[%s1 + $0x4fc] sm:$0xf]
  %v334 = vld [vmem:[%s1 + $0x500] sm:$0xf]
  %v335 = vld [vmem:[%s1 + $0x504] sm:$0xf]
  %v336 = vld [vmem:[%s1 + $0x508] sm:$0xf]
  %v337 = vld [vmem:[%s1 + $0x50c] sm:$0xf]
  %v338 = vld [vmem:[%s1 + $0x510] sm:$0xf]
  %v339 = vld [vmem:[%s1 + $0x514] sm:$0xf]
  %v340 = vld [vmem:[%s1 + $0x518] sm:$0xf]
  %v341 = vld [vmem:[%s1 + $0x51c] sm:$0xf]
  %v342 = vld [vmem:[%s1 + $0x520] sm:$0xf]
  %v343 = vld [vmem:[%s1 + $0x524] sm:$0xf]
  %v344 = vld [vmem:[%s1 + $0x528] sm:$0xf]
  %v345 = vld [vmem:[%s1 + $0x52c] sm:$0xf]
  %v346 = vld [vmem:[%s1 + $0x530] sm:$0xf]
  %v347 = vld [vmem:[%s1 + $0x534] sm:$0xf]
  %v348 = vld [vmem:[%s1 + $0x538] sm:$0xf]
  %v349 = vld [vmem:[%s1 + $0x53c] sm:$0xf]
  %v350 = vld [vmem:[%s1 + $0x540] sm:$0xf]
  %v351 = vld [vmem:[%s1 + $0x544] sm:$0xf]
  %v352 = vld [vmem:[%s1 + $0x548] sm:$0xf]
  %v353 = vld [vmem:[%s1 + $0x54c] sm:$0xf]
  %v354 = vld [vmem:[%s1 + $0x550] sm:$0xf]
  %v355 = vld [vmem:[%s1 + $0x554] sm:$0xf]
  %v356 = vld [vmem:[%s1 + $0x558] sm:$0xf]
  %v357 = vld [vmem:[%s1 + $0x55c] sm:$0xf]
  %v358 = vld [vmem:[%s1 + $0x560] sm:$0xf]
  %v359 = vld [vmem:[%s1 + $0x564] sm:$0xf]
  %v360 = vld [vmem:[%s1 + $0x568] sm:$0xf]
  %v361 = vld [vmem:[%s1 + $0x56c] sm:$0xf]
  %v362 = vld [vmem:[%s1 + $0x570] sm:$0xf]
  %v363 = vld [vmem:[%s1 + $0x574] sm:$0xf]
  %v364 = vld [vmem:[%s1 + $0x578] sm:$0xf]
  %v365 = vld [vmem:[%s1 + $0x57c] sm:$0xf]
  %v366 = vld [vmem:[%s1 + $0x580] sm:$0xf]
  %v367 = vld [vmem:[%s1 + $0x584] sm:$0xf]
  %v368 = vld [vmem:[%s1 + $0x588] sm:$0xf]
  %v369 = vld [vmem:[%s1 + $0x58c] sm:$0xf]
  %v370 = vld [vmem:[%s1 + $0x590] sm:$0xf]
  %v371 = vld [vmem:[%s1 + $0x594] sm:$0xf]
  %v372 = vld [vmem:[%s1 + $0x598] sm:$0xf]
  %v373 = vld [vmem:[%s1 + $0x59c] sm:$0xf]
  %v374 = vld [vmem:[%s1 + $0x5a0] sm:$0xf]
  %v375 = vld [vmem:[%s1 + $0x5a4] sm:$0xf]
  %v376 = vld [vmem:[%s1 + $0x5a8] sm:$0xf]
  %v377 = vld [vmem:[%s1 + $0x5ac] sm:$0xf]
  %v378 = vld [vmem:[%s1 + $0x5b0] sm:$0xf]
  %v379 = vld [vmem:[%s1 + $0x5b4] sm:$0xf]
  %v380 = vld [vmem:[%s1 + $0x5b8] sm:$0xf]
  %v381 = vld [vmem:[%s1 + $0x5bc] sm:$0xf]
  %v382 = vld [vmem:[%s1 + $0x5c0] sm:$0xf]
  %v383 = vld [vmem:[%s1 + $0x5c4] sm:$0xf]
  %v384 = vld [vmem:[%s1 + $0x5c8] sm:$0xf]
  %v385 = vld [vmem:[%s1 + $0x5cc] sm:$0xf]
  %v386 = vld [vmem:[%s1 + $0x5d0] sm:$0xf]
  %v387 = vld [vmem:[%s1 + $0x5d4] sm:$0xf]
  %v388 = vld [vmem:[%s1 + $0x5d8] sm:$0xf]
  %v389 = vld [vmem:[%s1 + $0x5dc] sm:$0xf]
  %v390 = vld [vmem:[%s1 + $0x5e0] sm:$0xf]
  %v391 = vld [vmem:[%s1 + $0x5e4] sm:$0xf]
  %v392 = vld [vmem:[%s1 + $0x5e8] sm:$0xf]
  %v393 = vld [vmem:[%s1 + $0x5ec] sm:$0xf]
  %v394 = vld [vmem:[%s1 + $0x5f0] sm:$0xf]
  %v395 = vld [vmem:[%s1 + $0x5f4] sm:$0xf]
  %v396 = vld [vmem:[%s1 + $0x5f8] sm:$0xf]
  %v397 = vld [vmem:[%s1 + $0x5fc] sm:$0xf]
  %v398 = vld [vmem:[%s1 + $0x600] sm:$0xf]
  %v399 = vld [vmem:[%s1 + $0x604] sm:$0xf]
  %v400 = vld [vmem:[%s1 + $0x608] sm:$0xf]
  %v401 = vld [vmem:[%s1 + $0x60c] sm:$0xf]
  %v402 = vld [vmem:[%s1 + $0x610] sm:$0xf]
  %v403 = vld [vmem:[%s1 + $0x614] sm:$0xf]
  %v404 = vld [vmem:[%s1 + $0x618] sm:$0xf]
  %v405 = vld [vmem:[%s1 + $0x61c] sm:$0xf]
  %v406 = vld [vmem:[%s1 + $0x620] sm:$0xf]
  %v407 = vld [vmem:[%s1 + $0x624] sm:$0xf]
  %v408 = vld [vmem:[%s1 + $0x628] sm:$0xf]
  %v409 = vld [vmem:[%s1 + $0x62c] sm:$0xf]
  %v410 = vld [vmem:[%s1 + $0x630] sm:$0xf]
  %v411 = vld [vmem:[%s1 + $0x634] sm:$0xf]
  %v412 = vld [vmem:[%s1 + $0x638] sm:$0xf]
  %v413 = vld [vmem:[%s1 + $0x63c] sm:$0xf]
  %v414 = vld [vmem:[%s2] sm:$0x1]
  %v415 = vld [vmem:[%s0] sm:$0xff]
  %v416 = vld [vmem:[%s0 + $0x8] sm:$0xff]
  %v417 = vld [vmem:[%s0 + $0x10] sm:$0xff]
  %v418 = vld [vmem:[%s0 + $0x18] sm:$0xff]
  %v419 = vld [vmem:[%s0 + $0x20] sm:$0xff]
  %v420 = vld [vmem:[%s0 + $0x28] sm:$0xff]
  %v421 = vld [vmem:[%s0 + $0x30] sm:$0xff]
  %v422 = vld [vmem:[%s0 + $0x38] sm:$0xff]
  %v423 = vld [vmem:[%s0 + $0x40] sm:$0xff]
  %v424 = vld [vmem:[%s0 + $0x48] sm:$0xff]
  %v425 = vld [vmem:[%s0 + $0x50] sm:$0xff]
  %v426 = vld [vmem:[%s0 + $0x58] sm:$0xff]
  %v427 = vld [vmem:[%s0 + $0x60] sm:$0xf]
  %v429 = vperm.slane %v414, 0
  %v444 = vunpack.c.l.b16 %v415
  %v445 = vunpack.c.h.b16 %v415
  %v446 = vunpack.c.l.b16 %v416
  %v447 = vunpack.c.h.b16 %v416
  %v448 = vunpack.c.l.b16 %v417
  %v449 = vunpack.c.h.b16 %v417
  %v450 = vunpack.c.l.b16 %v418
  %v451 = vunpack.c.h.b16 %v418
  %v452 = vunpack.c.l.b16 %v419
  %v453 = vunpack.c.h.b16 %v419
  %v454 = vunpack.c.l.b16 %v420
  %v455 = vunpack.c.h.b16 %v420
  %v456 = vunpack.c.l.b16 %v421
  %v457 = vunpack.c.h.b16 %v421
  %v458 = vunpack.c.l.b16 %v422
  %v459 = vunpack.c.h.b16 %v422
  %v460 = vunpack.c.l.b16 %v423
  %v461 = vunpack.c.h.b16 %v423
  %v462 = vunpack.c.l.b16 %v424
  %v463 = vunpack.c.h.b16 %v424
  %v464 = vunpack.c.l.b16 %v425
  %v465 = vunpack.c.h.b16 %v425
  %v466 = vunpack.c.l.b16 %v426
  %v467 = vunpack.c.h.b16 %v426
  %v468 = vunpack.c.l.b16 %v427
  %v469 = vpack.c.b16 %v444, %v444
  %v470 = vpack.c.b16 %v445, %v445
  %v471 = vpack.c.b16 %v446, %v446
  %v472 = vpack.c.b16 %v447, %v447
  %v473 = vpack.c.b16 %v448, %v448
  %v474 = vpack.c.b16 %v449, %v449
  %v475 = vpack.c.b16 %v450, %v450
  %v476 = vpack.c.b16 %v451, %v451
  %v477 = vpack.c.b16 %v452, %v452
  %v478 = vpack.c.b16 %v453, %v453
  %v479 = vpack.c.b16 %v454, %v454
  %v480 = vpack.c.b16 %v455, %v455
  %v481 = vpack.c.b16 %v456, %v456
  %v482 = vpack.c.b16 %v457, %v457
  %v483 = vpack.c.b16 %v458, %v458
  %v484 = vpack.c.b16 %v459, %v459
  %v485 = vpack.c.b16 %v460, %v460
  %v486 = vpack.c.b16 %v461, %v461
  %v487 = vpack.c.b16 %v462, %v462
  %v488 = vpack.c.b16 %v463, %v463
  %v489 = vpack.c.b16 %v464, %v464
  %v490 = vpack.c.b16 %v465, %v465
  %v491 = vpack.c.b16 %v466, %v466
  %v492 = vpack.c.b16 %v467, %v467
  %v493 = vpack.c.b16 %v468, %v468
  %v919 = vunpack.c.l.b16 %v14
  %v920 = vunpack.c.l.b16 %v15
  %v921 = vunpack.c.l.b16 %v16
  %v922 = vunpack.c.l.b16 %v17
  %v923 = vunpack.c.l.b16 %v18
  %v924 = vunpack.c.l.b16 %v19
  %v925 = vunpack.c.l.b16 %v20
  %v926 = vunpack.c.l.b16 %v21
  %v927 = vunpack.c.l.b16 %v22
  %v928 = vunpack.c.l.b16 %v23
  %v929 = vunpack.c.l.b16 %v24
  %v930 = vunpack.c.l.b16 %v25
  %v931 = vunpack.c.l.b16 %v26
  %v932 = vunpack.c.l.b16 %v27
  %v933 = vunpack.c.l.b16 %v28
  %v934 = vunpack.c.l.b16 %v29
  %v935 = vunpack.c.l.b16 %v30
  %v936 = vunpack.c.l.b16 %v31
  %v937 = vunpack.c.l.b16 %v32
  %v938 = vunpack.c.l.b16 %v33
  %v939 = vunpack.c.l.b16 %v34
  %v940 = vunpack.c.l.b16 %v35
  %v941 = vunpack.c.l.b16 %v36
  %v942 = vunpack.c.l.b16 %v37
  %v943 = vunpack.c.l.b16 %v38
  %v944 = vunpack.c.l.b16 %v39
  %v945 = vunpack.c.l.b16 %v40
  %v946 = vunpack.c.l.b16 %v41
  %v947 = vunpack.c.l.b16 %v42
  %v948 = vunpack.c.l.b16 %v43
  %v949 = vunpack.c.l.b16 %v44
  %v950 = vunpack.c.l.b16 %v45
  %v951 = vunpack.c.l.b16 %v46
  %v952 = vunpack.c.l.b16 %v47
  %v953 = vunpack.c.l.b16 %v48
  %v954 = vunpack.c.l.b16 %v49
  %v955 = vunpack.c.l.b16 %v50
  %v956 = vunpack.c.l.b16 %v51
  %v957 = vunpack.c.l.b16 %v52
  %v958 = vunpack.c.l.b16 %v53
  %v959 = vunpack.c.l.b16 %v54
  %v960 = vunpack.c.l.b16 %v55
  %v961 = vunpack.c.l.b16 %v56
  %v962 = vunpack.c.l.b16 %v57
  %v963 = vunpack.c.l.b16 %v58
  %v964 = vunpack.c.l.b16 %v59
  %v965 = vunpack.c.l.b16 %v60
  %v966 = vunpack.c.l.b16 %v61
  %v967 = vunpack.c.l.b16 %v62
  %v968 = vunpack.c.l.b16 %v63
  %v969 = vunpack.c.l.b16 %v64
  %v970 = vunpack.c.l.b16 %v65
  %v971 = vunpack.c.l.b16 %v66
  %v972 = vunpack.c.l.b16 %v67
  %v973 = vunpack.c.l.b16 %v68
  %v974 = vunpack.c.l.b16 %v69
  %v975 = vunpack.c.l.b16 %v70
  %v976 = vunpack.c.l.b16 %v71
  %v977 = vunpack.c.l.b16 %v72
  %v978 = vunpack.c.l.b16 %v73
  %v979 = vunpack.c.l.b16 %v74
  %v980 = vunpack.c.l.b16 %v75
  %v981 = vunpack.c.l.b16 %v76
  %v982 = vunpack.c.l.b16 %v77
  %v983 = vunpack.c.l.b16 %v78
  %v984 = vunpack.c.l.b16 %v79
  %v985 = vunpack.c.l.b16 %v80
  %v986 = vunpack.c.l.b16 %v81
  %v987 = vunpack.c.l.b16 %v82
  %v988 = vunpack.c.l.b16 %v83
  %v989 = vunpack.c.l.b16 %v84
  %v990 = vunpack.c.l.b16 %v85
  %v991 = vunpack.c.l.b16 %v86
  %v992 = vunpack.c.l.b16 %v87
  %v993 = vunpack.c.l.b16 %v88
  %v994 = vunpack.c.l.b16 %v89
  %v995 = vunpack.c.l.b16 %v90
  %v996 = vunpack.c.l.b16 %v91
  %v997 = vunpack.c.l.b16 %v92
  %v998 = vunpack.c.l.b16 %v93
  %v999 = vunpack.c.l.b16 %v94
  %v1000 = vunpack.c.l.b16 %v95
  %v1001 = vunpack.c.l.b16 %v96
  %v1002 = vunpack.c.l.b16 %v97
  %v1003 = vunpack.c.l.b16 %v98
  %v1004 = vunpack.c.l.b16 %v99
  %v1005 = vunpack.c.l.b16 %v100
  %v1006 = vunpack.c.l.b16 %v101
  %v1007 = vunpack.c.l.b16 %v102
  %v1008 = vunpack.c.l.b16 %v103
  %v1009 = vunpack.c.l.b16 %v104
  %v1010 = vunpack.c.l.b16 %v105
  %v1011 = vunpack.c.l.b16 %v106
  %v1012 = vunpack.c.l.b16 %v107
  %v1013 = vunpack.c.l.b16 %v108
  %v1014 = vunpack.c.l.b16 %v109
  %v1015 = vunpack.c.l.b16 %v110
  %v1016 = vunpack.c.l.b16 %v111
  %v1017 = vunpack.c.l.b16 %v112
  %v1018 = vunpack.c.l.b16 %v113
  %v1019 = vunpack.c.l.b16 %v114
  %v1020 = vunpack.c.l.b16 %v115
  %v1021 = vunpack.c.l.b16 %v116
  %v1022 = vunpack.c.l.b16 %v117
  %v1023 = vunpack.c.l.b16 %v118
  %v1024 = vunpack.c.l.b16 %v119
  %v1025 = vunpack.c.l.b16 %v120
  %v1026 = vunpack.c.l.b16 %v121
  %v1027 = vunpack.c.l.b16 %v122
  %v1028 = vunpack.c.l.b16 %v123
  %v1029 = vunpack.c.l.b16 %v124
  %v1030 = vunpack.c.l.b16 %v125
  %v1031 = vunpack.c.l.b16 %v126
  %v1032 = vunpack.c.l.b16 %v127
  %v1033 = vunpack.c.l.b16 %v128
  %v1034 = vunpack.c.l.b16 %v129
  %v1035 = vunpack.c.l.b16 %v130
  %v1036 = vunpack.c.l.b16 %v131
  %v1037 = vunpack.c.l.b16 %v132
  %v1038 = vunpack.c.l.b16 %v133
  %v1039 = vunpack.c.l.b16 %v134
  %v1040 = vunpack.c.l.b16 %v135
  %v1041 = vunpack.c.l.b16 %v136
  %v1042 = vunpack.c.l.b16 %v137
  %v1043 = vunpack.c.l.b16 %v138
  %v1044 = vunpack.c.l.b16 %v139
  %v1045 = vunpack.c.l.b16 %v140
  %v1046 = vunpack.c.l.b16 %v141
  %v1047 = vunpack.c.l.b16 %v142
  %v1048 = vunpack.c.l.b16 %v143
  %v1049 = vunpack.c.l.b16 %v144
  %v1050 = vunpack.c.l.b16 %v145
  %v1051 = vunpack.c.l.b16 %v146
  %v1052 = vunpack.c.l.b16 %v147
  %v1053 = vunpack.c.l.b16 %v148
  %v1054 = vunpack.c.l.b16 %v149
  %v1055 = vunpack.c.l.b16 %v150
  %v1056 = vunpack.c.l.b16 %v151
  %v1057 = vunpack.c.l.b16 %v152
  %v1058 = vunpack.c.l.b16 %v153
  %v1059 = vunpack.c.l.b16 %v154
  %v1060 = vunpack.c.l.b16 %v155
  %v1061 = vunpack.c.l.b16 %v156
  %v1062 = vunpack.c.l.b16 %v157
  %v1063 = vunpack.c.l.b16 %v158
  %v1064 = vunpack.c.l.b16 %v159
  %v1065 = vunpack.c.l.b16 %v160
  %v1066 = vunpack.c.l.b16 %v161
  %v1067 = vunpack.c.l.b16 %v162
  %v1068 = vunpack.c.l.b16 %v163
  %v1069 = vunpack.c.l.b16 %v164
  %v1070 = vunpack.c.l.b16 %v165
  %v1071 = vunpack.c.l.b16 %v166
  %v1072 = vunpack.c.l.b16 %v167
  %v1073 = vunpack.c.l.b16 %v168
  %v1074 = vunpack.c.l.b16 %v169
  %v1075 = vunpack.c.l.b16 %v170
  %v1076 = vunpack.c.l.b16 %v171
  %v1077 = vunpack.c.l.b16 %v172
  %v1078 = vunpack.c.l.b16 %v173
  %v1079 = vunpack.c.l.b16 %v174
  %v1080 = vunpack.c.l.b16 %v175
  %v1081 = vunpack.c.l.b16 %v176
  %v1082 = vunpack.c.l.b16 %v177
  %v1083 = vunpack.c.l.b16 %v178
  %v1084 = vunpack.c.l.b16 %v179
  %v1085 = vunpack.c.l.b16 %v180
  %v1086 = vunpack.c.l.b16 %v181
  %v1087 = vunpack.c.l.b16 %v182
  %v1088 = vunpack.c.l.b16 %v183
  %v1089 = vunpack.c.l.b16 %v184
  %v1090 = vunpack.c.l.b16 %v185
  %v1091 = vunpack.c.l.b16 %v186
  %v1092 = vunpack.c.l.b16 %v187
  %v1093 = vunpack.c.l.b16 %v188
  %v1094 = vunpack.c.l.b16 %v189
  %v1095 = vunpack.c.l.b16 %v190
  %v1096 = vunpack.c.l.b16 %v191
  %v1097 = vunpack.c.l.b16 %v192
  %v1098 = vunpack.c.l.b16 %v193
  %v1099 = vunpack.c.l.b16 %v194
  %v1100 = vunpack.c.l.b16 %v195
  %v1101 = vunpack.c.l.b16 %v196
  %v1102 = vunpack.c.l.b16 %v197
  %v1103 = vunpack.c.l.b16 %v198
  %v1104 = vunpack.c.l.b16 %v199
  %v1105 = vunpack.c.l.b16 %v200
  %v1106 = vunpack.c.l.b16 %v201
  %v1107 = vunpack.c.l.b16 %v202
  %v1108 = vunpack.c.l.b16 %v203
  %v1109 = vunpack.c.l.b16 %v204
  %v1110 = vunpack.c.l.b16 %v205
  %v1111 = vunpack.c.l.b16 %v206
  %v1112 = vunpack.c.l.b16 %v207
  %v1113 = vunpack.c.l.b16 %v208
  %v1114 = vunpack.c.l.b16 %v209
  %v1115 = vunpack.c.l.b16 %v210
  %v1116 = vunpack.c.l.b16 %v211
  %v1117 = vunpack.c.l.b16 %v212
  %v1118 = vunpack.c.l.b16 %v213
  %v1119 = vunpack.c.l.b16 %v214
  %v1120 = vunpack.c.l.b16 %v215
  %v1121 = vunpack.c.l.b16 %v216
  %v1122 = vunpack.c.l.b16 %v217
  %v1123 = vunpack.c.l.b16 %v218
  %v1124 = vunpack.c.l.b16 %v219
  %v1125 = vunpack.c.l.b16 %v220
  %v1126 = vunpack.c.l.b16 %v221
  %v1127 = vunpack.c.l.b16 %v222
  %v1128 = vunpack.c.l.b16 %v223
  %v1129 = vunpack.c.l.b16 %v224
  %v1130 = vunpack.c.l.b16 %v225
  %v1131 = vunpack.c.l.b16 %v226
  %v1132 = vunpack.c.l.b16 %v227
  %v1133 = vunpack.c.l.b16 %v228
  %v1134 = vunpack.c.l.b16 %v229
  %v1135 = vunpack.c.l.b16 %v230
  %v1136 = vunpack.c.l.b16 %v231
  %v1137 = vunpack.c.l.b16 %v232
  %v1138 = vunpack.c.l.b16 %v233
  %v1139 = vunpack.c.l.b16 %v234
  %v1140 = vunpack.c.l.b16 %v235
  %v1141 = vunpack.c.l.b16 %v236
  %v1142 = vunpack.c.l.b16 %v237
  %v1143 = vunpack.c.l.b16 %v238
  %v1144 = vunpack.c.l.b16 %v239
  %v1145 = vunpack.c.l.b16 %v240
  %v1146 = vunpack.c.l.b16 %v241
  %v1147 = vunpack.c.l.b16 %v242
  %v1148 = vunpack.c.l.b16 %v243
  %v1149 = vunpack.c.l.b16 %v244
  %v1150 = vunpack.c.l.b16 %v245
  %v1151 = vunpack.c.l.b16 %v246
  %v1152 = vunpack.c.l.b16 %v247
  %v1153 = vunpack.c.l.b16 %v248
  %v1154 = vunpack.c.l.b16 %v249
  %v1155 = vunpack.c.l.b16 %v250
  %v1156 = vunpack.c.l.b16 %v251
  %v1157 = vunpack.c.l.b16 %v252
  %v1158 = vunpack.c.l.b16 %v253
  %v1159 = vunpack.c.l.b16 %v254
  %v1160 = vunpack.c.l.b16 %v255
  %v1161 = vunpack.c.l.b16 %v256
  %v1162 = vunpack.c.l.b16 %v257
  %v1163 = vunpack.c.l.b16 %v258
  %v1164 = vunpack.c.l.b16 %v259
  %v1165 = vunpack.c.l.b16 %v260
  %v1166 = vunpack.c.l.b16 %v261
  %v1167 = vunpack.c.l.b16 %v262
  %v1168 = vunpack.c.l.b16 %v263
  %v1169 = vunpack.c.l.b16 %v264
  %v1170 = vunpack.c.l.b16 %v265
  %v1171 = vunpack.c.l.b16 %v266
  %v1172 = vunpack.c.l.b16 %v267
  %v1173 = vunpack.c.l.b16 %v268
  %v1174 = vunpack.c.l.b16 %v269
  %v1175 = vunpack.c.l.b16 %v270
  %v1176 = vunpack.c.l.b16 %v271
  %v1177 = vunpack.c.l.b16 %v272
  %v1178 = vunpack.c.l.b16 %v273
  %v1179 = vunpack.c.l.b16 %v274
  %v1180 = vunpack.c.l.b16 %v275
  %v1181 = vunpack.c.l.b16 %v276
  %v1182 = vunpack.c.l.b16 %v277
  %v1183 = vunpack.c.l.b16 %v278
  %v1184 = vunpack.c.l.b16 %v279
  %v1185 = vunpack.c.l.b16 %v280
  %v1186 = vunpack.c.l.b16 %v281
  %v1187 = vunpack.c.l.b16 %v282
  %v1188 = vunpack.c.l.b16 %v283
  %v1189 = vunpack.c.l.b16 %v284
  %v1190 = vunpack.c.l.b16 %v285
  %v1191 = vunpack.c.l.b16 %v286
  %v1192 = vunpack.c.l.b16 %v287
  %v1193 = vunpack.c.l.b16 %v288
  %v1194 = vunpack.c.l.b16 %v289
  %v1195 = vunpack.c.l.b16 %v290
  %v1196 = vunpack.c.l.b16 %v291
  %v1197 = vunpack.c.l.b16 %v292
  %v1198 = vunpack.c.l.b16 %v293
  %v1199 = vunpack.c.l.b16 %v294
  %v1200 = vunpack.c.l.b16 %v295
  %v1201 = vunpack.c.l.b16 %v296
  %v1202 = vunpack.c.l.b16 %v297
  %v1203 = vunpack.c.l.b16 %v298
  %v1204 = vunpack.c.l.b16 %v299
  %v1205 = vunpack.c.l.b16 %v300
  %v1206 = vunpack.c.l.b16 %v301
  %v1207 = vunpack.c.l.b16 %v302
  %v1208 = vunpack.c.l.b16 %v303
  %v1209 = vunpack.c.l.b16 %v304
  %v1210 = vunpack.c.l.b16 %v305
  %v1211 = vunpack.c.l.b16 %v306
  %v1212 = vunpack.c.l.b16 %v307
  %v1213 = vunpack.c.l.b16 %v308
  %v1214 = vunpack.c.l.b16 %v309
  %v1215 = vunpack.c.l.b16 %v310
  %v1216 = vunpack.c.l.b16 %v311
  %v1217 = vunpack.c.l.b16 %v312
  %v1218 = vunpack.c.l.b16 %v313
  %v1219 = vunpack.c.l.b16 %v314
  %v1220 = vunpack.c.l.b16 %v315
  %v1221 = vunpack.c.l.b16 %v316
  %v1222 = vunpack.c.l.b16 %v317
  %v1223 = vunpack.c.l.b16 %v318
  %v1224 = vunpack.c.l.b16 %v319
  %v1225 = vunpack.c.l.b16 %v320
  %v1226 = vunpack.c.l.b16 %v321
  %v1227 = vunpack.c.l.b16 %v322
  %v1228 = vunpack.c.l.b16 %v323
  %v1229 = vunpack.c.l.b16 %v324
  %v1230 = vunpack.c.l.b16 %v325
  %v1231 = vunpack.c.l.b16 %v326
  %v1232 = vunpack.c.l.b16 %v327
  %v1233 = vunpack.c.l.b16 %v328
  %v1234 = vunpack.c.l.b16 %v329
  %v1235 = vunpack.c.l.b16 %v330
  %v1236 = vunpack.c.l.b16 %v331
  %v1237 = vunpack.c.l.b16 %v332
  %v1238 = vunpack.c.l.b16 %v333
  %v1239 = vunpack.c.l.b16 %v334
  %v1240 = vunpack.c.l.b16 %v335
  %v1241 = vunpack.c.l.b16 %v336
  %v1242 = vunpack.c.l.b16 %v337
  %v1243 = vunpack.c.l.b16 %v338
  %v1244 = vunpack.c.l.b16 %v339
  %v1245 = vunpack.c.l.b16 %v340
  %v1246 = vunpack.c.l.b16 %v341
  %v1247 = vunpack.c.l.b16 %v342
  %v1248 = vunpack.c.l.b16 %v343
  %v1249 = vunpack.c.l.b16 %v344
  %v1250 = vunpack.c.l.b16 %v345
  %v1251 = vunpack.c.l.b16 %v346
  %v1252 = vunpack.c.l.b16 %v347
  %v1253 = vunpack.c.l.b16 %v348
  %v1254 = vunpack.c.l.b16 %v349
  %v1255 = vunpack.c.l.b16 %v350
  %v1256 = vunpack.c.l.b16 %v351
  %v1257 = vunpack.c.l.b16 %v352
  %v1258 = vunpack.c.l.b16 %v353
  %v1259 = vunpack.c.l.b16 %v354
  %v1260 = vunpack.c.l.b16 %v355
  %v1261 = vunpack.c.l.b16 %v356
  %v1262 = vunpack.c.l.b16 %v357
  %v1263 = vunpack.c.l.b16 %v358
  %v1264 = vunpack.c.l.b16 %v359
  %v1265 = vunpack.c.l.b16 %v360
  %v1266 = vunpack.c.l.b16 %v361
  %v1267 = vunpack.c.l.b16 %v362
  %v1268 = vunpack.c.l.b16 %v363
  %v1269 = vunpack.c.l.b16 %v364
  %v1270 = vunpack.c.l.b16 %v365
  %v1271 = vunpack.c.l.b16 %v366
  %v1272 = vunpack.c.l.b16 %v367
  %v1273 = vunpack.c.l.b16 %v368
  %v1274 = vunpack.c.l.b16 %v369
  %v1275 = vunpack.c.l.b16 %v370
  %v1276 = vunpack.c.l.b16 %v371
  %v1277 = vunpack.c.l.b16 %v372
  %v1278 = vunpack.c.l.b16 %v373
  %v1279 = vunpack.c.l.b16 %v374
  %v1280 = vunpack.c.l.b16 %v375
  %v1281 = vunpack.c.l.b16 %v376
  %v1282 = vunpack.c.l.b16 %v377
  %v1283 = vunpack.c.l.b16 %v378
  %v1284 = vunpack.c.l.b16 %v379
  %v1285 = vunpack.c.l.b16 %v380
  %v1286 = vunpack.c.l.b16 %v381
  %v1287 = vunpack.c.l.b16 %v382
  %v1288 = vunpack.c.l.b16 %v383
  %v1289 = vunpack.c.l.b16 %v384
  %v1290 = vunpack.c.l.b16 %v385
  %v1291 = vunpack.c.l.b16 %v386
  %v1292 = vunpack.c.l.b16 %v387
  %v1293 = vunpack.c.l.b16 %v388
  %v1294 = vunpack.c.l.b16 %v389
  %v1295 = vunpack.c.l.b16 %v390
  %v1296 = vunpack.c.l.b16 %v391
  %v1297 = vunpack.c.l.b16 %v392
  %v1298 = vunpack.c.l.b16 %v393
  %v1299 = vunpack.c.l.b16 %v394
  %v1300 = vunpack.c.l.b16 %v395
  %v1301 = vunpack.c.l.b16 %v396
  %v1302 = vunpack.c.l.b16 %v397
  %v1303 = vunpack.c.l.b16 %v398
  %v1304 = vunpack.c.l.b16 %v399
  %v1305 = vunpack.c.l.b16 %v400
  %v1306 = vunpack.c.l.b16 %v401
  %v1307 = vunpack.c.l.b16 %v402
  %v1308 = vunpack.c.l.b16 %v403
  %v1309 = vunpack.c.l.b16 %v404
  %v1310 = vunpack.c.l.b16 %v405
  %v1311 = vunpack.c.l.b16 %v406
  %v1312 = vunpack.c.l.b16 %v407
  %v1313 = vunpack.c.l.b16 %v408
  %v1314 = vunpack.c.l.b16 %v409
  %v1315 = vunpack.c.l.b16 %v410
  %v1316 = vunpack.c.l.b16 %v411
  %v1317 = vunpack.c.l.b16 %v412
  %v1318 = vunpack.c.l.b16 %v413
  %v1319 = vpack.c.b16 %v920, %v919
  %v1320 = vpack.c.b16 %v922, %v921
  %v1321 = vpack.c.b16 %v924, %v923
  %v1322 = vpack.c.b16 %v926, %v925
  %v1323 = vpack.c.b16 %v928, %v927
  %v1324 = vpack.c.b16 %v930, %v929
  %v1325 = vpack.c.b16 %v932, %v931
  %v1326 = vpack.c.b16 %v934, %v933
  %v1327 = vpack.c.b16 %v936, %v935
  %v1328 = vpack.c.b16 %v938, %v937
  %v1329 = vpack.c.b16 %v940, %v939
  %v1330 = vpack.c.b16 %v942, %v941
  %v1331 = vpack.c.b16 %v944, %v943
  %v1332 = vpack.c.b16 %v946, %v945
  %v1333 = vpack.c.b16 %v948, %v947
  %v1334 = vpack.c.b16 %v950, %v949
  %v1335 = vpack.c.b16 %v952, %v951
  %v1336 = vpack.c.b16 %v954, %v953
  %v1337 = vpack.c.b16 %v956, %v955
  %v1338 = vpack.c.b16 %v958, %v957
  %v1339 = vpack.c.b16 %v960, %v959
  %v1340 = vpack.c.b16 %v962, %v961
  %v1341 = vpack.c.b16 %v964, %v963
  %v1342 = vpack.c.b16 %v966, %v965
  %v1343 = vpack.c.b16 %v968, %v967
  %v1344 = vpack.c.b16 %v970, %v969
  %v1345 = vpack.c.b16 %v972, %v971
  %v1346 = vpack.c.b16 %v974, %v973
  %v1347 = vpack.c.b16 %v976, %v975
  %v1348 = vpack.c.b16 %v978, %v977
  %v1349 = vpack.c.b16 %v980, %v979
  %v1350 = vpack.c.b16 %v982, %v981
  %v1351 = vpack.c.b16 %v984, %v983
  %v1352 = vpack.c.b16 %v986, %v985
  %v1353 = vpack.c.b16 %v988, %v987
  %v1354 = vpack.c.b16 %v990, %v989
  %v1355 = vpack.c.b16 %v992, %v991
  %v1356 = vpack.c.b16 %v994, %v993
  %v1357 = vpack.c.b16 %v996, %v995
  %v1358 = vpack.c.b16 %v998, %v997
  %v1359 = vpack.c.b16 %v1000, %v999
  %v1360 = vpack.c.b16 %v1002, %v1001
  %v1361 = vpack.c.b16 %v1004, %v1003
  %v1362 = vpack.c.b16 %v1006, %v1005
  %v1363 = vpack.c.b16 %v1008, %v1007
  %v1364 = vpack.c.b16 %v1010, %v1009
  %v1365 = vpack.c.b16 %v1012, %v1011
  %v1366 = vpack.c.b16 %v1014, %v1013
  %v1367 = vpack.c.b16 %v1016, %v1015
  %v1368 = vpack.c.b16 %v1018, %v1017
  %v1369 = vpack.c.b16 %v1020, %v1019
  %v1370 = vpack.c.b16 %v1022, %v1021
  %v1371 = vpack.c.b16 %v1024, %v1023
  %v1372 = vpack.c.b16 %v1026, %v1025
  %v1373 = vpack.c.b16 %v1028, %v1027
  %v1374 = vpack.c.b16 %v1030, %v1029
  %v1375 = vpack.c.b16 %v1032, %v1031
  %v1376 = vpack.c.b16 %v1034, %v1033
  %v1377 = vpack.c.b16 %v1036, %v1035
  %v1378 = vpack.c.b16 %v1038, %v1037
  %v1379 = vpack.c.b16 %v1040, %v1039
  %v1380 = vpack.c.b16 %v1042, %v1041
  %v1381 = vpack.c.b16 %v1044, %v1043
  %v1382 = vpack.c.b16 %v1046, %v1045
  %v1383 = vpack.c.b16 %v1048, %v1047
  %v1384 = vpack.c.b16 %v1050, %v1049
  %v1385 = vpack.c.b16 %v1052, %v1051
  %v1386 = vpack.c.b16 %v1054, %v1053
  %v1387 = vpack.c.b16 %v1056, %v1055
  %v1388 = vpack.c.b16 %v1058, %v1057
  %v1389 = vpack.c.b16 %v1060, %v1059
  %v1390 = vpack.c.b16 %v1062, %v1061
  %v1391 = vpack.c.b16 %v1064, %v1063
  %v1392 = vpack.c.b16 %v1066, %v1065
  %v1393 = vpack.c.b16 %v1068, %v1067
  %v1394 = vpack.c.b16 %v1070, %v1069
  %v1395 = vpack.c.b16 %v1072, %v1071
  %v1396 = vpack.c.b16 %v1074, %v1073
  %v1397 = vpack.c.b16 %v1076, %v1075
  %v1398 = vpack.c.b16 %v1078, %v1077
  %v1399 = vpack.c.b16 %v1080, %v1079
  %v1400 = vpack.c.b16 %v1082, %v1081
  %v1401 = vpack.c.b16 %v1084, %v1083
  %v1402 = vpack.c.b16 %v1086, %v1085
  %v1403 = vpack.c.b16 %v1088, %v1087
  %v1404 = vpack.c.b16 %v1090, %v1089
  %v1405 = vpack.c.b16 %v1092, %v1091
  %v1406 = vpack.c.b16 %v1094, %v1093
  %v1407 = vpack.c.b16 %v1096, %v1095
  %v1408 = vpack.c.b16 %v1098, %v1097
  %v1409 = vpack.c.b16 %v1100, %v1099
  %v1410 = vpack.c.b16 %v1102, %v1101
  %v1411 = vpack.c.b16 %v1104, %v1103
  %v1412 = vpack.c.b16 %v1106, %v1105
  %v1413 = vpack.c.b16 %v1108, %v1107
  %v1414 = vpack.c.b16 %v1110, %v1109
  %v1415 = vpack.c.b16 %v1112, %v1111
  %v1416 = vpack.c.b16 %v1114, %v1113
  %v1417 = vpack.c.b16 %v1116, %v1115
  %v1418 = vpack.c.b16 %v1118, %v1117
  %v1419 = vpack.c.b16 %v1120, %v1119
  %v1420 = vpack.c.b16 %v1122, %v1121
  %v1421 = vpack.c.b16 %v1124, %v1123
  %v1422 = vpack.c.b16 %v1126, %v1125
  %v1423 = vpack.c.b16 %v1128, %v1127
  %v1424 = vpack.c.b16 %v1130, %v1129
  %v1425 = vpack.c.b16 %v1132, %v1131
  %v1426 = vpack.c.b16 %v1134, %v1133
  %v1427 = vpack.c.b16 %v1136, %v1135
  %v1428 = vpack.c.b16 %v1138, %v1137
  %v1429 = vpack.c.b16 %v1140, %v1139
  %v1430 = vpack.c.b16 %v1142, %v1141
  %v1431 = vpack.c.b16 %v1144, %v1143
  %v1432 = vpack.c.b16 %v1146, %v1145
  %v1433 = vpack.c.b16 %v1148, %v1147
  %v1434 = vpack.c.b16 %v1150, %v1149
  %v1435 = vpack.c.b16 %v1152, %v1151
  %v1436 = vpack.c.b16 %v1154, %v1153
  %v1437 = vpack.c.b16 %v1156, %v1155
  %v1438 = vpack.c.b16 %v1158, %v1157
  %v1439 = vpack.c.b16 %v1160, %v1159
  %v1440 = vpack.c.b16 %v1162, %v1161
  %v1441 = vpack.c.b16 %v1164, %v1163
  %v1442 = vpack.c.b16 %v1166, %v1165
  %v1443 = vpack.c.b16 %v1168, %v1167
  %v1444 = vpack.c.b16 %v1170, %v1169
  %v1445 = vpack.c.b16 %v1172, %v1171
  %v1446 = vpack.c.b16 %v1174, %v1173
  %v1447 = vpack.c.b16 %v1176, %v1175
  %v1448 = vpack.c.b16 %v1178, %v1177
  %v1449 = vpack.c.b16 %v1180, %v1179
  %v1450 = vpack.c.b16 %v1182, %v1181
  %v1451 = vpack.c.b16 %v1184, %v1183
  %v1452 = vpack.c.b16 %v1186, %v1185
  %v1453 = vpack.c.b16 %v1188, %v1187
  %v1454 = vpack.c.b16 %v1190, %v1189
  %v1455 = vpack.c.b16 %v1192, %v1191
  %v1456 = vpack.c.b16 %v1194, %v1193
  %v1457 = vpack.c.b16 %v1196, %v1195
  %v1458 = vpack.c.b16 %v1198, %v1197
  %v1459 = vpack.c.b16 %v1200, %v1199
  %v1460 = vpack.c.b16 %v1202, %v1201
  %v1461 = vpack.c.b16 %v1204, %v1203
  %v1462 = vpack.c.b16 %v1206, %v1205
  %v1463 = vpack.c.b16 %v1208, %v1207
  %v1464 = vpack.c.b16 %v1210, %v1209
  %v1465 = vpack.c.b16 %v1212, %v1211
  %v1466 = vpack.c.b16 %v1214, %v1213
  %v1467 = vpack.c.b16 %v1216, %v1215
  %v1468 = vpack.c.b16 %v1218, %v1217
  %v1469 = vpack.c.b16 %v1220, %v1219
  %v1470 = vpack.c.b16 %v1222, %v1221
  %v1471 = vpack.c.b16 %v1224, %v1223
  %v1472 = vpack.c.b16 %v1226, %v1225
  %v1473 = vpack.c.b16 %v1228, %v1227
  %v1474 = vpack.c.b16 %v1230, %v1229
  %v1475 = vpack.c.b16 %v1232, %v1231
  %v1476 = vpack.c.b16 %v1234, %v1233
  %v1477 = vpack.c.b16 %v1236, %v1235
  %v1478 = vpack.c.b16 %v1238, %v1237
  %v1479 = vpack.c.b16 %v1240, %v1239
  %v1480 = vpack.c.b16 %v1242, %v1241
  %v1481 = vpack.c.b16 %v1244, %v1243
  %v1482 = vpack.c.b16 %v1246, %v1245
  %v1483 = vpack.c.b16 %v1248, %v1247
  %v1484 = vpack.c.b16 %v1250, %v1249
  %v1485 = vpack.c.b16 %v1252, %v1251
  %v1486 = vpack.c.b16 %v1254, %v1253
  %v1487 = vpack.c.b16 %v1256, %v1255
  %v1488 = vpack.c.b16 %v1258, %v1257
  %v1489 = vpack.c.b16 %v1260, %v1259
  %v1490 = vpack.c.b16 %v1262, %v1261
  %v1491 = vpack.c.b16 %v1264, %v1263
  %v1492 = vpack.c.b16 %v1266, %v1265
  %v1493 = vpack.c.b16 %v1268, %v1267
  %v1494 = vpack.c.b16 %v1270, %v1269
  %v1495 = vpack.c.b16 %v1272, %v1271
  %v1496 = vpack.c.b16 %v1274, %v1273
  %v1497 = vpack.c.b16 %v1276, %v1275
  %v1498 = vpack.c.b16 %v1278, %v1277
  %v1499 = vpack.c.b16 %v1280, %v1279
  %v1500 = vpack.c.b16 %v1282, %v1281
  %v1501 = vpack.c.b16 %v1284, %v1283
  %v1502 = vpack.c.b16 %v1286, %v1285
  %v1503 = vpack.c.b16 %v1288, %v1287
  %v1504 = vpack.c.b16 %v1290, %v1289
  %v1505 = vpack.c.b16 %v1292, %v1291
  %v1506 = vpack.c.b16 %v1294, %v1293
  %v1507 = vpack.c.b16 %v1296, %v1295
  %v1508 = vpack.c.b16 %v1298, %v1297
  %v1509 = vpack.c.b16 %v1300, %v1299
  %v1510 = vpack.c.b16 %v1302, %v1301
  %v1511 = vpack.c.b16 %v1304, %v1303
  %v1512 = vpack.c.b16 %v1306, %v1305
  %v1513 = vpack.c.b16 %v1308, %v1307
  %v1514 = vpack.c.b16 %v1310, %v1309
  %v1515 = vpack.c.b16 %v1312, %v1311
  %v1516 = vpack.c.b16 %v1314, %v1313
  %v1517 = vpack.c.b16 %v1316, %v1315
  %v1518 = vpack.c.b16 %v1318, %v1317
  %1719 = vmatpush.bf16.msra.mxu0 %v1326
  %1720 = vmatpush.bf16.msra.mxu0 %v1325
  %1721 = vmatpush.bf16.msra.mxu0 %v1324
  %1722 = vmatpush.bf16.msra.mxu0 %v1323
  %1723 = vmatpush.bf16.msra.mxu0 %v1322
  %1724 = vmatpush.bf16.msra.mxu0 %v1321
  %1725 = vmatpush.bf16.msra.mxu0 %v1320
  %1726 = vmatpush.bf16.msra.mxu0 %v1319
  %1727 = vmatmul.bf16.gmra.mxu0 %v469
  %v1728 = vpop.f32.mrf.mxu0
  %v1729 = vadd.f32 %v429, %v1728
  %v1730 = vpop.f32.mrf.mxu0
  %1731 = vdwg.mxu0
  %1732 = vmatpush.bf16.msra.mxu0 %v1334
  %1733 = vmatpush.bf16.msra.mxu0 %v1333
  %1734 = vmatpush.bf16.msra.mxu0 %v1332
  %1735 = vmatpush.bf16.msra.mxu0 %v1331
  %1736 = vmatpush.bf16.msra.mxu0 %v1330
  %1737 = vmatpush.bf16.msra.mxu0 %v1329
  %1738 = vmatpush.bf16.msra.mxu0 %v1328
  %1739 = vmatpush.bf16.msra.mxu0 %v1327
  %1740 = vmatmul.bf16.gmra.mxu0 %v470
  %v1741 = vpop.f32.mrf.mxu0
  %v1742 = vadd.f32 %v1729, %v1741
  %v1743 = vpop.f32.mrf.mxu0
  %1744 = vdwg.mxu0
  %1745 = vmatpush.bf16.msra.mxu0 %v1342
  %1746 = vmatpush.bf16.msra.mxu0 %v1341
  %1747 = vmatpush.bf16.msra.mxu0 %v1340
  %1748 = vmatpush.bf16.msra.mxu0 %v1339
  %1749 = vmatpush.bf16.msra.mxu0 %v1338
  %1750 = vmatpush.bf16.msra.mxu0 %v1337
  %1751 = vmatpush.bf16.msra.mxu0 %v1336
  %1752 = vmatpush.bf16.msra.mxu0 %v1335
  %1753 = vmatmul.bf16.gmra.mxu0 %v471
  %v1754 = vpop.f32.mrf.mxu0
  %v1755 = vadd.f32 %v1742, %v1754
  %v1756 = vpop.f32.mrf.mxu0
  %1757 = vdwg.mxu0
  %1758 = vmatpush.bf16.msra.mxu0 %v1350
  %1759 = vmatpush.bf16.msra.mxu0 %v1349
  %1760 = vmatpush.bf16.msra.mxu0 %v1348
  %1761 = vmatpush.bf16.msra.mxu0 %v1347
  %1762 = vmatpush.bf16.msra.mxu0 %v1346
  %1763 = vmatpush.bf16.msra.mxu0 %v1345
  %1764 = vmatpush.bf16.msra.mxu0 %v1344
  %1765 = vmatpush.bf16.msra.mxu0 %v1343
  %1766 = vmatmul.bf16.gmra.mxu0 %v472
  %v1767 = vpop.f32.mrf.mxu0
  %v1768 = vadd.f32 %v1755, %v1767
  %v1769 = vpop.f32.mrf.mxu0
  %1770 = vdwg.mxu0
  %1771 = vmatpush.bf16.msra.mxu0 %v1358
  %1772 = vmatpush.bf16.msra.mxu0 %v1357
  %1773 = vmatpush.bf16.msra.mxu0 %v1356
  %1774 = vmatpush.bf16.msra.mxu0 %v1355
  %1775 = vmatpush.bf16.msra.mxu0 %v1354
  %1776 = vmatpush.bf16.msra.mxu0 %v1353
  %1777 = vmatpush.bf16.msra.mxu0 %v1352
  %1778 = vmatpush.bf16.msra.mxu0 %v1351
  %1779 = vmatmul.bf16.gmra.mxu0 %v473
  %v1780 = vpop.f32.mrf.mxu0
  %v1781 = vadd.f32 %v1768, %v1780
  %v1782 = vpop.f32.mrf.mxu0
  %1783 = vdwg.mxu0
  %1784 = vmatpush.bf16.msra.mxu0 %v1366
  %1785 = vmatpush.bf16.msra.mxu0 %v1365
  %1786 = vmatpush.bf16.msra.mxu0 %v1364
  %1787 = vmatpush.bf16.msra.mxu0 %v1363
  %1788 = vmatpush.bf16.msra.mxu0 %v1362
  %1789 = vmatpush.bf16.msra.mxu0 %v1361
  %1790 = vmatpush.bf16.msra.mxu0 %v1360
  %1791 = vmatpush.bf16.msra.mxu0 %v1359
  %1792 = vmatmul.bf16.gmra.mxu0 %v474
  %v1793 = vpop.f32.mrf.mxu0
  %v1794 = vadd.f32 %v1781, %v1793
  %v1795 = vpop.f32.mrf.mxu0
  %1796 = vdwg.mxu0
  %1797 = vmatpush.bf16.msra.mxu0 %v1374
  %1798 = vmatpush.bf16.msra.mxu0 %v1373
  %1799 = vmatpush.bf16.msra.mxu0 %v1372
  %1800 = vmatpush.bf16.msra.mxu0 %v1371
  %1801 = vmatpush.bf16.msra.mxu0 %v1370
  %1802 = vmatpush.bf16.msra.mxu0 %v1369
  %1803 = vmatpush.bf16.msra.mxu0 %v1368
  %1804 = vmatpush.bf16.msra.mxu0 %v1367
  %1805 = vmatmul.bf16.gmra.mxu0 %v475
  %v1806 = vpop.f32.mrf.mxu0
  %v1807 = vadd.f32 %v1794, %v1806
  %v1808 = vpop.f32.mrf.mxu0
  %1809 = vdwg.mxu0
  %1810 = vmatpush.bf16.msra.mxu0 %v1382
  %1811 = vmatpush.bf16.msra.mxu0 %v1381
  %1812 = vmatpush.bf16.msra.mxu0 %v1380
  %1813 = vmatpush.bf16.msra.mxu0 %v1379
  %1814 = vmatpush.bf16.msra.mxu0 %v1378
  %1815 = vmatpush.bf16.msra.mxu0 %v1377
  %1816 = vmatpush.bf16.msra.mxu0 %v1376
  %1817 = vmatpush.bf16.msra.mxu0 %v1375
  %1818 = vmatmul.bf16.gmra.mxu0 %v476
  %v1819 = vpop.f32.mrf.mxu0
  %v1820 = vadd.f32 %v1807, %v1819
  %v1821 = vpop.f32.mrf.mxu0
  %1822 = vdwg.mxu0
  %1823 = vmatpush.bf16.msra.mxu0 %v1390
  %1824 = vmatpush.bf16.msra.mxu0 %v1389
  %1825 = vmatpush.bf16.msra.mxu0 %v1388
  %1826 = vmatpush.bf16.msra.mxu0 %v1387
  %1827 = vmatpush.bf16.msra.mxu0 %v1386
  %1828 = vmatpush.bf16.msra.mxu0 %v1385
  %1829 = vmatpush.bf16.msra.mxu0 %v1384
  %1830 = vmatpush.bf16.msra.mxu0 %v1383
  %1831 = vmatmul.bf16.gmra.mxu0 %v477
  %v1832 = vpop.f32.mrf.mxu0
  %v1833 = vadd.f32 %v1820, %v1832
  %v1834 = vpop.f32.mrf.mxu0
  %1835 = vdwg.mxu0
  %1836 = vmatpush.bf16.msra.mxu0 %v1398
  %1837 = vmatpush.bf16.msra.mxu0 %v1397
  %1838 = vmatpush.bf16.msra.mxu0 %v1396
  %1839 = vmatpush.bf16.msra.mxu0 %v1395
  %1840 = vmatpush.bf16.msra.mxu0 %v1394
  %1841 = vmatpush.bf16.msra.mxu0 %v1393
  %1842 = vmatpush.bf16.msra.mxu0 %v1392
  %1843 = vmatpush.bf16.msra.mxu0 %v1391
  %1844 = vmatmul.bf16.gmra.mxu0 %v478
  %v1845 = vpop.f32.mrf.mxu0
  %v1846 = vadd.f32 %v1833, %v1845
  %v1847 = vpop.f32.mrf.mxu0
  %1848 = vdwg.mxu0
  %1849 = vmatpush.bf16.msra.mxu0 %v1406
  %1850 = vmatpush.bf16.msra.mxu0 %v1405
  %1851 = vmatpush.bf16.msra.mxu0 %v1404
  %1852 = vmatpush.bf16.msra.mxu0 %v1403
  %1853 = vmatpush.bf16.msra.mxu0 %v1402
  %1854 = vmatpush.bf16.msra.mxu0 %v1401
  %1855 = vmatpush.bf16.msra.mxu0 %v1400
  %1856 = vmatpush.bf16.msra.mxu0 %v1399
  %1857 = vmatmul.bf16.gmra.mxu0 %v479
  %v1858 = vpop.f32.mrf.mxu0
  %v1859 = vadd.f32 %v1846, %v1858
  %v1860 = vpop.f32.mrf.mxu0
  %1861 = vdwg.mxu0
  %1862 = vmatpush.bf16.msra.mxu0 %v1414
  %1863 = vmatpush.bf16.msra.mxu0 %v1413
  %1864 = vmatpush.bf16.msra.mxu0 %v1412
  %1865 = vmatpush.bf16.msra.mxu0 %v1411
  %1866 = vmatpush.bf16.msra.mxu0 %v1410
  %1867 = vmatpush.bf16.msra.mxu0 %v1409
  %1868 = vmatpush.bf16.msra.mxu0 %v1408
  %1869 = vmatpush.bf16.msra.mxu0 %v1407
  %1870 = vmatmul.bf16.gmra.mxu0 %v480
  %v1871 = vpop.f32.mrf.mxu0
  %v1872 = vadd.f32 %v1859, %v1871
  %v1873 = vpop.f32.mrf.mxu0
  %1874 = vdwg.mxu0
  %1875 = vmatpush.bf16.msra.mxu0 %v1422
  %1876 = vmatpush.bf16.msra.mxu0 %v1421
  %1877 = vmatpush.bf16.msra.mxu0 %v1420
  %1878 = vmatpush.bf16.msra.mxu0 %v1419
  %1879 = vmatpush.bf16.msra.mxu0 %v1418
  %1880 = vmatpush.bf16.msra.mxu0 %v1417
  %1881 = vmatpush.bf16.msra.mxu0 %v1416
  %1882 = vmatpush.bf16.msra.mxu0 %v1415
  %1883 = vmatmul.bf16.gmra.mxu0 %v481
  %v1884 = vpop.f32.mrf.mxu0
  %v1885 = vadd.f32 %v1872, %v1884
  %v1886 = vpop.f32.mrf.mxu0
  %1887 = vdwg.mxu0
  %1888 = vmatpush.bf16.msra.mxu0 %v1430
  %1889 = vmatpush.bf16.msra.mxu0 %v1429
  %1890 = vmatpush.bf16.msra.mxu0 %v1428
  %1891 = vmatpush.bf16.msra.mxu0 %v1427
  %1892 = vmatpush.bf16.msra.mxu0 %v1426
  %1893 = vmatpush.bf16.msra.mxu0 %v1425
  %1894 = vmatpush.bf16.msra.mxu0 %v1424
  %1895 = vmatpush.bf16.msra.mxu0 %v1423
  %1896 = vmatmul.bf16.gmra.mxu0 %v482
  %v1897 = vpop.f32.mrf.mxu0
  %v1898 = vadd.f32 %v1885, %v1897
  %v1899 = vpop.f32.mrf.mxu0
  %1900 = vdwg.mxu0
  %1901 = vmatpush.bf16.msra.mxu0 %v1438
  %1902 = vmatpush.bf16.msra.mxu0 %v1437
  %1903 = vmatpush.bf16.msra.mxu0 %v1436
  %1904 = vmatpush.bf16.msra.mxu0 %v1435
  %1905 = vmatpush.bf16.msra.mxu0 %v1434
  %1906 = vmatpush.bf16.msra.mxu0 %v1433
  %1907 = vmatpush.bf16.msra.mxu0 %v1432
  %1908 = vmatpush.bf16.msra.mxu0 %v1431
  %1909 = vmatmul.bf16.gmra.mxu0 %v483
  %v1910 = vpop.f32.mrf.mxu0
  %v1911 = vadd.f32 %v1898, %v1910
  %v1912 = vpop.f32.mrf.mxu0
  %1913 = vdwg.mxu0
  %1914 = vmatpush.bf16.msra.mxu0 %v1446
  %1915 = vmatpush.bf16.msra.mxu0 %v1445
  %1916 = vmatpush.bf16.msra.mxu0 %v1444
  %1917 = vmatpush.bf16.msra.mxu0 %v1443
  %1918 = vmatpush.bf16.msra.mxu0 %v1442
  %1919 = vmatpush.bf16.msra.mxu0 %v1441
  %1920 = vmatpush.bf16.msra.mxu0 %v1440
  %1921 = vmatpush.bf16.msra.mxu0 %v1439
  %1922 = vmatmul.bf16.gmra.mxu0 %v484
  %v1923 = vpop.f32.mrf.mxu0
  %v1924 = vadd.f32 %v1911, %v1923
  %v1925 = vpop.f32.mrf.mxu0
  %1926 = vdwg.mxu0
  %1927 = vmatpush.bf16.msra.mxu0 %v1454
  %1928 = vmatpush.bf16.msra.mxu0 %v1453
  %1929 = vmatpush.bf16.msra.mxu0 %v1452
  %1930 = vmatpush.bf16.msra.mxu0 %v1451
  %1931 = vmatpush.bf16.msra.mxu0 %v1450
  %1932 = vmatpush.bf16.msra.mxu0 %v1449
  %1933 = vmatpush.bf16.msra.mxu0 %v1448
  %1934 = vmatpush.bf16.msra.mxu0 %v1447
  %1935 = vmatmul.bf16.gmra.mxu0 %v485
  %v1936 = vpop.f32.mrf.mxu0
  %v1937 = vadd.f32 %v1924, %v1936
  %v1938 = vpop.f32.mrf.mxu0
  %1939 = vdwg.mxu0
  %1940 = vmatpush.bf16.msra.mxu0 %v1462
  %1941 = vmatpush.bf16.msra.mxu0 %v1461
  %1942 = vmatpush.bf16.msra.mxu0 %v1460
  %1943 = vmatpush.bf16.msra.mxu0 %v1459
  %1944 = vmatpush.bf16.msra.mxu0 %v1458
  %1945 = vmatpush.bf16.msra.mxu0 %v1457
  %1946 = vmatpush.bf16.msra.mxu0 %v1456
  %1947 = vmatpush.bf16.msra.mxu0 %v1455
  %1948 = vmatmul.bf16.gmra.mxu0 %v486
  %v1949 = vpop.f32.mrf.mxu0
  %v1950 = vadd.f32 %v1937, %v1949
  %v1951 = vpop.f32.mrf.mxu0
  %1952 = vdwg.mxu0
  %1953 = vmatpush.bf16.msra.mxu0 %v1470
  %1954 = vmatpush.bf16.msra.mxu0 %v1469
  %1955 = vmatpush.bf16.msra.mxu0 %v1468
  %1956 = vmatpush.bf16.msra.mxu0 %v1467
  %1957 = vmatpush.bf16.msra.mxu0 %v1466
  %1958 = vmatpush.bf16.msra.mxu0 %v1465
  %1959 = vmatpush.bf16.msra.mxu0 %v1464
  %1960 = vmatpush.bf16.msra.mxu0 %v1463
  %1961 = vmatmul.bf16.gmra.mxu0 %v487
  %v1962 = vpop.f32.mrf.mxu0
  %v1963 = vadd.f32 %v1950, %v1962
  %v1964 = vpop.f32.mrf.mxu0
  %1965 = vdwg.mxu0
  %1966 = vmatpush.bf16.msra.mxu0 %v1478
  %1967 = vmatpush.bf16.msra.mxu0 %v1477
  %1968 = vmatpush.bf16.msra.mxu0 %v1476
  %1969 = vmatpush.bf16.msra.mxu0 %v1475
  %1970 = vmatpush.bf16.msra.mxu0 %v1474
  %1971 = vmatpush.bf16.msra.mxu0 %v1473
  %1972 = vmatpush.bf16.msra.mxu0 %v1472
  %1973 = vmatpush.bf16.msra.mxu0 %v1471
  %1974 = vmatmul.bf16.gmra.mxu0 %v488
  %v1975 = vpop.f32.mrf.mxu0
  %v1976 = vadd.f32 %v1963, %v1975
  %v1977 = vpop.f32.mrf.mxu0
  %1978 = vdwg.mxu0
  %1979 = vmatpush.bf16.msra.mxu0 %v1486
  %1980 = vmatpush.bf16.msra.mxu0 %v1485
  %1981 = vmatpush.bf16.msra.mxu0 %v1484
  %1982 = vmatpush.bf16.msra.mxu0 %v1483
  %1983 = vmatpush.bf16.msra.mxu0 %v1482
  %1984 = vmatpush.bf16.msra.mxu0 %v1481
  %1985 = vmatpush.bf16.msra.mxu0 %v1480
  %1986 = vmatpush.bf16.msra.mxu0 %v1479
  %1987 = vmatmul.bf16.gmra.mxu0 %v489
  %v1988 = vpop.f32.mrf.mxu0
  %v1989 = vadd.f32 %v1976, %v1988
  %v1990 = vpop.f32.mrf.mxu0
  %1991 = vdwg.mxu0
  %1992 = vmatpush.bf16.msra.mxu0 %v1494
  %1993 = vmatpush.bf16.msra.mxu0 %v1493
  %1994 = vmatpush.bf16.msra.mxu0 %v1492
  %1995 = vmatpush.bf16.msra.mxu0 %v1491
  %1996 = vmatpush.bf16.msra.mxu0 %v1490
  %1997 = vmatpush.bf16.msra.mxu0 %v1489
  %1998 = vmatpush.bf16.msra.mxu0 %v1488
  %1999 = vmatpush.bf16.msra.mxu0 %v1487
  %2000 = vmatmul.bf16.gmra.mxu0 %v490
  %v2001 = vpop.f32.mrf.mxu0
  %v2002 = vadd.f32 %v1989, %v2001
  %v2003 = vpop.f32.mrf.mxu0
  %2004 = vdwg.mxu0
  %2005 = vmatpush.bf16.msra.mxu0 %v1502
  %2006 = vmatpush.bf16.msra.mxu0 %v1501
  %2007 = vmatpush.bf16.msra.mxu0 %v1500
  %2008 = vmatpush.bf16.msra.mxu0 %v1499
  %2009 = vmatpush.bf16.msra.mxu0 %v1498
  %2010 = vmatpush.bf16.msra.mxu0 %v1497
  %2011 = vmatpush.bf16.msra.mxu0 %v1496
  %2012 = vmatpush.bf16.msra.mxu0 %v1495
  %2013 = vmatmul.bf16.gmra.mxu0 %v491
  %v2014 = vpop.f32.mrf.mxu0
  %v2015 = vadd.f32 %v2002, %v2014
  %v2016 = vpop.f32.mrf.mxu0
  %2017 = vdwg.mxu0
  %2018 = vmatpush.bf16.msra.mxu0 %v1510
  %2019 = vmatpush.bf16.msra.mxu0 %v1509
  %2020 = vmatpush.bf16.msra.mxu0 %v1508
  %2021 = vmatpush.bf16.msra.mxu0 %v1507
  %2022 = vmatpush.bf16.msra.mxu0 %v1506
  %2023 = vmatpush.bf16.msra.mxu0 %v1505
  %2024 = vmatpush.bf16.msra.mxu0 %v1504
  %2025 = vmatpush.bf16.msra.mxu0 %v1503
  %2026 = vmatmul.bf16.gmra.mxu0 %v492
  %v2027 = vpop.f32.mrf.mxu0
  %v2028 = vadd.f32 %v2015, %v2027
  %v2029 = vpop.f32.mrf.mxu0
  %2030 = vdwg.mxu0
  %2031 = vmatpush.bf16.msra.mxu0 %v1518
  %2032 = vmatpush.bf16.msra.mxu0 %v1517
  %2033 = vmatpush.bf16.msra.mxu0 %v1516
  %2034 = vmatpush.bf16.msra.mxu0 %v1515
  %2035 = vmatpush.bf16.msra.mxu0 %v1514
  %2036 = vmatpush.bf16.msra.mxu0 %v1513
  %2037 = vmatpush.bf16.msra.mxu0 %v1512
  %2038 = vmatpush.bf16.msra.mxu0 %v1511
  %2039 = vmatmul.bf16.gmra.mxu0 %v493
  %v2040 = vpop.f32.mrf.mxu0
  %v2041 = vadd.f32 %v2028, %v2040
  %v2042 = vpop.f32.mrf.mxu0
  %2043 = vdwg.mxu0
  %v2044 = vmax.f32 %v2041, 0.0
  %s2045 = scalar_lea.vmem %s0, 100
  %v2046 = vld [vmem:[%s2045] sm:$0xff]
  %v2047 = vld [vmem:[%s2045 + $0x8] sm:$0xff]
  %v2048 = vld [vmem:[%s2045 + $0x10] sm:$0xff]
  %v2049 = vld [vmem:[%s2045 + $0x18] sm:$0xff]
  %v2050 = vld [vmem:[%s2045 + $0x20] sm:$0xff]
  %v2051 = vld [vmem:[%s2045 + $0x28] sm:$0xff]
  %v2052 = vld [vmem:[%s2045 + $0x30] sm:$0xff]
  %v2053 = vld [vmem:[%s2045 + $0x38] sm:$0xff]
  %v2054 = vld [vmem:[%s2045 + $0x40] sm:$0xff]
  %v2055 = vld [vmem:[%s2045 + $0x48] sm:$0xff]
  %v2056 = vld [vmem:[%s2045 + $0x50] sm:$0xff]
  %v2057 = vld [vmem:[%s2045 + $0x58] sm:$0xff]
  %v2058 = vld [vmem:[%s2045 + $0x60] sm:$0xf]
  %v2072 = vunpack.c.l.b16 %v2046
  %v2073 = vunpack.c.h.b16 %v2046
  %v2074 = vunpack.c.l.b16 %v2047
  %v2075 = vunpack.c.h.b16 %v2047
  %v2076 = vunpack.c.l.b16 %v2048
  %v2077 = vunpack.c.h.b16 %v2048
  %v2078 = vunpack.c.l.b16 %v2049
  %v2079 = vunpack.c.h.b16 %v2049
  %v2080 = vunpack.c.l.b16 %v2050
  %v2081 = vunpack.c.h.b16 %v2050
  %v2082 = vunpack.c.l.b16 %v2051
  %v2083 = vunpack.c.h.b16 %v2051
  %v2084 = vunpack.c.l.b16 %v2052
  %v2085 = vunpack.c.h.b16 %v2052
  %v2086 = vunpack.c.l.b16 %v2053
  %v2087 = vunpack.c.h.b16 %v2053
  %v2088 = vunpack.c.l.b16 %v2054
  %v2089 = vunpack.c.h.b16 %v2054
  %v2090 = vunpack.c.l.b16 %v2055
  %v2091 = vunpack.c.h.b16 %v2055
  %v2092 = vunpack.c.l.b16 %v2056
  %v2093 = vunpack.c.h.b16 %v2056
  %v2094 = vunpack.c.l.b16 %v2057
  %v2095 = vunpack.c.h.b16 %v2057
  %v2096 = vunpack.c.l.b16 %v2058
  %v2097 = vpack.c.b16 %v2072, %v2072
  %v2098 = vpack.c.b16 %v2073, %v2073
  %v2099 = vpack.c.b16 %v2074, %v2074
  %v2100 = vpack.c.b16 %v2075, %v2075
  %v2101 = vpack.c.b16 %v2076, %v2076
  %v2102 = vpack.c.b16 %v2077, %v2077
  %v2103 = vpack.c.b16 %v2078, %v2078
  %v2104 = vpack.c.b16 %v2079, %v2079
  %v2105 = vpack.c.b16 %v2080, %v2080
  %v2106 = vpack.c.b16 %v2081, %v2081
  %v2107 = vpack.c.b16 %v2082, %v2082
  %v2108 = vpack.c.b16 %v2083, %v2083
  %v2109 = vpack.c.b16 %v2084, %v2084
  %v2110 = vpack.c.b16 %v2085, %v2085
  %v2111 = vpack.c.b16 %v2086, %v2086
  %v2112 = vpack.c.b16 %v2087, %v2087
  %v2113 = vpack.c.b16 %v2088, %v2088
  %v2114 = vpack.c.b16 %v2089, %v2089
  %v2115 = vpack.c.b16 %v2090, %v2090
  %v2116 = vpack.c.b16 %v2091, %v2091
  %v2117 = vpack.c.b16 %v2092, %v2092
  %v2118 = vpack.c.b16 %v2093, %v2093
  %v2119 = vpack.c.b16 %v2094, %v2094
  %v2120 = vpack.c.b16 %v2095, %v2095
  %v2121 = vpack.c.b16 %v2096, %v2096
  %2147 = vmatpush.bf16.msra.mxu0 %v1326
  %2148 = vmatpush.bf16.msra.mxu0 %v1325
  %2149 = vmatpush.bf16.msra.mxu0 %v1324
  %2150 = vmatpush.bf16.msra.mxu0 %v1323
  %2151 = vmatpush.bf16.msra.mxu0 %v1322
  %2152 = vmatpush.bf16.msra.mxu0 %v1321
  %2153 = vmatpush.bf16.msra.mxu0 %v1320
  %2154 = vmatpush.bf16.msra.mxu0 %v1319
  %2155 = vmatmul.bf16.gmra.mxu0 %v2097
  %v2156 = vpop.f32.mrf.mxu0
  %v2157 = vadd.f32 %v429, %v2156
  %v2158 = vpop.f32.mrf.mxu0
  %2159 = vdwg.mxu0
  %2160 = vmatpush.bf16.msra.mxu0 %v1334
  %2161 = vmatpush.bf16.msra.mxu0 %v1333
  %2162 = vmatpush.bf16.msra.mxu0 %v1332
  %2163 = vmatpush.bf16.msra.mxu0 %v1331
  %2164 = vmatpush.bf16.msra.mxu0 %v1330
  %2165 = vmatpush.bf16.msra.mxu0 %v1329
  %2166 = vmatpush.bf16.msra.mxu0 %v1328
  %2167 = vmatpush.bf16.msra.mxu0 %v1327
  %2168 = vmatmul.bf16.gmra.mxu0 %v2098
  %v2169 = vpop.f32.mrf.mxu0
  %v2170 = vadd.f32 %v2157, %v2169
  %v2171 = vpop.f32.mrf.mxu0
  %2172 = vdwg.mxu0
  %2173 = vmatpush.bf16.msra.mxu0 %v1342
  %2174 = vmatpush.bf16.msra.mxu0 %v1341
  %2175 = vmatpush.bf16.msra.mxu0 %v1340
  %2176 = vmatpush.bf16.msra.mxu0 %v1339
  %2177 = vmatpush.bf16.msra.mxu0 %v1338
  %2178 = vmatpush.bf16.msra.mxu0 %v1337
  %2179 = vmatpush.bf16.msra.mxu0 %v1336
  %2180 = vmatpush.bf16.msra.mxu0 %v1335
  %2181 = vmatmul.bf16.gmra.mxu0 %v2099
  %v2182 = vpop.f32.mrf.mxu0
  %v2183 = vadd.f32 %v2170, %v2182
  %v2184 = vpop.f32.mrf.mxu0
  %2185 = vdwg.mxu0
  %2186 = vmatpush.bf16.msra.mxu0 %v1350
  %2187 = vmatpush.bf16.msra.mxu0 %v1349
  %2188 = vmatpush.bf16.msra.mxu0 %v1348
  %2189 = vmatpush.bf16.msra.mxu0 %v1347
  %2190 = vmatpush.bf16.msra.mxu0 %v1346
  %2191 = vmatpush.bf16.msra.mxu0 %v1345
  %2192 = vmatpush.bf16.msra.mxu0 %v1344
  %2193 = vmatpush.bf16.msra.mxu0 %v1343
  %2194 = vmatmul.bf16.gmra.mxu0 %v2100
  %v2195 = vpop.f32.mrf.mxu0
  %v2196 = vadd.f32 %v2183, %v2195
  %v2197 = vpop.f32.mrf.mxu0
  %2198 = vdwg.mxu0
  %2199 = vmatpush.bf16.msra.mxu0 %v1358
  %2200 = vmatpush.bf16.msra.mxu0 %v1357
  %2201 = vmatpush.bf16.msra.mxu0 %v1356
  %2202 = vmatpush.bf16.msra.mxu0 %v1355
  %2203 = vmatpush.bf16.msra.mxu0 %v1354
  %2204 = vmatpush.bf16.msra.mxu0 %v1353
  %2205 = vmatpush.bf16.msra.mxu0 %v1352
  %2206 = vmatpush.bf16.msra.mxu0 %v1351
  %2207 = vmatmul.bf16.gmra.mxu0 %v2101
  %v2208 = vpop.f32.mrf.mxu0
  %v2209 = vadd.f32 %v2196, %v2208
  %v2210 = vpop.f32.mrf.mxu0
  %2211 = vdwg.mxu0
  %2212 = vmatpush.bf16.msra.mxu0 %v1366
  %2213 = vmatpush.bf16.msra.mxu0 %v1365
  %2214 = vmatpush.bf16.msra.mxu0 %v1364
  %2215 = vmatpush.bf16.msra.mxu0 %v1363
  %2216 = vmatpush.bf16.msra.mxu0 %v1362
  %2217 = vmatpush.bf16.msra.mxu0 %v1361
  %2218 = vmatpush.bf16.msra.mxu0 %v1360
  %2219 = vmatpush.bf16.msra.mxu0 %v1359
  %2220 = vmatmul.bf16.gmra.mxu0 %v2102
  %v2221 = vpop.f32.mrf.mxu0
  %v2222 = vadd.f32 %v2209, %v2221
  %v2223 = vpop.f32.mrf.mxu0
  %2224 = vdwg.mxu0
  %2225 = vmatpush.bf16.msra.mxu0 %v1374
  %2226 = vmatpush.bf16.msra.mxu0 %v1373
  %2227 = vmatpush.bf16.msra.mxu0 %v1372
  %2228 = vmatpush.bf16.msra.mxu0 %v1371
  %2229 = vmatpush.bf16.msra.mxu0 %v1370
  %2230 = vmatpush.bf16.msra.mxu0 %v1369
  %2231 = vmatpush.bf16.msra.mxu0 %v1368
  %2232 = vmatpush.bf16.msra.mxu0 %v1367
  %2233 = vmatmul.bf16.gmra.mxu0 %v2103
  %v2234 = vpop.f32.mrf.mxu0
  %v2235 = vadd.f32 %v2222, %v2234
  %v2236 = vpop.f32.mrf.mxu0
  %2237 = vdwg.mxu0
  %2238 = vmatpush.bf16.msra.mxu0 %v1382
  %2239 = vmatpush.bf16.msra.mxu0 %v1381
  %2240 = vmatpush.bf16.msra.mxu0 %v1380
  %2241 = vmatpush.bf16.msra.mxu0 %v1379
  %2242 = vmatpush.bf16.msra.mxu0 %v1378
  %2243 = vmatpush.bf16.msra.mxu0 %v1377
  %2244 = vmatpush.bf16.msra.mxu0 %v1376
  %2245 = vmatpush.bf16.msra.mxu0 %v1375
  %2246 = vmatmul.bf16.gmra.mxu0 %v2104
  %v2247 = vpop.f32.mrf.mxu0
  %v2248 = vadd.f32 %v2235, %v2247
  %v2249 = vpop.f32.mrf.mxu0
  %2250 = vdwg.mxu0
  %2251 = vmatpush.bf16.msra.mxu0 %v1390
  %2252 = vmatpush.bf16.msra.mxu0 %v1389
  %2253 = vmatpush.bf16.msra.mxu0 %v1388
  %2254 = vmatpush.bf16.msra.mxu0 %v1387
  %2255 = vmatpush.bf16.msra.mxu0 %v1386
  %2256 = vmatpush.bf16.msra.mxu0 %v1385
  %2257 = vmatpush.bf16.msra.mxu0 %v1384
  %2258 = vmatpush.bf16.msra.mxu0 %v1383
  %2259 = vmatmul.bf16.gmra.mxu0 %v2105
  %v2260 = vpop.f32.mrf.mxu0
  %v2261 = vadd.f32 %v2248, %v2260
  %v2262 = vpop.f32.mrf.mxu0
  %2263 = vdwg.mxu0
  %2264 = vmatpush.bf16.msra.mxu0 %v1398
  %2265 = vmatpush.bf16.msra.mxu0 %v1397
  %2266 = vmatpush.bf16.msra.mxu0 %v1396
  %2267 = vmatpush.bf16.msra.mxu0 %v1395
  %2268 = vmatpush.bf16.msra.mxu0 %v1394
  %2269 = vmatpush.bf16.msra.mxu0 %v1393
  %2270 = vmatpush.bf16.msra.mxu0 %v1392
  %2271 = vmatpush.bf16.msra.mxu0 %v1391
  %2272 = vmatmul.bf16.gmra.mxu0 %v2106
  %v2273 = vpop.f32.mrf.mxu0
  %v2274 = vadd.f32 %v2261, %v2273
  %v2275 = vpop.f32.mrf.mxu0
  %2276 = vdwg.mxu0
  %2277 = vmatpush.bf16.msra.mxu0 %v1406
  %2278 = vmatpush.bf16.msra.mxu0 %v1405
  %2279 = vmatpush.bf16.msra.mxu0 %v1404
  %2280 = vmatpush.bf16.msra.mxu0 %v1403
  %2281 = vmatpush.bf16.msra.mxu0 %v1402
  %2282 = vmatpush.bf16.msra.mxu0 %v1401
  %2283 = vmatpush.bf16.msra.mxu0 %v1400
  %2284 = vmatpush.bf16.msra.mxu0 %v1399
  %2285 = vmatmul.bf16.gmra.mxu0 %v2107
  %v2286 = vpop.f32.mrf.mxu0
  %v2287 = vadd.f32 %v2274, %v2286
  %v2288 = vpop.f32.mrf.mxu0
  %2289 = vdwg.mxu0
  %2290 = vmatpush.bf16.msra.mxu0 %v1414
  %2291 = vmatpush.bf16.msra.mxu0 %v1413
  %2292 = vmatpush.bf16.msra.mxu0 %v1412
  %2293 = vmatpush.bf16.msra.mxu0 %v1411
  %2294 = vmatpush.bf16.msra.mxu0 %v1410
  %2295 = vmatpush.bf16.msra.mxu0 %v1409
  %2296 = vmatpush.bf16.msra.mxu0 %v1408
  %2297 = vmatpush.bf16.msra.mxu0 %v1407
  %2298 = vmatmul.bf16.gmra.mxu0 %v2108
  %v2299 = vpop.f32.mrf.mxu0
  %v2300 = vadd.f32 %v2287, %v2299
  %v2301 = vpop.f32.mrf.mxu0
  %2302 = vdwg.mxu0
  %2303 = vmatpush.bf16.msra.mxu0 %v1422
  %2304 = vmatpush.bf16.msra.mxu0 %v1421
  %2305 = vmatpush.bf16.msra.mxu0 %v1420
  %2306 = vmatpush.bf16.msra.mxu0 %v1419
  %2307 = vmatpush.bf16.msra.mxu0 %v1418
  %2308 = vmatpush.bf16.msra.mxu0 %v1417
  %2309 = vmatpush.bf16.msra.mxu0 %v1416
  %2310 = vmatpush.bf16.msra.mxu0 %v1415
  %2311 = vmatmul.bf16.gmra.mxu0 %v2109
  %v2312 = vpop.f32.mrf.mxu0
  %v2313 = vadd.f32 %v2300, %v2312
  %v2314 = vpop.f32.mrf.mxu0
  %2315 = vdwg.mxu0
  %2316 = vmatpush.bf16.msra.mxu0 %v1430
  %2317 = vmatpush.bf16.msra.mxu0 %v1429
  %2318 = vmatpush.bf16.msra.mxu0 %v1428
  %2319 = vmatpush.bf16.msra.mxu0 %v1427
  %2320 = vmatpush.bf16.msra.mxu0 %v1426
  %2321 = vmatpush.bf16.msra.mxu0 %v1425
  %2322 = vmatpush.bf16.msra.mxu0 %v1424
  %2323 = vmatpush.bf16.msra.mxu0 %v1423
  %2324 = vmatmul.bf16.gmra.mxu0 %v2110
  %v2325 = vpop.f32.mrf.mxu0
  %v2326 = vadd.f32 %v2313, %v2325
  %v2327 = vpop.f32.mrf.mxu0
  %2328 = vdwg.mxu0
  %2329 = vmatpush.bf16.msra.mxu0 %v1438
  %2330 = vmatpush.bf16.msra.mxu0 %v1437
  %2331 = vmatpush.bf16.msra.mxu0 %v1436
  %2332 = vmatpush.bf16.msra.mxu0 %v1435
  %2333 = vmatpush.bf16.msra.mxu0 %v1434
  %2334 = vmatpush.bf16.msra.mxu0 %v1433
  %2335 = vmatpush.bf16.msra.mxu0 %v1432
  %2336 = vmatpush.bf16.msra.mxu0 %v1431
  %2337 = vmatmul.bf16.gmra.mxu0 %v2111
  %v2338 = vpop.f32.mrf.mxu0
  %v2339 = vadd.f32 %v2326, %v2338
  %v2340 = vpop.f32.mrf.mxu0
  %2341 = vdwg.mxu0
  %2342 = vmatpush.bf16.msra.mxu0 %v1446
  %2343 = vmatpush.bf16.msra.mxu0 %v1445
  %2344 = vmatpush.bf16.msra.mxu0 %v1444
  %2345 = vmatpush.bf16.msra.mxu0 %v1443
  %2346 = vmatpush.bf16.msra.mxu0 %v1442
  %2347 = vmatpush.bf16.msra.mxu0 %v1441
  %2348 = vmatpush.bf16.msra.mxu0 %v1440
  %2349 = vmatpush.bf16.msra.mxu0 %v1439
  %2350 = vmatmul.bf16.gmra.mxu0 %v2112
  %v2351 = vpop.f32.mrf.mxu0
  %v2352 = vadd.f32 %v2339, %v2351
  %v2353 = vpop.f32.mrf.mxu0
  %2354 = vdwg.mxu0
  %2355 = vmatpush.bf16.msra.mxu0 %v1454
  %2356 = vmatpush.bf16.msra.mxu0 %v1453
  %2357 = vmatpush.bf16.msra.mxu0 %v1452
  %2358 = vmatpush.bf16.msra.mxu0 %v1451
  %2359 = vmatpush.bf16.msra.mxu0 %v1450
  %2360 = vmatpush.bf16.msra.mxu0 %v1449
  %2361 = vmatpush.bf16.msra.mxu0 %v1448
  %2362 = vmatpush.bf16.msra.mxu0 %v1447
  %2363 = vmatmul.bf16.gmra.mxu0 %v2113
  %v2364 = vpop.f32.mrf.mxu0
  %v2365 = vadd.f32 %v2352, %v2364
  %v2366 = vpop.f32.mrf.mxu0
  %2367 = vdwg.mxu0
  %2368 = vmatpush.bf16.msra.mxu0 %v1462
  %2369 = vmatpush.bf16.msra.mxu0 %v1461
  %2370 = vmatpush.bf16.msra.mxu0 %v1460
  %2371 = vmatpush.bf16.msra.mxu0 %v1459
  %2372 = vmatpush.bf16.msra.mxu0 %v1458
  %2373 = vmatpush.bf16.msra.mxu0 %v1457
  %2374 = vmatpush.bf16.msra.mxu0 %v1456
  %2375 = vmatpush.bf16.msra.mxu0 %v1455
  %2376 = vmatmul.bf16.gmra.mxu0 %v2114
  %v2377 = vpop.f32.mrf.mxu0
  %v2378 = vadd.f32 %v2365, %v2377
  %v2379 = vpop.f32.mrf.mxu0
  %2380 = vdwg.mxu0
  %2381 = vmatpush.bf16.msra.mxu0 %v1470
  %2382 = vmatpush.bf16.msra.mxu0 %v1469
  %2383 = vmatpush.bf16.msra.mxu0 %v1468
  %2384 = vmatpush.bf16.msra.mxu0 %v1467
  %2385 = vmatpush.bf16.msra.mxu0 %v1466
  %2386 = vmatpush.bf16.msra.mxu0 %v1465
  %2387 = vmatpush.bf16.msra.mxu0 %v1464
  %2388 = vmatpush.bf16.msra.mxu0 %v1463
  %2389 = vmatmul.bf16.gmra.mxu0 %v2115
  %v2390 = vpop.f32.mrf.mxu0
  %v2391 = vadd.f32 %v2378, %v2390
  %v2392 = vpop.f32.mrf.mxu0
  %2393 = vdwg.mxu0
  %2394 = vmatpush.bf16.msra.mxu0 %v1478
  %2395 = vmatpush.bf16.msra.mxu0 %v1477
  %2396 = vmatpush.bf16.msra.mxu0 %v1476
  %2397 = vmatpush.bf16.msra.mxu0 %v1475
  %2398 = vmatpush.bf16.msra.mxu0 %v1474
  %2399 = vmatpush.bf16.msra.mxu0 %v1473
  %2400 = vmatpush.bf16.msra.mxu0 %v1472
  %2401 = vmatpush.bf16.msra.mxu0 %v1471
  %2402 = vmatmul.bf16.gmra.mxu0 %v2116
  %v2403 = vpop.f32.mrf.mxu0
  %v2404 = vadd.f32 %v2391, %v2403
  %v2405 = vpop.f32.mrf.mxu0
  %2406 = vdwg.mxu0
  %2407 = vmatpush.bf16.msra.mxu0 %v1486
  %2408 = vmatpush.bf16.msra.mxu0 %v1485
  %2409 = vmatpush.bf16.msra.mxu0 %v1484
  %2410 = vmatpush.bf16.msra.mxu0 %v1483
  %2411 = vmatpush.bf16.msra.mxu0 %v1482
  %2412 = vmatpush.bf16.msra.mxu0 %v1481
  %2413 = vmatpush.bf16.msra.mxu0 %v1480
  %2414 = vmatpush.bf16.msra.mxu0 %v1479
  %2415 = vmatmul.bf16.gmra.mxu0 %v2117
  %v2416 = vpop.f32.mrf.mxu0
  %v2417 = vadd.f32 %v2404, %v2416
  %v2418 = vpop.f32.mrf.mxu0
  %2419 = vdwg.mxu0
  %2420 = vmatpush.bf16.msra.mxu0 %v1494
  %2421 = vmatpush.bf16.msra.mxu0 %v1493
  %2422 = vmatpush.bf16.msra.mxu0 %v1492
  %2423 = vmatpush.bf16.msra.mxu0 %v1491
  %2424 = vmatpush.bf16.msra.mxu0 %v1490
  %2425 = vmatpush.bf16.msra.mxu0 %v1489
  %2426 = vmatpush.bf16.msra.mxu0 %v1488
  %2427 = vmatpush.bf16.msra.mxu0 %v1487
  %2428 = vmatmul.bf16.gmra.mxu0 %v2118
  %v2429 = vpop.f32.mrf.mxu0
  %v2430 = vadd.f32 %v2417, %v2429
  %v2431 = vpop.f32.mrf.mxu0
  %2432 = vdwg.mxu0
  %2433 = vmatpush.bf16.msra.mxu0 %v1502
  %2434 = vmatpush.bf16.msra.mxu0 %v1501
  %2435 = vmatpush.bf16.msra.mxu0 %v1500
  %2436 = vmatpush.bf16.msra.mxu0 %v1499
  %2437 = vmatpush.bf16.msra.mxu0 %v1498
  %2438 = vmatpush.bf16.msra.mxu0 %v1497
  %2439 = vmatpush.bf16.msra.mxu0 %v1496
  %2440 = vmatpush.bf16.msra.mxu0 %v1495
  %2441 = vmatmul.bf16.gmra.mxu0 %v2119
  %v2442 = vpop.f32.mrf.mxu0
  %v2443 = vadd.f32 %v2430, %v2442
  %v2444 = vpop.f32.mrf.mxu0
  %2445 = vdwg.mxu0
  %2446 = vmatpush.bf16.msra.mxu0 %v1510
  %2447 = vmatpush.bf16.msra.mxu0 %v1509
  %2448 = vmatpush.bf16.msra.mxu0 %v1508
  %2449 = vmatpush.bf16.msra.mxu0 %v1507
  %2450 = vmatpush.bf16.msra.mxu0 %v1506
  %2451 = vmatpush.bf16.msra.mxu0 %v1505
  %2452 = vmatpush.bf16.msra.mxu0 %v1504
  %2453 = vmatpush.bf16.msra.mxu0 %v1503
  %2454 = vmatmul.bf16.gmra.mxu0 %v2120
  %v2455 = vpop.f32.mrf.mxu0
  %v2456 = vadd.f32 %v2443, %v2455
  %v2457 = vpop.f32.mrf.mxu0
  %2458 = vdwg.mxu0
  %2459 = vmatpush.bf16.msra.mxu0 %v1518
  %2460 = vmatpush.bf16.msra.mxu0 %v1517
  %2461 = vmatpush.bf16.msra.mxu0 %v1516
  %2462 = vmatpush.bf16.msra.mxu0 %v1515
  %2463 = vmatpush.bf16.msra.mxu0 %v1514
  %2464 = vmatpush.bf16.msra.mxu0 %v1513
  %2465 = vmatpush.bf16.msra.mxu0 %v1512
  %2466 = vmatpush.bf16.msra.mxu0 %v1511
  %2467 = vmatmul.bf16.gmra.mxu0 %v2121
  %v2468 = vpop.f32.mrf.mxu0
  %v2469 = vadd.f32 %v2456, %v2468
  %v2470 = vpop.f32.mrf.mxu0
  %2471 = vdwg.mxu0
  %v2472 = vmax.f32 %v2469, 0.0
  %v2473 = vmax.f32 %v2044, %v2472
  %s2474 = scalar_lea.vmem %s0, 200
  %v2475 = vld [vmem:[%s2474] sm:$0xff]
  %v2476 = vld [vmem:[%s2474 + $0x8] sm:$0xff]
  %v2477 = vld [vmem:[%s2474 + $0x10] sm:$0xff]
  %v2478 = vld [vmem:[%s2474 + $0x18] sm:$0xff]
  %v2479 = vld [vmem:[%s2474 + $0x20] sm:$0xff]
  %v2480 = vld [vmem:[%s2474 + $0x28] sm:$0xff]
  %v2481 = vld [vmem:[%s2474 + $0x30] sm:$0xff]
  %v2482 = vld [vmem:[%s2474 + $0x38] sm:$0xff]
  %v2483 = vld [vmem:[%s2474 + $0x40] sm:$0xff]
  %v2484 = vld [vmem:[%s2474 + $0x48] sm:$0xff]
  %v2485 = vld [vmem:[%s2474 + $0x50] sm:$0xff]
  %v2486 = vld [vmem:[%s2474 + $0x58] sm:$0xff]
  %v2487 = vld [vmem:[%s2474 + $0x60] sm:$0xf]
  %v2501 = vunpack.c.l.b16 %v2475
  %v2502 = vunpack.c.h.b16 %v2475
  %v2503 = vunpack.c.l.b16 %v2476
  %v2504 = vunpack.c.h.b16 %v2476
  %v2505 = vunpack.c.l.b16 %v2477
  %v2506 = vunpack.c.h.b16 %v2477
  %v2507 = vunpack.c.l.b16 %v2478
  %v2508 = vunpack.c.h.b16 %v2478
  %v2509 = vunpack.c.l.b16 %v2479
  %v2510 = vunpack.c.h.b16 %v2479
  %v2511 = vunpack.c.l.b16 %v2480
  %v2512 = vunpack.c.h.b16 %v2480
  %v2513 = vunpack.c.l.b16 %v2481
  %v2514 = vunpack.c.h.b16 %v2481
  %v2515 = vunpack.c.l.b16 %v2482
  %v2516 = vunpack.c.h.b16 %v2482
  %v2517 = vunpack.c.l.b16 %v2483
  %v2518 = vunpack.c.h.b16 %v2483
  %v2519 = vunpack.c.l.b16 %v2484
  %v2520 = vunpack.c.h.b16 %v2484
  %v2521 = vunpack.c.l.b16 %v2485
  %v2522 = vunpack.c.h.b16 %v2485
  %v2523 = vunpack.c.l.b16 %v2486
  %v2524 = vunpack.c.h.b16 %v2486
  %v2525 = vunpack.c.l.b16 %v2487
  %v2526 = vpack.c.b16 %v2501, %v2501
  %v2527 = vpack.c.b16 %v2502, %v2502
  %v2528 = vpack.c.b16 %v2503, %v2503
  %v2529 = vpack.c.b16 %v2504, %v2504
  %v2530 = vpack.c.b16 %v2505, %v2505
  %v2531 = vpack.c.b16 %v2506, %v2506
  %v2532 = vpack.c.b16 %v2507, %v2507
  %v2533 = vpack.c.b16 %v2508, %v2508
  %v2534 = vpack.c.b16 %v2509, %v2509
  %v2535 = vpack.c.b16 %v2510, %v2510
  %v2536 = vpack.c.b16 %v2511, %v2511
  %v2537 = vpack.c.b16 %v2512, %v2512
  %v2538 = vpack.c.b16 %v2513, %v2513
  %v2539 = vpack.c.b16 %v2514, %v2514
  %v2540 = vpack.c.b16 %v2515, %v2515
  %v2541 = vpack.c.b16 %v2516, %v2516
  %v2542 = vpack.c.b16 %v2517, %v2517
  %v2543 = vpack.c.b16 %v2518, %v2518
  %v2544 = vpack.c.b16 %v2519, %v2519
  %v2545 = vpack.c.b16 %v2520, %v2520
  %v2546 = vpack.c.b16 %v2521, %v2521
  %v2547 = vpack.c.b16 %v2522, %v2522
  %v2548 = vpack.c.b16 %v2523, %v2523
  %v2549 = vpack.c.b16 %v2524, %v2524
  %v2550 = vpack.c.b16 %v2525, %v2525
  %2576 = vmatpush.bf16.msra.mxu0 %v1326
  %2577 = vmatpush.bf16.msra.mxu0 %v1325
  %2578 = vmatpush.bf16.msra.mxu0 %v1324
  %2579 = vmatpush.bf16.msra.mxu0 %v1323
  %2580 = vmatpush.bf16.msra.mxu0 %v1322
  %2581 = vmatpush.bf16.msra.mxu0 %v1321
  %2582 = vmatpush.bf16.msra.mxu0 %v1320
  %2583 = vmatpush.bf16.msra.mxu0 %v1319
  %2584 = vmatmul.bf16.gmra.mxu0 %v2526
  %v2585 = vpop.f32.mrf.mxu0
  %v2586 = vadd.f32 %v429, %v2585
  %v2587 = vpop.f32.mrf.mxu0
  %2588 = vdwg.mxu0
  %2589 = vmatpush.bf16.msra.mxu0 %v1334
  %2590 = vmatpush.bf16.msra.mxu0 %v1333
  %2591 = vmatpush.bf16.msra.mxu0 %v1332
  %2592 = vmatpush.bf16.msra.mxu0 %v1331
  %2593 = vmatpush.bf16.msra.mxu0 %v1330
  %2594 = vmatpush.bf16.msra.mxu0 %v1329
  %2595 = vmatpush.bf16.msra.mxu0 %v1328
  %2596 = vmatpush.bf16.msra.mxu0 %v1327
  %2597 = vmatmul.bf16.gmra.mxu0 %v2527
  %v2598 = vpop.f32.mrf.mxu0
  %v2599 = vadd.f32 %v2586, %v2598
  %v2600 = vpop.f32.mrf.mxu0
  %2601 = vdwg.mxu0
  %2602 = vmatpush.bf16.msra.mxu0 %v1342
  %2603 = vmatpush.bf16.msra.mxu0 %v1341
  %2604 = vmatpush.bf16.msra.mxu0 %v1340
  %2605 = vmatpush.bf16.msra.mxu0 %v1339
  %2606 = vmatpush.bf16.msra.mxu0 %v1338
  %2607 = vmatpush.bf16.msra.mxu0 %v1337
  %2608 = vmatpush.bf16.msra.mxu0 %v1336
  %2609 = vmatpush.bf16.msra.mxu0 %v1335
  %2610 = vmatmul.bf16.gmra.mxu0 %v2528
  %v2611 = vpop.f32.mrf.mxu0
  %v2612 = vadd.f32 %v2599, %v2611
  %v2613 = vpop.f32.mrf.mxu0
  %2614 = vdwg.mxu0
  %2615 = vmatpush.bf16.msra.mxu0 %v1350
  %2616 = vmatpush.bf16.msra.mxu0 %v1349
  %2617 = vmatpush.bf16.msra.mxu0 %v1348
  %2618 = vmatpush.bf16.msra.mxu0 %v1347
  %2619 = vmatpush.bf16.msra.mxu0 %v1346
  %2620 = vmatpush.bf16.msra.mxu0 %v1345
  %2621 = vmatpush.bf16.msra.mxu0 %v1344
  %2622 = vmatpush.bf16.msra.mxu0 %v1343
  %2623 = vmatmul.bf16.gmra.mxu0 %v2529
  %v2624 = vpop.f32.mrf.mxu0
  %v2625 = vadd.f32 %v2612, %v2624
  %v2626 = vpop.f32.mrf.mxu0
  %2627 = vdwg.mxu0
  %2628 = vmatpush.bf16.msra.mxu0 %v1358
  %2629 = vmatpush.bf16.msra.mxu0 %v1357
  %2630 = vmatpush.bf16.msra.mxu0 %v1356
  %2631 = vmatpush.bf16.msra.mxu0 %v1355
  %2632 = vmatpush.bf16.msra.mxu0 %v1354
  %2633 = vmatpush.bf16.msra.mxu0 %v1353
  %2634 = vmatpush.bf16.msra.mxu0 %v1352
  %2635 = vmatpush.bf16.msra.mxu0 %v1351
  %2636 = vmatmul.bf16.gmra.mxu0 %v2530
  %v2637 = vpop.f32.mrf.mxu0
  %v2638 = vadd.f32 %v2625, %v2637
  %v2639 = vpop.f32.mrf.mxu0
  %2640 = vdwg.mxu0
  %2641 = vmatpush.bf16.msra.mxu0 %v1366
  %2642 = vmatpush.bf16.msra.mxu0 %v1365
  %2643 = vmatpush.bf16.msra.mxu0 %v1364
  %2644 = vmatpush.bf16.msra.mxu0 %v1363
  %2645 = vmatpush.bf16.msra.mxu0 %v1362
  %2646 = vmatpush.bf16.msra.mxu0 %v1361
  %2647 = vmatpush.bf16.msra.mxu0 %v1360
  %2648 = vmatpush.bf16.msra.mxu0 %v1359
  %2649 = vmatmul.bf16.gmra.mxu0 %v2531
  %v2650 = vpop.f32.mrf.mxu0
  %v2651 = vadd.f32 %v2638, %v2650
  %v2652 = vpop.f32.mrf.mxu0
  %2653 = vdwg.mxu0
  %2654 = vmatpush.bf16.msra.mxu0 %v1374
  %2655 = vmatpush.bf16.msra.mxu0 %v1373
  %2656 = vmatpush.bf16.msra.mxu0 %v1372
  %2657 = vmatpush.bf16.msra.mxu0 %v1371
  %2658 = vmatpush.bf16.msra.mxu0 %v1370
  %2659 = vmatpush.bf16.msra.mxu0 %v1369
  %2660 = vmatpush.bf16.msra.mxu0 %v1368
  %2661 = vmatpush.bf16.msra.mxu0 %v1367
  %2662 = vmatmul.bf16.gmra.mxu0 %v2532
  %v2663 = vpop.f32.mrf.mxu0
  %v2664 = vadd.f32 %v2651, %v2663
  %v2665 = vpop.f32.mrf.mxu0
  %2666 = vdwg.mxu0
  %2667 = vmatpush.bf16.msra.mxu0 %v1382
  %2668 = vmatpush.bf16.msra.mxu0 %v1381
  %2669 = vmatpush.bf16.msra.mxu0 %v1380
  %2670 = vmatpush.bf16.msra.mxu0 %v1379
  %2671 = vmatpush.bf16.msra.mxu0 %v1378
  %2672 = vmatpush.bf16.msra.mxu0 %v1377
  %2673 = vmatpush.bf16.msra.mxu0 %v1376
  %2674 = vmatpush.bf16.msra.mxu0 %v1375
  %2675 = vmatmul.bf16.gmra.mxu0 %v2533
  %v2676 = vpop.f32.mrf.mxu0
  %v2677 = vadd.f32 %v2664, %v2676
  %v2678 = vpop.f32.mrf.mxu0
  %2679 = vdwg.mxu0
  %2680 = vmatpush.bf16.msra.mxu0 %v1390
  %2681 = vmatpush.bf16.msra.mxu0 %v1389
  %2682 = vmatpush.bf16.msra.mxu0 %v1388
  %2683 = vmatpush.bf16.msra.mxu0 %v1387
  %2684 = vmatpush.bf16.msra.mxu0 %v1386
  %2685 = vmatpush.bf16.msra.mxu0 %v1385
  %2686 = vmatpush.bf16.msra.mxu0 %v1384
  %2687 = vmatpush.bf16.msra.mxu0 %v1383
  %2688 = vmatmul.bf16.gmra.mxu0 %v2534
  %v2689 = vpop.f32.mrf.mxu0
  %v2690 = vadd.f32 %v2677, %v2689
  %v2691 = vpop.f32.mrf.mxu0
  %2692 = vdwg.mxu0
  %2693 = vmatpush.bf16.msra.mxu0 %v1398
  %2694 = vmatpush.bf16.msra.mxu0 %v1397
  %2695 = vmatpush.bf16.msra.mxu0 %v1396
  %2696 = vmatpush.bf16.msra.mxu0 %v1395
  %2697 = vmatpush.bf16.msra.mxu0 %v1394
  %2698 = vmatpush.bf16.msra.mxu0 %v1393
  %2699 = vmatpush.bf16.msra.mxu0 %v1392
  %2700 = vmatpush.bf16.msra.mxu0 %v1391
  %2701 = vmatmul.bf16.gmra.mxu0 %v2535
  %v2702 = vpop.f32.mrf.mxu0
  %v2703 = vadd.f32 %v2690, %v2702
  %v2704 = vpop.f32.mrf.mxu0
  %2705 = vdwg.mxu0
  %2706 = vmatpush.bf16.msra.mxu0 %v1406
  %2707 = vmatpush.bf16.msra.mxu0 %v1405
  %2708 = vmatpush.bf16.msra.mxu0 %v1404
  %2709 = vmatpush.bf16.msra.mxu0 %v1403
  %2710 = vmatpush.bf16.msra.mxu0 %v1402
  %2711 = vmatpush.bf16.msra.mxu0 %v1401
  %2712 = vmatpush.bf16.msra.mxu0 %v1400
  %2713 = vmatpush.bf16.msra.mxu0 %v1399
  %2714 = vmatmul.bf16.gmra.mxu0 %v2536
  %v2715 = vpop.f32.mrf.mxu0
  %v2716 = vadd.f32 %v2703, %v2715
  %v2717 = vpop.f32.mrf.mxu0
  %2718 = vdwg.mxu0
  %2719 = vmatpush.bf16.msra.mxu0 %v1414
  %2720 = vmatpush.bf16.msra.mxu0 %v1413
  %2721 = vmatpush.bf16.msra.mxu0 %v1412
  %2722 = vmatpush.bf16.msra.mxu0 %v1411
  %2723 = vmatpush.bf16.msra.mxu0 %v1410
  %2724 = vmatpush.bf16.msra.mxu0 %v1409
  %2725 = vmatpush.bf16.msra.mxu0 %v1408
  %2726 = vmatpush.bf16.msra.mxu0 %v1407
  %2727 = vmatmul.bf16.gmra.mxu0 %v2537
  %v2728 = vpop.f32.mrf.mxu0
  %v2729 = vadd.f32 %v2716, %v2728
  %v2730 = vpop.f32.mrf.mxu0
  %2731 = vdwg.mxu0
  %2732 = vmatpush.bf16.msra.mxu0 %v1422
  %2733 = vmatpush.bf16.msra.mxu0 %v1421
  %2734 = vmatpush.bf16.msra.mxu0 %v1420
  %2735 = vmatpush.bf16.msra.mxu0 %v1419
  %2736 = vmatpush.bf16.msra.mxu0 %v1418
  %2737 = vmatpush.bf16.msra.mxu0 %v1417
  %2738 = vmatpush.bf16.msra.mxu0 %v1416
  %2739 = vmatpush.bf16.msra.mxu0 %v1415
  %2740 = vmatmul.bf16.gmra.mxu0 %v2538
  %v2741 = vpop.f32.mrf.mxu0
  %v2742 = vadd.f32 %v2729, %v2741
  %v2743 = vpop.f32.mrf.mxu0
  %2744 = vdwg.mxu0
  %2745 = vmatpush.bf16.msra.mxu0 %v1430
  %2746 = vmatpush.bf16.msra.mxu0 %v1429
  %2747 = vmatpush.bf16.msra.mxu0 %v1428
  %2748 = vmatpush.bf16.msra.mxu0 %v1427
  %2749 = vmatpush.bf16.msra.mxu0 %v1426
  %2750 = vmatpush.bf16.msra.mxu0 %v1425
  %2751 = vmatpush.bf16.msra.mxu0 %v1424
  %2752 = vmatpush.bf16.msra.mxu0 %v1423
  %2753 = vmatmul.bf16.gmra.mxu0 %v2539
  %v2754 = vpop.f32.mrf.mxu0
  %v2755 = vadd.f32 %v2742, %v2754
  %v2756 = vpop.f32.mrf.mxu0
  %2757 = vdwg.mxu0
  %2758 = vmatpush.bf16.msra.mxu0 %v1438
  %2759 = vmatpush.bf16.msra.mxu0 %v1437
  %2760 = vmatpush.bf16.msra.mxu0 %v1436
  %2761 = vmatpush.bf16.msra.mxu0 %v1435
  %2762 = vmatpush.bf16.msra.mxu0 %v1434
  %2763 = vmatpush.bf16.msra.mxu0 %v1433
  %2764 = vmatpush.bf16.msra.mxu0 %v1432
  %2765 = vmatpush.bf16.msra.mxu0 %v1431
  %2766 = vmatmul.bf16.gmra.mxu0 %v2540
  %v2767 = vpop.f32.mrf.mxu0
  %v2768 = vadd.f32 %v2755, %v2767
  %v2769 = vpop.f32.mrf.mxu0
  %2770 = vdwg.mxu0
  %2771 = vmatpush.bf16.msra.mxu0 %v1446
  %2772 = vmatpush.bf16.msra.mxu0 %v1445
  %2773 = vmatpush.bf16.msra.mxu0 %v1444
  %2774 = vmatpush.bf16.msra.mxu0 %v1443
  %2775 = vmatpush.bf16.msra.mxu0 %v1442
  %2776 = vmatpush.bf16.msra.mxu0 %v1441
  %2777 = vmatpush.bf16.msra.mxu0 %v1440
  %2778 = vmatpush.bf16.msra.mxu0 %v1439
  %2779 = vmatmul.bf16.gmra.mxu0 %v2541
  %v2780 = vpop.f32.mrf.mxu0
  %v2781 = vadd.f32 %v2768, %v2780
  %v2782 = vpop.f32.mrf.mxu0
  %2783 = vdwg.mxu0
  %2784 = vmatpush.bf16.msra.mxu0 %v1454
  %2785 = vmatpush.bf16.msra.mxu0 %v1453
  %2786 = vmatpush.bf16.msra.mxu0 %v1452
  %2787 = vmatpush.bf16.msra.mxu0 %v1451
  %2788 = vmatpush.bf16.msra.mxu0 %v1450
  %2789 = vmatpush.bf16.msra.mxu0 %v1449
  %2790 = vmatpush.bf16.msra.mxu0 %v1448
  %2791 = vmatpush.bf16.msra.mxu0 %v1447
  %2792 = vmatmul.bf16.gmra.mxu0 %v2542
  %v2793 = vpop.f32.mrf.mxu0
  %v2794 = vadd.f32 %v2781, %v2793
  %v2795 = vpop.f32.mrf.mxu0
  %2796 = vdwg.mxu0
  %2797 = vmatpush.bf16.msra.mxu0 %v1462
  %2798 = vmatpush.bf16.msra.mxu0 %v1461
  %2799 = vmatpush.bf16.msra.mxu0 %v1460
  %2800 = vmatpush.bf16.msra.mxu0 %v1459
  %2801 = vmatpush.bf16.msra.mxu0 %v1458
  %2802 = vmatpush.bf16.msra.mxu0 %v1457
  %2803 = vmatpush.bf16.msra.mxu0 %v1456
  %2804 = vmatpush.bf16.msra.mxu0 %v1455
  %2805 = vmatmul.bf16.gmra.mxu0 %v2543
  %v2806 = vpop.f32.mrf.mxu0
  %v2807 = vadd.f32 %v2794, %v2806
  %v2808 = vpop.f32.mrf.mxu0
  %2809 = vdwg.mxu0
  %2810 = vmatpush.bf16.msra.mxu0 %v1470
  %2811 = vmatpush.bf16.msra.mxu0 %v1469
  %2812 = vmatpush.bf16.msra.mxu0 %v1468
  %2813 = vmatpush.bf16.msra.mxu0 %v1467
  %2814 = vmatpush.bf16.msra.mxu0 %v1466
  %2815 = vmatpush.bf16.msra.mxu0 %v1465
  %2816 = vmatpush.bf16.msra.mxu0 %v1464
  %2817 = vmatpush.bf16.msra.mxu0 %v1463
  %2818 = vmatmul.bf16.gmra.mxu0 %v2544
  %v2819 = vpop.f32.mrf.mxu0
  %v2820 = vadd.f32 %v2807, %v2819
  %v2821 = vpop.f32.mrf.mxu0
  %2822 = vdwg.mxu0
  %2823 = vmatpush.bf16.msra.mxu0 %v1478
  %2824 = vmatpush.bf16.msra.mxu0 %v1477
  %2825 = vmatpush.bf16.msra.mxu0 %v1476
  %2826 = vmatpush.bf16.msra.mxu0 %v1475
  %2827 = vmatpush.bf16.msra.mxu0 %v1474
  %2828 = vmatpush.bf16.msra.mxu0 %v1473
  %2829 = vmatpush.bf16.msra.mxu0 %v1472
  %2830 = vmatpush.bf16.msra.mxu0 %v1471
  %2831 = vmatmul.bf16.gmra.mxu0 %v2545
  %v2832 = vpop.f32.mrf.mxu0
  %v2833 = vadd.f32 %v2820, %v2832
  %v2834 = vpop.f32.mrf.mxu0
  %2835 = vdwg.mxu0
  %2836 = vmatpush.bf16.msra.mxu0 %v1486
  %2837 = vmatpush.bf16.msra.mxu0 %v1485
  %2838 = vmatpush.bf16.msra.mxu0 %v1484
  %2839 = vmatpush.bf16.msra.mxu0 %v1483
  %2840 = vmatpush.bf16.msra.mxu0 %v1482
  %2841 = vmatpush.bf16.msra.mxu0 %v1481
  %2842 = vmatpush.bf16.msra.mxu0 %v1480
  %2843 = vmatpush.bf16.msra.mxu0 %v1479
  %2844 = vmatmul.bf16.gmra.mxu0 %v2546
  %v2845 = vpop.f32.mrf.mxu0
  %v2846 = vadd.f32 %v2833, %v2845
  %v2847 = vpop.f32.mrf.mxu0
  %2848 = vdwg.mxu0
  %2849 = vmatpush.bf16.msra.mxu0 %v1494
  %2850 = vmatpush.bf16.msra.mxu0 %v1493
  %2851 = vmatpush.bf16.msra.mxu0 %v1492
  %2852 = vmatpush.bf16.msra.mxu0 %v1491
  %2853 = vmatpush.bf16.msra.mxu0 %v1490
  %2854 = vmatpush.bf16.msra.mxu0 %v1489
  %2855 = vmatpush.bf16.msra.mxu0 %v1488
  %2856 = vmatpush.bf16.msra.mxu0 %v1487
  %2857 = vmatmul.bf16.gmra.mxu0 %v2547
  %v2858 = vpop.f32.mrf.mxu0
  %v2859 = vadd.f32 %v2846, %v2858
  %v2860 = vpop.f32.mrf.mxu0
  %2861 = vdwg.mxu0
  %2862 = vmatpush.bf16.msra.mxu0 %v1502
  %2863 = vmatpush.bf16.msra.mxu0 %v1501
  %2864 = vmatpush.bf16.msra.mxu0 %v1500
  %2865 = vmatpush.bf16.msra.mxu0 %v1499
  %2866 = vmatpush.bf16.msra.mxu0 %v1498
  %2867 = vmatpush.bf16.msra.mxu0 %v1497
  %2868 = vmatpush.bf16.msra.mxu0 %v1496
  %2869 = vmatpush.bf16.msra.mxu0 %v1495
  %2870 = vmatmul.bf16.gmra.mxu0 %v2548
  %v2871 = vpop.f32.mrf.mxu0
  %v2872 = vadd.f32 %v2859, %v2871
  %v2873 = vpop.f32.mrf.mxu0
  %2874 = vdwg.mxu0
  %2875 = vmatpush.bf16.msra.mxu0 %v1510
  %2876 = vmatpush.bf16.msra.mxu0 %v1509
  %2877 = vmatpush.bf16.msra.mxu0 %v1508
  %2878 = vmatpush.bf16.msra.mxu0 %v1507
  %2879 = vmatpush.bf16.msra.mxu0 %v1506
  %2880 = vmatpush.bf16.msra.mxu0 %v1505
  %2881 = vmatpush.bf16.msra.mxu0 %v1504
  %2882 = vmatpush.bf16.msra.mxu0 %v1503
  %2883 = vmatmul.bf16.gmra.mxu0 %v2549
  %v2884 = vpop.f32.mrf.mxu0
  %v2885 = vadd.f32 %v2872, %v2884
  %v2886 = vpop.f32.mrf.mxu0
  %2887 = vdwg.mxu0
  %2888 = vmatpush.bf16.msra.mxu0 %v1518
  %2889 = vmatpush.bf16.msra.mxu0 %v1517
  %2890 = vmatpush.bf16.msra.mxu0 %v1516
  %2891 = vmatpush.bf16.msra.mxu0 %v1515
  %2892 = vmatpush.bf16.msra.mxu0 %v1514
  %2893 = vmatpush.bf16.msra.mxu0 %v1513
  %2894 = vmatpush.bf16.msra.mxu0 %v1512
  %2895 = vmatpush.bf16.msra.mxu0 %v1511
  %2896 = vmatmul.bf16.gmra.mxu0 %v2550
  %v2897 = vpop.f32.mrf.mxu0
  %v2898 = vadd.f32 %v2885, %v2897
  %v2899 = vpop.f32.mrf.mxu0
  %2900 = vdwg.mxu0
  %v2901 = vmax.f32 %v2898, 0.0
  %s2902 = scalar_lea.vmem %s0, 300
  %v2903 = vld [vmem:[%s2902] sm:$0xff]
  %v2904 = vld [vmem:[%s2902 + $0x8] sm:$0xff]
  %v2905 = vld [vmem:[%s2902 + $0x10] sm:$0xff]
  %v2906 = vld [vmem:[%s2902 + $0x18] sm:$0xff]
  %v2907 = vld [vmem:[%s2902 + $0x20] sm:$0xff]
  %v2908 = vld [vmem:[%s2902 + $0x28] sm:$0xff]
  %v2909 = vld [vmem:[%s2902 + $0x30] sm:$0xff]
  %v2910 = vld [vmem:[%s2902 + $0x38] sm:$0xff]
  %v2911 = vld [vmem:[%s2902 + $0x40] sm:$0xff]
  %v2912 = vld [vmem:[%s2902 + $0x48] sm:$0xff]
  %v2913 = vld [vmem:[%s2902 + $0x50] sm:$0xff]
  %v2914 = vld [vmem:[%s2902 + $0x58] sm:$0xff]
  %v2915 = vld [vmem:[%s2902 + $0x60] sm:$0xf]
  %v2929 = vunpack.c.l.b16 %v2903
  %v2930 = vunpack.c.h.b16 %v2903
  %v2931 = vunpack.c.l.b16 %v2904
  %v2932 = vunpack.c.h.b16 %v2904
  %v2933 = vunpack.c.l.b16 %v2905
  %v2934 = vunpack.c.h.b16 %v2905
  %v2935 = vunpack.c.l.b16 %v2906
  %v2936 = vunpack.c.h.b16 %v2906
  %v2937 = vunpack.c.l.b16 %v2907
  %v2938 = vunpack.c.h.b16 %v2907
  %v2939 = vunpack.c.l.b16 %v2908
  %v2940 = vunpack.c.h.b16 %v2908
  %v2941 = vunpack.c.l.b16 %v2909
  %v2942 = vunpack.c.h.b16 %v2909
  %v2943 = vunpack.c.l.b16 %v2910
  %v2944 = vunpack.c.h.b16 %v2910
  %v2945 = vunpack.c.l.b16 %v2911
  %v2946 = vunpack.c.h.b16 %v2911
  %v2947 = vunpack.c.l.b16 %v2912
  %v2948 = vunpack.c.h.b16 %v2912
  %v2949 = vunpack.c.l.b16 %v2913
  %v2950 = vunpack.c.h.b16 %v2913
  %v2951 = vunpack.c.l.b16 %v2914
  %v2952 = vunpack.c.h.b16 %v2914
  %v2953 = vunpack.c.l.b16 %v2915
  %v2954 = vpack.c.b16 %v2929, %v2929
  %v2955 = vpack.c.b16 %v2930, %v2930
  %v2956 = vpack.c.b16 %v2931, %v2931
  %v2957 = vpack.c.b16 %v2932, %v2932
  %v2958 = vpack.c.b16 %v2933, %v2933
  %v2959 = vpack.c.b16 %v2934, %v2934
  %v2960 = vpack.c.b16 %v2935, %v2935
  %v2961 = vpack.c.b16 %v2936, %v2936
  %v2962 = vpack.c.b16 %v2937, %v2937
  %v2963 = vpack.c.b16 %v2938, %v2938
  %v2964 = vpack.c.b16 %v2939, %v2939
  %v2965 = vpack.c.b16 %v2940, %v2940
  %v2966 = vpack.c.b16 %v2941, %v2941
  %v2967 = vpack.c.b16 %v2942, %v2942
  %v2968 = vpack.c.b16 %v2943, %v2943
  %v2969 = vpack.c.b16 %v2944, %v2944
  %v2970 = vpack.c.b16 %v2945, %v2945
  %v2971 = vpack.c.b16 %v2946, %v2946
  %v2972 = vpack.c.b16 %v2947, %v2947
  %v2973 = vpack.c.b16 %v2948, %v2948
  %v2974 = vpack.c.b16 %v2949, %v2949
  %v2975 = vpack.c.b16 %v2950, %v2950
  %v2976 = vpack.c.b16 %v2951, %v2951
  %v2977 = vpack.c.b16 %v2952, %v2952
  %v2978 = vpack.c.b16 %v2953, %v2953
  %3004 = vmatpush.bf16.msra.mxu0 %v1326
  %3005 = vmatpush.bf16.msra.mxu0 %v1325
  %3006 = vmatpush.bf16.msra.mxu0 %v1324
  %3007 = vmatpush.bf16.msra.mxu0 %v1323
  %3008 = vmatpush.bf16.msra.mxu0 %v1322
  %3009 = vmatpush.bf16.msra.mxu0 %v1321
  %3010 = vmatpush.bf16.msra.mxu0 %v1320
  %3011 = vmatpush.bf16.msra.mxu0 %v1319
  %3012 = vmatmul.bf16.gmra.mxu0 %v2954
  %v3013 = vpop.f32.mrf.mxu0
  %v3014 = vadd.f32 %v429, %v3013
  %v3015 = vpop.f32.mrf.mxu0
  %3016 = vdwg.mxu0
  %3017 = vmatpush.bf16.msra.mxu0 %v1334
  %3018 = vmatpush.bf16.msra.mxu0 %v1333
  %3019 = vmatpush.bf16.msra.mxu0 %v1332
  %3020 = vmatpush.bf16.msra.mxu0 %v1331
  %3021 = vmatpush.bf16.msra.mxu0 %v1330
  %3022 = vmatpush.bf16.msra.mxu0 %v1329
  %3023 = vmatpush.bf16.msra.mxu0 %v1328
  %3024 = vmatpush.bf16.msra.mxu0 %v1327
  %3025 = vmatmul.bf16.gmra.mxu0 %v2955
  %v3026 = vpop.f32.mrf.mxu0
  %v3027 = vadd.f32 %v3014, %v3026
  %v3028 = vpop.f32.mrf.mxu0
  %3029 = vdwg.mxu0
  %3030 = vmatpush.bf16.msra.mxu0 %v1342
  %3031 = vmatpush.bf16.msra.mxu0 %v1341
  %3032 = vmatpush.bf16.msra.mxu0 %v1340
  %3033 = vmatpush.bf16.msra.mxu0 %v1339
  %3034 = vmatpush.bf16.msra.mxu0 %v1338
  %3035 = vmatpush.bf16.msra.mxu0 %v1337
  %3036 = vmatpush.bf16.msra.mxu0 %v1336
  %3037 = vmatpush.bf16.msra.mxu0 %v1335
  %3038 = vmatmul.bf16.gmra.mxu0 %v2956
  %v3039 = vpop.f32.mrf.mxu0
  %v3040 = vadd.f32 %v3027, %v3039
  %v3041 = vpop.f32.mrf.mxu0
  %3042 = vdwg.mxu0
  %3043 = vmatpush.bf16.msra.mxu0 %v1350
  %3044 = vmatpush.bf16.msra.mxu0 %v1349
  %3045 = vmatpush.bf16.msra.mxu0 %v1348
  %3046 = vmatpush.bf16.msra.mxu0 %v1347
  %3047 = vmatpush.bf16.msra.mxu0 %v1346
  %3048 = vmatpush.bf16.msra.mxu0 %v1345
  %3049 = vmatpush.bf16.msra.mxu0 %v1344
  %3050 = vmatpush.bf16.msra.mxu0 %v1343
  %3051 = vmatmul.bf16.gmra.mxu0 %v2957
  %v3052 = vpop.f32.mrf.mxu0
  %v3053 = vadd.f32 %v3040, %v3052
  %v3054 = vpop.f32.mrf.mxu0
  %3055 = vdwg.mxu0
  %3056 = vmatpush.bf16.msra.mxu0 %v1358
  %3057 = vmatpush.bf16.msra.mxu0 %v1357
  %3058 = vmatpush.bf16.msra.mxu0 %v1356
  %3059 = vmatpush.bf16.msra.mxu0 %v1355
  %3060 = vmatpush.bf16.msra.mxu0 %v1354
  %3061 = vmatpush.bf16.msra.mxu0 %v1353
  %3062 = vmatpush.bf16.msra.mxu0 %v1352
  %3063 = vmatpush.bf16.msra.mxu0 %v1351
  %3064 = vmatmul.bf16.gmra.mxu0 %v2958
  %v3065 = vpop.f32.mrf.mxu0
  %v3066 = vadd.f32 %v3053, %v3065
  %v3067 = vpop.f32.mrf.mxu0
  %3068 = vdwg.mxu0
  %3069 = vmatpush.bf16.msra.mxu0 %v1366
  %3070 = vmatpush.bf16.msra.mxu0 %v1365
  %3071 = vmatpush.bf16.msra.mxu0 %v1364
  %3072 = vmatpush.bf16.msra.mxu0 %v1363
  %3073 = vmatpush.bf16.msra.mxu0 %v1362
  %3074 = vmatpush.bf16.msra.mxu0 %v1361
  %3075 = vmatpush.bf16.msra.mxu0 %v1360
  %3076 = vmatpush.bf16.msra.mxu0 %v1359
  %3077 = vmatmul.bf16.gmra.mxu0 %v2959
  %v3078 = vpop.f32.mrf.mxu0
  %v3079 = vadd.f32 %v3066, %v3078
  %v3080 = vpop.f32.mrf.mxu0
  %3081 = vdwg.mxu0
  %3082 = vmatpush.bf16.msra.mxu0 %v1374
  %3083 = vmatpush.bf16.msra.mxu0 %v1373
  %3084 = vmatpush.bf16.msra.mxu0 %v1372
  %3085 = vmatpush.bf16.msra.mxu0 %v1371
  %3086 = vmatpush.bf16.msra.mxu0 %v1370
  %3087 = vmatpush.bf16.msra.mxu0 %v1369
  %3088 = vmatpush.bf16.msra.mxu0 %v1368
  %3089 = vmatpush.bf16.msra.mxu0 %v1367
  %3090 = vmatmul.bf16.gmra.mxu0 %v2960
  %v3091 = vpop.f32.mrf.mxu0
  %v3092 = vadd.f32 %v3079, %v3091
  %v3093 = vpop.f32.mrf.mxu0
  %3094 = vdwg.mxu0
  %3095 = vmatpush.bf16.msra.mxu0 %v1382
  %3096 = vmatpush.bf16.msra.mxu0 %v1381
  %3097 = vmatpush.bf16.msra.mxu0 %v1380
  %3098 = vmatpush.bf16.msra.mxu0 %v1379
  %3099 = vmatpush.bf16.msra.mxu0 %v1378
  %3100 = vmatpush.bf16.msra.mxu0 %v1377
  %3101 = vmatpush.bf16.msra.mxu0 %v1376
  %3102 = vmatpush.bf16.msra.mxu0 %v1375
  %3103 = vmatmul.bf16.gmra.mxu0 %v2961
  %v3104 = vpop.f32.mrf.mxu0
  %v3105 = vadd.f32 %v3092, %v3104
  %v3106 = vpop.f32.mrf.mxu0
  %3107 = vdwg.mxu0
  %3108 = vmatpush.bf16.msra.mxu0 %v1390
  %3109 = vmatpush.bf16.msra.mxu0 %v1389
  %3110 = vmatpush.bf16.msra.mxu0 %v1388
  %3111 = vmatpush.bf16.msra.mxu0 %v1387
  %3112 = vmatpush.bf16.msra.mxu0 %v1386
  %3113 = vmatpush.bf16.msra.mxu0 %v1385
  %3114 = vmatpush.bf16.msra.mxu0 %v1384
  %3115 = vmatpush.bf16.msra.mxu0 %v1383
  %3116 = vmatmul.bf16.gmra.mxu0 %v2962
  %v3117 = vpop.f32.mrf.mxu0
  %v3118 = vadd.f32 %v3105, %v3117
  %v3119 = vpop.f32.mrf.mxu0
  %3120 = vdwg.mxu0
  %3121 = vmatpush.bf16.msra.mxu0 %v1398
  %3122 = vmatpush.bf16.msra.mxu0 %v1397
  %3123 = vmatpush.bf16.msra.mxu0 %v1396
  %3124 = vmatpush.bf16.msra.mxu0 %v1395
  %3125 = vmatpush.bf16.msra.mxu0 %v1394
  %3126 = vmatpush.bf16.msra.mxu0 %v1393
  %3127 = vmatpush.bf16.msra.mxu0 %v1392
  %3128 = vmatpush.bf16.msra.mxu0 %v1391
  %3129 = vmatmul.bf16.gmra.mxu0 %v2963
  %v3130 = vpop.f32.mrf.mxu0
  %v3131 = vadd.f32 %v3118, %v3130
  %v3132 = vpop.f32.mrf.mxu0
  %3133 = vdwg.mxu0
  %3134 = vmatpush.bf16.msra.mxu0 %v1406
  %3135 = vmatpush.bf16.msra.mxu0 %v1405
  %3136 = vmatpush.bf16.msra.mxu0 %v1404
  %3137 = vmatpush.bf16.msra.mxu0 %v1403
  %3138 = vmatpush.bf16.msra.mxu0 %v1402
  %3139 = vmatpush.bf16.msra.mxu0 %v1401
  %3140 = vmatpush.bf16.msra.mxu0 %v1400
  %3141 = vmatpush.bf16.msra.mxu0 %v1399
  %3142 = vmatmul.bf16.gmra.mxu0 %v2964
  %v3143 = vpop.f32.mrf.mxu0
  %v3144 = vadd.f32 %v3131, %v3143
  %v3145 = vpop.f32.mrf.mxu0
  %3146 = vdwg.mxu0
  %3147 = vmatpush.bf16.msra.mxu0 %v1414
  %3148 = vmatpush.bf16.msra.mxu0 %v1413
  %3149 = vmatpush.bf16.msra.mxu0 %v1412
  %3150 = vmatpush.bf16.msra.mxu0 %v1411
  %3151 = vmatpush.bf16.msra.mxu0 %v1410
  %3152 = vmatpush.bf16.msra.mxu0 %v1409
  %3153 = vmatpush.bf16.msra.mxu0 %v1408
  %3154 = vmatpush.bf16.msra.mxu0 %v1407
  %3155 = vmatmul.bf16.gmra.mxu0 %v2965
  %v3156 = vpop.f32.mrf.mxu0
  %v3157 = vadd.f32 %v3144, %v3156
  %v3158 = vpop.f32.mrf.mxu0
  %3159 = vdwg.mxu0
  %3160 = vmatpush.bf16.msra.mxu0 %v1422
  %3161 = vmatpush.bf16.msra.mxu0 %v1421
  %3162 = vmatpush.bf16.msra.mxu0 %v1420
  %3163 = vmatpush.bf16.msra.mxu0 %v1419
  %3164 = vmatpush.bf16.msra.mxu0 %v1418
  %3165 = vmatpush.bf16.msra.mxu0 %v1417
  %3166 = vmatpush.bf16.msra.mxu0 %v1416
  %3167 = vmatpush.bf16.msra.mxu0 %v1415
  %3168 = vmatmul.bf16.gmra.mxu0 %v2966
  %v3169 = vpop.f32.mrf.mxu0
  %v3170 = vadd.f32 %v3157, %v3169
  %v3171 = vpop.f32.mrf.mxu0
  %3172 = vdwg.mxu0
  %3173 = vmatpush.bf16.msra.mxu0 %v1430
  %3174 = vmatpush.bf16.msra.mxu0 %v1429
  %3175 = vmatpush.bf16.msra.mxu0 %v1428
  %3176 = vmatpush.bf16.msra.mxu0 %v1427
  %3177 = vmatpush.bf16.msra.mxu0 %v1426
  %3178 = vmatpush.bf16.msra.mxu0 %v1425
  %3179 = vmatpush.bf16.msra.mxu0 %v1424
  %3180 = vmatpush.bf16.msra.mxu0 %v1423
  %3181 = vmatmul.bf16.gmra.mxu0 %v2967
  %v3182 = vpop.f32.mrf.mxu0
  %v3183 = vadd.f32 %v3170, %v3182
  %v3184 = vpop.f32.mrf.mxu0
  %3185 = vdwg.mxu0
  %3186 = vmatpush.bf16.msra.mxu0 %v1438
  %3187 = vmatpush.bf16.msra.mxu0 %v1437
  %3188 = vmatpush.bf16.msra.mxu0 %v1436
  %3189 = vmatpush.bf16.msra.mxu0 %v1435
  %3190 = vmatpush.bf16.msra.mxu0 %v1434
  %3191 = vmatpush.bf16.msra.mxu0 %v1433
  %3192 = vmatpush.bf16.msra.mxu0 %v1432
  %3193 = vmatpush.bf16.msra.mxu0 %v1431
  %3194 = vmatmul.bf16.gmra.mxu0 %v2968
  %v3195 = vpop.f32.mrf.mxu0
  %v3196 = vadd.f32 %v3183, %v3195
  %v3197 = vpop.f32.mrf.mxu0
  %3198 = vdwg.mxu0
  %3199 = vmatpush.bf16.msra.mxu0 %v1446
  %3200 = vmatpush.bf16.msra.mxu0 %v1445
  %3201 = vmatpush.bf16.msra.mxu0 %v1444
  %3202 = vmatpush.bf16.msra.mxu0 %v1443
  %3203 = vmatpush.bf16.msra.mxu0 %v1442
  %3204 = vmatpush.bf16.msra.mxu0 %v1441
  %3205 = vmatpush.bf16.msra.mxu0 %v1440
  %3206 = vmatpush.bf16.msra.mxu0 %v1439
  %3207 = vmatmul.bf16.gmra.mxu0 %v2969
  %v3208 = vpop.f32.mrf.mxu0
  %v3209 = vadd.f32 %v3196, %v3208
  %v3210 = vpop.f32.mrf.mxu0
  %3211 = vdwg.mxu0
  %3212 = vmatpush.bf16.msra.mxu0 %v1454
  %3213 = vmatpush.bf16.msra.mxu0 %v1453
  %3214 = vmatpush.bf16.msra.mxu0 %v1452
  %3215 = vmatpush.bf16.msra.mxu0 %v1451
  %3216 = vmatpush.bf16.msra.mxu0 %v1450
  %3217 = vmatpush.bf16.msra.mxu0 %v1449
  %3218 = vmatpush.bf16.msra.mxu0 %v1448
  %3219 = vmatpush.bf16.msra.mxu0 %v1447
  %3220 = vmatmul.bf16.gmra.mxu0 %v2970
  %v3221 = vpop.f32.mrf.mxu0
  %v3222 = vadd.f32 %v3209, %v3221
  %v3223 = vpop.f32.mrf.mxu0
  %3224 = vdwg.mxu0
  %3225 = vmatpush.bf16.msra.mxu0 %v1462
  %3226 = vmatpush.bf16.msra.mxu0 %v1461
  %3227 = vmatpush.bf16.msra.mxu0 %v1460
  %3228 = vmatpush.bf16.msra.mxu0 %v1459
  %3229 = vmatpush.bf16.msra.mxu0 %v1458
  %3230 = vmatpush.bf16.msra.mxu0 %v1457
  %3231 = vmatpush.bf16.msra.mxu0 %v1456
  %3232 = vmatpush.bf16.msra.mxu0 %v1455
  %3233 = vmatmul.bf16.gmra.mxu0 %v2971
  %v3234 = vpop.f32.mrf.mxu0
  %v3235 = vadd.f32 %v3222, %v3234
  %v3236 = vpop.f32.mrf.mxu0
  %3237 = vdwg.mxu0
  %3238 = vmatpush.bf16.msra.mxu0 %v1470
  %3239 = vmatpush.bf16.msra.mxu0 %v1469
  %3240 = vmatpush.bf16.msra.mxu0 %v1468
  %3241 = vmatpush.bf16.msra.mxu0 %v1467
  %3242 = vmatpush.bf16.msra.mxu0 %v1466
  %3243 = vmatpush.bf16.msra.mxu0 %v1465
  %3244 = vmatpush.bf16.msra.mxu0 %v1464
  %3245 = vmatpush.bf16.msra.mxu0 %v1463
  %3246 = vmatmul.bf16.gmra.mxu0 %v2972
  %v3247 = vpop.f32.mrf.mxu0
  %v3248 = vadd.f32 %v3235, %v3247
  %v3249 = vpop.f32.mrf.mxu0
  %3250 = vdwg.mxu0
  %3251 = vmatpush.bf16.msra.mxu0 %v1478
  %3252 = vmatpush.bf16.msra.mxu0 %v1477
  %3253 = vmatpush.bf16.msra.mxu0 %v1476
  %3254 = vmatpush.bf16.msra.mxu0 %v1475
  %3255 = vmatpush.bf16.msra.mxu0 %v1474
  %3256 = vmatpush.bf16.msra.mxu0 %v1473
  %3257 = vmatpush.bf16.msra.mxu0 %v1472
  %3258 = vmatpush.bf16.msra.mxu0 %v1471
  %3259 = vmatmul.bf16.gmra.mxu0 %v2973
  %v3260 = vpop.f32.mrf.mxu0
  %v3261 = vadd.f32 %v3248, %v3260
  %v3262 = vpop.f32.mrf.mxu0
  %3263 = vdwg.mxu0
  %3264 = vmatpush.bf16.msra.mxu0 %v1486
  %3265 = vmatpush.bf16.msra.mxu0 %v1485
  %3266 = vmatpush.bf16.msra.mxu0 %v1484
  %3267 = vmatpush.bf16.msra.mxu0 %v1483
  %3268 = vmatpush.bf16.msra.mxu0 %v1482
  %3269 = vmatpush.bf16.msra.mxu0 %v1481
  %3270 = vmatpush.bf16.msra.mxu0 %v1480
  %3271 = vmatpush.bf16.msra.mxu0 %v1479
  %3272 = vmatmul.bf16.gmra.mxu0 %v2974
  %v3273 = vpop.f32.mrf.mxu0
  %v3274 = vadd.f32 %v3261, %v3273
  %v3275 = vpop.f32.mrf.mxu0
  %3276 = vdwg.mxu0
  %3277 = vmatpush.bf16.msra.mxu0 %v1494
  %3278 = vmatpush.bf16.msra.mxu0 %v1493
  %3279 = vmatpush.bf16.msra.mxu0 %v1492
  %3280 = vmatpush.bf16.msra.mxu0 %v1491
  %3281 = vmatpush.bf16.msra.mxu0 %v1490
  %3282 = vmatpush.bf16.msra.mxu0 %v1489
  %3283 = vmatpush.bf16.msra.mxu0 %v1488
  %3284 = vmatpush.bf16.msra.mxu0 %v1487
  %3285 = vmatmul.bf16.gmra.mxu0 %v2975
  %v3286 = vpop.f32.mrf.mxu0
  %v3287 = vadd.f32 %v3274, %v3286
  %v3288 = vpop.f32.mrf.mxu0
  %3289 = vdwg.mxu0
  %3290 = vmatpush.bf16.msra.mxu0 %v1502
  %3291 = vmatpush.bf16.msra.mxu0 %v1501
  %3292 = vmatpush.bf16.msra.mxu0 %v1500
  %3293 = vmatpush.bf16.msra.mxu0 %v1499
  %3294 = vmatpush.bf16.msra.mxu0 %v1498
  %3295 = vmatpush.bf16.msra.mxu0 %v1497
  %3296 = vmatpush.bf16.msra.mxu0 %v1496
  %3297 = vmatpush.bf16.msra.mxu0 %v1495
  %3298 = vmatmul.bf16.gmra.mxu0 %v2976
  %v3299 = vpop.f32.mrf.mxu0
  %v3300 = vadd.f32 %v3287, %v3299
  %v3301 = vpop.f32.mrf.mxu0
  %3302 = vdwg.mxu0
  %3303 = vmatpush.bf16.msra.mxu0 %v1510
  %3304 = vmatpush.bf16.msra.mxu0 %v1509
  %3305 = vmatpush.bf16.msra.mxu0 %v1508
  %3306 = vmatpush.bf16.msra.mxu0 %v1507
  %3307 = vmatpush.bf16.msra.mxu0 %v1506
  %3308 = vmatpush.bf16.msra.mxu0 %v1505
  %3309 = vmatpush.bf16.msra.mxu0 %v1504
  %3310 = vmatpush.bf16.msra.mxu0 %v1503
  %3311 = vmatmul.bf16.gmra.mxu0 %v2977
  %v3312 = vpop.f32.mrf.mxu0
  %v3313 = vadd.f32 %v3300, %v3312
  %v3314 = vpop.f32.mrf.mxu0
  %3315 = vdwg.mxu0
  %3316 = vmatpush.bf16.msra.mxu0 %v1518
  %3317 = vmatpush.bf16.msra.mxu0 %v1517
  %3318 = vmatpush.bf16.msra.mxu0 %v1516
  %3319 = vmatpush.bf16.msra.mxu0 %v1515
  %3320 = vmatpush.bf16.msra.mxu0 %v1514
  %3321 = vmatpush.bf16.msra.mxu0 %v1513
  %3322 = vmatpush.bf16.msra.mxu0 %v1512
  %3323 = vmatpush.bf16.msra.mxu0 %v1511
  %3324 = vmatmul.bf16.gmra.mxu0 %v2978
  %v3325 = vpop.f32.mrf.mxu0
  %v3326 = vadd.f32 %v3313, %v3325
  %v3327 = vpop.f32.mrf.mxu0
  %3328 = vdwg.mxu0
  %v3329 = vmax.f32 %v3326, 0.0
  %v3330 = vmax.f32 %v2901, %v3329
  %v3331 = vmax.f32 %v2473, %v3330
  %v3332 = vpack.c.bf16 %v3331, %v3331
  %3333 = vst [vmem:[%s3] sm:$0xf] %v3332
  // Predicated region
  $region14: #{lenet_enhanced2_forward.8} parent=0 // pred_check
    _
  $region15: #{lenet_enhanced2_forward.8} parent=0 // pred_check_branch
    %3335 = sbr.rel (0) target = $region17
  $region16: #{lenet_enhanced2_forward.8} parent=0 // pred_region
    _
  $region17: #{lenet_enhanced2_forward.8} parent=0 // pred_fallthru
    _
  // Predicated region
  $region18: #{lenet_enhanced2_forward.8} parent=0 // pred_check
    _
  $region19: #{lenet_enhanced2_forward.8} parent=0 // pred_check_branch
    %3337 = sbr.rel (0) target = $region21
  $region20: #{lenet_enhanced2_forward.8} parent=0 // pred_region
    _
  $region21: #{lenet_enhanced2_forward.8} parent=0 // pred_fallthru
    _

// kernel: lenet_enhanced2_forward.9
$region0: #{lenet_enhanced2_forward.9}
  #allocation0 [shape = 'u32[]', space=smem, size = 0x4, offset = 0x4, fixed_abs, tag = 'smem constant byte address 0x4 - core index']
  #allocation1 [shape = 'u32[72,128]{1,0:T(1,128)}', space=vmem, size = 0x9000, scoped, tag = 'internal scratch']
  %s0 = inlined_call_operand.vmem [shape: bf16[8,3200], index: 0, kind: input, shape index: {}]
  %s1 = inlined_call_operand.vmem [shape: bf16[3200,128], index: 1, kind: input, shape index: {}]
  %s2 = inlined_call_operand.vmem [shape: f32[1,128], index: 2, kind: input, shape index: {}]
  %s3 = inlined_call_operand.vmem [shape: bf16[8,128], index: 3, kind: output, shape index: {}]
  %s4 = sld [smem:[#allocation0]]
  $region22: #{lenet_enhanced2_forward.9} parent=0
    _
  %s6 = ssub.s32 1, %s4
  %s7 = scalar_select 0, %s6, %s4
  // Predicated region
  $region2: #{lenet_enhanced2_forward.9} parent=0 // pred_check
    _
  $region3: #{lenet_enhanced2_forward.9} parent=0 // pred_check_branch
    %9 = sbr.rel (0) target = $region5
  $region4: #{lenet_enhanced2_forward.9} parent=0 // pred_region
    _
  $region5: #{lenet_enhanced2_forward.9} parent=0 // pred_fallthru
    _
  // Predicated region
  $region6: #{lenet_enhanced2_forward.9} parent=0 // pred_check
    _
  $region7: #{lenet_enhanced2_forward.9} parent=0 // pred_check_branch
    %11 = sbr.rel (0) target = $region9
  $region8: #{lenet_enhanced2_forward.9} parent=0 // pred_region
    _
  $region9: #{lenet_enhanced2_forward.9} parent=0 // pred_fallthru
    _
  // Predicated region
  $region10: #{lenet_enhanced2_forward.9} parent=0 // pred_check
    _
  $region11: #{lenet_enhanced2_forward.9} parent=0 // pred_check_branch
    %13 = sbr.rel (0) target = $region13
  $region12: #{lenet_enhanced2_forward.9} parent=0 // pred_region
    _
  $region13: #{lenet_enhanced2_forward.9} parent=0 // pred_fallthru
    _
  %v14 = vld [vmem:[%s0] sm:$0xff]
  %v15 = vld [vmem:[%s0 + $0x8] sm:$0xff]
  %v16 = vld [vmem:[%s0 + $0x10] sm:$0xff]
  %v17 = vld [vmem:[%s0 + $0x18] sm:$0xff]
  %v18 = vld [vmem:[%s0 + $0x20] sm:$0xff]
  %v19 = vld [vmem:[%s0 + $0x28] sm:$0xff]
  %v20 = vld [vmem:[%s0 + $0x30] sm:$0xff]
  %v21 = vld [vmem:[%s0 + $0x38] sm:$0xff]
  %v22 = vld [vmem:[%s0 + $0x40] sm:$0xff]
  %v23 = vld [vmem:[%s0 + $0x48] sm:$0xff]
  %v24 = vld [vmem:[%s0 + $0x50] sm:$0xff]
  %v25 = vld [vmem:[%s0 + $0x58] sm:$0xff]
  %v26 = vld [vmem:[%s0 + $0x60] sm:$0xf]
  %v27 = vld [vmem:[%s1] sm:$0xf]
  %v28 = vld [vmem:[%s1 + $0x4] sm:$0xf]
  %v29 = vld [vmem:[%s1 + $0x8] sm:$0xf]
  %v30 = vld [vmem:[%s1 + $0xc] sm:$0xf]
  %v31 = vld [vmem:[%s1 + $0x10] sm:$0xf]
  %v32 = vld [vmem:[%s1 + $0x14] sm:$0xf]
  %v33 = vld [vmem:[%s1 + $0x18] sm:$0xf]
  %v34 = vld [vmem:[%s1 + $0x1c] sm:$0xf]
  %v35 = vld [vmem:[%s1 + $0x20] sm:$0xf]
  %v36 = vld [vmem:[%s1 + $0x24] sm:$0xf]
  %v37 = vld [vmem:[%s1 + $0x28] sm:$0xf]
  %v38 = vld [vmem:[%s1 + $0x2c] sm:$0xf]
  %v39 = vld [vmem:[%s1 + $0x30] sm:$0xf]
  %v40 = vld [vmem:[%s1 + $0x34] sm:$0xf]
  %v41 = vld [vmem:[%s1 + $0x38] sm:$0xf]
  %v42 = vld [vmem:[%s1 + $0x3c] sm:$0xf]
  %v43 = vld [vmem:[%s1 + $0x40] sm:$0xf]
  %v44 = vld [vmem:[%s1 + $0x44] sm:$0xf]
  %v45 = vld [vmem:[%s1 + $0x48] sm:$0xf]
  %v46 = vld [vmem:[%s1 + $0x4c] sm:$0xf]
  %v47 = vld [vmem:[%s1 + $0x50] sm:$0xf]
  %v48 = vld [vmem:[%s1 + $0x54] sm:$0xf]
  %v49 = vld [vmem:[%s1 + $0x58] sm:$0xf]
  %v50 = vld [vmem:[%s1 + $0x5c] sm:$0xf]
  %v51 = vld [vmem:[%s1 + $0x60] sm:$0xf]
  %v52 = vld [vmem:[%s1 + $0x64] sm:$0xf]
  %v53 = vld [vmem:[%s1 + $0x68] sm:$0xf]
  %v54 = vld [vmem:[%s1 + $0x6c] sm:$0xf]
  %v55 = vld [vmem:[%s1 + $0x70] sm:$0xf]
  %v56 = vld [vmem:[%s1 + $0x74] sm:$0xf]
  %v57 = vld [vmem:[%s1 + $0x78] sm:$0xf]
  %v58 = vld [vmem:[%s1 + $0x7c] sm:$0xf]
  %v59 = vld [vmem:[%s1 + $0x80] sm:$0xf]
  %v60 = vld [vmem:[%s1 + $0x84] sm:$0xf]
  %v61 = vld [vmem:[%s1 + $0x88] sm:$0xf]
  %v62 = vld [vmem:[%s1 + $0x8c] sm:$0xf]
  %v63 = vld [vmem:[%s1 + $0x90] sm:$0xf]
  %v64 = vld [vmem:[%s1 + $0x94] sm:$0xf]
  %v65 = vld [vmem:[%s1 + $0x98] sm:$0xf]
  %v66 = vld [vmem:[%s1 + $0x9c] sm:$0xf]
  %v67 = vld [vmem:[%s1 + $0xa0] sm:$0xf]
  %v68 = vld [vmem:[%s1 + $0xa4] sm:$0xf]
  %v69 = vld [vmem:[%s1 + $0xa8] sm:$0xf]
  %v70 = vld [vmem:[%s1 + $0xac] sm:$0xf]
  %v71 = vld [vmem:[%s1 + $0xb0] sm:$0xf]
  %v72 = vld [vmem:[%s1 + $0xb4] sm:$0xf]
  %v73 = vld [vmem:[%s1 + $0xb8] sm:$0xf]
  %v74 = vld [vmem:[%s1 + $0xbc] sm:$0xf]
  %v75 = vld [vmem:[%s1 + $0xc0] sm:$0xf]
  %v76 = vld [vmem:[%s1 + $0xc4] sm:$0xf]
  %v77 = vld [vmem:[%s1 + $0xc8] sm:$0xf]
  %v78 = vld [vmem:[%s1 + $0xcc] sm:$0xf]
  %v79 = vld [vmem:[%s1 + $0xd0] sm:$0xf]
  %v80 = vld [vmem:[%s1 + $0xd4] sm:$0xf]
  %v81 = vld [vmem:[%s1 + $0xd8] sm:$0xf]
  %v82 = vld [vmem:[%s1 + $0xdc] sm:$0xf]
  %v83 = vld [vmem:[%s1 + $0xe0] sm:$0xf]
  %v84 = vld [vmem:[%s1 + $0xe4] sm:$0xf]
  %v85 = vld [vmem:[%s1 + $0xe8] sm:$0xf]
  %v86 = vld [vmem:[%s1 + $0xec] sm:$0xf]
  %v87 = vld [vmem:[%s1 + $0xf0] sm:$0xf]
  %v88 = vld [vmem:[%s1 + $0xf4] sm:$0xf]
  %v89 = vld [vmem:[%s1 + $0xf8] sm:$0xf]
  %v90 = vld [vmem:[%s1 + $0xfc] sm:$0xf]
  %v91 = vld [vmem:[%s1 + $0x100] sm:$0xf]
  %v92 = vld [vmem:[%s1 + $0x104] sm:$0xf]
  %v93 = vld [vmem:[%s1 + $0x108] sm:$0xf]
  %v94 = vld [vmem:[%s1 + $0x10c] sm:$0xf]
  %v95 = vld [vmem:[%s1 + $0x110] sm:$0xf]
  %v96 = vld [vmem:[%s1 + $0x114] sm:$0xf]
  %v97 = vld [vmem:[%s1 + $0x118] sm:$0xf]
  %v98 = vld [vmem:[%s1 + $0x11c] sm:$0xf]
  %v99 = vld [vmem:[%s1 + $0x120] sm:$0xf]
  %v100 = vld [vmem:[%s1 + $0x124] sm:$0xf]
  %v101 = vld [vmem:[%s1 + $0x128] sm:$0xf]
  %v102 = vld [vmem:[%s1 + $0x12c] sm:$0xf]
  %v103 = vld [vmem:[%s1 + $0x130] sm:$0xf]
  %v104 = vld [vmem:[%s1 + $0x134] sm:$0xf]
  %v105 = vld [vmem:[%s1 + $0x138] sm:$0xf]
  %v106 = vld [vmem:[%s1 + $0x13c] sm:$0xf]
  %v107 = vld [vmem:[%s1 + $0x140] sm:$0xf]
  %v108 = vld [vmem:[%s1 + $0x144] sm:$0xf]
  %v109 = vld [vmem:[%s1 + $0x148] sm:$0xf]
  %v110 = vld [vmem:[%s1 + $0x14c] sm:$0xf]
  %v111 = vld [vmem:[%s1 + $0x150] sm:$0xf]
  %v112 = vld [vmem:[%s1 + $0x154] sm:$0xf]
  %v113 = vld [vmem:[%s1 + $0x158] sm:$0xf]
  %v114 = vld [vmem:[%s1 + $0x15c] sm:$0xf]
  %v115 = vld [vmem:[%s1 + $0x160] sm:$0xf]
  %v116 = vld [vmem:[%s1 + $0x164] sm:$0xf]
  %v117 = vld [vmem:[%s1 + $0x168] sm:$0xf]
  %v118 = vld [vmem:[%s1 + $0x16c] sm:$0xf]
  %v119 = vld [vmem:[%s1 + $0x170] sm:$0xf]
  %v120 = vld [vmem:[%s1 + $0x174] sm:$0xf]
  %v121 = vld [vmem:[%s1 + $0x178] sm:$0xf]
  %v122 = vld [vmem:[%s1 + $0x17c] sm:$0xf]
  %v123 = vld [vmem:[%s1 + $0x180] sm:$0xf]
  %v124 = vld [vmem:[%s1 + $0x184] sm:$0xf]
  %v125 = vld [vmem:[%s1 + $0x188] sm:$0xf]
  %v126 = vld [vmem:[%s1 + $0x18c] sm:$0xf]
  %v127 = vld [vmem:[%s1 + $0x190] sm:$0xf]
  %v128 = vld [vmem:[%s1 + $0x194] sm:$0xf]
  %v129 = vld [vmem:[%s1 + $0x198] sm:$0xf]
  %v130 = vld [vmem:[%s1 + $0x19c] sm:$0xf]
  %v131 = vld [vmem:[%s1 + $0x1a0] sm:$0xf]
  %v132 = vld [vmem:[%s1 + $0x1a4] sm:$0xf]
  %v133 = vld [vmem:[%s1 + $0x1a8] sm:$0xf]
  %v134 = vld [vmem:[%s1 + $0x1ac] sm:$0xf]
  %v135 = vld [vmem:[%s1 + $0x1b0] sm:$0xf]
  %v136 = vld [vmem:[%s1 + $0x1b4] sm:$0xf]
  %v137 = vld [vmem:[%s1 + $0x1b8] sm:$0xf]
  %v138 = vld [vmem:[%s1 + $0x1bc] sm:$0xf]
  %v139 = vld [vmem:[%s1 + $0x1c0] sm:$0xf]
  %v140 = vld [vmem:[%s1 + $0x1c4] sm:$0xf]
  %v141 = vld [vmem:[%s1 + $0x1c8] sm:$0xf]
  %v142 = vld [vmem:[%s1 + $0x1cc] sm:$0xf]
  %v143 = vld [vmem:[%s1 + $0x1d0] sm:$0xf]
  %v144 = vld [vmem:[%s1 + $0x1d4] sm:$0xf]
  %v145 = vld [vmem:[%s1 + $0x1d8] sm:$0xf]
  %v146 = vld [vmem:[%s1 + $0x1dc] sm:$0xf]
  %v147 = vld [vmem:[%s1 + $0x1e0] sm:$0xf]
  %v148 = vld [vmem:[%s1 + $0x1e4] sm:$0xf]
  %v149 = vld [vmem:[%s1 + $0x1e8] sm:$0xf]
  %v150 = vld [vmem:[%s1 + $0x1ec] sm:$0xf]
  %v151 = vld [vmem:[%s1 + $0x1f0] sm:$0xf]
  %v152 = vld [vmem:[%s1 + $0x1f4] sm:$0xf]
  %v153 = vld [vmem:[%s1 + $0x1f8] sm:$0xf]
  %v154 = vld [vmem:[%s1 + $0x1fc] sm:$0xf]
  %v155 = vld [vmem:[%s1 + $0x200] sm:$0xf]
  %v156 = vld [vmem:[%s1 + $0x204] sm:$0xf]
  %v157 = vld [vmem:[%s1 + $0x208] sm:$0xf]
  %v158 = vld [vmem:[%s1 + $0x20c] sm:$0xf]
  %v159 = vld [vmem:[%s1 + $0x210] sm:$0xf]
  %v160 = vld [vmem:[%s1 + $0x214] sm:$0xf]
  %v161 = vld [vmem:[%s1 + $0x218] sm:$0xf]
  %v162 = vld [vmem:[%s1 + $0x21c] sm:$0xf]
  %v163 = vld [vmem:[%s1 + $0x220] sm:$0xf]
  %v164 = vld [vmem:[%s1 + $0x224] sm:$0xf]
  %v165 = vld [vmem:[%s1 + $0x228] sm:$0xf]
  %v166 = vld [vmem:[%s1 + $0x22c] sm:$0xf]
  %v167 = vld [vmem:[%s1 + $0x230] sm:$0xf]
  %v168 = vld [vmem:[%s1 + $0x234] sm:$0xf]
  %v169 = vld [vmem:[%s1 + $0x238] sm:$0xf]
  %v170 = vld [vmem:[%s1 + $0x23c] sm:$0xf]
  %v171 = vld [vmem:[%s1 + $0x240] sm:$0xf]
  %v172 = vld [vmem:[%s1 + $0x244] sm:$0xf]
  %v173 = vld [vmem:[%s1 + $0x248] sm:$0xf]
  %v174 = vld [vmem:[%s1 + $0x24c] sm:$0xf]
  %v175 = vld [vmem:[%s1 + $0x250] sm:$0xf]
  %v176 = vld [vmem:[%s1 + $0x254] sm:$0xf]
  %v177 = vld [vmem:[%s1 + $0x258] sm:$0xf]
  %v178 = vld [vmem:[%s1 + $0x25c] sm:$0xf]
  %v179 = vld [vmem:[%s1 + $0x260] sm:$0xf]
  %v180 = vld [vmem:[%s1 + $0x264] sm:$0xf]
  %v181 = vld [vmem:[%s1 + $0x268] sm:$0xf]
  %v182 = vld [vmem:[%s1 + $0x26c] sm:$0xf]
  %v183 = vld [vmem:[%s1 + $0x270] sm:$0xf]
  %v184 = vld [vmem:[%s1 + $0x274] sm:$0xf]
  %v185 = vld [vmem:[%s1 + $0x278] sm:$0xf]
  %v186 = vld [vmem:[%s1 + $0x27c] sm:$0xf]
  %v187 = vld [vmem:[%s1 + $0x280] sm:$0xf]
  %v188 = vld [vmem:[%s1 + $0x284] sm:$0xf]
  %v189 = vld [vmem:[%s1 + $0x288] sm:$0xf]
  %v190 = vld [vmem:[%s1 + $0x28c] sm:$0xf]
  %v191 = vld [vmem:[%s1 + $0x290] sm:$0xf]
  %v192 = vld [vmem:[%s1 + $0x294] sm:$0xf]
  %v193 = vld [vmem:[%s1 + $0x298] sm:$0xf]
  %v194 = vld [vmem:[%s1 + $0x29c] sm:$0xf]
  %v195 = vld [vmem:[%s1 + $0x2a0] sm:$0xf]
  %v196 = vld [vmem:[%s1 + $0x2a4] sm:$0xf]
  %v197 = vld [vmem:[%s1 + $0x2a8] sm:$0xf]
  %v198 = vld [vmem:[%s1 + $0x2ac] sm:$0xf]
  %v199 = vld [vmem:[%s1 + $0x2b0] sm:$0xf]
  %v200 = vld [vmem:[%s1 + $0x2b4] sm:$0xf]
  %v201 = vld [vmem:[%s1 + $0x2b8] sm:$0xf]
  %v202 = vld [vmem:[%s1 + $0x2bc] sm:$0xf]
  %v203 = vld [vmem:[%s1 + $0x2c0] sm:$0xf]
  %v204 = vld [vmem:[%s1 + $0x2c4] sm:$0xf]
  %v205 = vld [vmem:[%s1 + $0x2c8] sm:$0xf]
  %v206 = vld [vmem:[%s1 + $0x2cc] sm:$0xf]
  %v207 = vld [vmem:[%s1 + $0x2d0] sm:$0xf]
  %v208 = vld [vmem:[%s1 + $0x2d4] sm:$0xf]
  %v209 = vld [vmem:[%s1 + $0x2d8] sm:$0xf]
  %v210 = vld [vmem:[%s1 + $0x2dc] sm:$0xf]
  %v211 = vld [vmem:[%s1 + $0x2e0] sm:$0xf]
  %v212 = vld [vmem:[%s1 + $0x2e4] sm:$0xf]
  %v213 = vld [vmem:[%s1 + $0x2e8] sm:$0xf]
  %v214 = vld [vmem:[%s1 + $0x2ec] sm:$0xf]
  %v215 = vld [vmem:[%s1 + $0x2f0] sm:$0xf]
  %v216 = vld [vmem:[%s1 + $0x2f4] sm:$0xf]
  %v217 = vld [vmem:[%s1 + $0x2f8] sm:$0xf]
  %v218 = vld [vmem:[%s1 + $0x2fc] sm:$0xf]
  %v219 = vld [vmem:[%s1 + $0x300] sm:$0xf]
  %v220 = vld [vmem:[%s1 + $0x304] sm:$0xf]
  %v221 = vld [vmem:[%s1 + $0x308] sm:$0xf]
  %v222 = vld [vmem:[%s1 + $0x30c] sm:$0xf]
  %v223 = vld [vmem:[%s1 + $0x310] sm:$0xf]
  %v224 = vld [vmem:[%s1 + $0x314] sm:$0xf]
  %v225 = vld [vmem:[%s1 + $0x318] sm:$0xf]
  %v226 = vld [vmem:[%s1 + $0x31c] sm:$0xf]
  %v227 = vld [vmem:[%s1 + $0x320] sm:$0xf]
  %v228 = vld [vmem:[%s1 + $0x324] sm:$0xf]
  %v229 = vld [vmem:[%s1 + $0x328] sm:$0xf]
  %v230 = vld [vmem:[%s1 + $0x32c] sm:$0xf]
  %v231 = vld [vmem:[%s1 + $0x330] sm:$0xf]
  %v232 = vld [vmem:[%s1 + $0x334] sm:$0xf]
  %v233 = vld [vmem:[%s1 + $0x338] sm:$0xf]
  %v234 = vld [vmem:[%s1 + $0x33c] sm:$0xf]
  %v235 = vld [vmem:[%s1 + $0x340] sm:$0xf]
  %v236 = vld [vmem:[%s1 + $0x344] sm:$0xf]
  %v237 = vld [vmem:[%s1 + $0x348] sm:$0xf]
  %v238 = vld [vmem:[%s1 + $0x34c] sm:$0xf]
  %v239 = vld [vmem:[%s1 + $0x350] sm:$0xf]
  %v240 = vld [vmem:[%s1 + $0x354] sm:$0xf]
  %v241 = vld [vmem:[%s1 + $0x358] sm:$0xf]
  %v242 = vld [vmem:[%s1 + $0x35c] sm:$0xf]
  %v243 = vld [vmem:[%s1 + $0x360] sm:$0xf]
  %v244 = vld [vmem:[%s1 + $0x364] sm:$0xf]
  %v245 = vld [vmem:[%s1 + $0x368] sm:$0xf]
  %v246 = vld [vmem:[%s1 + $0x36c] sm:$0xf]
  %v247 = vld [vmem:[%s1 + $0x370] sm:$0xf]
  %v248 = vld [vmem:[%s1 + $0x374] sm:$0xf]
  %v249 = vld [vmem:[%s1 + $0x378] sm:$0xf]
  %v250 = vld [vmem:[%s1 + $0x37c] sm:$0xf]
  %v251 = vld [vmem:[%s1 + $0x380] sm:$0xf]
  %v252 = vld [vmem:[%s1 + $0x384] sm:$0xf]
  %v253 = vld [vmem:[%s1 + $0x388] sm:$0xf]
  %v254 = vld [vmem:[%s1 + $0x38c] sm:$0xf]
  %v255 = vld [vmem:[%s1 + $0x390] sm:$0xf]
  %v256 = vld [vmem:[%s1 + $0x394] sm:$0xf]
  %v257 = vld [vmem:[%s1 + $0x398] sm:$0xf]
  %v258 = vld [vmem:[%s1 + $0x39c] sm:$0xf]
  %v259 = vld [vmem:[%s1 + $0x3a0] sm:$0xf]
  %v260 = vld [vmem:[%s1 + $0x3a4] sm:$0xf]
  %v261 = vld [vmem:[%s1 + $0x3a8] sm:$0xf]
  %v262 = vld [vmem:[%s1 + $0x3ac] sm:$0xf]
  %v263 = vld [vmem:[%s1 + $0x3b0] sm:$0xf]
  %v264 = vld [vmem:[%s1 + $0x3b4] sm:$0xf]
  %v265 = vld [vmem:[%s1 + $0x3b8] sm:$0xf]
  %v266 = vld [vmem:[%s1 + $0x3bc] sm:$0xf]
  %v267 = vld [vmem:[%s1 + $0x3c0] sm:$0xf]
  %v268 = vld [vmem:[%s1 + $0x3c4] sm:$0xf]
  %v269 = vld [vmem:[%s1 + $0x3c8] sm:$0xf]
  %v270 = vld [vmem:[%s1 + $0x3cc] sm:$0xf]
  %v271 = vld [vmem:[%s1 + $0x3d0] sm:$0xf]
  %v272 = vld [vmem:[%s1 + $0x3d4] sm:$0xf]
  %v273 = vld [vmem:[%s1 + $0x3d8] sm:$0xf]
  %v274 = vld [vmem:[%s1 + $0x3dc] sm:$0xf]
  %v275 = vld [vmem:[%s1 + $0x3e0] sm:$0xf]
  %v276 = vld [vmem:[%s1 + $0x3e4] sm:$0xf]
  %v277 = vld [vmem:[%s1 + $0x3e8] sm:$0xf]
  %v278 = vld [vmem:[%s1 + $0x3ec] sm:$0xf]
  %v279 = vld [vmem:[%s1 + $0x3f0] sm:$0xf]
  %v280 = vld [vmem:[%s1 + $0x3f4] sm:$0xf]
  %v281 = vld [vmem:[%s1 + $0x3f8] sm:$0xf]
  %v282 = vld [vmem:[%s1 + $0x3fc] sm:$0xf]
  %v283 = vld [vmem:[%s1 + $0x400] sm:$0xf]
  %v284 = vld [vmem:[%s1 + $0x404] sm:$0xf]
  %v285 = vld [vmem:[%s1 + $0x408] sm:$0xf]
  %v286 = vld [vmem:[%s1 + $0x40c] sm:$0xf]
  %v287 = vld [vmem:[%s1 + $0x410] sm:$0xf]
  %v288 = vld [vmem:[%s1 + $0x414] sm:$0xf]
  %v289 = vld [vmem:[%s1 + $0x418] sm:$0xf]
  %v290 = vld [vmem:[%s1 + $0x41c] sm:$0xf]
  %v291 = vld [vmem:[%s1 + $0x420] sm:$0xf]
  %v292 = vld [vmem:[%s1 + $0x424] sm:$0xf]
  %v293 = vld [vmem:[%s1 + $0x428] sm:$0xf]
  %v294 = vld [vmem:[%s1 + $0x42c] sm:$0xf]
  %v295 = vld [vmem:[%s1 + $0x430] sm:$0xf]
  %v296 = vld [vmem:[%s1 + $0x434] sm:$0xf]
  %v297 = vld [vmem:[%s1 + $0x438] sm:$0xf]
  %v298 = vld [vmem:[%s1 + $0x43c] sm:$0xf]
  %v299 = vld [vmem:[%s1 + $0x440] sm:$0xf]
  %v300 = vld [vmem:[%s1 + $0x444] sm:$0xf]
  %v301 = vld [vmem:[%s1 + $0x448] sm:$0xf]
  %v302 = vld [vmem:[%s1 + $0x44c] sm:$0xf]
  %v303 = vld [vmem:[%s1 + $0x450] sm:$0xf]
  %v304 = vld [vmem:[%s1 + $0x454] sm:$0xf]
  %v305 = vld [vmem:[%s1 + $0x458] sm:$0xf]
  %v306 = vld [vmem:[%s1 + $0x45c] sm:$0xf]
  %v307 = vld [vmem:[%s1 + $0x460] sm:$0xf]
  %v308 = vld [vmem:[%s1 + $0x464] sm:$0xf]
  %v309 = vld [vmem:[%s1 + $0x468] sm:$0xf]
  %v310 = vld [vmem:[%s1 + $0x46c] sm:$0xf]
  %v311 = vld [vmem:[%s1 + $0x470] sm:$0xf]
  %v312 = vld [vmem:[%s1 + $0x474] sm:$0xf]
  %v313 = vld [vmem:[%s1 + $0x478] sm:$0xf]
  %v314 = vld [vmem:[%s1 + $0x47c] sm:$0xf]
  %v315 = vld [vmem:[%s1 + $0x480] sm:$0xf]
  %v316 = vld [vmem:[%s1 + $0x484] sm:$0xf]
  %v317 = vld [vmem:[%s1 + $0x488] sm:$0xf]
  %v318 = vld [vmem:[%s1 + $0x48c] sm:$0xf]
  %v319 = vld [vmem:[%s1 + $0x490] sm:$0xf]
  %v320 = vld [vmem:[%s1 + $0x494] sm:$0xf]
  %v321 = vld [vmem:[%s1 + $0x498] sm:$0xf]
  %v322 = vld [vmem:[%s1 + $0x49c] sm:$0xf]
  %v323 = vld [vmem:[%s1 + $0x4a0] sm:$0xf]
  %v324 = vld [vmem:[%s1 + $0x4a4] sm:$0xf]
  %v325 = vld [vmem:[%s1 + $0x4a8] sm:$0xf]
  %v326 = vld [vmem:[%s1 + $0x4ac] sm:$0xf]
  %v327 = vld [vmem:[%s1 + $0x4b0] sm:$0xf]
  %v328 = vld [vmem:[%s1 + $0x4b4] sm:$0xf]
  %v329 = vld [vmem:[%s1 + $0x4b8] sm:$0xf]
  %v330 = vld [vmem:[%s1 + $0x4bc] sm:$0xf]
  %v331 = vld [vmem:[%s1 + $0x4c0] sm:$0xf]
  %v332 = vld [vmem:[%s1 + $0x4c4] sm:$0xf]
  %v333 = vld [vmem:[%s1 + $0x4c8] sm:$0xf]
  %v334 = vld [vmem:[%s1 + $0x4cc] sm:$0xf]
  %v335 = vld [vmem:[%s1 + $0x4d0] sm:$0xf]
  %v336 = vld [vmem:[%s1 + $0x4d4] sm:$0xf]
  %v337 = vld [vmem:[%s1 + $0x4d8] sm:$0xf]
  %v338 = vld [vmem:[%s1 + $0x4dc] sm:$0xf]
  %v339 = vld [vmem:[%s1 + $0x4e0] sm:$0xf]
  %v340 = vld [vmem:[%s1 + $0x4e4] sm:$0xf]
  %v341 = vld [vmem:[%s1 + $0x4e8] sm:$0xf]
  %v342 = vld [vmem:[%s1 + $0x4ec] sm:$0xf]
  %v343 = vld [vmem:[%s1 + $0x4f0] sm:$0xf]
  %v344 = vld [vmem:[%s1 + $0x4f4] sm:$0xf]
  %v345 = vld [vmem:[%s1 + $0x4f8] sm:$0xf]
  %v346 = vld [vmem:[%s1 + $0x4fc] sm:$0xf]
  %v347 = vld [vmem:[%s1 + $0x500] sm:$0xf]
  %v348 = vld [vmem:[%s1 + $0x504] sm:$0xf]
  %v349 = vld [vmem:[%s1 + $0x508] sm:$0xf]
  %v350 = vld [vmem:[%s1 + $0x50c] sm:$0xf]
  %v351 = vld [vmem:[%s1 + $0x510] sm:$0xf]
  %v352 = vld [vmem:[%s1 + $0x514] sm:$0xf]
  %v353 = vld [vmem:[%s1 + $0x518] sm:$0xf]
  %v354 = vld [vmem:[%s1 + $0x51c] sm:$0xf]
  %v355 = vld [vmem:[%s1 + $0x520] sm:$0xf]
  %v356 = vld [vmem:[%s1 + $0x524] sm:$0xf]
  %v357 = vld [vmem:[%s1 + $0x528] sm:$0xf]
  %v358 = vld [vmem:[%s1 + $0x52c] sm:$0xf]
  %v359 = vld [vmem:[%s1 + $0x530] sm:$0xf]
  %v360 = vld [vmem:[%s1 + $0x534] sm:$0xf]
  %v361 = vld [vmem:[%s1 + $0x538] sm:$0xf]
  %v362 = vld [vmem:[%s1 + $0x53c] sm:$0xf]
  %v363 = vld [vmem:[%s1 + $0x540] sm:$0xf]
  %v364 = vld [vmem:[%s1 + $0x544] sm:$0xf]
  %v365 = vld [vmem:[%s1 + $0x548] sm:$0xf]
  %v366 = vld [vmem:[%s1 + $0x54c] sm:$0xf]
  %v367 = vld [vmem:[%s1 + $0x550] sm:$0xf]
  %v368 = vld [vmem:[%s1 + $0x554] sm:$0xf]
  %v369 = vld [vmem:[%s1 + $0x558] sm:$0xf]
  %v370 = vld [vmem:[%s1 + $0x55c] sm:$0xf]
  %v371 = vld [vmem:[%s1 + $0x560] sm:$0xf]
  %v372 = vld [vmem:[%s1 + $0x564] sm:$0xf]
  %v373 = vld [vmem:[%s1 + $0x568] sm:$0xf]
  %v374 = vld [vmem:[%s1 + $0x56c] sm:$0xf]
  %v375 = vld [vmem:[%s1 + $0x570] sm:$0xf]
  %v376 = vld [vmem:[%s1 + $0x574] sm:$0xf]
  %v377 = vld [vmem:[%s1 + $0x578] sm:$0xf]
  %v378 = vld [vmem:[%s1 + $0x57c] sm:$0xf]
  %v379 = vld [vmem:[%s1 + $0x580] sm:$0xf]
  %v380 = vld [vmem:[%s1 + $0x584] sm:$0xf]
  %v381 = vld [vmem:[%s1 + $0x588] sm:$0xf]
  %v382 = vld [vmem:[%s1 + $0x58c] sm:$0xf]
  %v383 = vld [vmem:[%s1 + $0x590] sm:$0xf]
  %v384 = vld [vmem:[%s1 + $0x594] sm:$0xf]
  %v385 = vld [vmem:[%s1 + $0x598] sm:$0xf]
  %v386 = vld [vmem:[%s1 + $0x59c] sm:$0xf]
  %v387 = vld [vmem:[%s1 + $0x5a0] sm:$0xf]
  %v388 = vld [vmem:[%s1 + $0x5a4] sm:$0xf]
  %v389 = vld [vmem:[%s1 + $0x5a8] sm:$0xf]
  %v390 = vld [vmem:[%s1 + $0x5ac] sm:$0xf]
  %v391 = vld [vmem:[%s1 + $0x5b0] sm:$0xf]
  %v392 = vld [vmem:[%s1 + $0x5b4] sm:$0xf]
  %v393 = vld [vmem:[%s1 + $0x5b8] sm:$0xf]
  %v394 = vld [vmem:[%s1 + $0x5bc] sm:$0xf]
  %v395 = vld [vmem:[%s1 + $0x5c0] sm:$0xf]
  %v396 = vld [vmem:[%s1 + $0x5c4] sm:$0xf]
  %v397 = vld [vmem:[%s1 + $0x5c8] sm:$0xf]
  %v398 = vld [vmem:[%s1 + $0x5cc] sm:$0xf]
  %v399 = vld [vmem:[%s1 + $0x5d0] sm:$0xf]
  %v400 = vld [vmem:[%s1 + $0x5d4] sm:$0xf]
  %v401 = vld [vmem:[%s1 + $0x5d8] sm:$0xf]
  %v402 = vld [vmem:[%s1 + $0x5dc] sm:$0xf]
  %v403 = vld [vmem:[%s1 + $0x5e0] sm:$0xf]
  %v404 = vld [vmem:[%s1 + $0x5e4] sm:$0xf]
  %v405 = vld [vmem:[%s1 + $0x5e8] sm:$0xf]
  %v406 = vld [vmem:[%s1 + $0x5ec] sm:$0xf]
  %v407 = vld [vmem:[%s1 + $0x5f0] sm:$0xf]
  %v408 = vld [vmem:[%s1 + $0x5f4] sm:$0xf]
  %v409 = vld [vmem:[%s1 + $0x5f8] sm:$0xf]
  %v410 = vld [vmem:[%s1 + $0x5fc] sm:$0xf]
  %v411 = vld [vmem:[%s1 + $0x600] sm:$0xf]
  %v412 = vld [vmem:[%s1 + $0x604] sm:$0xf]
  %v413 = vld [vmem:[%s1 + $0x608] sm:$0xf]
  %v414 = vld [vmem:[%s1 + $0x60c] sm:$0xf]
  %v415 = vld [vmem:[%s1 + $0x610] sm:$0xf]
  %v416 = vld [vmem:[%s1 + $0x614] sm:$0xf]
  %v417 = vld [vmem:[%s1 + $0x618] sm:$0xf]
  %v418 = vld [vmem:[%s1 + $0x61c] sm:$0xf]
  %v419 = vld [vmem:[%s1 + $0x620] sm:$0xf]
  %v420 = vld [vmem:[%s1 + $0x624] sm:$0xf]
  %v421 = vld [vmem:[%s1 + $0x628] sm:$0xf]
  %v422 = vld [vmem:[%s1 + $0x62c] sm:$0xf]
  %v423 = vld [vmem:[%s1 + $0x630] sm:$0xf]
  %v424 = vld [vmem:[%s1 + $0x634] sm:$0xf]
  %v425 = vld [vmem:[%s1 + $0x638] sm:$0xf]
  %v426 = vld [vmem:[%s1 + $0x63c] sm:$0xf]
  %v427 = vld [vmem:[%s2] sm:$0x1]
  %v429 = vperm.slane %v427, 0
  %v444 = vunpack.c.l.b16 %v14
  %v445 = vunpack.c.h.b16 %v14
  %v446 = vunpack.c.l.b16 %v15
  %v447 = vunpack.c.h.b16 %v15
  %v448 = vunpack.c.l.b16 %v16
  %v449 = vunpack.c.h.b16 %v16
  %v450 = vunpack.c.l.b16 %v17
  %v451 = vunpack.c.h.b16 %v17
  %v452 = vunpack.c.l.b16 %v18
  %v453 = vunpack.c.h.b16 %v18
  %v454 = vunpack.c.l.b16 %v19
  %v455 = vunpack.c.h.b16 %v19
  %v456 = vunpack.c.l.b16 %v20
  %v457 = vunpack.c.h.b16 %v20
  %v458 = vunpack.c.l.b16 %v21
  %v459 = vunpack.c.h.b16 %v21
  %v460 = vunpack.c.l.b16 %v22
  %v461 = vunpack.c.h.b16 %v22
  %v462 = vunpack.c.l.b16 %v23
  %v463 = vunpack.c.h.b16 %v23
  %v464 = vunpack.c.l.b16 %v24
  %v465 = vunpack.c.h.b16 %v24
  %v466 = vunpack.c.l.b16 %v25
  %v467 = vunpack.c.h.b16 %v25
  %v468 = vunpack.c.l.b16 %v26
  %v469 = vpack.c.b16 %v444, %v444
  %v470 = vpack.c.b16 %v445, %v445
  %v471 = vpack.c.b16 %v446, %v446
  %v472 = vpack.c.b16 %v447, %v447
  %v473 = vpack.c.b16 %v448, %v448
  %v474 = vpack.c.b16 %v449, %v449
  %v475 = vpack.c.b16 %v450, %v450
  %v476 = vpack.c.b16 %v451, %v451
  %v477 = vpack.c.b16 %v452, %v452
  %v478 = vpack.c.b16 %v453, %v453
  %v479 = vpack.c.b16 %v454, %v454
  %v480 = vpack.c.b16 %v455, %v455
  %v481 = vpack.c.b16 %v456, %v456
  %v482 = vpack.c.b16 %v457, %v457
  %v483 = vpack.c.b16 %v458, %v458
  %v484 = vpack.c.b16 %v459, %v459
  %v485 = vpack.c.b16 %v460, %v460
  %v486 = vpack.c.b16 %v461, %v461
  %v487 = vpack.c.b16 %v462, %v462
  %v488 = vpack.c.b16 %v463, %v463
  %v489 = vpack.c.b16 %v464, %v464
  %v490 = vpack.c.b16 %v465, %v465
  %v491 = vpack.c.b16 %v466, %v466
  %v492 = vpack.c.b16 %v467, %v467
  %v493 = vpack.c.b16 %v468, %v468
  %v919 = vunpack.c.l.b16 %v27
  %v920 = vunpack.c.l.b16 %v28
  %v921 = vunpack.c.l.b16 %v29
  %v922 = vunpack.c.l.b16 %v30
  %v923 = vunpack.c.l.b16 %v31
  %v924 = vunpack.c.l.b16 %v32
  %v925 = vunpack.c.l.b16 %v33
  %v926 = vunpack.c.l.b16 %v34
  %v927 = vunpack.c.l.b16 %v35
  %v928 = vunpack.c.l.b16 %v36
  %v929 = vunpack.c.l.b16 %v37
  %v930 = vunpack.c.l.b16 %v38
  %v931 = vunpack.c.l.b16 %v39
  %v932 = vunpack.c.l.b16 %v40
  %v933 = vunpack.c.l.b16 %v41
  %v934 = vunpack.c.l.b16 %v42
  %v935 = vunpack.c.l.b16 %v43
  %v936 = vunpack.c.l.b16 %v44
  %v937 = vunpack.c.l.b16 %v45
  %v938 = vunpack.c.l.b16 %v46
  %v939 = vunpack.c.l.b16 %v47
  %v940 = vunpack.c.l.b16 %v48
  %v941 = vunpack.c.l.b16 %v49
  %v942 = vunpack.c.l.b16 %v50
  %v943 = vunpack.c.l.b16 %v51
  %v944 = vunpack.c.l.b16 %v52
  %v945 = vunpack.c.l.b16 %v53
  %v946 = vunpack.c.l.b16 %v54
  %v947 = vunpack.c.l.b16 %v55
  %v948 = vunpack.c.l.b16 %v56
  %v949 = vunpack.c.l.b16 %v57
  %v950 = vunpack.c.l.b16 %v58
  %v951 = vunpack.c.l.b16 %v59
  %v952 = vunpack.c.l.b16 %v60
  %v953 = vunpack.c.l.b16 %v61
  %v954 = vunpack.c.l.b16 %v62
  %v955 = vunpack.c.l.b16 %v63
  %v956 = vunpack.c.l.b16 %v64
  %v957 = vunpack.c.l.b16 %v65
  %v958 = vunpack.c.l.b16 %v66
  %v959 = vunpack.c.l.b16 %v67
  %v960 = vunpack.c.l.b16 %v68
  %v961 = vunpack.c.l.b16 %v69
  %v962 = vunpack.c.l.b16 %v70
  %v963 = vunpack.c.l.b16 %v71
  %v964 = vunpack.c.l.b16 %v72
  %v965 = vunpack.c.l.b16 %v73
  %v966 = vunpack.c.l.b16 %v74
  %v967 = vunpack.c.l.b16 %v75
  %v968 = vunpack.c.l.b16 %v76
  %v969 = vunpack.c.l.b16 %v77
  %v970 = vunpack.c.l.b16 %v78
  %v971 = vunpack.c.l.b16 %v79
  %v972 = vunpack.c.l.b16 %v80
  %v973 = vunpack.c.l.b16 %v81
  %v974 = vunpack.c.l.b16 %v82
  %v975 = vunpack.c.l.b16 %v83
  %v976 = vunpack.c.l.b16 %v84
  %v977 = vunpack.c.l.b16 %v85
  %v978 = vunpack.c.l.b16 %v86
  %v979 = vunpack.c.l.b16 %v87
  %v980 = vunpack.c.l.b16 %v88
  %v981 = vunpack.c.l.b16 %v89
  %v982 = vunpack.c.l.b16 %v90
  %v983 = vunpack.c.l.b16 %v91
  %v984 = vunpack.c.l.b16 %v92
  %v985 = vunpack.c.l.b16 %v93
  %v986 = vunpack.c.l.b16 %v94
  %v987 = vunpack.c.l.b16 %v95
  %v988 = vunpack.c.l.b16 %v96
  %v989 = vunpack.c.l.b16 %v97
  %v990 = vunpack.c.l.b16 %v98
  %v991 = vunpack.c.l.b16 %v99
  %v992 = vunpack.c.l.b16 %v100
  %v993 = vunpack.c.l.b16 %v101
  %v994 = vunpack.c.l.b16 %v102
  %v995 = vunpack.c.l.b16 %v103
  %v996 = vunpack.c.l.b16 %v104
  %v997 = vunpack.c.l.b16 %v105
  %v998 = vunpack.c.l.b16 %v106
  %v999 = vunpack.c.l.b16 %v107
  %v1000 = vunpack.c.l.b16 %v108
  %v1001 = vunpack.c.l.b16 %v109
  %v1002 = vunpack.c.l.b16 %v110
  %v1003 = vunpack.c.l.b16 %v111
  %v1004 = vunpack.c.l.b16 %v112
  %v1005 = vunpack.c.l.b16 %v113
  %v1006 = vunpack.c.l.b16 %v114
  %v1007 = vunpack.c.l.b16 %v115
  %v1008 = vunpack.c.l.b16 %v116
  %v1009 = vunpack.c.l.b16 %v117
  %v1010 = vunpack.c.l.b16 %v118
  %v1011 = vunpack.c.l.b16 %v119
  %v1012 = vunpack.c.l.b16 %v120
  %v1013 = vunpack.c.l.b16 %v121
  %v1014 = vunpack.c.l.b16 %v122
  %v1015 = vunpack.c.l.b16 %v123
  %v1016 = vunpack.c.l.b16 %v124
  %v1017 = vunpack.c.l.b16 %v125
  %v1018 = vunpack.c.l.b16 %v126
  %v1019 = vunpack.c.l.b16 %v127
  %v1020 = vunpack.c.l.b16 %v128
  %v1021 = vunpack.c.l.b16 %v129
  %v1022 = vunpack.c.l.b16 %v130
  %v1023 = vunpack.c.l.b16 %v131
  %v1024 = vunpack.c.l.b16 %v132
  %v1025 = vunpack.c.l.b16 %v133
  %v1026 = vunpack.c.l.b16 %v134
  %v1027 = vunpack.c.l.b16 %v135
  %v1028 = vunpack.c.l.b16 %v136
  %v1029 = vunpack.c.l.b16 %v137
  %v1030 = vunpack.c.l.b16 %v138
  %v1031 = vunpack.c.l.b16 %v139
  %v1032 = vunpack.c.l.b16 %v140
  %v1033 = vunpack.c.l.b16 %v141
  %v1034 = vunpack.c.l.b16 %v142
  %v1035 = vunpack.c.l.b16 %v143
  %v1036 = vunpack.c.l.b16 %v144
  %v1037 = vunpack.c.l.b16 %v145
  %v1038 = vunpack.c.l.b16 %v146
  %v1039 = vunpack.c.l.b16 %v147
  %v1040 = vunpack.c.l.b16 %v148
  %v1041 = vunpack.c.l.b16 %v149
  %v1042 = vunpack.c.l.b16 %v150
  %v1043 = vunpack.c.l.b16 %v151
  %v1044 = vunpack.c.l.b16 %v152
  %v1045 = vunpack.c.l.b16 %v153
  %v1046 = vunpack.c.l.b16 %v154
  %v1047 = vunpack.c.l.b16 %v155
  %v1048 = vunpack.c.l.b16 %v156
  %v1049 = vunpack.c.l.b16 %v157
  %v1050 = vunpack.c.l.b16 %v158
  %v1051 = vunpack.c.l.b16 %v159
  %v1052 = vunpack.c.l.b16 %v160
  %v1053 = vunpack.c.l.b16 %v161
  %v1054 = vunpack.c.l.b16 %v162
  %v1055 = vunpack.c.l.b16 %v163
  %v1056 = vunpack.c.l.b16 %v164
  %v1057 = vunpack.c.l.b16 %v165
  %v1058 = vunpack.c.l.b16 %v166
  %v1059 = vunpack.c.l.b16 %v167
  %v1060 = vunpack.c.l.b16 %v168
  %v1061 = vunpack.c.l.b16 %v169
  %v1062 = vunpack.c.l.b16 %v170
  %v1063 = vunpack.c.l.b16 %v171
  %v1064 = vunpack.c.l.b16 %v172
  %v1065 = vunpack.c.l.b16 %v173
  %v1066 = vunpack.c.l.b16 %v174
  %v1067 = vunpack.c.l.b16 %v175
  %v1068 = vunpack.c.l.b16 %v176
  %v1069 = vunpack.c.l.b16 %v177
  %v1070 = vunpack.c.l.b16 %v178
  %v1071 = vunpack.c.l.b16 %v179
  %v1072 = vunpack.c.l.b16 %v180
  %v1073 = vunpack.c.l.b16 %v181
  %v1074 = vunpack.c.l.b16 %v182
  %v1075 = vunpack.c.l.b16 %v183
  %v1076 = vunpack.c.l.b16 %v184
  %v1077 = vunpack.c.l.b16 %v185
  %v1078 = vunpack.c.l.b16 %v186
  %v1079 = vunpack.c.l.b16 %v187
  %v1080 = vunpack.c.l.b16 %v188
  %v1081 = vunpack.c.l.b16 %v189
  %v1082 = vunpack.c.l.b16 %v190
  %v1083 = vunpack.c.l.b16 %v191
  %v1084 = vunpack.c.l.b16 %v192
  %v1085 = vunpack.c.l.b16 %v193
  %v1086 = vunpack.c.l.b16 %v194
  %v1087 = vunpack.c.l.b16 %v195
  %v1088 = vunpack.c.l.b16 %v196
  %v1089 = vunpack.c.l.b16 %v197
  %v1090 = vunpack.c.l.b16 %v198
  %v1091 = vunpack.c.l.b16 %v199
  %v1092 = vunpack.c.l.b16 %v200
  %v1093 = vunpack.c.l.b16 %v201
  %v1094 = vunpack.c.l.b16 %v202
  %v1095 = vunpack.c.l.b16 %v203
  %v1096 = vunpack.c.l.b16 %v204
  %v1097 = vunpack.c.l.b16 %v205
  %v1098 = vunpack.c.l.b16 %v206
  %v1099 = vunpack.c.l.b16 %v207
  %v1100 = vunpack.c.l.b16 %v208
  %v1101 = vunpack.c.l.b16 %v209
  %v1102 = vunpack.c.l.b16 %v210
  %v1103 = vunpack.c.l.b16 %v211
  %v1104 = vunpack.c.l.b16 %v212
  %v1105 = vunpack.c.l.b16 %v213
  %v1106 = vunpack.c.l.b16 %v214
  %v1107 = vunpack.c.l.b16 %v215
  %v1108 = vunpack.c.l.b16 %v216
  %v1109 = vunpack.c.l.b16 %v217
  %v1110 = vunpack.c.l.b16 %v218
  %v1111 = vunpack.c.l.b16 %v219
  %v1112 = vunpack.c.l.b16 %v220
  %v1113 = vunpack.c.l.b16 %v221
  %v1114 = vunpack.c.l.b16 %v222
  %v1115 = vunpack.c.l.b16 %v223
  %v1116 = vunpack.c.l.b16 %v224
  %v1117 = vunpack.c.l.b16 %v225
  %v1118 = vunpack.c.l.b16 %v226
  %v1119 = vunpack.c.l.b16 %v227
  %v1120 = vunpack.c.l.b16 %v228
  %v1121 = vunpack.c.l.b16 %v229
  %v1122 = vunpack.c.l.b16 %v230
  %v1123 = vunpack.c.l.b16 %v231
  %v1124 = vunpack.c.l.b16 %v232
  %v1125 = vunpack.c.l.b16 %v233
  %v1126 = vunpack.c.l.b16 %v234
  %v1127 = vunpack.c.l.b16 %v235
  %v1128 = vunpack.c.l.b16 %v236
  %v1129 = vunpack.c.l.b16 %v237
  %v1130 = vunpack.c.l.b16 %v238
  %v1131 = vunpack.c.l.b16 %v239
  %v1132 = vunpack.c.l.b16 %v240
  %v1133 = vunpack.c.l.b16 %v241
  %v1134 = vunpack.c.l.b16 %v242
  %v1135 = vunpack.c.l.b16 %v243
  %v1136 = vunpack.c.l.b16 %v244
  %v1137 = vunpack.c.l.b16 %v245
  %v1138 = vunpack.c.l.b16 %v246
  %v1139 = vunpack.c.l.b16 %v247
  %v1140 = vunpack.c.l.b16 %v248
  %v1141 = vunpack.c.l.b16 %v249
  %v1142 = vunpack.c.l.b16 %v250
  %v1143 = vunpack.c.l.b16 %v251
  %v1144 = vunpack.c.l.b16 %v252
  %v1145 = vunpack.c.l.b16 %v253
  %v1146 = vunpack.c.l.b16 %v254
  %v1147 = vunpack.c.l.b16 %v255
  %v1148 = vunpack.c.l.b16 %v256
  %v1149 = vunpack.c.l.b16 %v257
  %v1150 = vunpack.c.l.b16 %v258
  %v1151 = vunpack.c.l.b16 %v259
  %v1152 = vunpack.c.l.b16 %v260
  %v1153 = vunpack.c.l.b16 %v261
  %v1154 = vunpack.c.l.b16 %v262
  %v1155 = vunpack.c.l.b16 %v263
  %v1156 = vunpack.c.l.b16 %v264
  %v1157 = vunpack.c.l.b16 %v265
  %v1158 = vunpack.c.l.b16 %v266
  %v1159 = vunpack.c.l.b16 %v267
  %v1160 = vunpack.c.l.b16 %v268
  %v1161 = vunpack.c.l.b16 %v269
  %v1162 = vunpack.c.l.b16 %v270
  %v1163 = vunpack.c.l.b16 %v271
  %v1164 = vunpack.c.l.b16 %v272
  %v1165 = vunpack.c.l.b16 %v273
  %v1166 = vunpack.c.l.b16 %v274
  %v1167 = vunpack.c.l.b16 %v275
  %v1168 = vunpack.c.l.b16 %v276
  %v1169 = vunpack.c.l.b16 %v277
  %v1170 = vunpack.c.l.b16 %v278
  %v1171 = vunpack.c.l.b16 %v279
  %v1172 = vunpack.c.l.b16 %v280
  %v1173 = vunpack.c.l.b16 %v281
  %v1174 = vunpack.c.l.b16 %v282
  %v1175 = vunpack.c.l.b16 %v283
  %v1176 = vunpack.c.l.b16 %v284
  %v1177 = vunpack.c.l.b16 %v285
  %v1178 = vunpack.c.l.b16 %v286
  %v1179 = vunpack.c.l.b16 %v287
  %v1180 = vunpack.c.l.b16 %v288
  %v1181 = vunpack.c.l.b16 %v289
  %v1182 = vunpack.c.l.b16 %v290
  %v1183 = vunpack.c.l.b16 %v291
  %v1184 = vunpack.c.l.b16 %v292
  %v1185 = vunpack.c.l.b16 %v293
  %v1186 = vunpack.c.l.b16 %v294
  %v1187 = vunpack.c.l.b16 %v295
  %v1188 = vunpack.c.l.b16 %v296
  %v1189 = vunpack.c.l.b16 %v297
  %v1190 = vunpack.c.l.b16 %v298
  %v1191 = vunpack.c.l.b16 %v299
  %v1192 = vunpack.c.l.b16 %v300
  %v1193 = vunpack.c.l.b16 %v301
  %v1194 = vunpack.c.l.b16 %v302
  %v1195 = vunpack.c.l.b16 %v303
  %v1196 = vunpack.c.l.b16 %v304
  %v1197 = vunpack.c.l.b16 %v305
  %v1198 = vunpack.c.l.b16 %v306
  %v1199 = vunpack.c.l.b16 %v307
  %v1200 = vunpack.c.l.b16 %v308
  %v1201 = vunpack.c.l.b16 %v309
  %v1202 = vunpack.c.l.b16 %v310
  %v1203 = vunpack.c.l.b16 %v311
  %v1204 = vunpack.c.l.b16 %v312
  %v1205 = vunpack.c.l.b16 %v313
  %v1206 = vunpack.c.l.b16 %v314
  %v1207 = vunpack.c.l.b16 %v315
  %v1208 = vunpack.c.l.b16 %v316
  %v1209 = vunpack.c.l.b16 %v317
  %v1210 = vunpack.c.l.b16 %v318
  %v1211 = vunpack.c.l.b16 %v319
  %v1212 = vunpack.c.l.b16 %v320
  %v1213 = vunpack.c.l.b16 %v321
  %v1214 = vunpack.c.l.b16 %v322
  %v1215 = vunpack.c.l.b16 %v323
  %v1216 = vunpack.c.l.b16 %v324
  %v1217 = vunpack.c.l.b16 %v325
  %v1218 = vunpack.c.l.b16 %v326
  %v1219 = vunpack.c.l.b16 %v327
  %v1220 = vunpack.c.l.b16 %v328
  %v1221 = vunpack.c.l.b16 %v329
  %v1222 = vunpack.c.l.b16 %v330
  %v1223 = vunpack.c.l.b16 %v331
  %v1224 = vunpack.c.l.b16 %v332
  %v1225 = vunpack.c.l.b16 %v333
  %v1226 = vunpack.c.l.b16 %v334
  %v1227 = vunpack.c.l.b16 %v335
  %v1228 = vunpack.c.l.b16 %v336
  %v1229 = vunpack.c.l.b16 %v337
  %v1230 = vunpack.c.l.b16 %v338
  %v1231 = vunpack.c.l.b16 %v339
  %v1232 = vunpack.c.l.b16 %v340
  %v1233 = vunpack.c.l.b16 %v341
  %v1234 = vunpack.c.l.b16 %v342
  %v1235 = vunpack.c.l.b16 %v343
  %v1236 = vunpack.c.l.b16 %v344
  %v1237 = vunpack.c.l.b16 %v345
  %v1238 = vunpack.c.l.b16 %v346
  %v1239 = vunpack.c.l.b16 %v347
  %v1240 = vunpack.c.l.b16 %v348
  %v1241 = vunpack.c.l.b16 %v349
  %v1242 = vunpack.c.l.b16 %v350
  %v1243 = vunpack.c.l.b16 %v351
  %v1244 = vunpack.c.l.b16 %v352
  %v1245 = vunpack.c.l.b16 %v353
  %v1246 = vunpack.c.l.b16 %v354
  %v1247 = vunpack.c.l.b16 %v355
  %v1248 = vunpack.c.l.b16 %v356
  %v1249 = vunpack.c.l.b16 %v357
  %v1250 = vunpack.c.l.b16 %v358
  %v1251 = vunpack.c.l.b16 %v359
  %v1252 = vunpack.c.l.b16 %v360
  %v1253 = vunpack.c.l.b16 %v361
  %v1254 = vunpack.c.l.b16 %v362
  %v1255 = vunpack.c.l.b16 %v363
  %v1256 = vunpack.c.l.b16 %v364
  %v1257 = vunpack.c.l.b16 %v365
  %v1258 = vunpack.c.l.b16 %v366
  %v1259 = vunpack.c.l.b16 %v367
  %v1260 = vunpack.c.l.b16 %v368
  %v1261 = vunpack.c.l.b16 %v369
  %v1262 = vunpack.c.l.b16 %v370
  %v1263 = vunpack.c.l.b16 %v371
  %v1264 = vunpack.c.l.b16 %v372
  %v1265 = vunpack.c.l.b16 %v373
  %v1266 = vunpack.c.l.b16 %v374
  %v1267 = vunpack.c.l.b16 %v375
  %v1268 = vunpack.c.l.b16 %v376
  %v1269 = vunpack.c.l.b16 %v377
  %v1270 = vunpack.c.l.b16 %v378
  %v1271 = vunpack.c.l.b16 %v379
  %v1272 = vunpack.c.l.b16 %v380
  %v1273 = vunpack.c.l.b16 %v381
  %v1274 = vunpack.c.l.b16 %v382
  %v1275 = vunpack.c.l.b16 %v383
  %v1276 = vunpack.c.l.b16 %v384
  %v1277 = vunpack.c.l.b16 %v385
  %v1278 = vunpack.c.l.b16 %v386
  %v1279 = vunpack.c.l.b16 %v387
  %v1280 = vunpack.c.l.b16 %v388
  %v1281 = vunpack.c.l.b16 %v389
  %v1282 = vunpack.c.l.b16 %v390
  %v1283 = vunpack.c.l.b16 %v391
  %v1284 = vunpack.c.l.b16 %v392
  %v1285 = vunpack.c.l.b16 %v393
  %v1286 = vunpack.c.l.b16 %v394
  %v1287 = vunpack.c.l.b16 %v395
  %v1288 = vunpack.c.l.b16 %v396
  %v1289 = vunpack.c.l.b16 %v397
  %v1290 = vunpack.c.l.b16 %v398
  %v1291 = vunpack.c.l.b16 %v399
  %v1292 = vunpack.c.l.b16 %v400
  %v1293 = vunpack.c.l.b16 %v401
  %v1294 = vunpack.c.l.b16 %v402
  %v1295 = vunpack.c.l.b16 %v403
  %v1296 = vunpack.c.l.b16 %v404
  %v1297 = vunpack.c.l.b16 %v405
  %v1298 = vunpack.c.l.b16 %v406
  %v1299 = vunpack.c.l.b16 %v407
  %v1300 = vunpack.c.l.b16 %v408
  %v1301 = vunpack.c.l.b16 %v409
  %v1302 = vunpack.c.l.b16 %v410
  %v1303 = vunpack.c.l.b16 %v411
  %v1304 = vunpack.c.l.b16 %v412
  %v1305 = vunpack.c.l.b16 %v413
  %v1306 = vunpack.c.l.b16 %v414
  %v1307 = vunpack.c.l.b16 %v415
  %v1308 = vunpack.c.l.b16 %v416
  %v1309 = vunpack.c.l.b16 %v417
  %v1310 = vunpack.c.l.b16 %v418
  %v1311 = vunpack.c.l.b16 %v419
  %v1312 = vunpack.c.l.b16 %v420
  %v1313 = vunpack.c.l.b16 %v421
  %v1314 = vunpack.c.l.b16 %v422
  %v1315 = vunpack.c.l.b16 %v423
  %v1316 = vunpack.c.l.b16 %v424
  %v1317 = vunpack.c.l.b16 %v425
  %v1318 = vunpack.c.l.b16 %v426
  %v1319 = vpack.c.b16 %v920, %v919
  %v1320 = vpack.c.b16 %v922, %v921
  %v1321 = vpack.c.b16 %v924, %v923
  %v1322 = vpack.c.b16 %v926, %v925
  %v1323 = vpack.c.b16 %v928, %v927
  %v1324 = vpack.c.b16 %v930, %v929
  %v1325 = vpack.c.b16 %v932, %v931
  %v1326 = vpack.c.b16 %v934, %v933
  %v1327 = vpack.c.b16 %v936, %v935
  %v1328 = vpack.c.b16 %v938, %v937
  %v1329 = vpack.c.b16 %v940, %v939
  %v1330 = vpack.c.b16 %v942, %v941
  %v1331 = vpack.c.b16 %v944, %v943
  %v1332 = vpack.c.b16 %v946, %v945
  %v1333 = vpack.c.b16 %v948, %v947
  %v1334 = vpack.c.b16 %v950, %v949
  %v1335 = vpack.c.b16 %v952, %v951
  %v1336 = vpack.c.b16 %v954, %v953
  %v1337 = vpack.c.b16 %v956, %v955
  %v1338 = vpack.c.b16 %v958, %v957
  %v1339 = vpack.c.b16 %v960, %v959
  %v1340 = vpack.c.b16 %v962, %v961
  %v1341 = vpack.c.b16 %v964, %v963
  %v1342 = vpack.c.b16 %v966, %v965
  %v1343 = vpack.c.b16 %v968, %v967
  %v1344 = vpack.c.b16 %v970, %v969
  %v1345 = vpack.c.b16 %v972, %v971
  %v1346 = vpack.c.b16 %v974, %v973
  %v1347 = vpack.c.b16 %v976, %v975
  %v1348 = vpack.c.b16 %v978, %v977
  %v1349 = vpack.c.b16 %v980, %v979
  %v1350 = vpack.c.b16 %v982, %v981
  %v1351 = vpack.c.b16 %v984, %v983
  %v1352 = vpack.c.b16 %v986, %v985
  %v1353 = vpack.c.b16 %v988, %v987
  %v1354 = vpack.c.b16 %v990, %v989
  %v1355 = vpack.c.b16 %v992, %v991
  %v1356 = vpack.c.b16 %v994, %v993
  %v1357 = vpack.c.b16 %v996, %v995
  %v1358 = vpack.c.b16 %v998, %v997
  %v1359 = vpack.c.b16 %v1000, %v999
  %v1360 = vpack.c.b16 %v1002, %v1001
  %v1361 = vpack.c.b16 %v1004, %v1003
  %v1362 = vpack.c.b16 %v1006, %v1005
  %v1363 = vpack.c.b16 %v1008, %v1007
  %v1364 = vpack.c.b16 %v1010, %v1009
  %v1365 = vpack.c.b16 %v1012, %v1011
  %v1366 = vpack.c.b16 %v1014, %v1013
  %v1367 = vpack.c.b16 %v1016, %v1015
  %v1368 = vpack.c.b16 %v1018, %v1017
  %v1369 = vpack.c.b16 %v1020, %v1019
  %v1370 = vpack.c.b16 %v1022, %v1021
  %v1371 = vpack.c.b16 %v1024, %v1023
  %v1372 = vpack.c.b16 %v1026, %v1025
  %v1373 = vpack.c.b16 %v1028, %v1027
  %v1374 = vpack.c.b16 %v1030, %v1029
  %v1375 = vpack.c.b16 %v1032, %v1031
  %v1376 = vpack.c.b16 %v1034, %v1033
  %v1377 = vpack.c.b16 %v1036, %v1035
  %v1378 = vpack.c.b16 %v1038, %v1037
  %v1379 = vpack.c.b16 %v1040, %v1039
  %v1380 = vpack.c.b16 %v1042, %v1041
  %v1381 = vpack.c.b16 %v1044, %v1043
  %v1382 = vpack.c.b16 %v1046, %v1045
  %v1383 = vpack.c.b16 %v1048, %v1047
  %v1384 = vpack.c.b16 %v1050, %v1049
  %v1385 = vpack.c.b16 %v1052, %v1051
  %v1386 = vpack.c.b16 %v1054, %v1053
  %v1387 = vpack.c.b16 %v1056, %v1055
  %v1388 = vpack.c.b16 %v1058, %v1057
  %v1389 = vpack.c.b16 %v1060, %v1059
  %v1390 = vpack.c.b16 %v1062, %v1061
  %v1391 = vpack.c.b16 %v1064, %v1063
  %v1392 = vpack.c.b16 %v1066, %v1065
  %v1393 = vpack.c.b16 %v1068, %v1067
  %v1394 = vpack.c.b16 %v1070, %v1069
  %v1395 = vpack.c.b16 %v1072, %v1071
  %v1396 = vpack.c.b16 %v1074, %v1073
  %v1397 = vpack.c.b16 %v1076, %v1075
  %v1398 = vpack.c.b16 %v1078, %v1077
  %v1399 = vpack.c.b16 %v1080, %v1079
  %v1400 = vpack.c.b16 %v1082, %v1081
  %v1401 = vpack.c.b16 %v1084, %v1083
  %v1402 = vpack.c.b16 %v1086, %v1085
  %v1403 = vpack.c.b16 %v1088, %v1087
  %v1404 = vpack.c.b16 %v1090, %v1089
  %v1405 = vpack.c.b16 %v1092, %v1091
  %v1406 = vpack.c.b16 %v1094, %v1093
  %v1407 = vpack.c.b16 %v1096, %v1095
  %v1408 = vpack.c.b16 %v1098, %v1097
  %v1409 = vpack.c.b16 %v1100, %v1099
  %v1410 = vpack.c.b16 %v1102, %v1101
  %v1411 = vpack.c.b16 %v1104, %v1103
  %v1412 = vpack.c.b16 %v1106, %v1105
  %v1413 = vpack.c.b16 %v1108, %v1107
  %v1414 = vpack.c.b16 %v1110, %v1109
  %v1415 = vpack.c.b16 %v1112, %v1111
  %v1416 = vpack.c.b16 %v1114, %v1113
  %v1417 = vpack.c.b16 %v1116, %v1115
  %v1418 = vpack.c.b16 %v1118, %v1117
  %v1419 = vpack.c.b16 %v1120, %v1119
  %v1420 = vpack.c.b16 %v1122, %v1121
  %v1421 = vpack.c.b16 %v1124, %v1123
  %v1422 = vpack.c.b16 %v1126, %v1125
  %v1423 = vpack.c.b16 %v1128, %v1127
  %v1424 = vpack.c.b16 %v1130, %v1129
  %v1425 = vpack.c.b16 %v1132, %v1131
  %v1426 = vpack.c.b16 %v1134, %v1133
  %v1427 = vpack.c.b16 %v1136, %v1135
  %v1428 = vpack.c.b16 %v1138, %v1137
  %v1429 = vpack.c.b16 %v1140, %v1139
  %v1430 = vpack.c.b16 %v1142, %v1141
  %v1431 = vpack.c.b16 %v1144, %v1143
  %v1432 = vpack.c.b16 %v1146, %v1145
  %v1433 = vpack.c.b16 %v1148, %v1147
  %v1434 = vpack.c.b16 %v1150, %v1149
  %v1435 = vpack.c.b16 %v1152, %v1151
  %v1436 = vpack.c.b16 %v1154, %v1153
  %v1437 = vpack.c.b16 %v1156, %v1155
  %v1438 = vpack.c.b16 %v1158, %v1157
  %v1439 = vpack.c.b16 %v1160, %v1159
  %v1440 = vpack.c.b16 %v1162, %v1161
  %v1441 = vpack.c.b16 %v1164, %v1163
  %v1442 = vpack.c.b16 %v1166, %v1165
  %v1443 = vpack.c.b16 %v1168, %v1167
  %v1444 = vpack.c.b16 %v1170, %v1169
  %v1445 = vpack.c.b16 %v1172, %v1171
  %v1446 = vpack.c.b16 %v1174, %v1173
  %v1447 = vpack.c.b16 %v1176, %v1175
  %v1448 = vpack.c.b16 %v1178, %v1177
  %v1449 = vpack.c.b16 %v1180, %v1179
  %v1450 = vpack.c.b16 %v1182, %v1181
  %v1451 = vpack.c.b16 %v1184, %v1183
  %v1452 = vpack.c.b16 %v1186, %v1185
  %v1453 = vpack.c.b16 %v1188, %v1187
  %v1454 = vpack.c.b16 %v1190, %v1189
  %v1455 = vpack.c.b16 %v1192, %v1191
  %v1456 = vpack.c.b16 %v1194, %v1193
  %v1457 = vpack.c.b16 %v1196, %v1195
  %v1458 = vpack.c.b16 %v1198, %v1197
  %v1459 = vpack.c.b16 %v1200, %v1199
  %v1460 = vpack.c.b16 %v1202, %v1201
  %v1461 = vpack.c.b16 %v1204, %v1203
  %v1462 = vpack.c.b16 %v1206, %v1205
  %v1463 = vpack.c.b16 %v1208, %v1207
  %v1464 = vpack.c.b16 %v1210, %v1209
  %v1465 = vpack.c.b16 %v1212, %v1211
  %v1466 = vpack.c.b16 %v1214, %v1213
  %v1467 = vpack.c.b16 %v1216, %v1215
  %v1468 = vpack.c.b16 %v1218, %v1217
  %v1469 = vpack.c.b16 %v1220, %v1219
  %v1470 = vpack.c.b16 %v1222, %v1221
  %v1471 = vpack.c.b16 %v1224, %v1223
  %v1472 = vpack.c.b16 %v1226, %v1225
  %v1473 = vpack.c.b16 %v1228, %v1227
  %v1474 = vpack.c.b16 %v1230, %v1229
  %v1475 = vpack.c.b16 %v1232, %v1231
  %v1476 = vpack.c.b16 %v1234, %v1233
  %v1477 = vpack.c.b16 %v1236, %v1235
  %v1478 = vpack.c.b16 %v1238, %v1237
  %v1479 = vpack.c.b16 %v1240, %v1239
  %v1480 = vpack.c.b16 %v1242, %v1241
  %v1481 = vpack.c.b16 %v1244, %v1243
  %v1482 = vpack.c.b16 %v1246, %v1245
  %v1483 = vpack.c.b16 %v1248, %v1247
  %v1484 = vpack.c.b16 %v1250, %v1249
  %v1485 = vpack.c.b16 %v1252, %v1251
  %v1486 = vpack.c.b16 %v1254, %v1253
  %v1487 = vpack.c.b16 %v1256, %v1255
  %v1488 = vpack.c.b16 %v1258, %v1257
  %v1489 = vpack.c.b16 %v1260, %v1259
  %v1490 = vpack.c.b16 %v1262, %v1261
  %v1491 = vpack.c.b16 %v1264, %v1263
  %v1492 = vpack.c.b16 %v1266, %v1265
  %v1493 = vpack.c.b16 %v1268, %v1267
  %v1494 = vpack.c.b16 %v1270, %v1269
  %v1495 = vpack.c.b16 %v1272, %v1271
  %v1496 = vpack.c.b16 %v1274, %v1273
  %v1497 = vpack.c.b16 %v1276, %v1275
  %v1498 = vpack.c.b16 %v1278, %v1277
  %v1499 = vpack.c.b16 %v1280, %v1279
  %v1500 = vpack.c.b16 %v1282, %v1281
  %v1501 = vpack.c.b16 %v1284, %v1283
  %v1502 = vpack.c.b16 %v1286, %v1285
  %v1503 = vpack.c.b16 %v1288, %v1287
  %v1504 = vpack.c.b16 %v1290, %v1289
  %v1505 = vpack.c.b16 %v1292, %v1291
  %v1506 = vpack.c.b16 %v1294, %v1293
  %v1507 = vpack.c.b16 %v1296, %v1295
  %v1508 = vpack.c.b16 %v1298, %v1297
  %v1509 = vpack.c.b16 %v1300, %v1299
  %v1510 = vpack.c.b16 %v1302, %v1301
  %v1511 = vpack.c.b16 %v1304, %v1303
  %v1512 = vpack.c.b16 %v1306, %v1305
  %v1513 = vpack.c.b16 %v1308, %v1307
  %v1514 = vpack.c.b16 %v1310, %v1309
  %v1515 = vpack.c.b16 %v1312, %v1311
  %v1516 = vpack.c.b16 %v1314, %v1313
  %v1517 = vpack.c.b16 %v1316, %v1315
  %v1518 = vpack.c.b16 %v1318, %v1317
  %1719 = vmatpush.bf16.msra.mxu0 %v1326
  %1720 = vmatpush.bf16.msra.mxu0 %v1325
  %1721 = vmatpush.bf16.msra.mxu0 %v1324
  %1722 = vmatpush.bf16.msra.mxu0 %v1323
  %1723 = vmatpush.bf16.msra.mxu0 %v1322
  %1724 = vmatpush.bf16.msra.mxu0 %v1321
  %1725 = vmatpush.bf16.msra.mxu0 %v1320
  %1726 = vmatpush.bf16.msra.mxu0 %v1319
  %1727 = vmatmul.bf16.gmra.mxu0 %v469
  %v1728 = vpop.f32.mrf.mxu0
  %v1729 = vadd.f32 %v429, %v1728
  %v1730 = vpop.f32.mrf.mxu0
  %1731 = vdwg.mxu0
  %1732 = vmatpush.bf16.msra.mxu0 %v1334
  %1733 = vmatpush.bf16.msra.mxu0 %v1333
  %1734 = vmatpush.bf16.msra.mxu0 %v1332
  %1735 = vmatpush.bf16.msra.mxu0 %v1331
  %1736 = vmatpush.bf16.msra.mxu0 %v1330
  %1737 = vmatpush.bf16.msra.mxu0 %v1329
  %1738 = vmatpush.bf16.msra.mxu0 %v1328
  %1739 = vmatpush.bf16.msra.mxu0 %v1327
  %1740 = vmatmul.bf16.gmra.mxu0 %v470
  %v1741 = vpop.f32.mrf.mxu0
  %v1742 = vadd.f32 %v1729, %v1741
  %v1743 = vpop.f32.mrf.mxu0
  %1744 = vdwg.mxu0
  %1745 = vmatpush.bf16.msra.mxu0 %v1342
  %1746 = vmatpush.bf16.msra.mxu0 %v1341
  %1747 = vmatpush.bf16.msra.mxu0 %v1340
  %1748 = vmatpush.bf16.msra.mxu0 %v1339
  %1749 = vmatpush.bf16.msra.mxu0 %v1338
  %1750 = vmatpush.bf16.msra.mxu0 %v1337
  %1751 = vmatpush.bf16.msra.mxu0 %v1336
  %1752 = vmatpush.bf16.msra.mxu0 %v1335
  %1753 = vmatmul.bf16.gmra.mxu0 %v471
  %v1754 = vpop.f32.mrf.mxu0
  %v1755 = vadd.f32 %v1742, %v1754
  %v1756 = vpop.f32.mrf.mxu0
  %1757 = vdwg.mxu0
  %1758 = vmatpush.bf16.msra.mxu0 %v1350
  %1759 = vmatpush.bf16.msra.mxu0 %v1349
  %1760 = vmatpush.bf16.msra.mxu0 %v1348
  %1761 = vmatpush.bf16.msra.mxu0 %v1347
  %1762 = vmatpush.bf16.msra.mxu0 %v1346
  %1763 = vmatpush.bf16.msra.mxu0 %v1345
  %1764 = vmatpush.bf16.msra.mxu0 %v1344
  %1765 = vmatpush.bf16.msra.mxu0 %v1343
  %1766 = vmatmul.bf16.gmra.mxu0 %v472
  %v1767 = vpop.f32.mrf.mxu0
  %v1768 = vadd.f32 %v1755, %v1767
  %v1769 = vpop.f32.mrf.mxu0
  %1770 = vdwg.mxu0
  %1771 = vmatpush.bf16.msra.mxu0 %v1358
  %1772 = vmatpush.bf16.msra.mxu0 %v1357
  %1773 = vmatpush.bf16.msra.mxu0 %v1356
  %1774 = vmatpush.bf16.msra.mxu0 %v1355
  %1775 = vmatpush.bf16.msra.mxu0 %v1354
  %1776 = vmatpush.bf16.msra.mxu0 %v1353
  %1777 = vmatpush.bf16.msra.mxu0 %v1352
  %1778 = vmatpush.bf16.msra.mxu0 %v1351
  %1779 = vmatmul.bf16.gmra.mxu0 %v473
  %v1780 = vpop.f32.mrf.mxu0
  %v1781 = vadd.f32 %v1768, %v1780
  %v1782 = vpop.f32.mrf.mxu0
  %1783 = vdwg.mxu0
  %1784 = vmatpush.bf16.msra.mxu0 %v1366
  %1785 = vmatpush.bf16.msra.mxu0 %v1365
  %1786 = vmatpush.bf16.msra.mxu0 %v1364
  %1787 = vmatpush.bf16.msra.mxu0 %v1363
  %1788 = vmatpush.bf16.msra.mxu0 %v1362
  %1789 = vmatpush.bf16.msra.mxu0 %v1361
  %1790 = vmatpush.bf16.msra.mxu0 %v1360
  %1791 = vmatpush.bf16.msra.mxu0 %v1359
  %1792 = vmatmul.bf16.gmra.mxu0 %v474
  %v1793 = vpop.f32.mrf.mxu0
  %v1794 = vadd.f32 %v1781, %v1793
  %v1795 = vpop.f32.mrf.mxu0
  %1796 = vdwg.mxu0
  %1797 = vmatpush.bf16.msra.mxu0 %v1374
  %1798 = vmatpush.bf16.msra.mxu0 %v1373
  %1799 = vmatpush.bf16.msra.mxu0 %v1372
  %1800 = vmatpush.bf16.msra.mxu0 %v1371
  %1801 = vmatpush.bf16.msra.mxu0 %v1370
  %1802 = vmatpush.bf16.msra.mxu0 %v1369
  %1803 = vmatpush.bf16.msra.mxu0 %v1368
  %1804 = vmatpush.bf16.msra.mxu0 %v1367
  %1805 = vmatmul.bf16.gmra.mxu0 %v475
  %v1806 = vpop.f32.mrf.mxu0
  %v1807 = vadd.f32 %v1794, %v1806
  %v1808 = vpop.f32.mrf.mxu0
  %1809 = vdwg.mxu0
  %1810 = vmatpush.bf16.msra.mxu0 %v1382
  %1811 = vmatpush.bf16.msra.mxu0 %v1381
  %1812 = vmatpush.bf16.msra.mxu0 %v1380
  %1813 = vmatpush.bf16.msra.mxu0 %v1379
  %1814 = vmatpush.bf16.msra.mxu0 %v1378
  %1815 = vmatpush.bf16.msra.mxu0 %v1377
  %1816 = vmatpush.bf16.msra.mxu0 %v1376
  %1817 = vmatpush.bf16.msra.mxu0 %v1375
  %1818 = vmatmul.bf16.gmra.mxu0 %v476
  %v1819 = vpop.f32.mrf.mxu0
  %v1820 = vadd.f32 %v1807, %v1819
  %v1821 = vpop.f32.mrf.mxu0
  %1822 = vdwg.mxu0
  %1823 = vmatpush.bf16.msra.mxu0 %v1390
  %1824 = vmatpush.bf16.msra.mxu0 %v1389
  %1825 = vmatpush.bf16.msra.mxu0 %v1388
  %1826 = vmatpush.bf16.msra.mxu0 %v1387
  %1827 = vmatpush.bf16.msra.mxu0 %v1386
  %1828 = vmatpush.bf16.msra.mxu0 %v1385
  %1829 = vmatpush.bf16.msra.mxu0 %v1384
  %1830 = vmatpush.bf16.msra.mxu0 %v1383
  %1831 = vmatmul.bf16.gmra.mxu0 %v477
  %v1832 = vpop.f32.mrf.mxu0
  %v1833 = vadd.f32 %v1820, %v1832
  %v1834 = vpop.f32.mrf.mxu0
  %1835 = vdwg.mxu0
  %1836 = vmatpush.bf16.msra.mxu0 %v1398
  %1837 = vmatpush.bf16.msra.mxu0 %v1397
  %1838 = vmatpush.bf16.msra.mxu0 %v1396
  %1839 = vmatpush.bf16.msra.mxu0 %v1395
  %1840 = vmatpush.bf16.msra.mxu0 %v1394
  %1841 = vmatpush.bf16.msra.mxu0 %v1393
  %1842 = vmatpush.bf16.msra.mxu0 %v1392
  %1843 = vmatpush.bf16.msra.mxu0 %v1391
  %1844 = vmatmul.bf16.gmra.mxu0 %v478
  %v1845 = vpop.f32.mrf.mxu0
  %v1846 = vadd.f32 %v1833, %v1845
  %v1847 = vpop.f32.mrf.mxu0
  %1848 = vdwg.mxu0
  %1849 = vmatpush.bf16.msra.mxu0 %v1406
  %1850 = vmatpush.bf16.msra.mxu0 %v1405
  %1851 = vmatpush.bf16.msra.mxu0 %v1404
  %1852 = vmatpush.bf16.msra.mxu0 %v1403
  %1853 = vmatpush.bf16.msra.mxu0 %v1402
  %1854 = vmatpush.bf16.msra.mxu0 %v1401
  %1855 = vmatpush.bf16.msra.mxu0 %v1400
  %1856 = vmatpush.bf16.msra.mxu0 %v1399
  %1857 = vmatmul.bf16.gmra.mxu0 %v479
  %v1858 = vpop.f32.mrf.mxu0
  %v1859 = vadd.f32 %v1846, %v1858
  %v1860 = vpop.f32.mrf.mxu0
  %1861 = vdwg.mxu0
  %1862 = vmatpush.bf16.msra.mxu0 %v1414
  %1863 = vmatpush.bf16.msra.mxu0 %v1413
  %1864 = vmatpush.bf16.msra.mxu0 %v1412
  %1865 = vmatpush.bf16.msra.mxu0 %v1411
  %1866 = vmatpush.bf16.msra.mxu0 %v1410
  %1867 = vmatpush.bf16.msra.mxu0 %v1409
  %1868 = vmatpush.bf16.msra.mxu0 %v1408
  %1869 = vmatpush.bf16.msra.mxu0 %v1407
  %1870 = vmatmul.bf16.gmra.mxu0 %v480
  %v1871 = vpop.f32.mrf.mxu0
  %v1872 = vadd.f32 %v1859, %v1871
  %v1873 = vpop.f32.mrf.mxu0
  %1874 = vdwg.mxu0
  %1875 = vmatpush.bf16.msra.mxu0 %v1422
  %1876 = vmatpush.bf16.msra.mxu0 %v1421
  %1877 = vmatpush.bf16.msra.mxu0 %v1420
  %1878 = vmatpush.bf16.msra.mxu0 %v1419
  %1879 = vmatpush.bf16.msra.mxu0 %v1418
  %1880 = vmatpush.bf16.msra.mxu0 %v1417
  %1881 = vmatpush.bf16.msra.mxu0 %v1416
  %1882 = vmatpush.bf16.msra.mxu0 %v1415
  %1883 = vmatmul.bf16.gmra.mxu0 %v481
  %v1884 = vpop.f32.mrf.mxu0
  %v1885 = vadd.f32 %v1872, %v1884
  %v1886 = vpop.f32.mrf.mxu0
  %1887 = vdwg.mxu0
  %1888 = vmatpush.bf16.msra.mxu0 %v1430
  %1889 = vmatpush.bf16.msra.mxu0 %v1429
  %1890 = vmatpush.bf16.msra.mxu0 %v1428
  %1891 = vmatpush.bf16.msra.mxu0 %v1427
  %1892 = vmatpush.bf16.msra.mxu0 %v1426
  %1893 = vmatpush.bf16.msra.mxu0 %v1425
  %1894 = vmatpush.bf16.msra.mxu0 %v1424
  %1895 = vmatpush.bf16.msra.mxu0 %v1423
  %1896 = vmatmul.bf16.gmra.mxu0 %v482
  %v1897 = vpop.f32.mrf.mxu0
  %v1898 = vadd.f32 %v1885, %v1897
  %v1899 = vpop.f32.mrf.mxu0
  %1900 = vdwg.mxu0
  %1901 = vmatpush.bf16.msra.mxu0 %v1438
  %1902 = vmatpush.bf16.msra.mxu0 %v1437
  %1903 = vmatpush.bf16.msra.mxu0 %v1436
  %1904 = vmatpush.bf16.msra.mxu0 %v1435
  %1905 = vmatpush.bf16.msra.mxu0 %v1434
  %1906 = vmatpush.bf16.msra.mxu0 %v1433
  %1907 = vmatpush.bf16.msra.mxu0 %v1432
  %1908 = vmatpush.bf16.msra.mxu0 %v1431
  %1909 = vmatmul.bf16.gmra.mxu0 %v483
  %v1910 = vpop.f32.mrf.mxu0
  %v1911 = vadd.f32 %v1898, %v1910
  %v1912 = vpop.f32.mrf.mxu0
  %1913 = vdwg.mxu0
  %1914 = vmatpush.bf16.msra.mxu0 %v1446
  %1915 = vmatpush.bf16.msra.mxu0 %v1445
  %1916 = vmatpush.bf16.msra.mxu0 %v1444
  %1917 = vmatpush.bf16.msra.mxu0 %v1443
  %1918 = vmatpush.bf16.msra.mxu0 %v1442
  %1919 = vmatpush.bf16.msra.mxu0 %v1441
  %1920 = vmatpush.bf16.msra.mxu0 %v1440
  %1921 = vmatpush.bf16.msra.mxu0 %v1439
  %1922 = vmatmul.bf16.gmra.mxu0 %v484
  %v1923 = vpop.f32.mrf.mxu0
  %v1924 = vadd.f32 %v1911, %v1923
  %v1925 = vpop.f32.mrf.mxu0
  %1926 = vdwg.mxu0
  %1927 = vmatpush.bf16.msra.mxu0 %v1454
  %1928 = vmatpush.bf16.msra.mxu0 %v1453
  %1929 = vmatpush.bf16.msra.mxu0 %v1452
  %1930 = vmatpush.bf16.msra.mxu0 %v1451
  %1931 = vmatpush.bf16.msra.mxu0 %v1450
  %1932 = vmatpush.bf16.msra.mxu0 %v1449
  %1933 = vmatpush.bf16.msra.mxu0 %v1448
  %1934 = vmatpush.bf16.msra.mxu0 %v1447
  %1935 = vmatmul.bf16.gmra.mxu0 %v485
  %v1936 = vpop.f32.mrf.mxu0
  %v1937 = vadd.f32 %v1924, %v1936
  %v1938 = vpop.f32.mrf.mxu0
  %1939 = vdwg.mxu0
  %1940 = vmatpush.bf16.msra.mxu0 %v1462
  %1941 = vmatpush.bf16.msra.mxu0 %v1461
  %1942 = vmatpush.bf16.msra.mxu0 %v1460
  %1943 = vmatpush.bf16.msra.mxu0 %v1459
  %1944 = vmatpush.bf16.msra.mxu0 %v1458
  %1945 = vmatpush.bf16.msra.mxu0 %v1457
  %1946 = vmatpush.bf16.msra.mxu0 %v1456
  %1947 = vmatpush.bf16.msra.mxu0 %v1455
  %1948 = vmatmul.bf16.gmra.mxu0 %v486
  %v1949 = vpop.f32.mrf.mxu0
  %v1950 = vadd.f32 %v1937, %v1949
  %v1951 = vpop.f32.mrf.mxu0
  %1952 = vdwg.mxu0
  %1953 = vmatpush.bf16.msra.mxu0 %v1470
  %1954 = vmatpush.bf16.msra.mxu0 %v1469
  %1955 = vmatpush.bf16.msra.mxu0 %v1468
  %1956 = vmatpush.bf16.msra.mxu0 %v1467
  %1957 = vmatpush.bf16.msra.mxu0 %v1466
  %1958 = vmatpush.bf16.msra.mxu0 %v1465
  %1959 = vmatpush.bf16.msra.mxu0 %v1464
  %1960 = vmatpush.bf16.msra.mxu0 %v1463
  %1961 = vmatmul.bf16.gmra.mxu0 %v487
  %v1962 = vpop.f32.mrf.mxu0
  %v1963 = vadd.f32 %v1950, %v1962
  %v1964 = vpop.f32.mrf.mxu0
  %1965 = vdwg.mxu0
  %1966 = vmatpush.bf16.msra.mxu0 %v1478
  %1967 = vmatpush.bf16.msra.mxu0 %v1477
  %1968 = vmatpush.bf16.msra.mxu0 %v1476
  %1969 = vmatpush.bf16.msra.mxu0 %v1475
  %1970 = vmatpush.bf16.msra.mxu0 %v1474
  %1971 = vmatpush.bf16.msra.mxu0 %v1473
  %1972 = vmatpush.bf16.msra.mxu0 %v1472
  %1973 = vmatpush.bf16.msra.mxu0 %v1471
  %1974 = vmatmul.bf16.gmra.mxu0 %v488
  %v1975 = vpop.f32.mrf.mxu0
  %v1976 = vadd.f32 %v1963, %v1975
  %v1977 = vpop.f32.mrf.mxu0
  %1978 = vdwg.mxu0
  %1979 = vmatpush.bf16.msra.mxu0 %v1486
  %1980 = vmatpush.bf16.msra.mxu0 %v1485
  %1981 = vmatpush.bf16.msra.mxu0 %v1484
  %1982 = vmatpush.bf16.msra.mxu0 %v1483
  %1983 = vmatpush.bf16.msra.mxu0 %v1482
  %1984 = vmatpush.bf16.msra.mxu0 %v1481
  %1985 = vmatpush.bf16.msra.mxu0 %v1480
  %1986 = vmatpush.bf16.msra.mxu0 %v1479
  %1987 = vmatmul.bf16.gmra.mxu0 %v489
  %v1988 = vpop.f32.mrf.mxu0
  %v1989 = vadd.f32 %v1976, %v1988
  %v1990 = vpop.f32.mrf.mxu0
  %1991 = vdwg.mxu0
  %1992 = vmatpush.bf16.msra.mxu0 %v1494
  %1993 = vmatpush.bf16.msra.mxu0 %v1493
  %1994 = vmatpush.bf16.msra.mxu0 %v1492
  %1995 = vmatpush.bf16.msra.mxu0 %v1491
  %1996 = vmatpush.bf16.msra.mxu0 %v1490
  %1997 = vmatpush.bf16.msra.mxu0 %v1489
  %1998 = vmatpush.bf16.msra.mxu0 %v1488
  %1999 = vmatpush.bf16.msra.mxu0 %v1487
  %2000 = vmatmul.bf16.gmra.mxu0 %v490
  %v2001 = vpop.f32.mrf.mxu0
  %v2002 = vadd.f32 %v1989, %v2001
  %v2003 = vpop.f32.mrf.mxu0
  %2004 = vdwg.mxu0
  %2005 = vmatpush.bf16.msra.mxu0 %v1502
  %2006 = vmatpush.bf16.msra.mxu0 %v1501
  %2007 = vmatpush.bf16.msra.mxu0 %v1500
  %2008 = vmatpush.bf16.msra.mxu0 %v1499
  %2009 = vmatpush.bf16.msra.mxu0 %v1498
  %2010 = vmatpush.bf16.msra.mxu0 %v1497
  %2011 = vmatpush.bf16.msra.mxu0 %v1496
  %2012 = vmatpush.bf16.msra.mxu0 %v1495
  %2013 = vmatmul.bf16.gmra.mxu0 %v491
  %v2014 = vpop.f32.mrf.mxu0
  %v2015 = vadd.f32 %v2002, %v2014
  %v2016 = vpop.f32.mrf.mxu0
  %2017 = vdwg.mxu0
  %2018 = vmatpush.bf16.msra.mxu0 %v1510
  %2019 = vmatpush.bf16.msra.mxu0 %v1509
  %2020 = vmatpush.bf16.msra.mxu0 %v1508
  %2021 = vmatpush.bf16.msra.mxu0 %v1507
  %2022 = vmatpush.bf16.msra.mxu0 %v1506
  %2023 = vmatpush.bf16.msra.mxu0 %v1505
  %2024 = vmatpush.bf16.msra.mxu0 %v1504
  %2025 = vmatpush.bf16.msra.mxu0 %v1503
  %2026 = vmatmul.bf16.gmra.mxu0 %v492
  %v2027 = vpop.f32.mrf.mxu0
  %v2028 = vadd.f32 %v2015, %v2027
  %v2029 = vpop.f32.mrf.mxu0
  %2030 = vdwg.mxu0
  %2031 = vmatpush.bf16.msra.mxu0 %v1518
  %2032 = vmatpush.bf16.msra.mxu0 %v1517
  %2033 = vmatpush.bf16.msra.mxu0 %v1516
  %2034 = vmatpush.bf16.msra.mxu0 %v1515
  %2035 = vmatpush.bf16.msra.mxu0 %v1514
  %2036 = vmatpush.bf16.msra.mxu0 %v1513
  %2037 = vmatpush.bf16.msra.mxu0 %v1512
  %2038 = vmatpush.bf16.msra.mxu0 %v1511
  %2039 = vmatmul.bf16.gmra.mxu0 %v493
  %v2040 = vpop.f32.mrf.mxu0
  %v2041 = vadd.f32 %v2028, %v2040
  %v2042 = vpop.f32.mrf.mxu0
  %2043 = vdwg.mxu0
  %v2044 = vmax.f32 %v2041, 0.0
  %v2045 = vpack.c.bf16 %v2044, %v2044
  %2046 = vst [vmem:[%s3] sm:$0xf] %v2045
  // Predicated region
  $region14: #{lenet_enhanced2_forward.9} parent=0 // pred_check
    _
  $region15: #{lenet_enhanced2_forward.9} parent=0 // pred_check_branch
    %2048 = sbr.rel (0) target = $region17
  $region16: #{lenet_enhanced2_forward.9} parent=0 // pred_region
    _
  $region17: #{lenet_enhanced2_forward.9} parent=0 // pred_fallthru
    _
  // Predicated region
  $region18: #{lenet_enhanced2_forward.9} parent=0 // pred_check
    _
  $region19: #{lenet_enhanced2_forward.9} parent=0 // pred_check_branch
    %2050 = sbr.rel (0) target = $region21
  $region20: #{lenet_enhanced2_forward.9} parent=0 // pred_region
    _
  $region21: #{lenet_enhanced2_forward.9} parent=0 // pred_fallthru
    _

// kernel: lenet_enhanced2_forward.11
$region0: #{lenet_enhanced2_forward.11}
  #allocation0 [shape = 'u32[]', space=smem, size = 0x4, offset = 0x4, fixed_abs, tag = 'smem constant byte address 0x4 - core index']
  #allocation1 [shape = 'u32[72,128]{1,0:T(1,128)}', space=vmem, size = 0x9000, scoped, tag = 'internal scratch']
  %s0 = inlined_call_operand.vmem [shape: bf16[8,512], index: 0, kind: input, shape index: {}]
  %s1 = inlined_call_operand.vmem [shape: bf16[512,1024], index: 1, kind: input, shape index: {}]
  %s2 = inlined_call_operand.vmem [shape: f32[1,1024], index: 2, kind: input, shape index: {}]
  %s3 = inlined_call_operand.vmem [shape: bf16[1024,512], index: 3, kind: input, shape index: {}]
  %s4 = inlined_call_operand.vmem [shape: f32[1,512], index: 4, kind: input, shape index: {}]
  %s5 = inlined_call_operand.vmem [shape: bf16[512,256], index: 5, kind: input, shape index: {}]
  %s6 = inlined_call_operand.vmem [shape: f32[1,256], index: 6, kind: input, shape index: {}]
  %s7 = inlined_call_operand.vmem [shape: bf16[256,128], index: 7, kind: input, shape index: {}]
  %s8 = inlined_call_operand.vmem [shape: f32[1,128], index: 8, kind: input, shape index: {}]
  %s9 = inlined_call_operand.vmem [shape: f32[8,128], index: 9, kind: output, shape index: {}]
  %s10 = sld [smem:[#allocation0]]
  $region46: #{lenet_enhanced2_forward.11} parent=0
    _
  %s12 = ssub.s32 1, %s10
  %s13 = scalar_select 0, %s12, %s10
  // Predicated region
  $region2: #{lenet_enhanced2_forward.11} parent=0 // pred_check
    _
  $region3: #{lenet_enhanced2_forward.11} parent=0 // pred_check_branch
    %15 = sbr.rel (0) target = $region5
  $region4: #{lenet_enhanced2_forward.11} parent=0 // pred_region
    _
  $region5: #{lenet_enhanced2_forward.11} parent=0 // pred_fallthru
    _
  // Predicated region
  $region6: #{lenet_enhanced2_forward.11} parent=0 // pred_check
    _
  $region7: #{lenet_enhanced2_forward.11} parent=0 // pred_check_branch
    %17 = sbr.rel (0) target = $region9
  $region8: #{lenet_enhanced2_forward.11} parent=0 // pred_region
    _
  $region9: #{lenet_enhanced2_forward.11} parent=0 // pred_fallthru
    _
  // Predicated region
  $region10: #{lenet_enhanced2_forward.11} parent=0 // pred_check
    _
  $region11: #{lenet_enhanced2_forward.11} parent=0 // pred_check_branch
    %19 = sbr.rel (0) target = $region13
  $region12: #{lenet_enhanced2_forward.11} parent=0 // pred_region
    _
  $region13: #{lenet_enhanced2_forward.11} parent=0 // pred_fallthru
    _
  // Predicated region
  $region14: #{lenet_enhanced2_forward.11} parent=0 // pred_check
    _
  $region15: #{lenet_enhanced2_forward.11} parent=0 // pred_check_branch
    %21 = sbr.rel (0) target = $region17
  $region16: #{lenet_enhanced2_forward.11} parent=0 // pred_region
    _
  $region17: #{lenet_enhanced2_forward.11} parent=0 // pred_fallthru
    _
  // Predicated region
  $region18: #{lenet_enhanced2_forward.11} parent=0 // pred_check
    _
  $region19: #{lenet_enhanced2_forward.11} parent=0 // pred_check_branch
    %23 = sbr.rel (0) target = $region21
  $region20: #{lenet_enhanced2_forward.11} parent=0 // pred_region
    _
  $region21: #{lenet_enhanced2_forward.11} parent=0 // pred_fallthru
    _
  // Predicated region
  $region22: #{lenet_enhanced2_forward.11} parent=0 // pred_check
    _
  $region23: #{lenet_enhanced2_forward.11} parent=0 // pred_check_branch
    %25 = sbr.rel (0) target = $region25
  $region24: #{lenet_enhanced2_forward.11} parent=0 // pred_region
    _
  $region25: #{lenet_enhanced2_forward.11} parent=0 // pred_fallthru
    _
  // Predicated region
  $region26: #{lenet_enhanced2_forward.11} parent=0 // pred_check
    _
  $region27: #{lenet_enhanced2_forward.11} parent=0 // pred_check_branch
    %27 = sbr.rel (0) target = $region29
  $region28: #{lenet_enhanced2_forward.11} parent=0 // pred_region
    _
  $region29: #{lenet_enhanced2_forward.11} parent=0 // pred_fallthru
    _
  // Predicated region
  $region30: #{lenet_enhanced2_forward.11} parent=0 // pred_check
    _
  $region31: #{lenet_enhanced2_forward.11} parent=0 // pred_check_branch
    %29 = sbr.rel (0) target = $region33
  $region32: #{lenet_enhanced2_forward.11} parent=0 // pred_region
    _
  $region33: #{lenet_enhanced2_forward.11} parent=0 // pred_fallthru
    _
  // Predicated region
  $region34: #{lenet_enhanced2_forward.11} parent=0 // pred_check
    _
  $region35: #{lenet_enhanced2_forward.11} parent=0 // pred_check_branch
    %31 = sbr.rel (0) target = $region37
  $region36: #{lenet_enhanced2_forward.11} parent=0 // pred_region
    _
  $region37: #{lenet_enhanced2_forward.11} parent=0 // pred_fallthru
    _
  %v32 = vld [vmem:[%s0] sm:$0xff]
  %v33 = vld [vmem:[%s0 + $0x8] sm:$0xff]
  %v34 = vld [vmem:[%s1] sm:$0xff]
  %v35 = vld [vmem:[%s1 + $0x8] sm:$0xff]
  %v36 = vld [vmem:[%s1 + $0x10] sm:$0xff]
  %v37 = vld [vmem:[%s1 + $0x18] sm:$0xff]
  %v38 = vld [vmem:[%s1 + $0x20] sm:$0xff]
  %v39 = vld [vmem:[%s1 + $0x28] sm:$0xff]
  %v40 = vld [vmem:[%s1 + $0x30] sm:$0xff]
  %v41 = vld [vmem:[%s1 + $0x38] sm:$0xff]
  %v42 = vld [vmem:[%s1 + $0x40] sm:$0xff]
  %v43 = vld [vmem:[%s1 + $0x48] sm:$0xff]
  %v44 = vld [vmem:[%s1 + $0x50] sm:$0xff]
  %v45 = vld [vmem:[%s1 + $0x58] sm:$0xff]
  %v46 = vld [vmem:[%s1 + $0x60] sm:$0xff]
  %v47 = vld [vmem:[%s1 + $0x68] sm:$0xff]
  %v48 = vld [vmem:[%s1 + $0x70] sm:$0xff]
  %v49 = vld [vmem:[%s1 + $0x78] sm:$0xff]
  %v50 = vld [vmem:[%s1 + $0x80] sm:$0xff]
  %v51 = vld [vmem:[%s1 + $0x88] sm:$0xff]
  %v52 = vld [vmem:[%s1 + $0x90] sm:$0xff]
  %v53 = vld [vmem:[%s1 + $0x98] sm:$0xff]
  %v54 = vld [vmem:[%s1 + $0xa0] sm:$0xff]
  %v55 = vld [vmem:[%s1 + $0xa8] sm:$0xff]
  %v56 = vld [vmem:[%s1 + $0xb0] sm:$0xff]
  %v57 = vld [vmem:[%s1 + $0xb8] sm:$0xff]
  %v58 = vld [vmem:[%s1 + $0xc0] sm:$0xff]
  %v59 = vld [vmem:[%s1 + $0xc8] sm:$0xff]
  %v60 = vld [vmem:[%s1 + $0xd0] sm:$0xff]
  %v61 = vld [vmem:[%s1 + $0xd8] sm:$0xff]
  %v62 = vld [vmem:[%s1 + $0xe0] sm:$0xff]
  %v63 = vld [vmem:[%s1 + $0xe8] sm:$0xff]
  %v64 = vld [vmem:[%s1 + $0xf0] sm:$0xff]
  %v65 = vld [vmem:[%s1 + $0xf8] sm:$0xff]
  %v66 = vld [vmem:[%s1 + $0x100] sm:$0xff]
  %v67 = vld [vmem:[%s1 + $0x108] sm:$0xff]
  %v68 = vld [vmem:[%s1 + $0x110] sm:$0xff]
  %v69 = vld [vmem:[%s1 + $0x118] sm:$0xff]
  %v70 = vld [vmem:[%s1 + $0x120] sm:$0xff]
  %v71 = vld [vmem:[%s1 + $0x128] sm:$0xff]
  %v72 = vld [vmem:[%s1 + $0x130] sm:$0xff]
  %v73 = vld [vmem:[%s1 + $0x138] sm:$0xff]
  %v74 = vld [vmem:[%s1 + $0x140] sm:$0xff]
  %v75 = vld [vmem:[%s1 + $0x148] sm:$0xff]
  %v76 = vld [vmem:[%s1 + $0x150] sm:$0xff]
  %v77 = vld [vmem:[%s1 + $0x158] sm:$0xff]
  %v78 = vld [vmem:[%s1 + $0x160] sm:$0xff]
  %v79 = vld [vmem:[%s1 + $0x168] sm:$0xff]
  %v80 = vld [vmem:[%s1 + $0x170] sm:$0xff]
  %v81 = vld [vmem:[%s1 + $0x178] sm:$0xff]
  %v82 = vld [vmem:[%s1 + $0x180] sm:$0xff]
  %v83 = vld [vmem:[%s1 + $0x188] sm:$0xff]
  %v84 = vld [vmem:[%s1 + $0x190] sm:$0xff]
  %v85 = vld [vmem:[%s1 + $0x198] sm:$0xff]
  %v86 = vld [vmem:[%s1 + $0x1a0] sm:$0xff]
  %v87 = vld [vmem:[%s1 + $0x1a8] sm:$0xff]
  %v88 = vld [vmem:[%s1 + $0x1b0] sm:$0xff]
  %v89 = vld [vmem:[%s1 + $0x1b8] sm:$0xff]
  %v90 = vld [vmem:[%s1 + $0x1c0] sm:$0xff]
  %v91 = vld [vmem:[%s1 + $0x1c8] sm:$0xff]
  %v92 = vld [vmem:[%s1 + $0x1d0] sm:$0xff]
  %v93 = vld [vmem:[%s1 + $0x1d8] sm:$0xff]
  %v94 = vld [vmem:[%s1 + $0x1e0] sm:$0xff]
  %v95 = vld [vmem:[%s1 + $0x1e8] sm:$0xff]
  %v96 = vld [vmem:[%s1 + $0x1f0] sm:$0xff]
  %v97 = vld [vmem:[%s1 + $0x1f8] sm:$0xff]
  %v98 = vld [vmem:[%s1 + $0x200] sm:$0xff]
  %v99 = vld [vmem:[%s1 + $0x208] sm:$0xff]
  %v100 = vld [vmem:[%s1 + $0x210] sm:$0xff]
  %v101 = vld [vmem:[%s1 + $0x218] sm:$0xff]
  %v102 = vld [vmem:[%s1 + $0x220] sm:$0xff]
  %v103 = vld [vmem:[%s1 + $0x228] sm:$0xff]
  %v104 = vld [vmem:[%s1 + $0x230] sm:$0xff]
  %v105 = vld [vmem:[%s1 + $0x238] sm:$0xff]
  %v106 = vld [vmem:[%s1 + $0x240] sm:$0xff]
  %v107 = vld [vmem:[%s1 + $0x248] sm:$0xff]
  %v108 = vld [vmem:[%s1 + $0x250] sm:$0xff]
  %v109 = vld [vmem:[%s1 + $0x258] sm:$0xff]
  %v110 = vld [vmem:[%s1 + $0x260] sm:$0xff]
  %v111 = vld [vmem:[%s1 + $0x268] sm:$0xff]
  %v112 = vld [vmem:[%s1 + $0x270] sm:$0xff]
  %v113 = vld [vmem:[%s1 + $0x278] sm:$0xff]
  %v114 = vld [vmem:[%s1 + $0x280] sm:$0xff]
  %v115 = vld [vmem:[%s1 + $0x288] sm:$0xff]
  %v116 = vld [vmem:[%s1 + $0x290] sm:$0xff]
  %v117 = vld [vmem:[%s1 + $0x298] sm:$0xff]
  %v118 = vld [vmem:[%s1 + $0x2a0] sm:$0xff]
  %v119 = vld [vmem:[%s1 + $0x2a8] sm:$0xff]
  %v120 = vld [vmem:[%s1 + $0x2b0] sm:$0xff]
  %v121 = vld [vmem:[%s1 + $0x2b8] sm:$0xff]
  %v122 = vld [vmem:[%s1 + $0x2c0] sm:$0xff]
  %v123 = vld [vmem:[%s1 + $0x2c8] sm:$0xff]
  %v124 = vld [vmem:[%s1 + $0x2d0] sm:$0xff]
  %v125 = vld [vmem:[%s1 + $0x2d8] sm:$0xff]
  %v126 = vld [vmem:[%s1 + $0x2e0] sm:$0xff]
  %v127 = vld [vmem:[%s1 + $0x2e8] sm:$0xff]
  %v128 = vld [vmem:[%s1 + $0x2f0] sm:$0xff]
  %v129 = vld [vmem:[%s1 + $0x2f8] sm:$0xff]
  %v130 = vld [vmem:[%s1 + $0x300] sm:$0xff]
  %v131 = vld [vmem:[%s1 + $0x308] sm:$0xff]
  %v132 = vld [vmem:[%s1 + $0x310] sm:$0xff]
  %v133 = vld [vmem:[%s1 + $0x318] sm:$0xff]
  %v134 = vld [vmem:[%s1 + $0x320] sm:$0xff]
  %v135 = vld [vmem:[%s1 + $0x328] sm:$0xff]
  %v136 = vld [vmem:[%s1 + $0x330] sm:$0xff]
  %v137 = vld [vmem:[%s1 + $0x338] sm:$0xff]
  %v138 = vld [vmem:[%s1 + $0x340] sm:$0xff]
  %v139 = vld [vmem:[%s1 + $0x348] sm:$0xff]
  %v140 = vld [vmem:[%s1 + $0x350] sm:$0xff]
  %v141 = vld [vmem:[%s1 + $0x358] sm:$0xff]
  %v142 = vld [vmem:[%s1 + $0x360] sm:$0xff]
  %v143 = vld [vmem:[%s1 + $0x368] sm:$0xff]
  %v144 = vld [vmem:[%s1 + $0x370] sm:$0xff]
  %v145 = vld [vmem:[%s1 + $0x378] sm:$0xff]
  %v146 = vld [vmem:[%s1 + $0x380] sm:$0xff]
  %v147 = vld [vmem:[%s1 + $0x388] sm:$0xff]
  %v148 = vld [vmem:[%s1 + $0x390] sm:$0xff]
  %v149 = vld [vmem:[%s1 + $0x398] sm:$0xff]
  %v150 = vld [vmem:[%s1 + $0x3a0] sm:$0xff]
  %v151 = vld [vmem:[%s1 + $0x3a8] sm:$0xff]
  %v152 = vld [vmem:[%s1 + $0x3b0] sm:$0xff]
  %v153 = vld [vmem:[%s1 + $0x3b8] sm:$0xff]
  %v154 = vld [vmem:[%s1 + $0x3c0] sm:$0xff]
  %v155 = vld [vmem:[%s1 + $0x3c8] sm:$0xff]
  %v156 = vld [vmem:[%s1 + $0x3d0] sm:$0xff]
  %v157 = vld [vmem:[%s1 + $0x3d8] sm:$0xff]
  %v158 = vld [vmem:[%s1 + $0x3e0] sm:$0xff]
  %v159 = vld [vmem:[%s1 + $0x3e8] sm:$0xff]
  %v160 = vld [vmem:[%s1 + $0x3f0] sm:$0xff]
  %v161 = vld [vmem:[%s1 + $0x3f8] sm:$0xff]
  %v162 = vld [vmem:[%s1 + $0x400] sm:$0xff]
  %v163 = vld [vmem:[%s1 + $0x408] sm:$0xff]
  %v164 = vld [vmem:[%s1 + $0x410] sm:$0xff]
  %v165 = vld [vmem:[%s1 + $0x418] sm:$0xff]
  %v166 = vld [vmem:[%s1 + $0x420] sm:$0xff]
  %v167 = vld [vmem:[%s1 + $0x428] sm:$0xff]
  %v168 = vld [vmem:[%s1 + $0x430] sm:$0xff]
  %v169 = vld [vmem:[%s1 + $0x438] sm:$0xff]
  %v170 = vld [vmem:[%s1 + $0x440] sm:$0xff]
  %v171 = vld [vmem:[%s1 + $0x448] sm:$0xff]
  %v172 = vld [vmem:[%s1 + $0x450] sm:$0xff]
  %v173 = vld [vmem:[%s1 + $0x458] sm:$0xff]
  %v174 = vld [vmem:[%s1 + $0x460] sm:$0xff]
  %v175 = vld [vmem:[%s1 + $0x468] sm:$0xff]
  %v176 = vld [vmem:[%s1 + $0x470] sm:$0xff]
  %v177 = vld [vmem:[%s1 + $0x478] sm:$0xff]
  %v178 = vld [vmem:[%s1 + $0x480] sm:$0xff]
  %v179 = vld [vmem:[%s1 + $0x488] sm:$0xff]
  %v180 = vld [vmem:[%s1 + $0x490] sm:$0xff]
  %v181 = vld [vmem:[%s1 + $0x498] sm:$0xff]
  %v182 = vld [vmem:[%s1 + $0x4a0] sm:$0xff]
  %v183 = vld [vmem:[%s1 + $0x4a8] sm:$0xff]
  %v184 = vld [vmem:[%s1 + $0x4b0] sm:$0xff]
  %v185 = vld [vmem:[%s1 + $0x4b8] sm:$0xff]
  %v186 = vld [vmem:[%s1 + $0x4c0] sm:$0xff]
  %v187 = vld [vmem:[%s1 + $0x4c8] sm:$0xff]
  %v188 = vld [vmem:[%s1 + $0x4d0] sm:$0xff]
  %v189 = vld [vmem:[%s1 + $0x4d8] sm:$0xff]
  %v190 = vld [vmem:[%s1 + $0x4e0] sm:$0xff]
  %v191 = vld [vmem:[%s1 + $0x4e8] sm:$0xff]
  %v192 = vld [vmem:[%s1 + $0x4f0] sm:$0xff]
  %v193 = vld [vmem:[%s1 + $0x4f8] sm:$0xff]
  %v194 = vld [vmem:[%s1 + $0x500] sm:$0xff]
  %v195 = vld [vmem:[%s1 + $0x508] sm:$0xff]
  %v196 = vld [vmem:[%s1 + $0x510] sm:$0xff]
  %v197 = vld [vmem:[%s1 + $0x518] sm:$0xff]
  %v198 = vld [vmem:[%s1 + $0x520] sm:$0xff]
  %v199 = vld [vmem:[%s1 + $0x528] sm:$0xff]
  %v200 = vld [vmem:[%s1 + $0x530] sm:$0xff]
  %v201 = vld [vmem:[%s1 + $0x538] sm:$0xff]
  %v202 = vld [vmem:[%s1 + $0x540] sm:$0xff]
  %v203 = vld [vmem:[%s1 + $0x548] sm:$0xff]
  %v204 = vld [vmem:[%s1 + $0x550] sm:$0xff]
  %v205 = vld [vmem:[%s1 + $0x558] sm:$0xff]
  %v206 = vld [vmem:[%s1 + $0x560] sm:$0xff]
  %v207 = vld [vmem:[%s1 + $0x568] sm:$0xff]
  %v208 = vld [vmem:[%s1 + $0x570] sm:$0xff]
  %v209 = vld [vmem:[%s1 + $0x578] sm:$0xff]
  %v210 = vld [vmem:[%s1 + $0x580] sm:$0xff]
  %v211 = vld [vmem:[%s1 + $0x588] sm:$0xff]
  %v212 = vld [vmem:[%s1 + $0x590] sm:$0xff]
  %v213 = vld [vmem:[%s1 + $0x598] sm:$0xff]
  %v214 = vld [vmem:[%s1 + $0x5a0] sm:$0xff]
  %v215 = vld [vmem:[%s1 + $0x5a8] sm:$0xff]
  %v216 = vld [vmem:[%s1 + $0x5b0] sm:$0xff]
  %v217 = vld [vmem:[%s1 + $0x5b8] sm:$0xff]
  %v218 = vld [vmem:[%s1 + $0x5c0] sm:$0xff]
  %v219 = vld [vmem:[%s1 + $0x5c8] sm:$0xff]
  %v220 = vld [vmem:[%s1 + $0x5d0] sm:$0xff]
  %v221 = vld [vmem:[%s1 + $0x5d8] sm:$0xff]
  %v222 = vld [vmem:[%s1 + $0x5e0] sm:$0xff]
  %v223 = vld [vmem:[%s1 + $0x5e8] sm:$0xff]
  %v224 = vld [vmem:[%s1 + $0x5f0] sm:$0xff]
  %v225 = vld [vmem:[%s1 + $0x5f8] sm:$0xff]
  %v226 = vld [vmem:[%s1 + $0x600] sm:$0xff]
  %v227 = vld [vmem:[%s1 + $0x608] sm:$0xff]
  %v228 = vld [vmem:[%s1 + $0x610] sm:$0xff]
  %v229 = vld [vmem:[%s1 + $0x618] sm:$0xff]
  %v230 = vld [vmem:[%s1 + $0x620] sm:$0xff]
  %v231 = vld [vmem:[%s1 + $0x628] sm:$0xff]
  %v232 = vld [vmem:[%s1 + $0x630] sm:$0xff]
  %v233 = vld [vmem:[%s1 + $0x638] sm:$0xff]
  %v234 = vld [vmem:[%s1 + $0x640] sm:$0xff]
  %v235 = vld [vmem:[%s1 + $0x648] sm:$0xff]
  %v236 = vld [vmem:[%s1 + $0x650] sm:$0xff]
  %v237 = vld [vmem:[%s1 + $0x658] sm:$0xff]
  %v238 = vld [vmem:[%s1 + $0x660] sm:$0xff]
  %v239 = vld [vmem:[%s1 + $0x668] sm:$0xff]
  %v240 = vld [vmem:[%s1 + $0x670] sm:$0xff]
  %v241 = vld [vmem:[%s1 + $0x678] sm:$0xff]
  %v242 = vld [vmem:[%s1 + $0x680] sm:$0xff]
  %v243 = vld [vmem:[%s1 + $0x688] sm:$0xff]
  %v244 = vld [vmem:[%s1 + $0x690] sm:$0xff]
  %v245 = vld [vmem:[%s1 + $0x698] sm:$0xff]
  %v246 = vld [vmem:[%s1 + $0x6a0] sm:$0xff]
  %v247 = vld [vmem:[%s1 + $0x6a8] sm:$0xff]
  %v248 = vld [vmem:[%s1 + $0x6b0] sm:$0xff]
  %v249 = vld [vmem:[%s1 + $0x6b8] sm:$0xff]
  %v250 = vld [vmem:[%s1 + $0x6c0] sm:$0xff]
  %v251 = vld [vmem:[%s1 + $0x6c8] sm:$0xff]
  %v252 = vld [vmem:[%s1 + $0x6d0] sm:$0xff]
  %v253 = vld [vmem:[%s1 + $0x6d8] sm:$0xff]
  %v254 = vld [vmem:[%s1 + $0x6e0] sm:$0xff]
  %v255 = vld [vmem:[%s1 + $0x6e8] sm:$0xff]
  %v256 = vld [vmem:[%s1 + $0x6f0] sm:$0xff]
  %v257 = vld [vmem:[%s1 + $0x6f8] sm:$0xff]
  %v258 = vld [vmem:[%s1 + $0x700] sm:$0xff]
  %v259 = vld [vmem:[%s1 + $0x708] sm:$0xff]
  %v260 = vld [vmem:[%s1 + $0x710] sm:$0xff]
  %v261 = vld [vmem:[%s1 + $0x718] sm:$0xff]
  %v262 = vld [vmem:[%s1 + $0x720] sm:$0xff]
  %v263 = vld [vmem:[%s1 + $0x728] sm:$0xff]
  %v264 = vld [vmem:[%s1 + $0x730] sm:$0xff]
  %v265 = vld [vmem:[%s1 + $0x738] sm:$0xff]
  %v266 = vld [vmem:[%s1 + $0x740] sm:$0xff]
  %v267 = vld [vmem:[%s1 + $0x748] sm:$0xff]
  %v268 = vld [vmem:[%s1 + $0x750] sm:$0xff]
  %v269 = vld [vmem:[%s1 + $0x758] sm:$0xff]
  %v270 = vld [vmem:[%s1 + $0x760] sm:$0xff]
  %v271 = vld [vmem:[%s1 + $0x768] sm:$0xff]
  %v272 = vld [vmem:[%s1 + $0x770] sm:$0xff]
  %v273 = vld [vmem:[%s1 + $0x778] sm:$0xff]
  %v274 = vld [vmem:[%s1 + $0x780] sm:$0xff]
  %v275 = vld [vmem:[%s1 + $0x788] sm:$0xff]
  %v276 = vld [vmem:[%s1 + $0x790] sm:$0xff]
  %v277 = vld [vmem:[%s1 + $0x798] sm:$0xff]
  %v278 = vld [vmem:[%s1 + $0x7a0] sm:$0xff]
  %v279 = vld [vmem:[%s1 + $0x7a8] sm:$0xff]
  %v280 = vld [vmem:[%s1 + $0x7b0] sm:$0xff]
  %v281 = vld [vmem:[%s1 + $0x7b8] sm:$0xff]
  %v282 = vld [vmem:[%s1 + $0x7c0] sm:$0xff]
  %v283 = vld [vmem:[%s1 + $0x7c8] sm:$0xff]
  %v284 = vld [vmem:[%s1 + $0x7d0] sm:$0xff]
  %v285 = vld [vmem:[%s1 + $0x7d8] sm:$0xff]
  %v286 = vld [vmem:[%s1 + $0x7e0] sm:$0xff]
  %v287 = vld [vmem:[%s1 + $0x7e8] sm:$0xff]
  %v288 = vld [vmem:[%s1 + $0x7f0] sm:$0xff]
  %v289 = vld [vmem:[%s1 + $0x7f8] sm:$0xff]
  %v290 = vld [vmem:[%s2] sm:$0xff]
  %v292 = vperm.slane %v290, 0
  %v293 = vperm.slane %v290, 1
  %v294 = vperm.slane %v290, 2
  %v295 = vperm.slane %v290, 3
  %v296 = vperm.slane %v290, 4
  %v297 = vperm.slane %v290, 5
  %v298 = vperm.slane %v290, 6
  %v299 = vperm.slane %v290, 7
  %v310 = vunpack.c.l.b16 %v32
  %v311 = vunpack.c.h.b16 %v32
  %v312 = vunpack.c.l.b16 %v33
  %v313 = vunpack.c.h.b16 %v33
  %v314 = vpack.c.b16 %v310, %v310
  %v315 = vpack.c.b16 %v311, %v311
  %v316 = vpack.c.b16 %v312, %v312
  %v317 = vpack.c.b16 %v313, %v313
  %v578 = vunpack.c.l.b16 %v34
  %v579 = vunpack.c.h.b16 %v34
  %v580 = vunpack.c.l.b16 %v35
  %v581 = vunpack.c.h.b16 %v35
  %v582 = vunpack.c.l.b16 %v36
  %v583 = vunpack.c.h.b16 %v36
  %v584 = vunpack.c.l.b16 %v37
  %v585 = vunpack.c.h.b16 %v37
  %v586 = vunpack.c.l.b16 %v38
  %v587 = vunpack.c.h.b16 %v38
  %v588 = vunpack.c.l.b16 %v39
  %v589 = vunpack.c.h.b16 %v39
  %v590 = vunpack.c.l.b16 %v40
  %v591 = vunpack.c.h.b16 %v40
  %v592 = vunpack.c.l.b16 %v41
  %v593 = vunpack.c.h.b16 %v41
  %v594 = vunpack.c.l.b16 %v42
  %v595 = vunpack.c.h.b16 %v42
  %v596 = vunpack.c.l.b16 %v43
  %v597 = vunpack.c.h.b16 %v43
  %v598 = vunpack.c.l.b16 %v44
  %v599 = vunpack.c.h.b16 %v44
  %v600 = vunpack.c.l.b16 %v45
  %v601 = vunpack.c.h.b16 %v45
  %v602 = vunpack.c.l.b16 %v46
  %v603 = vunpack.c.h.b16 %v46
  %v604 = vunpack.c.l.b16 %v47
  %v605 = vunpack.c.h.b16 %v47
  %v606 = vunpack.c.l.b16 %v48
  %v607 = vunpack.c.h.b16 %v48
  %v608 = vunpack.c.l.b16 %v49
  %v609 = vunpack.c.h.b16 %v49
  %v610 = vunpack.c.l.b16 %v50
  %v611 = vunpack.c.h.b16 %v50
  %v612 = vunpack.c.l.b16 %v51
  %v613 = vunpack.c.h.b16 %v51
  %v614 = vunpack.c.l.b16 %v52
  %v615 = vunpack.c.h.b16 %v52
  %v616 = vunpack.c.l.b16 %v53
  %v617 = vunpack.c.h.b16 %v53
  %v618 = vunpack.c.l.b16 %v54
  %v619 = vunpack.c.h.b16 %v54
  %v620 = vunpack.c.l.b16 %v55
  %v621 = vunpack.c.h.b16 %v55
  %v622 = vunpack.c.l.b16 %v56
  %v623 = vunpack.c.h.b16 %v56
  %v624 = vunpack.c.l.b16 %v57
  %v625 = vunpack.c.h.b16 %v57
  %v626 = vunpack.c.l.b16 %v58
  %v627 = vunpack.c.h.b16 %v58
  %v628 = vunpack.c.l.b16 %v59
  %v629 = vunpack.c.h.b16 %v59
  %v630 = vunpack.c.l.b16 %v60
  %v631 = vunpack.c.h.b16 %v60
  %v632 = vunpack.c.l.b16 %v61
  %v633 = vunpack.c.h.b16 %v61
  %v634 = vunpack.c.l.b16 %v62
  %v635 = vunpack.c.h.b16 %v62
  %v636 = vunpack.c.l.b16 %v63
  %v637 = vunpack.c.h.b16 %v63
  %v638 = vunpack.c.l.b16 %v64
  %v639 = vunpack.c.h.b16 %v64
  %v640 = vunpack.c.l.b16 %v65
  %v641 = vunpack.c.h.b16 %v65
  %v642 = vunpack.c.l.b16 %v66
  %v643 = vunpack.c.h.b16 %v66
  %v644 = vunpack.c.l.b16 %v67
  %v645 = vunpack.c.h.b16 %v67
  %v646 = vunpack.c.l.b16 %v68
  %v647 = vunpack.c.h.b16 %v68
  %v648 = vunpack.c.l.b16 %v69
  %v649 = vunpack.c.h.b16 %v69
  %v650 = vunpack.c.l.b16 %v70
  %v651 = vunpack.c.h.b16 %v70
  %v652 = vunpack.c.l.b16 %v71
  %v653 = vunpack.c.h.b16 %v71
  %v654 = vunpack.c.l.b16 %v72
  %v655 = vunpack.c.h.b16 %v72
  %v656 = vunpack.c.l.b16 %v73
  %v657 = vunpack.c.h.b16 %v73
  %v658 = vunpack.c.l.b16 %v74
  %v659 = vunpack.c.h.b16 %v74
  %v660 = vunpack.c.l.b16 %v75
  %v661 = vunpack.c.h.b16 %v75
  %v662 = vunpack.c.l.b16 %v76
  %v663 = vunpack.c.h.b16 %v76
  %v664 = vunpack.c.l.b16 %v77
  %v665 = vunpack.c.h.b16 %v77
  %v666 = vunpack.c.l.b16 %v78
  %v667 = vunpack.c.h.b16 %v78
  %v668 = vunpack.c.l.b16 %v79
  %v669 = vunpack.c.h.b16 %v79
  %v670 = vunpack.c.l.b16 %v80
  %v671 = vunpack.c.h.b16 %v80
  %v672 = vunpack.c.l.b16 %v81
  %v673 = vunpack.c.h.b16 %v81
  %v674 = vunpack.c.l.b16 %v82
  %v675 = vunpack.c.h.b16 %v82
  %v676 = vunpack.c.l.b16 %v83
  %v677 = vunpack.c.h.b16 %v83
  %v678 = vunpack.c.l.b16 %v84
  %v679 = vunpack.c.h.b16 %v84
  %v680 = vunpack.c.l.b16 %v85
  %v681 = vunpack.c.h.b16 %v85
  %v682 = vunpack.c.l.b16 %v86
  %v683 = vunpack.c.h.b16 %v86
  %v684 = vunpack.c.l.b16 %v87
  %v685 = vunpack.c.h.b16 %v87
  %v686 = vunpack.c.l.b16 %v88
  %v687 = vunpack.c.h.b16 %v88
  %v688 = vunpack.c.l.b16 %v89
  %v689 = vunpack.c.h.b16 %v89
  %v690 = vunpack.c.l.b16 %v90
  %v691 = vunpack.c.h.b16 %v90
  %v692 = vunpack.c.l.b16 %v91
  %v693 = vunpack.c.h.b16 %v91
  %v694 = vunpack.c.l.b16 %v92
  %v695 = vunpack.c.h.b16 %v92
  %v696 = vunpack.c.l.b16 %v93
  %v697 = vunpack.c.h.b16 %v93
  %v698 = vunpack.c.l.b16 %v94
  %v699 = vunpack.c.h.b16 %v94
  %v700 = vunpack.c.l.b16 %v95
  %v701 = vunpack.c.h.b16 %v95
  %v702 = vunpack.c.l.b16 %v96
  %v703 = vunpack.c.h.b16 %v96
  %v704 = vunpack.c.l.b16 %v97
  %v705 = vunpack.c.h.b16 %v97
  %v706 = vunpack.c.l.b16 %v98
  %v707 = vunpack.c.h.b16 %v98
  %v708 = vunpack.c.l.b16 %v99
  %v709 = vunpack.c.h.b16 %v99
  %v710 = vunpack.c.l.b16 %v100
  %v711 = vunpack.c.h.b16 %v100
  %v712 = vunpack.c.l.b16 %v101
  %v713 = vunpack.c.h.b16 %v101
  %v714 = vunpack.c.l.b16 %v102
  %v715 = vunpack.c.h.b16 %v102
  %v716 = vunpack.c.l.b16 %v103
  %v717 = vunpack.c.h.b16 %v103
  %v718 = vunpack.c.l.b16 %v104
  %v719 = vunpack.c.h.b16 %v104
  %v720 = vunpack.c.l.b16 %v105
  %v721 = vunpack.c.h.b16 %v105
  %v722 = vunpack.c.l.b16 %v106
  %v723 = vunpack.c.h.b16 %v106
  %v724 = vunpack.c.l.b16 %v107
  %v725 = vunpack.c.h.b16 %v107
  %v726 = vunpack.c.l.b16 %v108
  %v727 = vunpack.c.h.b16 %v108
  %v728 = vunpack.c.l.b16 %v109
  %v729 = vunpack.c.h.b16 %v109
  %v730 = vunpack.c.l.b16 %v110
  %v731 = vunpack.c.h.b16 %v110
  %v732 = vunpack.c.l.b16 %v111
  %v733 = vunpack.c.h.b16 %v111
  %v734 = vunpack.c.l.b16 %v112
  %v735 = vunpack.c.h.b16 %v112
  %v736 = vunpack.c.l.b16 %v113
  %v737 = vunpack.c.h.b16 %v113
  %v738 = vunpack.c.l.b16 %v114
  %v739 = vunpack.c.h.b16 %v114
  %v740 = vunpack.c.l.b16 %v115
  %v741 = vunpack.c.h.b16 %v115
  %v742 = vunpack.c.l.b16 %v116
  %v743 = vunpack.c.h.b16 %v116
  %v744 = vunpack.c.l.b16 %v117
  %v745 = vunpack.c.h.b16 %v117
  %v746 = vunpack.c.l.b16 %v118
  %v747 = vunpack.c.h.b16 %v118
  %v748 = vunpack.c.l.b16 %v119
  %v749 = vunpack.c.h.b16 %v119
  %v750 = vunpack.c.l.b16 %v120
  %v751 = vunpack.c.h.b16 %v120
  %v752 = vunpack.c.l.b16 %v121
  %v753 = vunpack.c.h.b16 %v121
  %v754 = vunpack.c.l.b16 %v122
  %v755 = vunpack.c.h.b16 %v122
  %v756 = vunpack.c.l.b16 %v123
  %v757 = vunpack.c.h.b16 %v123
  %v758 = vunpack.c.l.b16 %v124
  %v759 = vunpack.c.h.b16 %v124
  %v760 = vunpack.c.l.b16 %v125
  %v761 = vunpack.c.h.b16 %v125
  %v762 = vunpack.c.l.b16 %v126
  %v763 = vunpack.c.h.b16 %v126
  %v764 = vunpack.c.l.b16 %v127
  %v765 = vunpack.c.h.b16 %v127
  %v766 = vunpack.c.l.b16 %v128
  %v767 = vunpack.c.h.b16 %v128
  %v768 = vunpack.c.l.b16 %v129
  %v769 = vunpack.c.h.b16 %v129
  %v770 = vunpack.c.l.b16 %v130
  %v771 = vunpack.c.h.b16 %v130
  %v772 = vunpack.c.l.b16 %v131
  %v773 = vunpack.c.h.b16 %v131
  %v774 = vunpack.c.l.b16 %v132
  %v775 = vunpack.c.h.b16 %v132
  %v776 = vunpack.c.l.b16 %v133
  %v777 = vunpack.c.h.b16 %v133
  %v778 = vunpack.c.l.b16 %v134
  %v779 = vunpack.c.h.b16 %v134
  %v780 = vunpack.c.l.b16 %v135
  %v781 = vunpack.c.h.b16 %v135
  %v782 = vunpack.c.l.b16 %v136
  %v783 = vunpack.c.h.b16 %v136
  %v784 = vunpack.c.l.b16 %v137
  %v785 = vunpack.c.h.b16 %v137
  %v786 = vunpack.c.l.b16 %v138
  %v787 = vunpack.c.h.b16 %v138
  %v788 = vunpack.c.l.b16 %v139
  %v789 = vunpack.c.h.b16 %v139
  %v790 = vunpack.c.l.b16 %v140
  %v791 = vunpack.c.h.b16 %v140
  %v792 = vunpack.c.l.b16 %v141
  %v793 = vunpack.c.h.b16 %v141
  %v794 = vunpack.c.l.b16 %v142
  %v795 = vunpack.c.h.b16 %v142
  %v796 = vunpack.c.l.b16 %v143
  %v797 = vunpack.c.h.b16 %v143
  %v798 = vunpack.c.l.b16 %v144
  %v799 = vunpack.c.h.b16 %v144
  %v800 = vunpack.c.l.b16 %v145
  %v801 = vunpack.c.h.b16 %v145
  %v802 = vunpack.c.l.b16 %v146
  %v803 = vunpack.c.h.b16 %v146
  %v804 = vunpack.c.l.b16 %v147
  %v805 = vunpack.c.h.b16 %v147
  %v806 = vunpack.c.l.b16 %v148
  %v807 = vunpack.c.h.b16 %v148
  %v808 = vunpack.c.l.b16 %v149
  %v809 = vunpack.c.h.b16 %v149
  %v810 = vunpack.c.l.b16 %v150
  %v811 = vunpack.c.h.b16 %v150
  %v812 = vunpack.c.l.b16 %v151
  %v813 = vunpack.c.h.b16 %v151
  %v814 = vunpack.c.l.b16 %v152
  %v815 = vunpack.c.h.b16 %v152
  %v816 = vunpack.c.l.b16 %v153
  %v817 = vunpack.c.h.b16 %v153
  %v818 = vunpack.c.l.b16 %v154
  %v819 = vunpack.c.h.b16 %v154
  %v820 = vunpack.c.l.b16 %v155
  %v821 = vunpack.c.h.b16 %v155
  %v822 = vunpack.c.l.b16 %v156
  %v823 = vunpack.c.h.b16 %v156
  %v824 = vunpack.c.l.b16 %v157
  %v825 = vunpack.c.h.b16 %v157
  %v826 = vunpack.c.l.b16 %v158
  %v827 = vunpack.c.h.b16 %v158
  %v828 = vunpack.c.l.b16 %v159
  %v829 = vunpack.c.h.b16 %v159
  %v830 = vunpack.c.l.b16 %v160
  %v831 = vunpack.c.h.b16 %v160
  %v832 = vunpack.c.l.b16 %v161
  %v833 = vunpack.c.h.b16 %v161
  %v834 = vunpack.c.l.b16 %v162
  %v835 = vunpack.c.h.b16 %v162
  %v836 = vunpack.c.l.b16 %v163
  %v837 = vunpack.c.h.b16 %v163
  %v838 = vunpack.c.l.b16 %v164
  %v839 = vunpack.c.h.b16 %v164
  %v840 = vunpack.c.l.b16 %v165
  %v841 = vunpack.c.h.b16 %v165
  %v842 = vunpack.c.l.b16 %v166
  %v843 = vunpack.c.h.b16 %v166
  %v844 = vunpack.c.l.b16 %v167
  %v845 = vunpack.c.h.b16 %v167
  %v846 = vunpack.c.l.b16 %v168
  %v847 = vunpack.c.h.b16 %v168
  %v848 = vunpack.c.l.b16 %v169
  %v849 = vunpack.c.h.b16 %v169
  %v850 = vunpack.c.l.b16 %v170
  %v851 = vunpack.c.h.b16 %v170
  %v852 = vunpack.c.l.b16 %v171
  %v853 = vunpack.c.h.b16 %v171
  %v854 = vunpack.c.l.b16 %v172
  %v855 = vunpack.c.h.b16 %v172
  %v856 = vunpack.c.l.b16 %v173
  %v857 = vunpack.c.h.b16 %v173
  %v858 = vunpack.c.l.b16 %v174
  %v859 = vunpack.c.h.b16 %v174
  %v860 = vunpack.c.l.b16 %v175
  %v861 = vunpack.c.h.b16 %v175
  %v862 = vunpack.c.l.b16 %v176
  %v863 = vunpack.c.h.b16 %v176
  %v864 = vunpack.c.l.b16 %v177
  %v865 = vunpack.c.h.b16 %v177
  %v866 = vunpack.c.l.b16 %v178
  %v867 = vunpack.c.h.b16 %v178
  %v868 = vunpack.c.l.b16 %v179
  %v869 = vunpack.c.h.b16 %v179
  %v870 = vunpack.c.l.b16 %v180
  %v871 = vunpack.c.h.b16 %v180
  %v872 = vunpack.c.l.b16 %v181
  %v873 = vunpack.c.h.b16 %v181
  %v874 = vunpack.c.l.b16 %v182
  %v875 = vunpack.c.h.b16 %v182
  %v876 = vunpack.c.l.b16 %v183
  %v877 = vunpack.c.h.b16 %v183
  %v878 = vunpack.c.l.b16 %v184
  %v879 = vunpack.c.h.b16 %v184
  %v880 = vunpack.c.l.b16 %v185
  %v881 = vunpack.c.h.b16 %v185
  %v882 = vunpack.c.l.b16 %v186
  %v883 = vunpack.c.h.b16 %v186
  %v884 = vunpack.c.l.b16 %v187
  %v885 = vunpack.c.h.b16 %v187
  %v886 = vunpack.c.l.b16 %v188
  %v887 = vunpack.c.h.b16 %v188
  %v888 = vunpack.c.l.b16 %v189
  %v889 = vunpack.c.h.b16 %v189
  %v890 = vunpack.c.l.b16 %v190
  %v891 = vunpack.c.h.b16 %v190
  %v892 = vunpack.c.l.b16 %v191
  %v893 = vunpack.c.h.b16 %v191
  %v894 = vunpack.c.l.b16 %v192
  %v895 = vunpack.c.h.b16 %v192
  %v896 = vunpack.c.l.b16 %v193
  %v897 = vunpack.c.h.b16 %v193
  %v898 = vunpack.c.l.b16 %v194
  %v899 = vunpack.c.h.b16 %v194
  %v900 = vunpack.c.l.b16 %v195
  %v901 = vunpack.c.h.b16 %v195
  %v902 = vunpack.c.l.b16 %v196
  %v903 = vunpack.c.h.b16 %v196
  %v904 = vunpack.c.l.b16 %v197
  %v905 = vunpack.c.h.b16 %v197
  %v906 = vunpack.c.l.b16 %v198
  %v907 = vunpack.c.h.b16 %v198
  %v908 = vunpack.c.l.b16 %v199
  %v909 = vunpack.c.h.b16 %v199
  %v910 = vunpack.c.l.b16 %v200
  %v911 = vunpack.c.h.b16 %v200
  %v912 = vunpack.c.l.b16 %v201
  %v913 = vunpack.c.h.b16 %v201
  %v914 = vunpack.c.l.b16 %v202
  %v915 = vunpack.c.h.b16 %v202
  %v916 = vunpack.c.l.b16 %v203
  %v917 = vunpack.c.h.b16 %v203
  %v918 = vunpack.c.l.b16 %v204
  %v919 = vunpack.c.h.b16 %v204
  %v920 = vunpack.c.l.b16 %v205
  %v921 = vunpack.c.h.b16 %v205
  %v922 = vunpack.c.l.b16 %v206
  %v923 = vunpack.c.h.b16 %v206
  %v924 = vunpack.c.l.b16 %v207
  %v925 = vunpack.c.h.b16 %v207
  %v926 = vunpack.c.l.b16 %v208
  %v927 = vunpack.c.h.b16 %v208
  %v928 = vunpack.c.l.b16 %v209
  %v929 = vunpack.c.h.b16 %v209
  %v930 = vunpack.c.l.b16 %v210
  %v931 = vunpack.c.h.b16 %v210
  %v932 = vunpack.c.l.b16 %v211
  %v933 = vunpack.c.h.b16 %v211
  %v934 = vunpack.c.l.b16 %v212
  %v935 = vunpack.c.h.b16 %v212
  %v936 = vunpack.c.l.b16 %v213
  %v937 = vunpack.c.h.b16 %v213
  %v938 = vunpack.c.l.b16 %v214
  %v939 = vunpack.c.h.b16 %v214
  %v940 = vunpack.c.l.b16 %v215
  %v941 = vunpack.c.h.b16 %v215
  %v942 = vunpack.c.l.b16 %v216
  %v943 = vunpack.c.h.b16 %v216
  %v944 = vunpack.c.l.b16 %v217
  %v945 = vunpack.c.h.b16 %v217
  %v946 = vunpack.c.l.b16 %v218
  %v947 = vunpack.c.h.b16 %v218
  %v948 = vunpack.c.l.b16 %v219
  %v949 = vunpack.c.h.b16 %v219
  %v950 = vunpack.c.l.b16 %v220
  %v951 = vunpack.c.h.b16 %v220
  %v952 = vunpack.c.l.b16 %v221
  %v953 = vunpack.c.h.b16 %v221
  %v954 = vunpack.c.l.b16 %v222
  %v955 = vunpack.c.h.b16 %v222
  %v956 = vunpack.c.l.b16 %v223
  %v957 = vunpack.c.h.b16 %v223
  %v958 = vunpack.c.l.b16 %v224
  %v959 = vunpack.c.h.b16 %v224
  %v960 = vunpack.c.l.b16 %v225
  %v961 = vunpack.c.h.b16 %v225
  %v962 = vunpack.c.l.b16 %v226
  %v963 = vunpack.c.h.b16 %v226
  %v964 = vunpack.c.l.b16 %v227
  %v965 = vunpack.c.h.b16 %v227
  %v966 = vunpack.c.l.b16 %v228
  %v967 = vunpack.c.h.b16 %v228
  %v968 = vunpack.c.l.b16 %v229
  %v969 = vunpack.c.h.b16 %v229
  %v970 = vunpack.c.l.b16 %v230
  %v971 = vunpack.c.h.b16 %v230
  %v972 = vunpack.c.l.b16 %v231
  %v973 = vunpack.c.h.b16 %v231
  %v974 = vunpack.c.l.b16 %v232
  %v975 = vunpack.c.h.b16 %v232
  %v976 = vunpack.c.l.b16 %v233
  %v977 = vunpack.c.h.b16 %v233
  %v978 = vunpack.c.l.b16 %v234
  %v979 = vunpack.c.h.b16 %v234
  %v980 = vunpack.c.l.b16 %v235
  %v981 = vunpack.c.h.b16 %v235
  %v982 = vunpack.c.l.b16 %v236
  %v983 = vunpack.c.h.b16 %v236
  %v984 = vunpack.c.l.b16 %v237
  %v985 = vunpack.c.h.b16 %v237
  %v986 = vunpack.c.l.b16 %v238
  %v987 = vunpack.c.h.b16 %v238
  %v988 = vunpack.c.l.b16 %v239
  %v989 = vunpack.c.h.b16 %v239
  %v990 = vunpack.c.l.b16 %v240
  %v991 = vunpack.c.h.b16 %v240
  %v992 = vunpack.c.l.b16 %v241
  %v993 = vunpack.c.h.b16 %v241
  %v994 = vunpack.c.l.b16 %v242
  %v995 = vunpack.c.h.b16 %v242
  %v996 = vunpack.c.l.b16 %v243
  %v997 = vunpack.c.h.b16 %v243
  %v998 = vunpack.c.l.b16 %v244
  %v999 = vunpack.c.h.b16 %v244
  %v1000 = vunpack.c.l.b16 %v245
  %v1001 = vunpack.c.h.b16 %v245
  %v1002 = vunpack.c.l.b16 %v246
  %v1003 = vunpack.c.h.b16 %v246
  %v1004 = vunpack.c.l.b16 %v247
  %v1005 = vunpack.c.h.b16 %v247
  %v1006 = vunpack.c.l.b16 %v248
  %v1007 = vunpack.c.h.b16 %v248
  %v1008 = vunpack.c.l.b16 %v249
  %v1009 = vunpack.c.h.b16 %v249
  %v1010 = vunpack.c.l.b16 %v250
  %v1011 = vunpack.c.h.b16 %v250
  %v1012 = vunpack.c.l.b16 %v251
  %v1013 = vunpack.c.h.b16 %v251
  %v1014 = vunpack.c.l.b16 %v252
  %v1015 = vunpack.c.h.b16 %v252
  %v1016 = vunpack.c.l.b16 %v253
  %v1017 = vunpack.c.h.b16 %v253
  %v1018 = vunpack.c.l.b16 %v254
  %v1019 = vunpack.c.h.b16 %v254
  %v1020 = vunpack.c.l.b16 %v255
  %v1021 = vunpack.c.h.b16 %v255
  %v1022 = vunpack.c.l.b16 %v256
  %v1023 = vunpack.c.h.b16 %v256
  %v1024 = vunpack.c.l.b16 %v257
  %v1025 = vunpack.c.h.b16 %v257
  %v1026 = vunpack.c.l.b16 %v258
  %v1027 = vunpack.c.h.b16 %v258
  %v1028 = vunpack.c.l.b16 %v259
  %v1029 = vunpack.c.h.b16 %v259
  %v1030 = vunpack.c.l.b16 %v260
  %v1031 = vunpack.c.h.b16 %v260
  %v1032 = vunpack.c.l.b16 %v261
  %v1033 = vunpack.c.h.b16 %v261
  %v1034 = vunpack.c.l.b16 %v262
  %v1035 = vunpack.c.h.b16 %v262
  %v1036 = vunpack.c.l.b16 %v263
  %v1037 = vunpack.c.h.b16 %v263
  %v1038 = vunpack.c.l.b16 %v264
  %v1039 = vunpack.c.h.b16 %v264
  %v1040 = vunpack.c.l.b16 %v265
  %v1041 = vunpack.c.h.b16 %v265
  %v1042 = vunpack.c.l.b16 %v266
  %v1043 = vunpack.c.h.b16 %v266
  %v1044 = vunpack.c.l.b16 %v267
  %v1045 = vunpack.c.h.b16 %v267
  %v1046 = vunpack.c.l.b16 %v268
  %v1047 = vunpack.c.h.b16 %v268
  %v1048 = vunpack.c.l.b16 %v269
  %v1049 = vunpack.c.h.b16 %v269
  %v1050 = vunpack.c.l.b16 %v270
  %v1051 = vunpack.c.h.b16 %v270
  %v1052 = vunpack.c.l.b16 %v271
  %v1053 = vunpack.c.h.b16 %v271
  %v1054 = vunpack.c.l.b16 %v272
  %v1055 = vunpack.c.h.b16 %v272
  %v1056 = vunpack.c.l.b16 %v273
  %v1057 = vunpack.c.h.b16 %v273
  %v1058 = vunpack.c.l.b16 %v274
  %v1059 = vunpack.c.h.b16 %v274
  %v1060 = vunpack.c.l.b16 %v275
  %v1061 = vunpack.c.h.b16 %v275
  %v1062 = vunpack.c.l.b16 %v276
  %v1063 = vunpack.c.h.b16 %v276
  %v1064 = vunpack.c.l.b16 %v277
  %v1065 = vunpack.c.h.b16 %v277
  %v1066 = vunpack.c.l.b16 %v278
  %v1067 = vunpack.c.h.b16 %v278
  %v1068 = vunpack.c.l.b16 %v279
  %v1069 = vunpack.c.h.b16 %v279
  %v1070 = vunpack.c.l.b16 %v280
  %v1071 = vunpack.c.h.b16 %v280
  %v1072 = vunpack.c.l.b16 %v281
  %v1073 = vunpack.c.h.b16 %v281
  %v1074 = vunpack.c.l.b16 %v282
  %v1075 = vunpack.c.h.b16 %v282
  %v1076 = vunpack.c.l.b16 %v283
  %v1077 = vunpack.c.h.b16 %v283
  %v1078 = vunpack.c.l.b16 %v284
  %v1079 = vunpack.c.h.b16 %v284
  %v1080 = vunpack.c.l.b16 %v285
  %v1081 = vunpack.c.h.b16 %v285
  %v1082 = vunpack.c.l.b16 %v286
  %v1083 = vunpack.c.h.b16 %v286
  %v1084 = vunpack.c.l.b16 %v287
  %v1085 = vunpack.c.h.b16 %v287
  %v1086 = vunpack.c.l.b16 %v288
  %v1087 = vunpack.c.h.b16 %v288
  %v1088 = vunpack.c.l.b16 %v289
  %v1089 = vunpack.c.h.b16 %v289
  %v1090 = vpack.c.b16 %v586, %v578
  %v1091 = vpack.c.b16 %v587, %v579
  %v1092 = vpack.c.b16 %v588, %v580
  %v1093 = vpack.c.b16 %v589, %v581
  %v1094 = vpack.c.b16 %v590, %v582
  %v1095 = vpack.c.b16 %v591, %v583
  %v1096 = vpack.c.b16 %v592, %v584
  %v1097 = vpack.c.b16 %v593, %v585
  %v1098 = vpack.c.b16 %v602, %v594
  %v1099 = vpack.c.b16 %v603, %v595
  %v1100 = vpack.c.b16 %v604, %v596
  %v1101 = vpack.c.b16 %v605, %v597
  %v1102 = vpack.c.b16 %v606, %v598
  %v1103 = vpack.c.b16 %v607, %v599
  %v1104 = vpack.c.b16 %v608, %v600
  %v1105 = vpack.c.b16 %v609, %v601
  %v1106 = vpack.c.b16 %v618, %v610
  %v1107 = vpack.c.b16 %v619, %v611
  %v1108 = vpack.c.b16 %v620, %v612
  %v1109 = vpack.c.b16 %v621, %v613
  %v1110 = vpack.c.b16 %v622, %v614
  %v1111 = vpack.c.b16 %v623, %v615
  %v1112 = vpack.c.b16 %v624, %v616
  %v1113 = vpack.c.b16 %v625, %v617
  %v1114 = vpack.c.b16 %v634, %v626
  %v1115 = vpack.c.b16 %v635, %v627
  %v1116 = vpack.c.b16 %v636, %v628
  %v1117 = vpack.c.b16 %v637, %v629
  %v1118 = vpack.c.b16 %v638, %v630
  %v1119 = vpack.c.b16 %v639, %v631
  %v1120 = vpack.c.b16 %v640, %v632
  %v1121 = vpack.c.b16 %v641, %v633
  %v1122 = vpack.c.b16 %v650, %v642
  %v1123 = vpack.c.b16 %v651, %v643
  %v1124 = vpack.c.b16 %v652, %v644
  %v1125 = vpack.c.b16 %v653, %v645
  %v1126 = vpack.c.b16 %v654, %v646
  %v1127 = vpack.c.b16 %v655, %v647
  %v1128 = vpack.c.b16 %v656, %v648
  %v1129 = vpack.c.b16 %v657, %v649
  %v1130 = vpack.c.b16 %v666, %v658
  %v1131 = vpack.c.b16 %v667, %v659
  %v1132 = vpack.c.b16 %v668, %v660
  %v1133 = vpack.c.b16 %v669, %v661
  %v1134 = vpack.c.b16 %v670, %v662
  %v1135 = vpack.c.b16 %v671, %v663
  %v1136 = vpack.c.b16 %v672, %v664
  %v1137 = vpack.c.b16 %v673, %v665
  %v1138 = vpack.c.b16 %v682, %v674
  %v1139 = vpack.c.b16 %v683, %v675
  %v1140 = vpack.c.b16 %v684, %v676
  %v1141 = vpack.c.b16 %v685, %v677
  %v1142 = vpack.c.b16 %v686, %v678
  %v1143 = vpack.c.b16 %v687, %v679
  %v1144 = vpack.c.b16 %v688, %v680
  %v1145 = vpack.c.b16 %v689, %v681
  %v1146 = vpack.c.b16 %v698, %v690
  %v1147 = vpack.c.b16 %v699, %v691
  %v1148 = vpack.c.b16 %v700, %v692
  %v1149 = vpack.c.b16 %v701, %v693
  %v1150 = vpack.c.b16 %v702, %v694
  %v1151 = vpack.c.b16 %v703, %v695
  %v1152 = vpack.c.b16 %v704, %v696
  %v1153 = vpack.c.b16 %v705, %v697
  %v1154 = vpack.c.b16 %v714, %v706
  %v1155 = vpack.c.b16 %v715, %v707
  %v1156 = vpack.c.b16 %v716, %v708
  %v1157 = vpack.c.b16 %v717, %v709
  %v1158 = vpack.c.b16 %v718, %v710
  %v1159 = vpack.c.b16 %v719, %v711
  %v1160 = vpack.c.b16 %v720, %v712
  %v1161 = vpack.c.b16 %v721, %v713
  %v1162 = vpack.c.b16 %v730, %v722
  %v1163 = vpack.c.b16 %v731, %v723
  %v1164 = vpack.c.b16 %v732, %v724
  %v1165 = vpack.c.b16 %v733, %v725
  %v1166 = vpack.c.b16 %v734, %v726
  %v1167 = vpack.c.b16 %v735, %v727
  %v1168 = vpack.c.b16 %v736, %v728
  %v1169 = vpack.c.b16 %v737, %v729
  %v1170 = vpack.c.b16 %v746, %v738
  %v1171 = vpack.c.b16 %v747, %v739
  %v1172 = vpack.c.b16 %v748, %v740
  %v1173 = vpack.c.b16 %v749, %v741
  %v1174 = vpack.c.b16 %v750, %v742
  %v1175 = vpack.c.b16 %v751, %v743
  %v1176 = vpack.c.b16 %v752, %v744
  %v1177 = vpack.c.b16 %v753, %v745
  %v1178 = vpack.c.b16 %v762, %v754
  %v1179 = vpack.c.b16 %v763, %v755
  %v1180 = vpack.c.b16 %v764, %v756
  %v1181 = vpack.c.b16 %v765, %v757
  %v1182 = vpack.c.b16 %v766, %v758
  %v1183 = vpack.c.b16 %v767, %v759
  %v1184 = vpack.c.b16 %v768, %v760
  %v1185 = vpack.c.b16 %v769, %v761
  %v1186 = vpack.c.b16 %v778, %v770
  %v1187 = vpack.c.b16 %v779, %v771
  %v1188 = vpack.c.b16 %v780, %v772
  %v1189 = vpack.c.b16 %v781, %v773
  %v1190 = vpack.c.b16 %v782, %v774
  %v1191 = vpack.c.b16 %v783, %v775
  %v1192 = vpack.c.b16 %v784, %v776
  %v1193 = vpack.c.b16 %v785, %v777
  %v1194 = vpack.c.b16 %v794, %v786
  %v1195 = vpack.c.b16 %v795, %v787
  %v1196 = vpack.c.b16 %v796, %v788
  %v1197 = vpack.c.b16 %v797, %v789
  %v1198 = vpack.c.b16 %v798, %v790
  %v1199 = vpack.c.b16 %v799, %v791
  %v1200 = vpack.c.b16 %v800, %v792
  %v1201 = vpack.c.b16 %v801, %v793
  %v1202 = vpack.c.b16 %v810, %v802
  %v1203 = vpack.c.b16 %v811, %v803
  %v1204 = vpack.c.b16 %v812, %v804
  %v1205 = vpack.c.b16 %v813, %v805
  %v1206 = vpack.c.b16 %v814, %v806
  %v1207 = vpack.c.b16 %v815, %v807
  %v1208 = vpack.c.b16 %v816, %v808
  %v1209 = vpack.c.b16 %v817, %v809
  %v1210 = vpack.c.b16 %v826, %v818
  %v1211 = vpack.c.b16 %v827, %v819
  %v1212 = vpack.c.b16 %v828, %v820
  %v1213 = vpack.c.b16 %v829, %v821
  %v1214 = vpack.c.b16 %v830, %v822
  %v1215 = vpack.c.b16 %v831, %v823
  %v1216 = vpack.c.b16 %v832, %v824
  %v1217 = vpack.c.b16 %v833, %v825
  %v1218 = vpack.c.b16 %v842, %v834
  %v1219 = vpack.c.b16 %v843, %v835
  %v1220 = vpack.c.b16 %v844, %v836
  %v1221 = vpack.c.b16 %v845, %v837
  %v1222 = vpack.c.b16 %v846, %v838
  %v1223 = vpack.c.b16 %v847, %v839
  %v1224 = vpack.c.b16 %v848, %v840
  %v1225 = vpack.c.b16 %v849, %v841
  %v1226 = vpack.c.b16 %v858, %v850
  %v1227 = vpack.c.b16 %v859, %v851
  %v1228 = vpack.c.b16 %v860, %v852
  %v1229 = vpack.c.b16 %v861, %v853
  %v1230 = vpack.c.b16 %v862, %v854
  %v1231 = vpack.c.b16 %v863, %v855
  %v1232 = vpack.c.b16 %v864, %v856
  %v1233 = vpack.c.b16 %v865, %v857
  %v1234 = vpack.c.b16 %v874, %v866
  %v1235 = vpack.c.b16 %v875, %v867
  %v1236 = vpack.c.b16 %v876, %v868
  %v1237 = vpack.c.b16 %v877, %v869
  %v1238 = vpack.c.b16 %v878, %v870
  %v1239 = vpack.c.b16 %v879, %v871
  %v1240 = vpack.c.b16 %v880, %v872
  %v1241 = vpack.c.b16 %v881, %v873
  %v1242 = vpack.c.b16 %v890, %v882
  %v1243 = vpack.c.b16 %v891, %v883
  %v1244 = vpack.c.b16 %v892, %v884
  %v1245 = vpack.c.b16 %v893, %v885
  %v1246 = vpack.c.b16 %v894, %v886
  %v1247 = vpack.c.b16 %v895, %v887
  %v1248 = vpack.c.b16 %v896, %v888
  %v1249 = vpack.c.b16 %v897, %v889
  %v1250 = vpack.c.b16 %v906, %v898
  %v1251 = vpack.c.b16 %v907, %v899
  %v1252 = vpack.c.b16 %v908, %v900
  %v1253 = vpack.c.b16 %v909, %v901
  %v1254 = vpack.c.b16 %v910, %v902
  %v1255 = vpack.c.b16 %v911, %v903
  %v1256 = vpack.c.b16 %v912, %v904
  %v1257 = vpack.c.b16 %v913, %v905
  %v1258 = vpack.c.b16 %v922, %v914
  %v1259 = vpack.c.b16 %v923, %v915
  %v1260 = vpack.c.b16 %v924, %v916
  %v1261 = vpack.c.b16 %v925, %v917
  %v1262 = vpack.c.b16 %v926, %v918
  %v1263 = vpack.c.b16 %v927, %v919
  %v1264 = vpack.c.b16 %v928, %v920
  %v1265 = vpack.c.b16 %v929, %v921
  %v1266 = vpack.c.b16 %v938, %v930
  %v1267 = vpack.c.b16 %v939, %v931
  %v1268 = vpack.c.b16 %v940, %v932
  %v1269 = vpack.c.b16 %v941, %v933
  %v1270 = vpack.c.b16 %v942, %v934
  %v1271 = vpack.c.b16 %v943, %v935
  %v1272 = vpack.c.b16 %v944, %v936
  %v1273 = vpack.c.b16 %v945, %v937
  %v1274 = vpack.c.b16 %v954, %v946
  %v1275 = vpack.c.b16 %v955, %v947
  %v1276 = vpack.c.b16 %v956, %v948
  %v1277 = vpack.c.b16 %v957, %v949
  %v1278 = vpack.c.b16 %v958, %v950
  %v1279 = vpack.c.b16 %v959, %v951
  %v1280 = vpack.c.b16 %v960, %v952
  %v1281 = vpack.c.b16 %v961, %v953
  %v1282 = vpack.c.b16 %v970, %v962
  %v1283 = vpack.c.b16 %v971, %v963
  %v1284 = vpack.c.b16 %v972, %v964
  %v1285 = vpack.c.b16 %v973, %v965
  %v1286 = vpack.c.b16 %v974, %v966
  %v1287 = vpack.c.b16 %v975, %v967
  %v1288 = vpack.c.b16 %v976, %v968
  %v1289 = vpack.c.b16 %v977, %v969
  %v1290 = vpack.c.b16 %v986, %v978
  %v1291 = vpack.c.b16 %v987, %v979
  %v1292 = vpack.c.b16 %v988, %v980
  %v1293 = vpack.c.b16 %v989, %v981
  %v1294 = vpack.c.b16 %v990, %v982
  %v1295 = vpack.c.b16 %v991, %v983
  %v1296 = vpack.c.b16 %v992, %v984
  %v1297 = vpack.c.b16 %v993, %v985
  %v1298 = vpack.c.b16 %v1002, %v994
  %v1299 = vpack.c.b16 %v1003, %v995
  %v1300 = vpack.c.b16 %v1004, %v996
  %v1301 = vpack.c.b16 %v1005, %v997
  %v1302 = vpack.c.b16 %v1006, %v998
  %v1303 = vpack.c.b16 %v1007, %v999
  %v1304 = vpack.c.b16 %v1008, %v1000
  %v1305 = vpack.c.b16 %v1009, %v1001
  %v1306 = vpack.c.b16 %v1018, %v1010
  %v1307 = vpack.c.b16 %v1019, %v1011
  %v1308 = vpack.c.b16 %v1020, %v1012
  %v1309 = vpack.c.b16 %v1021, %v1013
  %v1310 = vpack.c.b16 %v1022, %v1014
  %v1311 = vpack.c.b16 %v1023, %v1015
  %v1312 = vpack.c.b16 %v1024, %v1016
  %v1313 = vpack.c.b16 %v1025, %v1017
  %v1314 = vpack.c.b16 %v1034, %v1026
  %v1315 = vpack.c.b16 %v1035, %v1027
  %v1316 = vpack.c.b16 %v1036, %v1028
  %v1317 = vpack.c.b16 %v1037, %v1029
  %v1318 = vpack.c.b16 %v1038, %v1030
  %v1319 = vpack.c.b16 %v1039, %v1031
  %v1320 = vpack.c.b16 %v1040, %v1032
  %v1321 = vpack.c.b16 %v1041, %v1033
  %v1322 = vpack.c.b16 %v1050, %v1042
  %v1323 = vpack.c.b16 %v1051, %v1043
  %v1324 = vpack.c.b16 %v1052, %v1044
  %v1325 = vpack.c.b16 %v1053, %v1045
  %v1326 = vpack.c.b16 %v1054, %v1046
  %v1327 = vpack.c.b16 %v1055, %v1047
  %v1328 = vpack.c.b16 %v1056, %v1048
  %v1329 = vpack.c.b16 %v1057, %v1049
  %v1330 = vpack.c.b16 %v1066, %v1058
  %v1331 = vpack.c.b16 %v1067, %v1059
  %v1332 = vpack.c.b16 %v1068, %v1060
  %v1333 = vpack.c.b16 %v1069, %v1061
  %v1334 = vpack.c.b16 %v1070, %v1062
  %v1335 = vpack.c.b16 %v1071, %v1063
  %v1336 = vpack.c.b16 %v1072, %v1064
  %v1337 = vpack.c.b16 %v1073, %v1065
  %v1338 = vpack.c.b16 %v1082, %v1074
  %v1339 = vpack.c.b16 %v1083, %v1075
  %v1340 = vpack.c.b16 %v1084, %v1076
  %v1341 = vpack.c.b16 %v1085, %v1077
  %v1342 = vpack.c.b16 %v1086, %v1078
  %v1343 = vpack.c.b16 %v1087, %v1079
  %v1344 = vpack.c.b16 %v1088, %v1080
  %v1345 = vpack.c.b16 %v1089, %v1081
  %1602 = vmatpush.bf16.msra.mxu0 %v1146
  %1603 = vmatpush.bf16.msra.mxu0 %v1138
  %1604 = vmatpush.bf16.msra.mxu0 %v1130
  %1605 = vmatpush.bf16.msra.mxu0 %v1122
  %1606 = vmatpush.bf16.msra.mxu0 %v1114
  %1607 = vmatpush.bf16.msra.mxu0 %v1106
  %1608 = vmatpush.bf16.msra.mxu0 %v1098
  %1609 = vmatpush.bf16.msra.mxu0 %v1090
  %1610 = vmatmul.bf16.gmra.mxu0 %v314
  %v1611 = vpop.f32.mrf.mxu0
  %v1612 = vadd.f32 %v292, %v1611
  %v1613 = vpop.f32.mrf.mxu0
  %1614 = vdwg.mxu0
  %1615 = vmatpush.bf16.msra.mxu0 %v1210
  %1616 = vmatpush.bf16.msra.mxu0 %v1202
  %1617 = vmatpush.bf16.msra.mxu0 %v1194
  %1618 = vmatpush.bf16.msra.mxu0 %v1186
  %1619 = vmatpush.bf16.msra.mxu0 %v1178
  %1620 = vmatpush.bf16.msra.mxu0 %v1170
  %1621 = vmatpush.bf16.msra.mxu0 %v1162
  %1622 = vmatpush.bf16.msra.mxu0 %v1154
  %1623 = vmatmul.bf16.gmra.mxu0 %v315
  %v1624 = vpop.f32.mrf.mxu0
  %v1625 = vadd.f32 %v1612, %v1624
  %v1626 = vpop.f32.mrf.mxu0
  %1627 = vdwg.mxu0
  %1628 = vmatpush.bf16.msra.mxu0 %v1274
  %1629 = vmatpush.bf16.msra.mxu0 %v1266
  %1630 = vmatpush.bf16.msra.mxu0 %v1258
  %1631 = vmatpush.bf16.msra.mxu0 %v1250
  %1632 = vmatpush.bf16.msra.mxu0 %v1242
  %1633 = vmatpush.bf16.msra.mxu0 %v1234
  %1634 = vmatpush.bf16.msra.mxu0 %v1226
  %1635 = vmatpush.bf16.msra.mxu0 %v1218
  %1636 = vmatmul.bf16.gmra.mxu0 %v316
  %v1637 = vpop.f32.mrf.mxu0
  %v1638 = vadd.f32 %v1625, %v1637
  %v1639 = vpop.f32.mrf.mxu0
  %1640 = vdwg.mxu0
  %1641 = vmatpush.bf16.msra.mxu0 %v1338
  %1642 = vmatpush.bf16.msra.mxu0 %v1330
  %1643 = vmatpush.bf16.msra.mxu0 %v1322
  %1644 = vmatpush.bf16.msra.mxu0 %v1314
  %1645 = vmatpush.bf16.msra.mxu0 %v1306
  %1646 = vmatpush.bf16.msra.mxu0 %v1298
  %1647 = vmatpush.bf16.msra.mxu0 %v1290
  %1648 = vmatpush.bf16.msra.mxu0 %v1282
  %1649 = vmatmul.bf16.gmra.mxu0 %v317
  %v1650 = vpop.f32.mrf.mxu0
  %v1651 = vadd.f32 %v1638, %v1650
  %v1652 = vpop.f32.mrf.mxu0
  %1653 = vdwg.mxu0
  %1654 = vmatpush.bf16.msra.mxu0 %v1147
  %1655 = vmatpush.bf16.msra.mxu0 %v1139
  %1656 = vmatpush.bf16.msra.mxu0 %v1131
  %1657 = vmatpush.bf16.msra.mxu0 %v1123
  %1658 = vmatpush.bf16.msra.mxu0 %v1115
  %1659 = vmatpush.bf16.msra.mxu0 %v1107
  %1660 = vmatpush.bf16.msra.mxu0 %v1099
  %1661 = vmatpush.bf16.msra.mxu0 %v1091
  %1662 = vmatmul.bf16.gmra.mxu0 %v314
  %v1663 = vpop.f32.mrf.mxu0
  %v1664 = vadd.f32 %v293, %v1663
  %v1665 = vpop.f32.mrf.mxu0
  %1666 = vdwg.mxu0
  %1667 = vmatpush.bf16.msra.mxu0 %v1211
  %1668 = vmatpush.bf16.msra.mxu0 %v1203
  %1669 = vmatpush.bf16.msra.mxu0 %v1195
  %1670 = vmatpush.bf16.msra.mxu0 %v1187
  %1671 = vmatpush.bf16.msra.mxu0 %v1179
  %1672 = vmatpush.bf16.msra.mxu0 %v1171
  %1673 = vmatpush.bf16.msra.mxu0 %v1163
  %1674 = vmatpush.bf16.msra.mxu0 %v1155
  %1675 = vmatmul.bf16.gmra.mxu0 %v315
  %v1676 = vpop.f32.mrf.mxu0
  %v1677 = vadd.f32 %v1664, %v1676
  %v1678 = vpop.f32.mrf.mxu0
  %1679 = vdwg.mxu0
  %1680 = vmatpush.bf16.msra.mxu0 %v1275
  %1681 = vmatpush.bf16.msra.mxu0 %v1267
  %1682 = vmatpush.bf16.msra.mxu0 %v1259
  %1683 = vmatpush.bf16.msra.mxu0 %v1251
  %1684 = vmatpush.bf16.msra.mxu0 %v1243
  %1685 = vmatpush.bf16.msra.mxu0 %v1235
  %1686 = vmatpush.bf16.msra.mxu0 %v1227
  %1687 = vmatpush.bf16.msra.mxu0 %v1219
  %1688 = vmatmul.bf16.gmra.mxu0 %v316
  %v1689 = vpop.f32.mrf.mxu0
  %v1690 = vadd.f32 %v1677, %v1689
  %v1691 = vpop.f32.mrf.mxu0
  %1692 = vdwg.mxu0
  %1693 = vmatpush.bf16.msra.mxu0 %v1339
  %1694 = vmatpush.bf16.msra.mxu0 %v1331
  %1695 = vmatpush.bf16.msra.mxu0 %v1323
  %1696 = vmatpush.bf16.msra.mxu0 %v1315
  %1697 = vmatpush.bf16.msra.mxu0 %v1307
  %1698 = vmatpush.bf16.msra.mxu0 %v1299
  %1699 = vmatpush.bf16.msra.mxu0 %v1291
  %1700 = vmatpush.bf16.msra.mxu0 %v1283
  %1701 = vmatmul.bf16.gmra.mxu0 %v317
  %v1702 = vpop.f32.mrf.mxu0
  %v1703 = vadd.f32 %v1690, %v1702
  %v1704 = vpop.f32.mrf.mxu0
  %1705 = vdwg.mxu0
  %1706 = vmatpush.bf16.msra.mxu0 %v1148
  %1707 = vmatpush.bf16.msra.mxu0 %v1140
  %1708 = vmatpush.bf16.msra.mxu0 %v1132
  %1709 = vmatpush.bf16.msra.mxu0 %v1124
  %1710 = vmatpush.bf16.msra.mxu0 %v1116
  %1711 = vmatpush.bf16.msra.mxu0 %v1108
  %1712 = vmatpush.bf16.msra.mxu0 %v1100
  %1713 = vmatpush.bf16.msra.mxu0 %v1092
  %1714 = vmatmul.bf16.gmra.mxu0 %v314
  %v1715 = vpop.f32.mrf.mxu0
  %v1716 = vadd.f32 %v294, %v1715
  %v1717 = vpop.f32.mrf.mxu0
  %1718 = vdwg.mxu0
  %1719 = vmatpush.bf16.msra.mxu0 %v1212
  %1720 = vmatpush.bf16.msra.mxu0 %v1204
  %1721 = vmatpush.bf16.msra.mxu0 %v1196
  %1722 = vmatpush.bf16.msra.mxu0 %v1188
  %1723 = vmatpush.bf16.msra.mxu0 %v1180
  %1724 = vmatpush.bf16.msra.mxu0 %v1172
  %1725 = vmatpush.bf16.msra.mxu0 %v1164
  %1726 = vmatpush.bf16.msra.mxu0 %v1156
  %1727 = vmatmul.bf16.gmra.mxu0 %v315
  %v1728 = vpop.f32.mrf.mxu0
  %v1729 = vadd.f32 %v1716, %v1728
  %v1730 = vpop.f32.mrf.mxu0
  %1731 = vdwg.mxu0
  %1732 = vmatpush.bf16.msra.mxu0 %v1276
  %1733 = vmatpush.bf16.msra.mxu0 %v1268
  %1734 = vmatpush.bf16.msra.mxu0 %v1260
  %1735 = vmatpush.bf16.msra.mxu0 %v1252
  %1736 = vmatpush.bf16.msra.mxu0 %v1244
  %1737 = vmatpush.bf16.msra.mxu0 %v1236
  %1738 = vmatpush.bf16.msra.mxu0 %v1228
  %1739 = vmatpush.bf16.msra.mxu0 %v1220
  %1740 = vmatmul.bf16.gmra.mxu0 %v316
  %v1741 = vpop.f32.mrf.mxu0
  %v1742 = vadd.f32 %v1729, %v1741
  %v1743 = vpop.f32.mrf.mxu0
  %1744 = vdwg.mxu0
  %1745 = vmatpush.bf16.msra.mxu0 %v1340
  %1746 = vmatpush.bf16.msra.mxu0 %v1332
  %1747 = vmatpush.bf16.msra.mxu0 %v1324
  %1748 = vmatpush.bf16.msra.mxu0 %v1316
  %1749 = vmatpush.bf16.msra.mxu0 %v1308
  %1750 = vmatpush.bf16.msra.mxu0 %v1300
  %1751 = vmatpush.bf16.msra.mxu0 %v1292
  %1752 = vmatpush.bf16.msra.mxu0 %v1284
  %1753 = vmatmul.bf16.gmra.mxu0 %v317
  %v1754 = vpop.f32.mrf.mxu0
  %v1755 = vadd.f32 %v1742, %v1754
  %v1756 = vpop.f32.mrf.mxu0
  %1757 = vdwg.mxu0
  %1758 = vmatpush.bf16.msra.mxu0 %v1149
  %1759 = vmatpush.bf16.msra.mxu0 %v1141
  %1760 = vmatpush.bf16.msra.mxu0 %v1133
  %1761 = vmatpush.bf16.msra.mxu0 %v1125
  %1762 = vmatpush.bf16.msra.mxu0 %v1117
  %1763 = vmatpush.bf16.msra.mxu0 %v1109
  %1764 = vmatpush.bf16.msra.mxu0 %v1101
  %1765 = vmatpush.bf16.msra.mxu0 %v1093
  %1766 = vmatmul.bf16.gmra.mxu0 %v314
  %v1767 = vpop.f32.mrf.mxu0
  %v1768 = vadd.f32 %v295, %v1767
  %v1769 = vpop.f32.mrf.mxu0
  %1770 = vdwg.mxu0
  %1771 = vmatpush.bf16.msra.mxu0 %v1213
  %1772 = vmatpush.bf16.msra.mxu0 %v1205
  %1773 = vmatpush.bf16.msra.mxu0 %v1197
  %1774 = vmatpush.bf16.msra.mxu0 %v1189
  %1775 = vmatpush.bf16.msra.mxu0 %v1181
  %1776 = vmatpush.bf16.msra.mxu0 %v1173
  %1777 = vmatpush.bf16.msra.mxu0 %v1165
  %1778 = vmatpush.bf16.msra.mxu0 %v1157
  %1779 = vmatmul.bf16.gmra.mxu0 %v315
  %v1780 = vpop.f32.mrf.mxu0
  %v1781 = vadd.f32 %v1768, %v1780
  %v1782 = vpop.f32.mrf.mxu0
  %1783 = vdwg.mxu0
  %1784 = vmatpush.bf16.msra.mxu0 %v1277
  %1785 = vmatpush.bf16.msra.mxu0 %v1269
  %1786 = vmatpush.bf16.msra.mxu0 %v1261
  %1787 = vmatpush.bf16.msra.mxu0 %v1253
  %1788 = vmatpush.bf16.msra.mxu0 %v1245
  %1789 = vmatpush.bf16.msra.mxu0 %v1237
  %1790 = vmatpush.bf16.msra.mxu0 %v1229
  %1791 = vmatpush.bf16.msra.mxu0 %v1221
  %1792 = vmatmul.bf16.gmra.mxu0 %v316
  %v1793 = vpop.f32.mrf.mxu0
  %v1794 = vadd.f32 %v1781, %v1793
  %v1795 = vpop.f32.mrf.mxu0
  %1796 = vdwg.mxu0
  %1797 = vmatpush.bf16.msra.mxu0 %v1341
  %1798 = vmatpush.bf16.msra.mxu0 %v1333
  %1799 = vmatpush.bf16.msra.mxu0 %v1325
  %1800 = vmatpush.bf16.msra.mxu0 %v1317
  %1801 = vmatpush.bf16.msra.mxu0 %v1309
  %1802 = vmatpush.bf16.msra.mxu0 %v1301
  %1803 = vmatpush.bf16.msra.mxu0 %v1293
  %1804 = vmatpush.bf16.msra.mxu0 %v1285
  %1805 = vmatmul.bf16.gmra.mxu0 %v317
  %v1806 = vpop.f32.mrf.mxu0
  %v1807 = vadd.f32 %v1794, %v1806
  %v1808 = vpop.f32.mrf.mxu0
  %1809 = vdwg.mxu0
  %1810 = vmatpush.bf16.msra.mxu0 %v1150
  %1811 = vmatpush.bf16.msra.mxu0 %v1142
  %1812 = vmatpush.bf16.msra.mxu0 %v1134
  %1813 = vmatpush.bf16.msra.mxu0 %v1126
  %1814 = vmatpush.bf16.msra.mxu0 %v1118
  %1815 = vmatpush.bf16.msra.mxu0 %v1110
  %1816 = vmatpush.bf16.msra.mxu0 %v1102
  %1817 = vmatpush.bf16.msra.mxu0 %v1094
  %1818 = vmatmul.bf16.gmra.mxu0 %v314
  %v1819 = vpop.f32.mrf.mxu0
  %v1820 = vadd.f32 %v296, %v1819
  %v1821 = vpop.f32.mrf.mxu0
  %1822 = vdwg.mxu0
  %1823 = vmatpush.bf16.msra.mxu0 %v1214
  %1824 = vmatpush.bf16.msra.mxu0 %v1206
  %1825 = vmatpush.bf16.msra.mxu0 %v1198
  %1826 = vmatpush.bf16.msra.mxu0 %v1190
  %1827 = vmatpush.bf16.msra.mxu0 %v1182
  %1828 = vmatpush.bf16.msra.mxu0 %v1174
  %1829 = vmatpush.bf16.msra.mxu0 %v1166
  %1830 = vmatpush.bf16.msra.mxu0 %v1158
  %1831 = vmatmul.bf16.gmra.mxu0 %v315
  %v1832 = vpop.f32.mrf.mxu0
  %v1833 = vadd.f32 %v1820, %v1832
  %v1834 = vpop.f32.mrf.mxu0
  %1835 = vdwg.mxu0
  %1836 = vmatpush.bf16.msra.mxu0 %v1278
  %1837 = vmatpush.bf16.msra.mxu0 %v1270
  %1838 = vmatpush.bf16.msra.mxu0 %v1262
  %1839 = vmatpush.bf16.msra.mxu0 %v1254
  %1840 = vmatpush.bf16.msra.mxu0 %v1246
  %1841 = vmatpush.bf16.msra.mxu0 %v1238
  %1842 = vmatpush.bf16.msra.mxu0 %v1230
  %1843 = vmatpush.bf16.msra.mxu0 %v1222
  %1844 = vmatmul.bf16.gmra.mxu0 %v316
  %v1845 = vpop.f32.mrf.mxu0
  %v1846 = vadd.f32 %v1833, %v1845
  %v1847 = vpop.f32.mrf.mxu0
  %1848 = vdwg.mxu0
  %1849 = vmatpush.bf16.msra.mxu0 %v1342
  %1850 = vmatpush.bf16.msra.mxu0 %v1334
  %1851 = vmatpush.bf16.msra.mxu0 %v1326
  %1852 = vmatpush.bf16.msra.mxu0 %v1318
  %1853 = vmatpush.bf16.msra.mxu0 %v1310
  %1854 = vmatpush.bf16.msra.mxu0 %v1302
  %1855 = vmatpush.bf16.msra.mxu0 %v1294
  %1856 = vmatpush.bf16.msra.mxu0 %v1286
  %1857 = vmatmul.bf16.gmra.mxu0 %v317
  %v1858 = vpop.f32.mrf.mxu0
  %v1859 = vadd.f32 %v1846, %v1858
  %v1860 = vpop.f32.mrf.mxu0
  %1861 = vdwg.mxu0
  %1862 = vmatpush.bf16.msra.mxu0 %v1151
  %1863 = vmatpush.bf16.msra.mxu0 %v1143
  %1864 = vmatpush.bf16.msra.mxu0 %v1135
  %1865 = vmatpush.bf16.msra.mxu0 %v1127
  %1866 = vmatpush.bf16.msra.mxu0 %v1119
  %1867 = vmatpush.bf16.msra.mxu0 %v1111
  %1868 = vmatpush.bf16.msra.mxu0 %v1103
  %1869 = vmatpush.bf16.msra.mxu0 %v1095
  %1870 = vmatmul.bf16.gmra.mxu0 %v314
  %v1871 = vpop.f32.mrf.mxu0
  %v1872 = vadd.f32 %v297, %v1871
  %v1873 = vpop.f32.mrf.mxu0
  %1874 = vdwg.mxu0
  %1875 = vmatpush.bf16.msra.mxu0 %v1215
  %1876 = vmatpush.bf16.msra.mxu0 %v1207
  %1877 = vmatpush.bf16.msra.mxu0 %v1199
  %1878 = vmatpush.bf16.msra.mxu0 %v1191
  %1879 = vmatpush.bf16.msra.mxu0 %v1183
  %1880 = vmatpush.bf16.msra.mxu0 %v1175
  %1881 = vmatpush.bf16.msra.mxu0 %v1167
  %1882 = vmatpush.bf16.msra.mxu0 %v1159
  %1883 = vmatmul.bf16.gmra.mxu0 %v315
  %v1884 = vpop.f32.mrf.mxu0
  %v1885 = vadd.f32 %v1872, %v1884
  %v1886 = vpop.f32.mrf.mxu0
  %1887 = vdwg.mxu0
  %1888 = vmatpush.bf16.msra.mxu0 %v1279
  %1889 = vmatpush.bf16.msra.mxu0 %v1271
  %1890 = vmatpush.bf16.msra.mxu0 %v1263
  %1891 = vmatpush.bf16.msra.mxu0 %v1255
  %1892 = vmatpush.bf16.msra.mxu0 %v1247
  %1893 = vmatpush.bf16.msra.mxu0 %v1239
  %1894 = vmatpush.bf16.msra.mxu0 %v1231
  %1895 = vmatpush.bf16.msra.mxu0 %v1223
  %1896 = vmatmul.bf16.gmra.mxu0 %v316
  %v1897 = vpop.f32.mrf.mxu0
  %v1898 = vadd.f32 %v1885, %v1897
  %v1899 = vpop.f32.mrf.mxu0
  %1900 = vdwg.mxu0
  %1901 = vmatpush.bf16.msra.mxu0 %v1343
  %1902 = vmatpush.bf16.msra.mxu0 %v1335
  %1903 = vmatpush.bf16.msra.mxu0 %v1327
  %1904 = vmatpush.bf16.msra.mxu0 %v1319
  %1905 = vmatpush.bf16.msra.mxu0 %v1311
  %1906 = vmatpush.bf16.msra.mxu0 %v1303
  %1907 = vmatpush.bf16.msra.mxu0 %v1295
  %1908 = vmatpush.bf16.msra.mxu0 %v1287
  %1909 = vmatmul.bf16.gmra.mxu0 %v317
  %v1910 = vpop.f32.mrf.mxu0
  %v1911 = vadd.f32 %v1898, %v1910
  %v1912 = vpop.f32.mrf.mxu0
  %1913 = vdwg.mxu0
  %1914 = vmatpush.bf16.msra.mxu0 %v1152
  %1915 = vmatpush.bf16.msra.mxu0 %v1144
  %1916 = vmatpush.bf16.msra.mxu0 %v1136
  %1917 = vmatpush.bf16.msra.mxu0 %v1128
  %1918 = vmatpush.bf16.msra.mxu0 %v1120
  %1919 = vmatpush.bf16.msra.mxu0 %v1112
  %1920 = vmatpush.bf16.msra.mxu0 %v1104
  %1921 = vmatpush.bf16.msra.mxu0 %v1096
  %1922 = vmatmul.bf16.gmra.mxu0 %v314
  %v1923 = vpop.f32.mrf.mxu0
  %v1924 = vadd.f32 %v298, %v1923
  %v1925 = vpop.f32.mrf.mxu0
  %1926 = vdwg.mxu0
  %1927 = vmatpush.bf16.msra.mxu0 %v1216
  %1928 = vmatpush.bf16.msra.mxu0 %v1208
  %1929 = vmatpush.bf16.msra.mxu0 %v1200
  %1930 = vmatpush.bf16.msra.mxu0 %v1192
  %1931 = vmatpush.bf16.msra.mxu0 %v1184
  %1932 = vmatpush.bf16.msra.mxu0 %v1176
  %1933 = vmatpush.bf16.msra.mxu0 %v1168
  %1934 = vmatpush.bf16.msra.mxu0 %v1160
  %1935 = vmatmul.bf16.gmra.mxu0 %v315
  %v1936 = vpop.f32.mrf.mxu0
  %v1937 = vadd.f32 %v1924, %v1936
  %v1938 = vpop.f32.mrf.mxu0
  %1939 = vdwg.mxu0
  %1940 = vmatpush.bf16.msra.mxu0 %v1280
  %1941 = vmatpush.bf16.msra.mxu0 %v1272
  %1942 = vmatpush.bf16.msra.mxu0 %v1264
  %1943 = vmatpush.bf16.msra.mxu0 %v1256
  %1944 = vmatpush.bf16.msra.mxu0 %v1248
  %1945 = vmatpush.bf16.msra.mxu0 %v1240
  %1946 = vmatpush.bf16.msra.mxu0 %v1232
  %1947 = vmatpush.bf16.msra.mxu0 %v1224
  %1948 = vmatmul.bf16.gmra.mxu0 %v316
  %v1949 = vpop.f32.mrf.mxu0
  %v1950 = vadd.f32 %v1937, %v1949
  %v1951 = vpop.f32.mrf.mxu0
  %1952 = vdwg.mxu0
  %1953 = vmatpush.bf16.msra.mxu0 %v1344
  %1954 = vmatpush.bf16.msra.mxu0 %v1336
  %1955 = vmatpush.bf16.msra.mxu0 %v1328
  %1956 = vmatpush.bf16.msra.mxu0 %v1320
  %1957 = vmatpush.bf16.msra.mxu0 %v1312
  %1958 = vmatpush.bf16.msra.mxu0 %v1304
  %1959 = vmatpush.bf16.msra.mxu0 %v1296
  %1960 = vmatpush.bf16.msra.mxu0 %v1288
  %1961 = vmatmul.bf16.gmra.mxu0 %v317
  %v1962 = vpop.f32.mrf.mxu0
  %v1963 = vadd.f32 %v1950, %v1962
  %v1964 = vpop.f32.mrf.mxu0
  %1965 = vdwg.mxu0
  %1966 = vmatpush.bf16.msra.mxu0 %v1153
  %1967 = vmatpush.bf16.msra.mxu0 %v1145
  %1968 = vmatpush.bf16.msra.mxu0 %v1137
  %1969 = vmatpush.bf16.msra.mxu0 %v1129
  %1970 = vmatpush.bf16.msra.mxu0 %v1121
  %1971 = vmatpush.bf16.msra.mxu0 %v1113
  %1972 = vmatpush.bf16.msra.mxu0 %v1105
  %1973 = vmatpush.bf16.msra.mxu0 %v1097
  %1974 = vmatmul.bf16.gmra.mxu0 %v314
  %v1975 = vpop.f32.mrf.mxu0
  %v1976 = vadd.f32 %v299, %v1975
  %v1977 = vpop.f32.mrf.mxu0
  %1978 = vdwg.mxu0
  %1979 = vmatpush.bf16.msra.mxu0 %v1217
  %1980 = vmatpush.bf16.msra.mxu0 %v1209
  %1981 = vmatpush.bf16.msra.mxu0 %v1201
  %1982 = vmatpush.bf16.msra.mxu0 %v1193
  %1983 = vmatpush.bf16.msra.mxu0 %v1185
  %1984 = vmatpush.bf16.msra.mxu0 %v1177
  %1985 = vmatpush.bf16.msra.mxu0 %v1169
  %1986 = vmatpush.bf16.msra.mxu0 %v1161
  %1987 = vmatmul.bf16.gmra.mxu0 %v315
  %v1988 = vpop.f32.mrf.mxu0
  %v1989 = vadd.f32 %v1976, %v1988
  %v1990 = vpop.f32.mrf.mxu0
  %1991 = vdwg.mxu0
  %1992 = vmatpush.bf16.msra.mxu0 %v1281
  %1993 = vmatpush.bf16.msra.mxu0 %v1273
  %1994 = vmatpush.bf16.msra.mxu0 %v1265
  %1995 = vmatpush.bf16.msra.mxu0 %v1257
  %1996 = vmatpush.bf16.msra.mxu0 %v1249
  %1997 = vmatpush.bf16.msra.mxu0 %v1241
  %1998 = vmatpush.bf16.msra.mxu0 %v1233
  %1999 = vmatpush.bf16.msra.mxu0 %v1225
  %2000 = vmatmul.bf16.gmra.mxu0 %v316
  %v2001 = vpop.f32.mrf.mxu0
  %v2002 = vadd.f32 %v1989, %v2001
  %v2003 = vpop.f32.mrf.mxu0
  %2004 = vdwg.mxu0
  %2005 = vmatpush.bf16.msra.mxu0 %v1345
  %2006 = vmatpush.bf16.msra.mxu0 %v1337
  %2007 = vmatpush.bf16.msra.mxu0 %v1329
  %2008 = vmatpush.bf16.msra.mxu0 %v1321
  %2009 = vmatpush.bf16.msra.mxu0 %v1313
  %2010 = vmatpush.bf16.msra.mxu0 %v1305
  %2011 = vmatpush.bf16.msra.mxu0 %v1297
  %2012 = vmatpush.bf16.msra.mxu0 %v1289
  %2013 = vmatmul.bf16.gmra.mxu0 %v317
  %v2014 = vpop.f32.mrf.mxu0
  %v2015 = vadd.f32 %v2002, %v2014
  %v2016 = vpop.f32.mrf.mxu0
  %2017 = vdwg.mxu0
  %v2018 = vmax.f32 %v1651, 0.0
  %v2019 = vmax.f32 %v1703, 0.0
  %v2020 = vmax.f32 %v1755, 0.0
  %v2021 = vmax.f32 %v1807, 0.0
  %v2022 = vmax.f32 %v1859, 0.0
  %v2023 = vmax.f32 %v1911, 0.0
  %v2024 = vmax.f32 %v1963, 0.0
  %v2025 = vmax.f32 %v2015, 0.0
  %v2026 = vpack.c.bf16 %v2018, %v2018
  %v2027 = vpack.c.bf16 %v2019, %v2019
  %v2028 = vpack.c.bf16 %v2020, %v2020
  %v2029 = vpack.c.bf16 %v2021, %v2021
  %v2030 = vpack.c.bf16 %v2022, %v2022
  %v2031 = vpack.c.bf16 %v2023, %v2023
  %v2032 = vpack.c.bf16 %v2024, %v2024
  %v2033 = vpack.c.bf16 %v2025, %v2025
  %v2034 = vld [vmem:[%s3] sm:$0xff]
  %v2035 = vld [vmem:[%s3 + $0x8] sm:$0xff]
  %v2036 = vld [vmem:[%s3 + $0x10] sm:$0xff]
  %v2037 = vld [vmem:[%s3 + $0x18] sm:$0xff]
  %v2038 = vld [vmem:[%s3 + $0x20] sm:$0xff]
  %v2039 = vld [vmem:[%s3 + $0x28] sm:$0xff]
  %v2040 = vld [vmem:[%s3 + $0x30] sm:$0xff]
  %v2041 = vld [vmem:[%s3 + $0x38] sm:$0xff]
  %v2042 = vld [vmem:[%s3 + $0x40] sm:$0xff]
  %v2043 = vld [vmem:[%s3 + $0x48] sm:$0xff]
  %v2044 = vld [vmem:[%s3 + $0x50] sm:$0xff]
  %v2045 = vld [vmem:[%s3 + $0x58] sm:$0xff]
  %v2046 = vld [vmem:[%s3 + $0x60] sm:$0xff]
  %v2047 = vld [vmem:[%s3 + $0x68] sm:$0xff]
  %v2048 = vld [vmem:[%s3 + $0x70] sm:$0xff]
  %v2049 = vld [vmem:[%s3 + $0x78] sm:$0xff]
  %v2050 = vld [vmem:[%s3 + $0x80] sm:$0xff]
  %v2051 = vld [vmem:[%s3 + $0x88] sm:$0xff]
  %v2052 = vld [vmem:[%s3 + $0x90] sm:$0xff]
  %v2053 = vld [vmem:[%s3 + $0x98] sm:$0xff]
  %v2054 = vld [vmem:[%s3 + $0xa0] sm:$0xff]
  %v2055 = vld [vmem:[%s3 + $0xa8] sm:$0xff]
  %v2056 = vld [vmem:[%s3 + $0xb0] sm:$0xff]
  %v2057 = vld [vmem:[%s3 + $0xb8] sm:$0xff]
  %v2058 = vld [vmem:[%s3 + $0xc0] sm:$0xff]
  %v2059 = vld [vmem:[%s3 + $0xc8] sm:$0xff]
  %v2060 = vld [vmem:[%s3 + $0xd0] sm:$0xff]
  %v2061 = vld [vmem:[%s3 + $0xd8] sm:$0xff]
  %v2062 = vld [vmem:[%s3 + $0xe0] sm:$0xff]
  %v2063 = vld [vmem:[%s3 + $0xe8] sm:$0xff]
  %v2064 = vld [vmem:[%s3 + $0xf0] sm:$0xff]
  %v2065 = vld [vmem:[%s3 + $0xf8] sm:$0xff]
  %v2066 = vld [vmem:[%s3 + $0x100] sm:$0xff]
  %v2067 = vld [vmem:[%s3 + $0x108] sm:$0xff]
  %v2068 = vld [vmem:[%s3 + $0x110] sm:$0xff]
  %v2069 = vld [vmem:[%s3 + $0x118] sm:$0xff]
  %v2070 = vld [vmem:[%s3 + $0x120] sm:$0xff]
  %v2071 = vld [vmem:[%s3 + $0x128] sm:$0xff]
  %v2072 = vld [vmem:[%s3 + $0x130] sm:$0xff]
  %v2073 = vld [vmem:[%s3 + $0x138] sm:$0xff]
  %v2074 = vld [vmem:[%s3 + $0x140] sm:$0xff]
  %v2075 = vld [vmem:[%s3 + $0x148] sm:$0xff]
  %v2076 = vld [vmem:[%s3 + $0x150] sm:$0xff]
  %v2077 = vld [vmem:[%s3 + $0x158] sm:$0xff]
  %v2078 = vld [vmem:[%s3 + $0x160] sm:$0xff]
  %v2079 = vld [vmem:[%s3 + $0x168] sm:$0xff]
  %v2080 = vld [vmem:[%s3 + $0x170] sm:$0xff]
  %v2081 = vld [vmem:[%s3 + $0x178] sm:$0xff]
  %v2082 = vld [vmem:[%s3 + $0x180] sm:$0xff]
  %v2083 = vld [vmem:[%s3 + $0x188] sm:$0xff]
  %v2084 = vld [vmem:[%s3 + $0x190] sm:$0xff]
  %v2085 = vld [vmem:[%s3 + $0x198] sm:$0xff]
  %v2086 = vld [vmem:[%s3 + $0x1a0] sm:$0xff]
  %v2087 = vld [vmem:[%s3 + $0x1a8] sm:$0xff]
  %v2088 = vld [vmem:[%s3 + $0x1b0] sm:$0xff]
  %v2089 = vld [vmem:[%s3 + $0x1b8] sm:$0xff]
  %v2090 = vld [vmem:[%s3 + $0x1c0] sm:$0xff]
  %v2091 = vld [vmem:[%s3 + $0x1c8] sm:$0xff]
  %v2092 = vld [vmem:[%s3 + $0x1d0] sm:$0xff]
  %v2093 = vld [vmem:[%s3 + $0x1d8] sm:$0xff]
  %v2094 = vld [vmem:[%s3 + $0x1e0] sm:$0xff]
  %v2095 = vld [vmem:[%s3 + $0x1e8] sm:$0xff]
  %v2096 = vld [vmem:[%s3 + $0x1f0] sm:$0xff]
  %v2097 = vld [vmem:[%s3 + $0x1f8] sm:$0xff]
  %v2098 = vld [vmem:[%s3 + $0x200] sm:$0xff]
  %v2099 = vld [vmem:[%s3 + $0x208] sm:$0xff]
  %v2100 = vld [vmem:[%s3 + $0x210] sm:$0xff]
  %v2101 = vld [vmem:[%s3 + $0x218] sm:$0xff]
  %v2102 = vld [vmem:[%s3 + $0x220] sm:$0xff]
  %v2103 = vld [vmem:[%s3 + $0x228] sm:$0xff]
  %v2104 = vld [vmem:[%s3 + $0x230] sm:$0xff]
  %v2105 = vld [vmem:[%s3 + $0x238] sm:$0xff]
  %v2106 = vld [vmem:[%s3 + $0x240] sm:$0xff]
  %v2107 = vld [vmem:[%s3 + $0x248] sm:$0xff]
  %v2108 = vld [vmem:[%s3 + $0x250] sm:$0xff]
  %v2109 = vld [vmem:[%s3 + $0x258] sm:$0xff]
  %v2110 = vld [vmem:[%s3 + $0x260] sm:$0xff]
  %v2111 = vld [vmem:[%s3 + $0x268] sm:$0xff]
  %v2112 = vld [vmem:[%s3 + $0x270] sm:$0xff]
  %v2113 = vld [vmem:[%s3 + $0x278] sm:$0xff]
  %v2114 = vld [vmem:[%s3 + $0x280] sm:$0xff]
  %v2115 = vld [vmem:[%s3 + $0x288] sm:$0xff]
  %v2116 = vld [vmem:[%s3 + $0x290] sm:$0xff]
  %v2117 = vld [vmem:[%s3 + $0x298] sm:$0xff]
  %v2118 = vld [vmem:[%s3 + $0x2a0] sm:$0xff]
  %v2119 = vld [vmem:[%s3 + $0x2a8] sm:$0xff]
  %v2120 = vld [vmem:[%s3 + $0x2b0] sm:$0xff]
  %v2121 = vld [vmem:[%s3 + $0x2b8] sm:$0xff]
  %v2122 = vld [vmem:[%s3 + $0x2c0] sm:$0xff]
  %v2123 = vld [vmem:[%s3 + $0x2c8] sm:$0xff]
  %v2124 = vld [vmem:[%s3 + $0x2d0] sm:$0xff]
  %v2125 = vld [vmem:[%s3 + $0x2d8] sm:$0xff]
  %v2126 = vld [vmem:[%s3 + $0x2e0] sm:$0xff]
  %v2127 = vld [vmem:[%s3 + $0x2e8] sm:$0xff]
  %v2128 = vld [vmem:[%s3 + $0x2f0] sm:$0xff]
  %v2129 = vld [vmem:[%s3 + $0x2f8] sm:$0xff]
  %v2130 = vld [vmem:[%s3 + $0x300] sm:$0xff]
  %v2131 = vld [vmem:[%s3 + $0x308] sm:$0xff]
  %v2132 = vld [vmem:[%s3 + $0x310] sm:$0xff]
  %v2133 = vld [vmem:[%s3 + $0x318] sm:$0xff]
  %v2134 = vld [vmem:[%s3 + $0x320] sm:$0xff]
  %v2135 = vld [vmem:[%s3 + $0x328] sm:$0xff]
  %v2136 = vld [vmem:[%s3 + $0x330] sm:$0xff]
  %v2137 = vld [vmem:[%s3 + $0x338] sm:$0xff]
  %v2138 = vld [vmem:[%s3 + $0x340] sm:$0xff]
  %v2139 = vld [vmem:[%s3 + $0x348] sm:$0xff]
  %v2140 = vld [vmem:[%s3 + $0x350] sm:$0xff]
  %v2141 = vld [vmem:[%s3 + $0x358] sm:$0xff]
  %v2142 = vld [vmem:[%s3 + $0x360] sm:$0xff]
  %v2143 = vld [vmem:[%s3 + $0x368] sm:$0xff]
  %v2144 = vld [vmem:[%s3 + $0x370] sm:$0xff]
  %v2145 = vld [vmem:[%s3 + $0x378] sm:$0xff]
  %v2146 = vld [vmem:[%s3 + $0x380] sm:$0xff]
  %v2147 = vld [vmem:[%s3 + $0x388] sm:$0xff]
  %v2148 = vld [vmem:[%s3 + $0x390] sm:$0xff]
  %v2149 = vld [vmem:[%s3 + $0x398] sm:$0xff]
  %v2150 = vld [vmem:[%s3 + $0x3a0] sm:$0xff]
  %v2151 = vld [vmem:[%s3 + $0x3a8] sm:$0xff]
  %v2152 = vld [vmem:[%s3 + $0x3b0] sm:$0xff]
  %v2153 = vld [vmem:[%s3 + $0x3b8] sm:$0xff]
  %v2154 = vld [vmem:[%s3 + $0x3c0] sm:$0xff]
  %v2155 = vld [vmem:[%s3 + $0x3c8] sm:$0xff]
  %v2156 = vld [vmem:[%s3 + $0x3d0] sm:$0xff]
  %v2157 = vld [vmem:[%s3 + $0x3d8] sm:$0xff]
  %v2158 = vld [vmem:[%s3 + $0x3e0] sm:$0xff]
  %v2159 = vld [vmem:[%s3 + $0x3e8] sm:$0xff]
  %v2160 = vld [vmem:[%s3 + $0x3f0] sm:$0xff]
  %v2161 = vld [vmem:[%s3 + $0x3f8] sm:$0xff]
  %v2162 = vld [vmem:[%s3 + $0x400] sm:$0xff]
  %v2163 = vld [vmem:[%s3 + $0x408] sm:$0xff]
  %v2164 = vld [vmem:[%s3 + $0x410] sm:$0xff]
  %v2165 = vld [vmem:[%s3 + $0x418] sm:$0xff]
  %v2166 = vld [vmem:[%s3 + $0x420] sm:$0xff]
  %v2167 = vld [vmem:[%s3 + $0x428] sm:$0xff]
  %v2168 = vld [vmem:[%s3 + $0x430] sm:$0xff]
  %v2169 = vld [vmem:[%s3 + $0x438] sm:$0xff]
  %v2170 = vld [vmem:[%s3 + $0x440] sm:$0xff]
  %v2171 = vld [vmem:[%s3 + $0x448] sm:$0xff]
  %v2172 = vld [vmem:[%s3 + $0x450] sm:$0xff]
  %v2173 = vld [vmem:[%s3 + $0x458] sm:$0xff]
  %v2174 = vld [vmem:[%s3 + $0x460] sm:$0xff]
  %v2175 = vld [vmem:[%s3 + $0x468] sm:$0xff]
  %v2176 = vld [vmem:[%s3 + $0x470] sm:$0xff]
  %v2177 = vld [vmem:[%s3 + $0x478] sm:$0xff]
  %v2178 = vld [vmem:[%s3 + $0x480] sm:$0xff]
  %v2179 = vld [vmem:[%s3 + $0x488] sm:$0xff]
  %v2180 = vld [vmem:[%s3 + $0x490] sm:$0xff]
  %v2181 = vld [vmem:[%s3 + $0x498] sm:$0xff]
  %v2182 = vld [vmem:[%s3 + $0x4a0] sm:$0xff]
  %v2183 = vld [vmem:[%s3 + $0x4a8] sm:$0xff]
  %v2184 = vld [vmem:[%s3 + $0x4b0] sm:$0xff]
  %v2185 = vld [vmem:[%s3 + $0x4b8] sm:$0xff]
  %v2186 = vld [vmem:[%s3 + $0x4c0] sm:$0xff]
  %v2187 = vld [vmem:[%s3 + $0x4c8] sm:$0xff]
  %v2188 = vld [vmem:[%s3 + $0x4d0] sm:$0xff]
  %v2189 = vld [vmem:[%s3 + $0x4d8] sm:$0xff]
  %v2190 = vld [vmem:[%s3 + $0x4e0] sm:$0xff]
  %v2191 = vld [vmem:[%s3 + $0x4e8] sm:$0xff]
  %v2192 = vld [vmem:[%s3 + $0x4f0] sm:$0xff]
  %v2193 = vld [vmem:[%s3 + $0x4f8] sm:$0xff]
  %v2194 = vld [vmem:[%s3 + $0x500] sm:$0xff]
  %v2195 = vld [vmem:[%s3 + $0x508] sm:$0xff]
  %v2196 = vld [vmem:[%s3 + $0x510] sm:$0xff]
  %v2197 = vld [vmem:[%s3 + $0x518] sm:$0xff]
  %v2198 = vld [vmem:[%s3 + $0x520] sm:$0xff]
  %v2199 = vld [vmem:[%s3 + $0x528] sm:$0xff]
  %v2200 = vld [vmem:[%s3 + $0x530] sm:$0xff]
  %v2201 = vld [vmem:[%s3 + $0x538] sm:$0xff]
  %v2202 = vld [vmem:[%s3 + $0x540] sm:$0xff]
  %v2203 = vld [vmem:[%s3 + $0x548] sm:$0xff]
  %v2204 = vld [vmem:[%s3 + $0x550] sm:$0xff]
  %v2205 = vld [vmem:[%s3 + $0x558] sm:$0xff]
  %v2206 = vld [vmem:[%s3 + $0x560] sm:$0xff]
  %v2207 = vld [vmem:[%s3 + $0x568] sm:$0xff]
  %v2208 = vld [vmem:[%s3 + $0x570] sm:$0xff]
  %v2209 = vld [vmem:[%s3 + $0x578] sm:$0xff]
  %v2210 = vld [vmem:[%s3 + $0x580] sm:$0xff]
  %v2211 = vld [vmem:[%s3 + $0x588] sm:$0xff]
  %v2212 = vld [vmem:[%s3 + $0x590] sm:$0xff]
  %v2213 = vld [vmem:[%s3 + $0x598] sm:$0xff]
  %v2214 = vld [vmem:[%s3 + $0x5a0] sm:$0xff]
  %v2215 = vld [vmem:[%s3 + $0x5a8] sm:$0xff]
  %v2216 = vld [vmem:[%s3 + $0x5b0] sm:$0xff]
  %v2217 = vld [vmem:[%s3 + $0x5b8] sm:$0xff]
  %v2218 = vld [vmem:[%s3 + $0x5c0] sm:$0xff]
  %v2219 = vld [vmem:[%s3 + $0x5c8] sm:$0xff]
  %v2220 = vld [vmem:[%s3 + $0x5d0] sm:$0xff]
  %v2221 = vld [vmem:[%s3 + $0x5d8] sm:$0xff]
  %v2222 = vld [vmem:[%s3 + $0x5e0] sm:$0xff]
  %v2223 = vld [vmem:[%s3 + $0x5e8] sm:$0xff]
  %v2224 = vld [vmem:[%s3 + $0x5f0] sm:$0xff]
  %v2225 = vld [vmem:[%s3 + $0x5f8] sm:$0xff]
  %v2226 = vld [vmem:[%s3 + $0x600] sm:$0xff]
  %v2227 = vld [vmem:[%s3 + $0x608] sm:$0xff]
  %v2228 = vld [vmem:[%s3 + $0x610] sm:$0xff]
  %v2229 = vld [vmem:[%s3 + $0x618] sm:$0xff]
  %v2230 = vld [vmem:[%s3 + $0x620] sm:$0xff]
  %v2231 = vld [vmem:[%s3 + $0x628] sm:$0xff]
  %v2232 = vld [vmem:[%s3 + $0x630] sm:$0xff]
  %v2233 = vld [vmem:[%s3 + $0x638] sm:$0xff]
  %v2234 = vld [vmem:[%s3 + $0x640] sm:$0xff]
  %v2235 = vld [vmem:[%s3 + $0x648] sm:$0xff]
  %v2236 = vld [vmem:[%s3 + $0x650] sm:$0xff]
  %v2237 = vld [vmem:[%s3 + $0x658] sm:$0xff]
  %v2238 = vld [vmem:[%s3 + $0x660] sm:$0xff]
  %v2239 = vld [vmem:[%s3 + $0x668] sm:$0xff]
  %v2240 = vld [vmem:[%s3 + $0x670] sm:$0xff]
  %v2241 = vld [vmem:[%s3 + $0x678] sm:$0xff]
  %v2242 = vld [vmem:[%s3 + $0x680] sm:$0xff]
  %v2243 = vld [vmem:[%s3 + $0x688] sm:$0xff]
  %v2244 = vld [vmem:[%s3 + $0x690] sm:$0xff]
  %v2245 = vld [vmem:[%s3 + $0x698] sm:$0xff]
  %v2246 = vld [vmem:[%s3 + $0x6a0] sm:$0xff]
  %v2247 = vld [vmem:[%s3 + $0x6a8] sm:$0xff]
  %v2248 = vld [vmem:[%s3 + $0x6b0] sm:$0xff]
  %v2249 = vld [vmem:[%s3 + $0x6b8] sm:$0xff]
  %v2250 = vld [vmem:[%s3 + $0x6c0] sm:$0xff]
  %v2251 = vld [vmem:[%s3 + $0x6c8] sm:$0xff]
  %v2252 = vld [vmem:[%s3 + $0x6d0] sm:$0xff]
  %v2253 = vld [vmem:[%s3 + $0x6d8] sm:$0xff]
  %v2254 = vld [vmem:[%s3 + $0x6e0] sm:$0xff]
  %v2255 = vld [vmem:[%s3 + $0x6e8] sm:$0xff]
  %v2256 = vld [vmem:[%s3 + $0x6f0] sm:$0xff]
  %v2257 = vld [vmem:[%s3 + $0x6f8] sm:$0xff]
  %v2258 = vld [vmem:[%s3 + $0x700] sm:$0xff]
  %v2259 = vld [vmem:[%s3 + $0x708] sm:$0xff]
  %v2260 = vld [vmem:[%s3 + $0x710] sm:$0xff]
  %v2261 = vld [vmem:[%s3 + $0x718] sm:$0xff]
  %v2262 = vld [vmem:[%s3 + $0x720] sm:$0xff]
  %v2263 = vld [vmem:[%s3 + $0x728] sm:$0xff]
  %v2264 = vld [vmem:[%s3 + $0x730] sm:$0xff]
  %v2265 = vld [vmem:[%s3 + $0x738] sm:$0xff]
  %v2266 = vld [vmem:[%s3 + $0x740] sm:$0xff]
  %v2267 = vld [vmem:[%s3 + $0x748] sm:$0xff]
  %v2268 = vld [vmem:[%s3 + $0x750] sm:$0xff]
  %v2269 = vld [vmem:[%s3 + $0x758] sm:$0xff]
  %v2270 = vld [vmem:[%s3 + $0x760] sm:$0xff]
  %v2271 = vld [vmem:[%s3 + $0x768] sm:$0xff]
  %v2272 = vld [vmem:[%s3 + $0x770] sm:$0xff]
  %v2273 = vld [vmem:[%s3 + $0x778] sm:$0xff]
  %v2274 = vld [vmem:[%s3 + $0x780] sm:$0xff]
  %v2275 = vld [vmem:[%s3 + $0x788] sm:$0xff]
  %v2276 = vld [vmem:[%s3 + $0x790] sm:$0xff]
  %v2277 = vld [vmem:[%s3 + $0x798] sm:$0xff]
  %v2278 = vld [vmem:[%s3 + $0x7a0] sm:$0xff]
  %v2279 = vld [vmem:[%s3 + $0x7a8] sm:$0xff]
  %v2280 = vld [vmem:[%s3 + $0x7b0] sm:$0xff]
  %v2281 = vld [vmem:[%s3 + $0x7b8] sm:$0xff]
  %v2282 = vld [vmem:[%s3 + $0x7c0] sm:$0xff]
  %v2283 = vld [vmem:[%s3 + $0x7c8] sm:$0xff]
  %v2284 = vld [vmem:[%s3 + $0x7d0] sm:$0xff]
  %v2285 = vld [vmem:[%s3 + $0x7d8] sm:$0xff]
  %v2286 = vld [vmem:[%s3 + $0x7e0] sm:$0xff]
  %v2287 = vld [vmem:[%s3 + $0x7e8] sm:$0xff]
  %v2288 = vld [vmem:[%s3 + $0x7f0] sm:$0xff]
  %v2289 = vld [vmem:[%s3 + $0x7f8] sm:$0xff]
  %v2290 = vld [vmem:[%s4] sm:$0xf]
  %v2292 = vperm.slane %v2290, 0
  %v2293 = vperm.slane %v2290, 1
  %v2294 = vperm.slane %v2290, 2
  %v2295 = vperm.slane %v2290, 3
  %v2556 = vunpack.c.l.b16 %v2034
  %v2557 = vunpack.c.h.b16 %v2034
  %v2558 = vunpack.c.l.b16 %v2035
  %v2559 = vunpack.c.h.b16 %v2035
  %v2560 = vunpack.c.l.b16 %v2036
  %v2561 = vunpack.c.h.b16 %v2036
  %v2562 = vunpack.c.l.b16 %v2037
  %v2563 = vunpack.c.h.b16 %v2037
  %v2564 = vunpack.c.l.b16 %v2038
  %v2565 = vunpack.c.h.b16 %v2038
  %v2566 = vunpack.c.l.b16 %v2039
  %v2567 = vunpack.c.h.b16 %v2039
  %v2568 = vunpack.c.l.b16 %v2040
  %v2569 = vunpack.c.h.b16 %v2040
  %v2570 = vunpack.c.l.b16 %v2041
  %v2571 = vunpack.c.h.b16 %v2041
  %v2572 = vunpack.c.l.b16 %v2042
  %v2573 = vunpack.c.h.b16 %v2042
  %v2574 = vunpack.c.l.b16 %v2043
  %v2575 = vunpack.c.h.b16 %v2043
  %v2576 = vunpack.c.l.b16 %v2044
  %v2577 = vunpack.c.h.b16 %v2044
  %v2578 = vunpack.c.l.b16 %v2045
  %v2579 = vunpack.c.h.b16 %v2045
  %v2580 = vunpack.c.l.b16 %v2046
  %v2581 = vunpack.c.h.b16 %v2046
  %v2582 = vunpack.c.l.b16 %v2047
  %v2583 = vunpack.c.h.b16 %v2047
  %v2584 = vunpack.c.l.b16 %v2048
  %v2585 = vunpack.c.h.b16 %v2048
  %v2586 = vunpack.c.l.b16 %v2049
  %v2587 = vunpack.c.h.b16 %v2049
  %v2588 = vunpack.c.l.b16 %v2050
  %v2589 = vunpack.c.h.b16 %v2050
  %v2590 = vunpack.c.l.b16 %v2051
  %v2591 = vunpack.c.h.b16 %v2051
  %v2592 = vunpack.c.l.b16 %v2052
  %v2593 = vunpack.c.h.b16 %v2052
  %v2594 = vunpack.c.l.b16 %v2053
  %v2595 = vunpack.c.h.b16 %v2053
  %v2596 = vunpack.c.l.b16 %v2054
  %v2597 = vunpack.c.h.b16 %v2054
  %v2598 = vunpack.c.l.b16 %v2055
  %v2599 = vunpack.c.h.b16 %v2055
  %v2600 = vunpack.c.l.b16 %v2056
  %v2601 = vunpack.c.h.b16 %v2056
  %v2602 = vunpack.c.l.b16 %v2057
  %v2603 = vunpack.c.h.b16 %v2057
  %v2604 = vunpack.c.l.b16 %v2058
  %v2605 = vunpack.c.h.b16 %v2058
  %v2606 = vunpack.c.l.b16 %v2059
  %v2607 = vunpack.c.h.b16 %v2059
  %v2608 = vunpack.c.l.b16 %v2060
  %v2609 = vunpack.c.h.b16 %v2060
  %v2610 = vunpack.c.l.b16 %v2061
  %v2611 = vunpack.c.h.b16 %v2061
  %v2612 = vunpack.c.l.b16 %v2062
  %v2613 = vunpack.c.h.b16 %v2062
  %v2614 = vunpack.c.l.b16 %v2063
  %v2615 = vunpack.c.h.b16 %v2063
  %v2616 = vunpack.c.l.b16 %v2064
  %v2617 = vunpack.c.h.b16 %v2064
  %v2618 = vunpack.c.l.b16 %v2065
  %v2619 = vunpack.c.h.b16 %v2065
  %v2620 = vunpack.c.l.b16 %v2066
  %v2621 = vunpack.c.h.b16 %v2066
  %v2622 = vunpack.c.l.b16 %v2067
  %v2623 = vunpack.c.h.b16 %v2067
  %v2624 = vunpack.c.l.b16 %v2068
  %v2625 = vunpack.c.h.b16 %v2068
  %v2626 = vunpack.c.l.b16 %v2069
  %v2627 = vunpack.c.h.b16 %v2069
  %v2628 = vunpack.c.l.b16 %v2070
  %v2629 = vunpack.c.h.b16 %v2070
  %v2630 = vunpack.c.l.b16 %v2071
  %v2631 = vunpack.c.h.b16 %v2071
  %v2632 = vunpack.c.l.b16 %v2072
  %v2633 = vunpack.c.h.b16 %v2072
  %v2634 = vunpack.c.l.b16 %v2073
  %v2635 = vunpack.c.h.b16 %v2073
  %v2636 = vunpack.c.l.b16 %v2074
  %v2637 = vunpack.c.h.b16 %v2074
  %v2638 = vunpack.c.l.b16 %v2075
  %v2639 = vunpack.c.h.b16 %v2075
  %v2640 = vunpack.c.l.b16 %v2076
  %v2641 = vunpack.c.h.b16 %v2076
  %v2642 = vunpack.c.l.b16 %v2077
  %v2643 = vunpack.c.h.b16 %v2077
  %v2644 = vunpack.c.l.b16 %v2078
  %v2645 = vunpack.c.h.b16 %v2078
  %v2646 = vunpack.c.l.b16 %v2079
  %v2647 = vunpack.c.h.b16 %v2079
  %v2648 = vunpack.c.l.b16 %v2080
  %v2649 = vunpack.c.h.b16 %v2080
  %v2650 = vunpack.c.l.b16 %v2081
  %v2651 = vunpack.c.h.b16 %v2081
  %v2652 = vunpack.c.l.b16 %v2082
  %v2653 = vunpack.c.h.b16 %v2082
  %v2654 = vunpack.c.l.b16 %v2083
  %v2655 = vunpack.c.h.b16 %v2083
  %v2656 = vunpack.c.l.b16 %v2084
  %v2657 = vunpack.c.h.b16 %v2084
  %v2658 = vunpack.c.l.b16 %v2085
  %v2659 = vunpack.c.h.b16 %v2085
  %v2660 = vunpack.c.l.b16 %v2086
  %v2661 = vunpack.c.h.b16 %v2086
  %v2662 = vunpack.c.l.b16 %v2087
  %v2663 = vunpack.c.h.b16 %v2087
  %v2664 = vunpack.c.l.b16 %v2088
  %v2665 = vunpack.c.h.b16 %v2088
  %v2666 = vunpack.c.l.b16 %v2089
  %v2667 = vunpack.c.h.b16 %v2089
  %v2668 = vunpack.c.l.b16 %v2090
  %v2669 = vunpack.c.h.b16 %v2090
  %v2670 = vunpack.c.l.b16 %v2091
  %v2671 = vunpack.c.h.b16 %v2091
  %v2672 = vunpack.c.l.b16 %v2092
  %v2673 = vunpack.c.h.b16 %v2092
  %v2674 = vunpack.c.l.b16 %v2093
  %v2675 = vunpack.c.h.b16 %v2093
  %v2676 = vunpack.c.l.b16 %v2094
  %v2677 = vunpack.c.h.b16 %v2094
  %v2678 = vunpack.c.l.b16 %v2095
  %v2679 = vunpack.c.h.b16 %v2095
  %v2680 = vunpack.c.l.b16 %v2096
  %v2681 = vunpack.c.h.b16 %v2096
  %v2682 = vunpack.c.l.b16 %v2097
  %v2683 = vunpack.c.h.b16 %v2097
  %v2684 = vunpack.c.l.b16 %v2098
  %v2685 = vunpack.c.h.b16 %v2098
  %v2686 = vunpack.c.l.b16 %v2099
  %v2687 = vunpack.c.h.b16 %v2099
  %v2688 = vunpack.c.l.b16 %v2100
  %v2689 = vunpack.c.h.b16 %v2100
  %v2690 = vunpack.c.l.b16 %v2101
  %v2691 = vunpack.c.h.b16 %v2101
  %v2692 = vunpack.c.l.b16 %v2102
  %v2693 = vunpack.c.h.b16 %v2102
  %v2694 = vunpack.c.l.b16 %v2103
  %v2695 = vunpack.c.h.b16 %v2103
  %v2696 = vunpack.c.l.b16 %v2104
  %v2697 = vunpack.c.h.b16 %v2104
  %v2698 = vunpack.c.l.b16 %v2105
  %v2699 = vunpack.c.h.b16 %v2105
  %v2700 = vunpack.c.l.b16 %v2106
  %v2701 = vunpack.c.h.b16 %v2106
  %v2702 = vunpack.c.l.b16 %v2107
  %v2703 = vunpack.c.h.b16 %v2107
  %v2704 = vunpack.c.l.b16 %v2108
  %v2705 = vunpack.c.h.b16 %v2108
  %v2706 = vunpack.c.l.b16 %v2109
  %v2707 = vunpack.c.h.b16 %v2109
  %v2708 = vunpack.c.l.b16 %v2110
  %v2709 = vunpack.c.h.b16 %v2110
  %v2710 = vunpack.c.l.b16 %v2111
  %v2711 = vunpack.c.h.b16 %v2111
  %v2712 = vunpack.c.l.b16 %v2112
  %v2713 = vunpack.c.h.b16 %v2112
  %v2714 = vunpack.c.l.b16 %v2113
  %v2715 = vunpack.c.h.b16 %v2113
  %v2716 = vunpack.c.l.b16 %v2114
  %v2717 = vunpack.c.h.b16 %v2114
  %v2718 = vunpack.c.l.b16 %v2115
  %v2719 = vunpack.c.h.b16 %v2115
  %v2720 = vunpack.c.l.b16 %v2116
  %v2721 = vunpack.c.h.b16 %v2116
  %v2722 = vunpack.c.l.b16 %v2117
  %v2723 = vunpack.c.h.b16 %v2117
  %v2724 = vunpack.c.l.b16 %v2118
  %v2725 = vunpack.c.h.b16 %v2118
  %v2726 = vunpack.c.l.b16 %v2119
  %v2727 = vunpack.c.h.b16 %v2119
  %v2728 = vunpack.c.l.b16 %v2120
  %v2729 = vunpack.c.h.b16 %v2120
  %v2730 = vunpack.c.l.b16 %v2121
  %v2731 = vunpack.c.h.b16 %v2121
  %v2732 = vunpack.c.l.b16 %v2122
  %v2733 = vunpack.c.h.b16 %v2122
  %v2734 = vunpack.c.l.b16 %v2123
  %v2735 = vunpack.c.h.b16 %v2123
  %v2736 = vunpack.c.l.b16 %v2124
  %v2737 = vunpack.c.h.b16 %v2124
  %v2738 = vunpack.c.l.b16 %v2125
  %v2739 = vunpack.c.h.b16 %v2125
  %v2740 = vunpack.c.l.b16 %v2126
  %v2741 = vunpack.c.h.b16 %v2126
  %v2742 = vunpack.c.l.b16 %v2127
  %v2743 = vunpack.c.h.b16 %v2127
  %v2744 = vunpack.c.l.b16 %v2128
  %v2745 = vunpack.c.h.b16 %v2128
  %v2746 = vunpack.c.l.b16 %v2129
  %v2747 = vunpack.c.h.b16 %v2129
  %v2748 = vunpack.c.l.b16 %v2130
  %v2749 = vunpack.c.h.b16 %v2130
  %v2750 = vunpack.c.l.b16 %v2131
  %v2751 = vunpack.c.h.b16 %v2131
  %v2752 = vunpack.c.l.b16 %v2132
  %v2753 = vunpack.c.h.b16 %v2132
  %v2754 = vunpack.c.l.b16 %v2133
  %v2755 = vunpack.c.h.b16 %v2133
  %v2756 = vunpack.c.l.b16 %v2134
  %v2757 = vunpack.c.h.b16 %v2134
  %v2758 = vunpack.c.l.b16 %v2135
  %v2759 = vunpack.c.h.b16 %v2135
  %v2760 = vunpack.c.l.b16 %v2136
  %v2761 = vunpack.c.h.b16 %v2136
  %v2762 = vunpack.c.l.b16 %v2137
  %v2763 = vunpack.c.h.b16 %v2137
  %v2764 = vunpack.c.l.b16 %v2138
  %v2765 = vunpack.c.h.b16 %v2138
  %v2766 = vunpack.c.l.b16 %v2139
  %v2767 = vunpack.c.h.b16 %v2139
  %v2768 = vunpack.c.l.b16 %v2140
  %v2769 = vunpack.c.h.b16 %v2140
  %v2770 = vunpack.c.l.b16 %v2141
  %v2771 = vunpack.c.h.b16 %v2141
  %v2772 = vunpack.c.l.b16 %v2142
  %v2773 = vunpack.c.h.b16 %v2142
  %v2774 = vunpack.c.l.b16 %v2143
  %v2775 = vunpack.c.h.b16 %v2143
  %v2776 = vunpack.c.l.b16 %v2144
  %v2777 = vunpack.c.h.b16 %v2144
  %v2778 = vunpack.c.l.b16 %v2145
  %v2779 = vunpack.c.h.b16 %v2145
  %v2780 = vunpack.c.l.b16 %v2146
  %v2781 = vunpack.c.h.b16 %v2146
  %v2782 = vunpack.c.l.b16 %v2147
  %v2783 = vunpack.c.h.b16 %v2147
  %v2784 = vunpack.c.l.b16 %v2148
  %v2785 = vunpack.c.h.b16 %v2148
  %v2786 = vunpack.c.l.b16 %v2149
  %v2787 = vunpack.c.h.b16 %v2149
  %v2788 = vunpack.c.l.b16 %v2150
  %v2789 = vunpack.c.h.b16 %v2150
  %v2790 = vunpack.c.l.b16 %v2151
  %v2791 = vunpack.c.h.b16 %v2151
  %v2792 = vunpack.c.l.b16 %v2152
  %v2793 = vunpack.c.h.b16 %v2152
  %v2794 = vunpack.c.l.b16 %v2153
  %v2795 = vunpack.c.h.b16 %v2153
  %v2796 = vunpack.c.l.b16 %v2154
  %v2797 = vunpack.c.h.b16 %v2154
  %v2798 = vunpack.c.l.b16 %v2155
  %v2799 = vunpack.c.h.b16 %v2155
  %v2800 = vunpack.c.l.b16 %v2156
  %v2801 = vunpack.c.h.b16 %v2156
  %v2802 = vunpack.c.l.b16 %v2157
  %v2803 = vunpack.c.h.b16 %v2157
  %v2804 = vunpack.c.l.b16 %v2158
  %v2805 = vunpack.c.h.b16 %v2158
  %v2806 = vunpack.c.l.b16 %v2159
  %v2807 = vunpack.c.h.b16 %v2159
  %v2808 = vunpack.c.l.b16 %v2160
  %v2809 = vunpack.c.h.b16 %v2160
  %v2810 = vunpack.c.l.b16 %v2161
  %v2811 = vunpack.c.h.b16 %v2161
  %v2812 = vunpack.c.l.b16 %v2162
  %v2813 = vunpack.c.h.b16 %v2162
  %v2814 = vunpack.c.l.b16 %v2163
  %v2815 = vunpack.c.h.b16 %v2163
  %v2816 = vunpack.c.l.b16 %v2164
  %v2817 = vunpack.c.h.b16 %v2164
  %v2818 = vunpack.c.l.b16 %v2165
  %v2819 = vunpack.c.h.b16 %v2165
  %v2820 = vunpack.c.l.b16 %v2166
  %v2821 = vunpack.c.h.b16 %v2166
  %v2822 = vunpack.c.l.b16 %v2167
  %v2823 = vunpack.c.h.b16 %v2167
  %v2824 = vunpack.c.l.b16 %v2168
  %v2825 = vunpack.c.h.b16 %v2168
  %v2826 = vunpack.c.l.b16 %v2169
  %v2827 = vunpack.c.h.b16 %v2169
  %v2828 = vunpack.c.l.b16 %v2170
  %v2829 = vunpack.c.h.b16 %v2170
  %v2830 = vunpack.c.l.b16 %v2171
  %v2831 = vunpack.c.h.b16 %v2171
  %v2832 = vunpack.c.l.b16 %v2172
  %v2833 = vunpack.c.h.b16 %v2172
  %v2834 = vunpack.c.l.b16 %v2173
  %v2835 = vunpack.c.h.b16 %v2173
  %v2836 = vunpack.c.l.b16 %v2174
  %v2837 = vunpack.c.h.b16 %v2174
  %v2838 = vunpack.c.l.b16 %v2175
  %v2839 = vunpack.c.h.b16 %v2175
  %v2840 = vunpack.c.l.b16 %v2176
  %v2841 = vunpack.c.h.b16 %v2176
  %v2842 = vunpack.c.l.b16 %v2177
  %v2843 = vunpack.c.h.b16 %v2177
  %v2844 = vunpack.c.l.b16 %v2178
  %v2845 = vunpack.c.h.b16 %v2178
  %v2846 = vunpack.c.l.b16 %v2179
  %v2847 = vunpack.c.h.b16 %v2179
  %v2848 = vunpack.c.l.b16 %v2180
  %v2849 = vunpack.c.h.b16 %v2180
  %v2850 = vunpack.c.l.b16 %v2181
  %v2851 = vunpack.c.h.b16 %v2181
  %v2852 = vunpack.c.l.b16 %v2182
  %v2853 = vunpack.c.h.b16 %v2182
  %v2854 = vunpack.c.l.b16 %v2183
  %v2855 = vunpack.c.h.b16 %v2183
  %v2856 = vunpack.c.l.b16 %v2184
  %v2857 = vunpack.c.h.b16 %v2184
  %v2858 = vunpack.c.l.b16 %v2185
  %v2859 = vunpack.c.h.b16 %v2185
  %v2860 = vunpack.c.l.b16 %v2186
  %v2861 = vunpack.c.h.b16 %v2186
  %v2862 = vunpack.c.l.b16 %v2187
  %v2863 = vunpack.c.h.b16 %v2187
  %v2864 = vunpack.c.l.b16 %v2188
  %v2865 = vunpack.c.h.b16 %v2188
  %v2866 = vunpack.c.l.b16 %v2189
  %v2867 = vunpack.c.h.b16 %v2189
  %v2868 = vunpack.c.l.b16 %v2190
  %v2869 = vunpack.c.h.b16 %v2190
  %v2870 = vunpack.c.l.b16 %v2191
  %v2871 = vunpack.c.h.b16 %v2191
  %v2872 = vunpack.c.l.b16 %v2192
  %v2873 = vunpack.c.h.b16 %v2192
  %v2874 = vunpack.c.l.b16 %v2193
  %v2875 = vunpack.c.h.b16 %v2193
  %v2876 = vunpack.c.l.b16 %v2194
  %v2877 = vunpack.c.h.b16 %v2194
  %v2878 = vunpack.c.l.b16 %v2195
  %v2879 = vunpack.c.h.b16 %v2195
  %v2880 = vunpack.c.l.b16 %v2196
  %v2881 = vunpack.c.h.b16 %v2196
  %v2882 = vunpack.c.l.b16 %v2197
  %v2883 = vunpack.c.h.b16 %v2197
  %v2884 = vunpack.c.l.b16 %v2198
  %v2885 = vunpack.c.h.b16 %v2198
  %v2886 = vunpack.c.l.b16 %v2199
  %v2887 = vunpack.c.h.b16 %v2199
  %v2888 = vunpack.c.l.b16 %v2200
  %v2889 = vunpack.c.h.b16 %v2200
  %v2890 = vunpack.c.l.b16 %v2201
  %v2891 = vunpack.c.h.b16 %v2201
  %v2892 = vunpack.c.l.b16 %v2202
  %v2893 = vunpack.c.h.b16 %v2202
  %v2894 = vunpack.c.l.b16 %v2203
  %v2895 = vunpack.c.h.b16 %v2203
  %v2896 = vunpack.c.l.b16 %v2204
  %v2897 = vunpack.c.h.b16 %v2204
  %v2898 = vunpack.c.l.b16 %v2205
  %v2899 = vunpack.c.h.b16 %v2205
  %v2900 = vunpack.c.l.b16 %v2206
  %v2901 = vunpack.c.h.b16 %v2206
  %v2902 = vunpack.c.l.b16 %v2207
  %v2903 = vunpack.c.h.b16 %v2207
  %v2904 = vunpack.c.l.b16 %v2208
  %v2905 = vunpack.c.h.b16 %v2208
  %v2906 = vunpack.c.l.b16 %v2209
  %v2907 = vunpack.c.h.b16 %v2209
  %v2908 = vunpack.c.l.b16 %v2210
  %v2909 = vunpack.c.h.b16 %v2210
  %v2910 = vunpack.c.l.b16 %v2211
  %v2911 = vunpack.c.h.b16 %v2211
  %v2912 = vunpack.c.l.b16 %v2212
  %v2913 = vunpack.c.h.b16 %v2212
  %v2914 = vunpack.c.l.b16 %v2213
  %v2915 = vunpack.c.h.b16 %v2213
  %v2916 = vunpack.c.l.b16 %v2214
  %v2917 = vunpack.c.h.b16 %v2214
  %v2918 = vunpack.c.l.b16 %v2215
  %v2919 = vunpack.c.h.b16 %v2215
  %v2920 = vunpack.c.l.b16 %v2216
  %v2921 = vunpack.c.h.b16 %v2216
  %v2922 = vunpack.c.l.b16 %v2217
  %v2923 = vunpack.c.h.b16 %v2217
  %v2924 = vunpack.c.l.b16 %v2218
  %v2925 = vunpack.c.h.b16 %v2218
  %v2926 = vunpack.c.l.b16 %v2219
  %v2927 = vunpack.c.h.b16 %v2219
  %v2928 = vunpack.c.l.b16 %v2220
  %v2929 = vunpack.c.h.b16 %v2220
  %v2930 = vunpack.c.l.b16 %v2221
  %v2931 = vunpack.c.h.b16 %v2221
  %v2932 = vunpack.c.l.b16 %v2222
  %v2933 = vunpack.c.h.b16 %v2222
  %v2934 = vunpack.c.l.b16 %v2223
  %v2935 = vunpack.c.h.b16 %v2223
  %v2936 = vunpack.c.l.b16 %v2224
  %v2937 = vunpack.c.h.b16 %v2224
  %v2938 = vunpack.c.l.b16 %v2225
  %v2939 = vunpack.c.h.b16 %v2225
  %v2940 = vunpack.c.l.b16 %v2226
  %v2941 = vunpack.c.h.b16 %v2226
  %v2942 = vunpack.c.l.b16 %v2227
  %v2943 = vunpack.c.h.b16 %v2227
  %v2944 = vunpack.c.l.b16 %v2228
  %v2945 = vunpack.c.h.b16 %v2228
  %v2946 = vunpack.c.l.b16 %v2229
  %v2947 = vunpack.c.h.b16 %v2229
  %v2948 = vunpack.c.l.b16 %v2230
  %v2949 = vunpack.c.h.b16 %v2230
  %v2950 = vunpack.c.l.b16 %v2231
  %v2951 = vunpack.c.h.b16 %v2231
  %v2952 = vunpack.c.l.b16 %v2232
  %v2953 = vunpack.c.h.b16 %v2232
  %v2954 = vunpack.c.l.b16 %v2233
  %v2955 = vunpack.c.h.b16 %v2233
  %v2956 = vunpack.c.l.b16 %v2234
  %v2957 = vunpack.c.h.b16 %v2234
  %v2958 = vunpack.c.l.b16 %v2235
  %v2959 = vunpack.c.h.b16 %v2235
  %v2960 = vunpack.c.l.b16 %v2236
  %v2961 = vunpack.c.h.b16 %v2236
  %v2962 = vunpack.c.l.b16 %v2237
  %v2963 = vunpack.c.h.b16 %v2237
  %v2964 = vunpack.c.l.b16 %v2238
  %v2965 = vunpack.c.h.b16 %v2238
  %v2966 = vunpack.c.l.b16 %v2239
  %v2967 = vunpack.c.h.b16 %v2239
  %v2968 = vunpack.c.l.b16 %v2240
  %v2969 = vunpack.c.h.b16 %v2240
  %v2970 = vunpack.c.l.b16 %v2241
  %v2971 = vunpack.c.h.b16 %v2241
  %v2972 = vunpack.c.l.b16 %v2242
  %v2973 = vunpack.c.h.b16 %v2242
  %v2974 = vunpack.c.l.b16 %v2243
  %v2975 = vunpack.c.h.b16 %v2243
  %v2976 = vunpack.c.l.b16 %v2244
  %v2977 = vunpack.c.h.b16 %v2244
  %v2978 = vunpack.c.l.b16 %v2245
  %v2979 = vunpack.c.h.b16 %v2245
  %v2980 = vunpack.c.l.b16 %v2246
  %v2981 = vunpack.c.h.b16 %v2246
  %v2982 = vunpack.c.l.b16 %v2247
  %v2983 = vunpack.c.h.b16 %v2247
  %v2984 = vunpack.c.l.b16 %v2248
  %v2985 = vunpack.c.h.b16 %v2248
  %v2986 = vunpack.c.l.b16 %v2249
  %v2987 = vunpack.c.h.b16 %v2249
  %v2988 = vunpack.c.l.b16 %v2250
  %v2989 = vunpack.c.h.b16 %v2250
  %v2990 = vunpack.c.l.b16 %v2251
  %v2991 = vunpack.c.h.b16 %v2251
  %v2992 = vunpack.c.l.b16 %v2252
  %v2993 = vunpack.c.h.b16 %v2252
  %v2994 = vunpack.c.l.b16 %v2253
  %v2995 = vunpack.c.h.b16 %v2253
  %v2996 = vunpack.c.l.b16 %v2254
  %v2997 = vunpack.c.h.b16 %v2254
  %v2998 = vunpack.c.l.b16 %v2255
  %v2999 = vunpack.c.h.b16 %v2255
  %v3000 = vunpack.c.l.b16 %v2256
  %v3001 = vunpack.c.h.b16 %v2256
  %v3002 = vunpack.c.l.b16 %v2257
  %v3003 = vunpack.c.h.b16 %v2257
  %v3004 = vunpack.c.l.b16 %v2258
  %v3005 = vunpack.c.h.b16 %v2258
  %v3006 = vunpack.c.l.b16 %v2259
  %v3007 = vunpack.c.h.b16 %v2259
  %v3008 = vunpack.c.l.b16 %v2260
  %v3009 = vunpack.c.h.b16 %v2260
  %v3010 = vunpack.c.l.b16 %v2261
  %v3011 = vunpack.c.h.b16 %v2261
  %v3012 = vunpack.c.l.b16 %v2262
  %v3013 = vunpack.c.h.b16 %v2262
  %v3014 = vunpack.c.l.b16 %v2263
  %v3015 = vunpack.c.h.b16 %v2263
  %v3016 = vunpack.c.l.b16 %v2264
  %v3017 = vunpack.c.h.b16 %v2264
  %v3018 = vunpack.c.l.b16 %v2265
  %v3019 = vunpack.c.h.b16 %v2265
  %v3020 = vunpack.c.l.b16 %v2266
  %v3021 = vunpack.c.h.b16 %v2266
  %v3022 = vunpack.c.l.b16 %v2267
  %v3023 = vunpack.c.h.b16 %v2267
  %v3024 = vunpack.c.l.b16 %v2268
  %v3025 = vunpack.c.h.b16 %v2268
  %v3026 = vunpack.c.l.b16 %v2269
  %v3027 = vunpack.c.h.b16 %v2269
  %v3028 = vunpack.c.l.b16 %v2270
  %v3029 = vunpack.c.h.b16 %v2270
  %v3030 = vunpack.c.l.b16 %v2271
  %v3031 = vunpack.c.h.b16 %v2271
  %v3032 = vunpack.c.l.b16 %v2272
  %v3033 = vunpack.c.h.b16 %v2272
  %v3034 = vunpack.c.l.b16 %v2273
  %v3035 = vunpack.c.h.b16 %v2273
  %v3036 = vunpack.c.l.b16 %v2274
  %v3037 = vunpack.c.h.b16 %v2274
  %v3038 = vunpack.c.l.b16 %v2275
  %v3039 = vunpack.c.h.b16 %v2275
  %v3040 = vunpack.c.l.b16 %v2276
  %v3041 = vunpack.c.h.b16 %v2276
  %v3042 = vunpack.c.l.b16 %v2277
  %v3043 = vunpack.c.h.b16 %v2277
  %v3044 = vunpack.c.l.b16 %v2278
  %v3045 = vunpack.c.h.b16 %v2278
  %v3046 = vunpack.c.l.b16 %v2279
  %v3047 = vunpack.c.h.b16 %v2279
  %v3048 = vunpack.c.l.b16 %v2280
  %v3049 = vunpack.c.h.b16 %v2280
  %v3050 = vunpack.c.l.b16 %v2281
  %v3051 = vunpack.c.h.b16 %v2281
  %v3052 = vunpack.c.l.b16 %v2282
  %v3053 = vunpack.c.h.b16 %v2282
  %v3054 = vunpack.c.l.b16 %v2283
  %v3055 = vunpack.c.h.b16 %v2283
  %v3056 = vunpack.c.l.b16 %v2284
  %v3057 = vunpack.c.h.b16 %v2284
  %v3058 = vunpack.c.l.b16 %v2285
  %v3059 = vunpack.c.h.b16 %v2285
  %v3060 = vunpack.c.l.b16 %v2286
  %v3061 = vunpack.c.h.b16 %v2286
  %v3062 = vunpack.c.l.b16 %v2287
  %v3063 = vunpack.c.h.b16 %v2287
  %v3064 = vunpack.c.l.b16 %v2288
  %v3065 = vunpack.c.h.b16 %v2288
  %v3066 = vunpack.c.l.b16 %v2289
  %v3067 = vunpack.c.h.b16 %v2289
  %v3068 = vpack.c.b16 %v2560, %v2556
  %v3069 = vpack.c.b16 %v2561, %v2557
  %v3070 = vpack.c.b16 %v2562, %v2558
  %v3071 = vpack.c.b16 %v2563, %v2559
  %v3072 = vpack.c.b16 %v2568, %v2564
  %v3073 = vpack.c.b16 %v2569, %v2565
  %v3074 = vpack.c.b16 %v2570, %v2566
  %v3075 = vpack.c.b16 %v2571, %v2567
  %v3076 = vpack.c.b16 %v2576, %v2572
  %v3077 = vpack.c.b16 %v2577, %v2573
  %v3078 = vpack.c.b16 %v2578, %v2574
  %v3079 = vpack.c.b16 %v2579, %v2575
  %v3080 = vpack.c.b16 %v2584, %v2580
  %v3081 = vpack.c.b16 %v2585, %v2581
  %v3082 = vpack.c.b16 %v2586, %v2582
  %v3083 = vpack.c.b16 %v2587, %v2583
  %v3084 = vpack.c.b16 %v2592, %v2588
  %v3085 = vpack.c.b16 %v2593, %v2589
  %v3086 = vpack.c.b16 %v2594, %v2590
  %v3087 = vpack.c.b16 %v2595, %v2591
  %v3088 = vpack.c.b16 %v2600, %v2596
  %v3089 = vpack.c.b16 %v2601, %v2597
  %v3090 = vpack.c.b16 %v2602, %v2598
  %v3091 = vpack.c.b16 %v2603, %v2599
  %v3092 = vpack.c.b16 %v2608, %v2604
  %v3093 = vpack.c.b16 %v2609, %v2605
  %v3094 = vpack.c.b16 %v2610, %v2606
  %v3095 = vpack.c.b16 %v2611, %v2607
  %v3096 = vpack.c.b16 %v2616, %v2612
  %v3097 = vpack.c.b16 %v2617, %v2613
  %v3098 = vpack.c.b16 %v2618, %v2614
  %v3099 = vpack.c.b16 %v2619, %v2615
  %v3100 = vpack.c.b16 %v2624, %v2620
  %v3101 = vpack.c.b16 %v2625, %v2621
  %v3102 = vpack.c.b16 %v2626, %v2622
  %v3103 = vpack.c.b16 %v2627, %v2623
  %v3104 = vpack.c.b16 %v2632, %v2628
  %v3105 = vpack.c.b16 %v2633, %v2629
  %v3106 = vpack.c.b16 %v2634, %v2630
  %v3107 = vpack.c.b16 %v2635, %v2631
  %v3108 = vpack.c.b16 %v2640, %v2636
  %v3109 = vpack.c.b16 %v2641, %v2637
  %v3110 = vpack.c.b16 %v2642, %v2638
  %v3111 = vpack.c.b16 %v2643, %v2639
  %v3112 = vpack.c.b16 %v2648, %v2644
  %v3113 = vpack.c.b16 %v2649, %v2645
  %v3114 = vpack.c.b16 %v2650, %v2646
  %v3115 = vpack.c.b16 %v2651, %v2647
  %v3116 = vpack.c.b16 %v2656, %v2652
  %v3117 = vpack.c.b16 %v2657, %v2653
  %v3118 = vpack.c.b16 %v2658, %v2654
  %v3119 = vpack.c.b16 %v2659, %v2655
  %v3120 = vpack.c.b16 %v2664, %v2660
  %v3121 = vpack.c.b16 %v2665, %v2661
  %v3122 = vpack.c.b16 %v2666, %v2662
  %v3123 = vpack.c.b16 %v2667, %v2663
  %v3124 = vpack.c.b16 %v2672, %v2668
  %v3125 = vpack.c.b16 %v2673, %v2669
  %v3126 = vpack.c.b16 %v2674, %v2670
  %v3127 = vpack.c.b16 %v2675, %v2671
  %v3128 = vpack.c.b16 %v2680, %v2676
  %v3129 = vpack.c.b16 %v2681, %v2677
  %v3130 = vpack.c.b16 %v2682, %v2678
  %v3131 = vpack.c.b16 %v2683, %v2679
  %v3132 = vpack.c.b16 %v2688, %v2684
  %v3133 = vpack.c.b16 %v2689, %v2685
  %v3134 = vpack.c.b16 %v2690, %v2686
  %v3135 = vpack.c.b16 %v2691, %v2687
  %v3136 = vpack.c.b16 %v2696, %v2692
  %v3137 = vpack.c.b16 %v2697, %v2693
  %v3138 = vpack.c.b16 %v2698, %v2694
  %v3139 = vpack.c.b16 %v2699, %v2695
  %v3140 = vpack.c.b16 %v2704, %v2700
  %v3141 = vpack.c.b16 %v2705, %v2701
  %v3142 = vpack.c.b16 %v2706, %v2702
  %v3143 = vpack.c.b16 %v2707, %v2703
  %v3144 = vpack.c.b16 %v2712, %v2708
  %v3145 = vpack.c.b16 %v2713, %v2709
  %v3146 = vpack.c.b16 %v2714, %v2710
  %v3147 = vpack.c.b16 %v2715, %v2711
  %v3148 = vpack.c.b16 %v2720, %v2716
  %v3149 = vpack.c.b16 %v2721, %v2717
  %v3150 = vpack.c.b16 %v2722, %v2718
  %v3151 = vpack.c.b16 %v2723, %v2719
  %v3152 = vpack.c.b16 %v2728, %v2724
  %v3153 = vpack.c.b16 %v2729, %v2725
  %v3154 = vpack.c.b16 %v2730, %v2726
  %v3155 = vpack.c.b16 %v2731, %v2727
  %v3156 = vpack.c.b16 %v2736, %v2732
  %v3157 = vpack.c.b16 %v2737, %v2733
  %v3158 = vpack.c.b16 %v2738, %v2734
  %v3159 = vpack.c.b16 %v2739, %v2735
  %v3160 = vpack.c.b16 %v2744, %v2740
  %v3161 = vpack.c.b16 %v2745, %v2741
  %v3162 = vpack.c.b16 %v2746, %v2742
  %v3163 = vpack.c.b16 %v2747, %v2743
  %v3164 = vpack.c.b16 %v2752, %v2748
  %v3165 = vpack.c.b16 %v2753, %v2749
  %v3166 = vpack.c.b16 %v2754, %v2750
  %v3167 = vpack.c.b16 %v2755, %v2751
  %v3168 = vpack.c.b16 %v2760, %v2756
  %v3169 = vpack.c.b16 %v2761, %v2757
  %v3170 = vpack.c.b16 %v2762, %v2758
  %v3171 = vpack.c.b16 %v2763, %v2759
  %v3172 = vpack.c.b16 %v2768, %v2764
  %v3173 = vpack.c.b16 %v2769, %v2765
  %v3174 = vpack.c.b16 %v2770, %v2766
  %v3175 = vpack.c.b16 %v2771, %v2767
  %v3176 = vpack.c.b16 %v2776, %v2772
  %v3177 = vpack.c.b16 %v2777, %v2773
  %v3178 = vpack.c.b16 %v2778, %v2774
  %v3179 = vpack.c.b16 %v2779, %v2775
  %v3180 = vpack.c.b16 %v2784, %v2780
  %v3181 = vpack.c.b16 %v2785, %v2781
  %v3182 = vpack.c.b16 %v2786, %v2782
  %v3183 = vpack.c.b16 %v2787, %v2783
  %v3184 = vpack.c.b16 %v2792, %v2788
  %v3185 = vpack.c.b16 %v2793, %v2789
  %v3186 = vpack.c.b16 %v2794, %v2790
  %v3187 = vpack.c.b16 %v2795, %v2791
  %v3188 = vpack.c.b16 %v2800, %v2796
  %v3189 = vpack.c.b16 %v2801, %v2797
  %v3190 = vpack.c.b16 %v2802, %v2798
  %v3191 = vpack.c.b16 %v2803, %v2799
  %v3192 = vpack.c.b16 %v2808, %v2804
  %v3193 = vpack.c.b16 %v2809, %v2805
  %v3194 = vpack.c.b16 %v2810, %v2806
  %v3195 = vpack.c.b16 %v2811, %v2807
  %v3196 = vpack.c.b16 %v2816, %v2812
  %v3197 = vpack.c.b16 %v2817, %v2813
  %v3198 = vpack.c.b16 %v2818, %v2814
  %v3199 = vpack.c.b16 %v2819, %v2815
  %v3200 = vpack.c.b16 %v2824, %v2820
  %v3201 = vpack.c.b16 %v2825, %v2821
  %v3202 = vpack.c.b16 %v2826, %v2822
  %v3203 = vpack.c.b16 %v2827, %v2823
  %v3204 = vpack.c.b16 %v2832, %v2828
  %v3205 = vpack.c.b16 %v2833, %v2829
  %v3206 = vpack.c.b16 %v2834, %v2830
  %v3207 = vpack.c.b16 %v2835, %v2831
  %v3208 = vpack.c.b16 %v2840, %v2836
  %v3209 = vpack.c.b16 %v2841, %v2837
  %v3210 = vpack.c.b16 %v2842, %v2838
  %v3211 = vpack.c.b16 %v2843, %v2839
  %v3212 = vpack.c.b16 %v2848, %v2844
  %v3213 = vpack.c.b16 %v2849, %v2845
  %v3214 = vpack.c.b16 %v2850, %v2846
  %v3215 = vpack.c.b16 %v2851, %v2847
  %v3216 = vpack.c.b16 %v2856, %v2852
  %v3217 = vpack.c.b16 %v2857, %v2853
  %v3218 = vpack.c.b16 %v2858, %v2854
  %v3219 = vpack.c.b16 %v2859, %v2855
  %v3220 = vpack.c.b16 %v2864, %v2860
  %v3221 = vpack.c.b16 %v2865, %v2861
  %v3222 = vpack.c.b16 %v2866, %v2862
  %v3223 = vpack.c.b16 %v2867, %v2863
  %v3224 = vpack.c.b16 %v2872, %v2868
  %v3225 = vpack.c.b16 %v2873, %v2869
  %v3226 = vpack.c.b16 %v2874, %v2870
  %v3227 = vpack.c.b16 %v2875, %v2871
  %v3228 = vpack.c.b16 %v2880, %v2876
  %v3229 = vpack.c.b16 %v2881, %v2877
  %v3230 = vpack.c.b16 %v2882, %v2878
  %v3231 = vpack.c.b16 %v2883, %v2879
  %v3232 = vpack.c.b16 %v2888, %v2884
  %v3233 = vpack.c.b16 %v2889, %v2885
  %v3234 = vpack.c.b16 %v2890, %v2886
  %v3235 = vpack.c.b16 %v2891, %v2887
  %v3236 = vpack.c.b16 %v2896, %v2892
  %v3237 = vpack.c.b16 %v2897, %v2893
  %v3238 = vpack.c.b16 %v2898, %v2894
  %v3239 = vpack.c.b16 %v2899, %v2895
  %v3240 = vpack.c.b16 %v2904, %v2900
  %v3241 = vpack.c.b16 %v2905, %v2901
  %v3242 = vpack.c.b16 %v2906, %v2902
  %v3243 = vpack.c.b16 %v2907, %v2903
  %v3244 = vpack.c.b16 %v2912, %v2908
  %v3245 = vpack.c.b16 %v2913, %v2909
  %v3246 = vpack.c.b16 %v2914, %v2910
  %v3247 = vpack.c.b16 %v2915, %v2911
  %v3248 = vpack.c.b16 %v2920, %v2916
  %v3249 = vpack.c.b16 %v2921, %v2917
  %v3250 = vpack.c.b16 %v2922, %v2918
  %v3251 = vpack.c.b16 %v2923, %v2919
  %v3252 = vpack.c.b16 %v2928, %v2924
  %v3253 = vpack.c.b16 %v2929, %v2925
  %v3254 = vpack.c.b16 %v2930, %v2926
  %v3255 = vpack.c.b16 %v2931, %v2927
  %v3256 = vpack.c.b16 %v2936, %v2932
  %v3257 = vpack.c.b16 %v2937, %v2933
  %v3258 = vpack.c.b16 %v2938, %v2934
  %v3259 = vpack.c.b16 %v2939, %v2935
  %v3260 = vpack.c.b16 %v2944, %v2940
  %v3261 = vpack.c.b16 %v2945, %v2941
  %v3262 = vpack.c.b16 %v2946, %v2942
  %v3263 = vpack.c.b16 %v2947, %v2943
  %v3264 = vpack.c.b16 %v2952, %v2948
  %v3265 = vpack.c.b16 %v2953, %v2949
  %v3266 = vpack.c.b16 %v2954, %v2950
  %v3267 = vpack.c.b16 %v2955, %v2951
  %v3268 = vpack.c.b16 %v2960, %v2956
  %v3269 = vpack.c.b16 %v2961, %v2957
  %v3270 = vpack.c.b16 %v2962, %v2958
  %v3271 = vpack.c.b16 %v2963, %v2959
  %v3272 = vpack.c.b16 %v2968, %v2964
  %v3273 = vpack.c.b16 %v2969, %v2965
  %v3274 = vpack.c.b16 %v2970, %v2966
  %v3275 = vpack.c.b16 %v2971, %v2967
  %v3276 = vpack.c.b16 %v2976, %v2972
  %v3277 = vpack.c.b16 %v2977, %v2973
  %v3278 = vpack.c.b16 %v2978, %v2974
  %v3279 = vpack.c.b16 %v2979, %v2975
  %v3280 = vpack.c.b16 %v2984, %v2980
  %v3281 = vpack.c.b16 %v2985, %v2981
  %v3282 = vpack.c.b16 %v2986, %v2982
  %v3283 = vpack.c.b16 %v2987, %v2983
  %v3284 = vpack.c.b16 %v2992, %v2988
  %v3285 = vpack.c.b16 %v2993, %v2989
  %v3286 = vpack.c.b16 %v2994, %v2990
  %v3287 = vpack.c.b16 %v2995, %v2991
  %v3288 = vpack.c.b16 %v3000, %v2996
  %v3289 = vpack.c.b16 %v3001, %v2997
  %v3290 = vpack.c.b16 %v3002, %v2998
  %v3291 = vpack.c.b16 %v3003, %v2999
  %v3292 = vpack.c.b16 %v3008, %v3004
  %v3293 = vpack.c.b16 %v3009, %v3005
  %v3294 = vpack.c.b16 %v3010, %v3006
  %v3295 = vpack.c.b16 %v3011, %v3007
  %v3296 = vpack.c.b16 %v3016, %v3012
  %v3297 = vpack.c.b16 %v3017, %v3013
  %v3298 = vpack.c.b16 %v3018, %v3014
  %v3299 = vpack.c.b16 %v3019, %v3015
  %v3300 = vpack.c.b16 %v3024, %v3020
  %v3301 = vpack.c.b16 %v3025, %v3021
  %v3302 = vpack.c.b16 %v3026, %v3022
  %v3303 = vpack.c.b16 %v3027, %v3023
  %v3304 = vpack.c.b16 %v3032, %v3028
  %v3305 = vpack.c.b16 %v3033, %v3029
  %v3306 = vpack.c.b16 %v3034, %v3030
  %v3307 = vpack.c.b16 %v3035, %v3031
  %v3308 = vpack.c.b16 %v3040, %v3036
  %v3309 = vpack.c.b16 %v3041, %v3037
  %v3310 = vpack.c.b16 %v3042, %v3038
  %v3311 = vpack.c.b16 %v3043, %v3039
  %v3312 = vpack.c.b16 %v3048, %v3044
  %v3313 = vpack.c.b16 %v3049, %v3045
  %v3314 = vpack.c.b16 %v3050, %v3046
  %v3315 = vpack.c.b16 %v3051, %v3047
  %v3316 = vpack.c.b16 %v3056, %v3052
  %v3317 = vpack.c.b16 %v3057, %v3053
  %v3318 = vpack.c.b16 %v3058, %v3054
  %v3319 = vpack.c.b16 %v3059, %v3055
  %v3320 = vpack.c.b16 %v3064, %v3060
  %v3321 = vpack.c.b16 %v3065, %v3061
  %v3322 = vpack.c.b16 %v3066, %v3062
  %v3323 = vpack.c.b16 %v3067, %v3063
  %3580 = vmatpush.bf16.msra.mxu0 %v3096
  %3581 = vmatpush.bf16.msra.mxu0 %v3092
  %3582 = vmatpush.bf16.msra.mxu0 %v3088
  %3583 = vmatpush.bf16.msra.mxu0 %v3084
  %3584 = vmatpush.bf16.msra.mxu0 %v3080
  %3585 = vmatpush.bf16.msra.mxu0 %v3076
  %3586 = vmatpush.bf16.msra.mxu0 %v3072
  %3587 = vmatpush.bf16.msra.mxu0 %v3068
  %3588 = vmatmul.bf16.gmra.mxu0 %v2026
  %v3589 = vpop.f32.mrf.mxu0
  %v3590 = vadd.f32 %v2292, %v3589
  %v3591 = vpop.f32.mrf.mxu0
  %3592 = vdwg.mxu0
  %3593 = vmatpush.bf16.msra.mxu0 %v3128
  %3594 = vmatpush.bf16.msra.mxu0 %v3124
  %3595 = vmatpush.bf16.msra.mxu0 %v3120
  %3596 = vmatpush.bf16.msra.mxu0 %v3116
  %3597 = vmatpush.bf16.msra.mxu0 %v3112
  %3598 = vmatpush.bf16.msra.mxu0 %v3108
  %3599 = vmatpush.bf16.msra.mxu0 %v3104
  %3600 = vmatpush.bf16.msra.mxu0 %v3100
  %3601 = vmatmul.bf16.gmra.mxu0 %v2027
  %v3602 = vpop.f32.mrf.mxu0
  %v3603 = vadd.f32 %v3590, %v3602
  %v3604 = vpop.f32.mrf.mxu0
  %3605 = vdwg.mxu0
  %3606 = vmatpush.bf16.msra.mxu0 %v3160
  %3607 = vmatpush.bf16.msra.mxu0 %v3156
  %3608 = vmatpush.bf16.msra.mxu0 %v3152
  %3609 = vmatpush.bf16.msra.mxu0 %v3148
  %3610 = vmatpush.bf16.msra.mxu0 %v3144
  %3611 = vmatpush.bf16.msra.mxu0 %v3140
  %3612 = vmatpush.bf16.msra.mxu0 %v3136
  %3613 = vmatpush.bf16.msra.mxu0 %v3132
  %3614 = vmatmul.bf16.gmra.mxu0 %v2028
  %v3615 = vpop.f32.mrf.mxu0
  %v3616 = vadd.f32 %v3603, %v3615
  %v3617 = vpop.f32.mrf.mxu0
  %3618 = vdwg.mxu0
  %3619 = vmatpush.bf16.msra.mxu0 %v3192
  %3620 = vmatpush.bf16.msra.mxu0 %v3188
  %3621 = vmatpush.bf16.msra.mxu0 %v3184
  %3622 = vmatpush.bf16.msra.mxu0 %v3180
  %3623 = vmatpush.bf16.msra.mxu0 %v3176
  %3624 = vmatpush.bf16.msra.mxu0 %v3172
  %3625 = vmatpush.bf16.msra.mxu0 %v3168
  %3626 = vmatpush.bf16.msra.mxu0 %v3164
  %3627 = vmatmul.bf16.gmra.mxu0 %v2029
  %v3628 = vpop.f32.mrf.mxu0
  %v3629 = vadd.f32 %v3616, %v3628
  %v3630 = vpop.f32.mrf.mxu0
  %3631 = vdwg.mxu0
  %3632 = vmatpush.bf16.msra.mxu0 %v3224
  %3633 = vmatpush.bf16.msra.mxu0 %v3220
  %3634 = vmatpush.bf16.msra.mxu0 %v3216
  %3635 = vmatpush.bf16.msra.mxu0 %v3212
  %3636 = vmatpush.bf16.msra.mxu0 %v3208
  %3637 = vmatpush.bf16.msra.mxu0 %v3204
  %3638 = vmatpush.bf16.msra.mxu0 %v3200
  %3639 = vmatpush.bf16.msra.mxu0 %v3196
  %3640 = vmatmul.bf16.gmra.mxu0 %v2030
  %v3641 = vpop.f32.mrf.mxu0
  %v3642 = vadd.f32 %v3629, %v3641
  %v3643 = vpop.f32.mrf.mxu0
  %3644 = vdwg.mxu0
  %3645 = vmatpush.bf16.msra.mxu0 %v3256
  %3646 = vmatpush.bf16.msra.mxu0 %v3252
  %3647 = vmatpush.bf16.msra.mxu0 %v3248
  %3648 = vmatpush.bf16.msra.mxu0 %v3244
  %3649 = vmatpush.bf16.msra.mxu0 %v3240
  %3650 = vmatpush.bf16.msra.mxu0 %v3236
  %3651 = vmatpush.bf16.msra.mxu0 %v3232
  %3652 = vmatpush.bf16.msra.mxu0 %v3228
  %3653 = vmatmul.bf16.gmra.mxu0 %v2031
  %v3654 = vpop.f32.mrf.mxu0
  %v3655 = vadd.f32 %v3642, %v3654
  %v3656 = vpop.f32.mrf.mxu0
  %3657 = vdwg.mxu0
  %3658 = vmatpush.bf16.msra.mxu0 %v3288
  %3659 = vmatpush.bf16.msra.mxu0 %v3284
  %3660 = vmatpush.bf16.msra.mxu0 %v3280
  %3661 = vmatpush.bf16.msra.mxu0 %v3276
  %3662 = vmatpush.bf16.msra.mxu0 %v3272
  %3663 = vmatpush.bf16.msra.mxu0 %v3268
  %3664 = vmatpush.bf16.msra.mxu0 %v3264
  %3665 = vmatpush.bf16.msra.mxu0 %v3260
  %3666 = vmatmul.bf16.gmra.mxu0 %v2032
  %v3667 = vpop.f32.mrf.mxu0
  %v3668 = vadd.f32 %v3655, %v3667
  %v3669 = vpop.f32.mrf.mxu0
  %3670 = vdwg.mxu0
  %3671 = vmatpush.bf16.msra.mxu0 %v3320
  %3672 = vmatpush.bf16.msra.mxu0 %v3316
  %3673 = vmatpush.bf16.msra.mxu0 %v3312
  %3674 = vmatpush.bf16.msra.mxu0 %v3308
  %3675 = vmatpush.bf16.msra.mxu0 %v3304
  %3676 = vmatpush.bf16.msra.mxu0 %v3300
  %3677 = vmatpush.bf16.msra.mxu0 %v3296
  %3678 = vmatpush.bf16.msra.mxu0 %v3292
  %3679 = vmatmul.bf16.gmra.mxu0 %v2033
  %v3680 = vpop.f32.mrf.mxu0
  %v3681 = vadd.f32 %v3668, %v3680
  %v3682 = vpop.f32.mrf.mxu0
  %3683 = vdwg.mxu0
  %3684 = vmatpush.bf16.msra.mxu0 %v3097
  %3685 = vmatpush.bf16.msra.mxu0 %v3093
  %3686 = vmatpush.bf16.msra.mxu0 %v3089
  %3687 = vmatpush.bf16.msra.mxu0 %v3085
  %3688 = vmatpush.bf16.msra.mxu0 %v3081
  %3689 = vmatpush.bf16.msra.mxu0 %v3077
  %3690 = vmatpush.bf16.msra.mxu0 %v3073
  %3691 = vmatpush.bf16.msra.mxu0 %v3069
  %3692 = vmatmul.bf16.gmra.mxu0 %v2026
  %v3693 = vpop.f32.mrf.mxu0
  %v3694 = vadd.f32 %v2293, %v3693
  %v3695 = vpop.f32.mrf.mxu0
  %3696 = vdwg.mxu0
  %3697 = vmatpush.bf16.msra.mxu0 %v3129
  %3698 = vmatpush.bf16.msra.mxu0 %v3125
  %3699 = vmatpush.bf16.msra.mxu0 %v3121
  %3700 = vmatpush.bf16.msra.mxu0 %v3117
  %3701 = vmatpush.bf16.msra.mxu0 %v3113
  %3702 = vmatpush.bf16.msra.mxu0 %v3109
  %3703 = vmatpush.bf16.msra.mxu0 %v3105
  %3704 = vmatpush.bf16.msra.mxu0 %v3101
  %3705 = vmatmul.bf16.gmra.mxu0 %v2027
  %v3706 = vpop.f32.mrf.mxu0
  %v3707 = vadd.f32 %v3694, %v3706
  %v3708 = vpop.f32.mrf.mxu0
  %3709 = vdwg.mxu0
  %3710 = vmatpush.bf16.msra.mxu0 %v3161
  %3711 = vmatpush.bf16.msra.mxu0 %v3157
  %3712 = vmatpush.bf16.msra.mxu0 %v3153
  %3713 = vmatpush.bf16.msra.mxu0 %v3149
  %3714 = vmatpush.bf16.msra.mxu0 %v3145
  %3715 = vmatpush.bf16.msra.mxu0 %v3141
  %3716 = vmatpush.bf16.msra.mxu0 %v3137
  %3717 = vmatpush.bf16.msra.mxu0 %v3133
  %3718 = vmatmul.bf16.gmra.mxu0 %v2028
  %v3719 = vpop.f32.mrf.mxu0
  %v3720 = vadd.f32 %v3707, %v3719
  %v3721 = vpop.f32.mrf.mxu0
  %3722 = vdwg.mxu0
  %3723 = vmatpush.bf16.msra.mxu0 %v3193
  %3724 = vmatpush.bf16.msra.mxu0 %v3189
  %3725 = vmatpush.bf16.msra.mxu0 %v3185
  %3726 = vmatpush.bf16.msra.mxu0 %v3181
  %3727 = vmatpush.bf16.msra.mxu0 %v3177
  %3728 = vmatpush.bf16.msra.mxu0 %v3173
  %3729 = vmatpush.bf16.msra.mxu0 %v3169
  %3730 = vmatpush.bf16.msra.mxu0 %v3165
  %3731 = vmatmul.bf16.gmra.mxu0 %v2029
  %v3732 = vpop.f32.mrf.mxu0
  %v3733 = vadd.f32 %v3720, %v3732
  %v3734 = vpop.f32.mrf.mxu0
  %3735 = vdwg.mxu0
  %3736 = vmatpush.bf16.msra.mxu0 %v3225
  %3737 = vmatpush.bf16.msra.mxu0 %v3221
  %3738 = vmatpush.bf16.msra.mxu0 %v3217
  %3739 = vmatpush.bf16.msra.mxu0 %v3213
  %3740 = vmatpush.bf16.msra.mxu0 %v3209
  %3741 = vmatpush.bf16.msra.mxu0 %v3205
  %3742 = vmatpush.bf16.msra.mxu0 %v3201
  %3743 = vmatpush.bf16.msra.mxu0 %v3197
  %3744 = vmatmul.bf16.gmra.mxu0 %v2030
  %v3745 = vpop.f32.mrf.mxu0
  %v3746 = vadd.f32 %v3733, %v3745
  %v3747 = vpop.f32.mrf.mxu0
  %3748 = vdwg.mxu0
  %3749 = vmatpush.bf16.msra.mxu0 %v3257
  %3750 = vmatpush.bf16.msra.mxu0 %v3253
  %3751 = vmatpush.bf16.msra.mxu0 %v3249
  %3752 = vmatpush.bf16.msra.mxu0 %v3245
  %3753 = vmatpush.bf16.msra.mxu0 %v3241
  %3754 = vmatpush.bf16.msra.mxu0 %v3237
  %3755 = vmatpush.bf16.msra.mxu0 %v3233
  %3756 = vmatpush.bf16.msra.mxu0 %v3229
  %3757 = vmatmul.bf16.gmra.mxu0 %v2031
  %v3758 = vpop.f32.mrf.mxu0
  %v3759 = vadd.f32 %v3746, %v3758
  %v3760 = vpop.f32.mrf.mxu0
  %3761 = vdwg.mxu0
  %3762 = vmatpush.bf16.msra.mxu0 %v3289
  %3763 = vmatpush.bf16.msra.mxu0 %v3285
  %3764 = vmatpush.bf16.msra.mxu0 %v3281
  %3765 = vmatpush.bf16.msra.mxu0 %v3277
  %3766 = vmatpush.bf16.msra.mxu0 %v3273
  %3767 = vmatpush.bf16.msra.mxu0 %v3269
  %3768 = vmatpush.bf16.msra.mxu0 %v3265
  %3769 = vmatpush.bf16.msra.mxu0 %v3261
  %3770 = vmatmul.bf16.gmra.mxu0 %v2032
  %v3771 = vpop.f32.mrf.mxu0
  %v3772 = vadd.f32 %v3759, %v3771
  %v3773 = vpop.f32.mrf.mxu0
  %3774 = vdwg.mxu0
  %3775 = vmatpush.bf16.msra.mxu0 %v3321
  %3776 = vmatpush.bf16.msra.mxu0 %v3317
  %3777 = vmatpush.bf16.msra.mxu0 %v3313
  %3778 = vmatpush.bf16.msra.mxu0 %v3309
  %3779 = vmatpush.bf16.msra.mxu0 %v3305
  %3780 = vmatpush.bf16.msra.mxu0 %v3301
  %3781 = vmatpush.bf16.msra.mxu0 %v3297
  %3782 = vmatpush.bf16.msra.mxu0 %v3293
  %3783 = vmatmul.bf16.gmra.mxu0 %v2033
  %v3784 = vpop.f32.mrf.mxu0
  %v3785 = vadd.f32 %v3772, %v3784
  %v3786 = vpop.f32.mrf.mxu0
  %3787 = vdwg.mxu0
  %3788 = vmatpush.bf16.msra.mxu0 %v3098
  %3789 = vmatpush.bf16.msra.mxu0 %v3094
  %3790 = vmatpush.bf16.msra.mxu0 %v3090
  %3791 = vmatpush.bf16.msra.mxu0 %v3086
  %3792 = vmatpush.bf16.msra.mxu0 %v3082
  %3793 = vmatpush.bf16.msra.mxu0 %v3078
  %3794 = vmatpush.bf16.msra.mxu0 %v3074
  %3795 = vmatpush.bf16.msra.mxu0 %v3070
  %3796 = vmatmul.bf16.gmra.mxu0 %v2026
  %v3797 = vpop.f32.mrf.mxu0
  %v3798 = vadd.f32 %v2294, %v3797
  %v3799 = vpop.f32.mrf.mxu0
  %3800 = vdwg.mxu0
  %3801 = vmatpush.bf16.msra.mxu0 %v3130
  %3802 = vmatpush.bf16.msra.mxu0 %v3126
  %3803 = vmatpush.bf16.msra.mxu0 %v3122
  %3804 = vmatpush.bf16.msra.mxu0 %v3118
  %3805 = vmatpush.bf16.msra.mxu0 %v3114
  %3806 = vmatpush.bf16.msra.mxu0 %v3110
  %3807 = vmatpush.bf16.msra.mxu0 %v3106
  %3808 = vmatpush.bf16.msra.mxu0 %v3102
  %3809 = vmatmul.bf16.gmra.mxu0 %v2027
  %v3810 = vpop.f32.mrf.mxu0
  %v3811 = vadd.f32 %v3798, %v3810
  %v3812 = vpop.f32.mrf.mxu0
  %3813 = vdwg.mxu0
  %3814 = vmatpush.bf16.msra.mxu0 %v3162
  %3815 = vmatpush.bf16.msra.mxu0 %v3158
  %3816 = vmatpush.bf16.msra.mxu0 %v3154
  %3817 = vmatpush.bf16.msra.mxu0 %v3150
  %3818 = vmatpush.bf16.msra.mxu0 %v3146
  %3819 = vmatpush.bf16.msra.mxu0 %v3142
  %3820 = vmatpush.bf16.msra.mxu0 %v3138
  %3821 = vmatpush.bf16.msra.mxu0 %v3134
  %3822 = vmatmul.bf16.gmra.mxu0 %v2028
  %v3823 = vpop.f32.mrf.mxu0
  %v3824 = vadd.f32 %v3811, %v3823
  %v3825 = vpop.f32.mrf.mxu0
  %3826 = vdwg.mxu0
  %3827 = vmatpush.bf16.msra.mxu0 %v3194
  %3828 = vmatpush.bf16.msra.mxu0 %v3190
  %3829 = vmatpush.bf16.msra.mxu0 %v3186
  %3830 = vmatpush.bf16.msra.mxu0 %v3182
  %3831 = vmatpush.bf16.msra.mxu0 %v3178
  %3832 = vmatpush.bf16.msra.mxu0 %v3174
  %3833 = vmatpush.bf16.msra.mxu0 %v3170
  %3834 = vmatpush.bf16.msra.mxu0 %v3166
  %3835 = vmatmul.bf16.gmra.mxu0 %v2029
  %v3836 = vpop.f32.mrf.mxu0
  %v3837 = vadd.f32 %v3824, %v3836
  %v3838 = vpop.f32.mrf.mxu0
  %3839 = vdwg.mxu0
  %3840 = vmatpush.bf16.msra.mxu0 %v3226
  %3841 = vmatpush.bf16.msra.mxu0 %v3222
  %3842 = vmatpush.bf16.msra.mxu0 %v3218
  %3843 = vmatpush.bf16.msra.mxu0 %v3214
  %3844 = vmatpush.bf16.msra.mxu0 %v3210
  %3845 = vmatpush.bf16.msra.mxu0 %v3206
  %3846 = vmatpush.bf16.msra.mxu0 %v3202
  %3847 = vmatpush.bf16.msra.mxu0 %v3198
  %3848 = vmatmul.bf16.gmra.mxu0 %v2030
  %v3849 = vpop.f32.mrf.mxu0
  %v3850 = vadd.f32 %v3837, %v3849
  %v3851 = vpop.f32.mrf.mxu0
  %3852 = vdwg.mxu0
  %3853 = vmatpush.bf16.msra.mxu0 %v3258
  %3854 = vmatpush.bf16.msra.mxu0 %v3254
  %3855 = vmatpush.bf16.msra.mxu0 %v3250
  %3856 = vmatpush.bf16.msra.mxu0 %v3246
  %3857 = vmatpush.bf16.msra.mxu0 %v3242
  %3858 = vmatpush.bf16.msra.mxu0 %v3238
  %3859 = vmatpush.bf16.msra.mxu0 %v3234
  %3860 = vmatpush.bf16.msra.mxu0 %v3230
  %3861 = vmatmul.bf16.gmra.mxu0 %v2031
  %v3862 = vpop.f32.mrf.mxu0
  %v3863 = vadd.f32 %v3850, %v3862
  %v3864 = vpop.f32.mrf.mxu0
  %3865 = vdwg.mxu0
  %3866 = vmatpush.bf16.msra.mxu0 %v3290
  %3867 = vmatpush.bf16.msra.mxu0 %v3286
  %3868 = vmatpush.bf16.msra.mxu0 %v3282
  %3869 = vmatpush.bf16.msra.mxu0 %v3278
  %3870 = vmatpush.bf16.msra.mxu0 %v3274
  %3871 = vmatpush.bf16.msra.mxu0 %v3270
  %3872 = vmatpush.bf16.msra.mxu0 %v3266
  %3873 = vmatpush.bf16.msra.mxu0 %v3262
  %3874 = vmatmul.bf16.gmra.mxu0 %v2032
  %v3875 = vpop.f32.mrf.mxu0
  %v3876 = vadd.f32 %v3863, %v3875
  %v3877 = vpop.f32.mrf.mxu0
  %3878 = vdwg.mxu0
  %3879 = vmatpush.bf16.msra.mxu0 %v3322
  %3880 = vmatpush.bf16.msra.mxu0 %v3318
  %3881 = vmatpush.bf16.msra.mxu0 %v3314
  %3882 = vmatpush.bf16.msra.mxu0 %v3310
  %3883 = vmatpush.bf16.msra.mxu0 %v3306
  %3884 = vmatpush.bf16.msra.mxu0 %v3302
  %3885 = vmatpush.bf16.msra.mxu0 %v3298
  %3886 = vmatpush.bf16.msra.mxu0 %v3294
  %3887 = vmatmul.bf16.gmra.mxu0 %v2033
  %v3888 = vpop.f32.mrf.mxu0
  %v3889 = vadd.f32 %v3876, %v3888
  %v3890 = vpop.f32.mrf.mxu0
  %3891 = vdwg.mxu0
  %3892 = vmatpush.bf16.msra.mxu0 %v3099
  %3893 = vmatpush.bf16.msra.mxu0 %v3095
  %3894 = vmatpush.bf16.msra.mxu0 %v3091
  %3895 = vmatpush.bf16.msra.mxu0 %v3087
  %3896 = vmatpush.bf16.msra.mxu0 %v3083
  %3897 = vmatpush.bf16.msra.mxu0 %v3079
  %3898 = vmatpush.bf16.msra.mxu0 %v3075
  %3899 = vmatpush.bf16.msra.mxu0 %v3071
  %3900 = vmatmul.bf16.gmra.mxu0 %v2026
  %v3901 = vpop.f32.mrf.mxu0
  %v3902 = vadd.f32 %v2295, %v3901
  %v3903 = vpop.f32.mrf.mxu0
  %3904 = vdwg.mxu0
  %3905 = vmatpush.bf16.msra.mxu0 %v3131
  %3906 = vmatpush.bf16.msra.mxu0 %v3127
  %3907 = vmatpush.bf16.msra.mxu0 %v3123
  %3908 = vmatpush.bf16.msra.mxu0 %v3119
  %3909 = vmatpush.bf16.msra.mxu0 %v3115
  %3910 = vmatpush.bf16.msra.mxu0 %v3111
  %3911 = vmatpush.bf16.msra.mxu0 %v3107
  %3912 = vmatpush.bf16.msra.mxu0 %v3103
  %3913 = vmatmul.bf16.gmra.mxu0 %v2027
  %v3914 = vpop.f32.mrf.mxu0
  %v3915 = vadd.f32 %v3902, %v3914
  %v3916 = vpop.f32.mrf.mxu0
  %3917 = vdwg.mxu0
  %3918 = vmatpush.bf16.msra.mxu0 %v3163
  %3919 = vmatpush.bf16.msra.mxu0 %v3159
  %3920 = vmatpush.bf16.msra.mxu0 %v3155
  %3921 = vmatpush.bf16.msra.mxu0 %v3151
  %3922 = vmatpush.bf16.msra.mxu0 %v3147
  %3923 = vmatpush.bf16.msra.mxu0 %v3143
  %3924 = vmatpush.bf16.msra.mxu0 %v3139
  %3925 = vmatpush.bf16.msra.mxu0 %v3135
  %3926 = vmatmul.bf16.gmra.mxu0 %v2028
  %v3927 = vpop.f32.mrf.mxu0
  %v3928 = vadd.f32 %v3915, %v3927
  %v3929 = vpop.f32.mrf.mxu0
  %3930 = vdwg.mxu0
  %3931 = vmatpush.bf16.msra.mxu0 %v3195
  %3932 = vmatpush.bf16.msra.mxu0 %v3191
  %3933 = vmatpush.bf16.msra.mxu0 %v3187
  %3934 = vmatpush.bf16.msra.mxu0 %v3183
  %3935 = vmatpush.bf16.msra.mxu0 %v3179
  %3936 = vmatpush.bf16.msra.mxu0 %v3175
  %3937 = vmatpush.bf16.msra.mxu0 %v3171
  %3938 = vmatpush.bf16.msra.mxu0 %v3167
  %3939 = vmatmul.bf16.gmra.mxu0 %v2029
  %v3940 = vpop.f32.mrf.mxu0
  %v3941 = vadd.f32 %v3928, %v3940
  %v3942 = vpop.f32.mrf.mxu0
  %3943 = vdwg.mxu0
  %3944 = vmatpush.bf16.msra.mxu0 %v3227
  %3945 = vmatpush.bf16.msra.mxu0 %v3223
  %3946 = vmatpush.bf16.msra.mxu0 %v3219
  %3947 = vmatpush.bf16.msra.mxu0 %v3215
  %3948 = vmatpush.bf16.msra.mxu0 %v3211
  %3949 = vmatpush.bf16.msra.mxu0 %v3207
  %3950 = vmatpush.bf16.msra.mxu0 %v3203
  %3951 = vmatpush.bf16.msra.mxu0 %v3199
  %3952 = vmatmul.bf16.gmra.mxu0 %v2030
  %v3953 = vpop.f32.mrf.mxu0
  %v3954 = vadd.f32 %v3941, %v3953
  %v3955 = vpop.f32.mrf.mxu0
  %3956 = vdwg.mxu0
  %3957 = vmatpush.bf16.msra.mxu0 %v3259
  %3958 = vmatpush.bf16.msra.mxu0 %v3255
  %3959 = vmatpush.bf16.msra.mxu0 %v3251
  %3960 = vmatpush.bf16.msra.mxu0 %v3247
  %3961 = vmatpush.bf16.msra.mxu0 %v3243
  %3962 = vmatpush.bf16.msra.mxu0 %v3239
  %3963 = vmatpush.bf16.msra.mxu0 %v3235
  %3964 = vmatpush.bf16.msra.mxu0 %v3231
  %3965 = vmatmul.bf16.gmra.mxu0 %v2031
  %v3966 = vpop.f32.mrf.mxu0
  %v3967 = vadd.f32 %v3954, %v3966
  %v3968 = vpop.f32.mrf.mxu0
  %3969 = vdwg.mxu0
  %3970 = vmatpush.bf16.msra.mxu0 %v3291
  %3971 = vmatpush.bf16.msra.mxu0 %v3287
  %3972 = vmatpush.bf16.msra.mxu0 %v3283
  %3973 = vmatpush.bf16.msra.mxu0 %v3279
  %3974 = vmatpush.bf16.msra.mxu0 %v3275
  %3975 = vmatpush.bf16.msra.mxu0 %v3271
  %3976 = vmatpush.bf16.msra.mxu0 %v3267
  %3977 = vmatpush.bf16.msra.mxu0 %v3263
  %3978 = vmatmul.bf16.gmra.mxu0 %v2032
  %v3979 = vpop.f32.mrf.mxu0
  %v3980 = vadd.f32 %v3967, %v3979
  %v3981 = vpop.f32.mrf.mxu0
  %3982 = vdwg.mxu0
  %3983 = vmatpush.bf16.msra.mxu0 %v3323
  %3984 = vmatpush.bf16.msra.mxu0 %v3319
  %3985 = vmatpush.bf16.msra.mxu0 %v3315
  %3986 = vmatpush.bf16.msra.mxu0 %v3311
  %3987 = vmatpush.bf16.msra.mxu0 %v3307
  %3988 = vmatpush.bf16.msra.mxu0 %v3303
  %3989 = vmatpush.bf16.msra.mxu0 %v3299
  %3990 = vmatpush.bf16.msra.mxu0 %v3295
  %3991 = vmatmul.bf16.gmra.mxu0 %v2033
  %v3992 = vpop.f32.mrf.mxu0
  %v3993 = vadd.f32 %v3980, %v3992
  %v3994 = vpop.f32.mrf.mxu0
  %3995 = vdwg.mxu0
  %v3996 = vmax.f32 %v3681, 0.0
  %v3997 = vmax.f32 %v3785, 0.0
  %v3998 = vmax.f32 %v3889, 0.0
  %v3999 = vmax.f32 %v3993, 0.0
  %v4000 = vpack.c.bf16 %v3996, %v3996
  %v4001 = vpack.c.bf16 %v3997, %v3997
  %v4002 = vpack.c.bf16 %v3998, %v3998
  %v4003 = vpack.c.bf16 %v3999, %v3999
  %v4004 = vld [vmem:[%s5] sm:$0xff]
  %v4005 = vld [vmem:[%s5 + $0x8] sm:$0xff]
  %v4006 = vld [vmem:[%s5 + $0x10] sm:$0xff]
  %v4007 = vld [vmem:[%s5 + $0x18] sm:$0xff]
  %v4008 = vld [vmem:[%s5 + $0x20] sm:$0xff]
  %v4009 = vld [vmem:[%s5 + $0x28] sm:$0xff]
  %v4010 = vld [vmem:[%s5 + $0x30] sm:$0xff]
  %v4011 = vld [vmem:[%s5 + $0x38] sm:$0xff]
  %v4012 = vld [vmem:[%s5 + $0x40] sm:$0xff]
  %v4013 = vld [vmem:[%s5 + $0x48] sm:$0xff]
  %v4014 = vld [vmem:[%s5 + $0x50] sm:$0xff]
  %v4015 = vld [vmem:[%s5 + $0x58] sm:$0xff]
  %v4016 = vld [vmem:[%s5 + $0x60] sm:$0xff]
  %v4017 = vld [vmem:[%s5 + $0x68] sm:$0xff]
  %v4018 = vld [vmem:[%s5 + $0x70] sm:$0xff]
  %v4019 = vld [vmem:[%s5 + $0x78] sm:$0xff]
  %v4020 = vld [vmem:[%s5 + $0x80] sm:$0xff]
  %v4021 = vld [vmem:[%s5 + $0x88] sm:$0xff]
  %v4022 = vld [vmem:[%s5 + $0x90] sm:$0xff]
  %v4023 = vld [vmem:[%s5 + $0x98] sm:$0xff]
  %v4024 = vld [vmem:[%s5 + $0xa0] sm:$0xff]
  %v4025 = vld [vmem:[%s5 + $0xa8] sm:$0xff]
  %v4026 = vld [vmem:[%s5 + $0xb0] sm:$0xff]
  %v4027 = vld [vmem:[%s5 + $0xb8] sm:$0xff]
  %v4028 = vld [vmem:[%s5 + $0xc0] sm:$0xff]
  %v4029 = vld [vmem:[%s5 + $0xc8] sm:$0xff]
  %v4030 = vld [vmem:[%s5 + $0xd0] sm:$0xff]
  %v4031 = vld [vmem:[%s5 + $0xd8] sm:$0xff]
  %v4032 = vld [vmem:[%s5 + $0xe0] sm:$0xff]
  %v4033 = vld [vmem:[%s5 + $0xe8] sm:$0xff]
  %v4034 = vld [vmem:[%s5 + $0xf0] sm:$0xff]
  %v4035 = vld [vmem:[%s5 + $0xf8] sm:$0xff]
  %v4036 = vld [vmem:[%s5 + $0x100] sm:$0xff]
  %v4037 = vld [vmem:[%s5 + $0x108] sm:$0xff]
  %v4038 = vld [vmem:[%s5 + $0x110] sm:$0xff]
  %v4039 = vld [vmem:[%s5 + $0x118] sm:$0xff]
  %v4040 = vld [vmem:[%s5 + $0x120] sm:$0xff]
  %v4041 = vld [vmem:[%s5 + $0x128] sm:$0xff]
  %v4042 = vld [vmem:[%s5 + $0x130] sm:$0xff]
  %v4043 = vld [vmem:[%s5 + $0x138] sm:$0xff]
  %v4044 = vld [vmem:[%s5 + $0x140] sm:$0xff]
  %v4045 = vld [vmem:[%s5 + $0x148] sm:$0xff]
  %v4046 = vld [vmem:[%s5 + $0x150] sm:$0xff]
  %v4047 = vld [vmem:[%s5 + $0x158] sm:$0xff]
  %v4048 = vld [vmem:[%s5 + $0x160] sm:$0xff]
  %v4049 = vld [vmem:[%s5 + $0x168] sm:$0xff]
  %v4050 = vld [vmem:[%s5 + $0x170] sm:$0xff]
  %v4051 = vld [vmem:[%s5 + $0x178] sm:$0xff]
  %v4052 = vld [vmem:[%s5 + $0x180] sm:$0xff]
  %v4053 = vld [vmem:[%s5 + $0x188] sm:$0xff]
  %v4054 = vld [vmem:[%s5 + $0x190] sm:$0xff]
  %v4055 = vld [vmem:[%s5 + $0x198] sm:$0xff]
  %v4056 = vld [vmem:[%s5 + $0x1a0] sm:$0xff]
  %v4057 = vld [vmem:[%s5 + $0x1a8] sm:$0xff]
  %v4058 = vld [vmem:[%s5 + $0x1b0] sm:$0xff]
  %v4059 = vld [vmem:[%s5 + $0x1b8] sm:$0xff]
  %v4060 = vld [vmem:[%s5 + $0x1c0] sm:$0xff]
  %v4061 = vld [vmem:[%s5 + $0x1c8] sm:$0xff]
  %v4062 = vld [vmem:[%s5 + $0x1d0] sm:$0xff]
  %v4063 = vld [vmem:[%s5 + $0x1d8] sm:$0xff]
  %v4064 = vld [vmem:[%s5 + $0x1e0] sm:$0xff]
  %v4065 = vld [vmem:[%s5 + $0x1e8] sm:$0xff]
  %v4066 = vld [vmem:[%s5 + $0x1f0] sm:$0xff]
  %v4067 = vld [vmem:[%s5 + $0x1f8] sm:$0xff]
  %v4068 = vld [vmem:[%s6] sm:$0x3]
  %v4070 = vperm.slane %v4068, 0
  %v4071 = vperm.slane %v4068, 1
  %v4138 = vunpack.c.l.b16 %v4004
  %v4139 = vunpack.c.h.b16 %v4004
  %v4140 = vunpack.c.l.b16 %v4005
  %v4141 = vunpack.c.h.b16 %v4005
  %v4142 = vunpack.c.l.b16 %v4006
  %v4143 = vunpack.c.h.b16 %v4006
  %v4144 = vunpack.c.l.b16 %v4007
  %v4145 = vunpack.c.h.b16 %v4007
  %v4146 = vunpack.c.l.b16 %v4008
  %v4147 = vunpack.c.h.b16 %v4008
  %v4148 = vunpack.c.l.b16 %v4009
  %v4149 = vunpack.c.h.b16 %v4009
  %v4150 = vunpack.c.l.b16 %v4010
  %v4151 = vunpack.c.h.b16 %v4010
  %v4152 = vunpack.c.l.b16 %v4011
  %v4153 = vunpack.c.h.b16 %v4011
  %v4154 = vunpack.c.l.b16 %v4012
  %v4155 = vunpack.c.h.b16 %v4012
  %v4156 = vunpack.c.l.b16 %v4013
  %v4157 = vunpack.c.h.b16 %v4013
  %v4158 = vunpack.c.l.b16 %v4014
  %v4159 = vunpack.c.h.b16 %v4014
  %v4160 = vunpack.c.l.b16 %v4015
  %v4161 = vunpack.c.h.b16 %v4015
  %v4162 = vunpack.c.l.b16 %v4016
  %v4163 = vunpack.c.h.b16 %v4016
  %v4164 = vunpack.c.l.b16 %v4017
  %v4165 = vunpack.c.h.b16 %v4017
  %v4166 = vunpack.c.l.b16 %v4018
  %v4167 = vunpack.c.h.b16 %v4018
  %v4168 = vunpack.c.l.b16 %v4019
  %v4169 = vunpack.c.h.b16 %v4019
  %v4170 = vunpack.c.l.b16 %v4020
  %v4171 = vunpack.c.h.b16 %v4020
  %v4172 = vunpack.c.l.b16 %v4021
  %v4173 = vunpack.c.h.b16 %v4021
  %v4174 = vunpack.c.l.b16 %v4022
  %v4175 = vunpack.c.h.b16 %v4022
  %v4176 = vunpack.c.l.b16 %v4023
  %v4177 = vunpack.c.h.b16 %v4023
  %v4178 = vunpack.c.l.b16 %v4024
  %v4179 = vunpack.c.h.b16 %v4024
  %v4180 = vunpack.c.l.b16 %v4025
  %v4181 = vunpack.c.h.b16 %v4025
  %v4182 = vunpack.c.l.b16 %v4026
  %v4183 = vunpack.c.h.b16 %v4026
  %v4184 = vunpack.c.l.b16 %v4027
  %v4185 = vunpack.c.h.b16 %v4027
  %v4186 = vunpack.c.l.b16 %v4028
  %v4187 = vunpack.c.h.b16 %v4028
  %v4188 = vunpack.c.l.b16 %v4029
  %v4189 = vunpack.c.h.b16 %v4029
  %v4190 = vunpack.c.l.b16 %v4030
  %v4191 = vunpack.c.h.b16 %v4030
  %v4192 = vunpack.c.l.b16 %v4031
  %v4193 = vunpack.c.h.b16 %v4031
  %v4194 = vunpack.c.l.b16 %v4032
  %v4195 = vunpack.c.h.b16 %v4032
  %v4196 = vunpack.c.l.b16 %v4033
  %v4197 = vunpack.c.h.b16 %v4033
  %v4198 = vunpack.c.l.b16 %v4034
  %v4199 = vunpack.c.h.b16 %v4034
  %v4200 = vunpack.c.l.b16 %v4035
  %v4201 = vunpack.c.h.b16 %v4035
  %v4202 = vunpack.c.l.b16 %v4036
  %v4203 = vunpack.c.h.b16 %v4036
  %v4204 = vunpack.c.l.b16 %v4037
  %v4205 = vunpack.c.h.b16 %v4037
  %v4206 = vunpack.c.l.b16 %v4038
  %v4207 = vunpack.c.h.b16 %v4038
  %v4208 = vunpack.c.l.b16 %v4039
  %v4209 = vunpack.c.h.b16 %v4039
  %v4210 = vunpack.c.l.b16 %v4040
  %v4211 = vunpack.c.h.b16 %v4040
  %v4212 = vunpack.c.l.b16 %v4041
  %v4213 = vunpack.c.h.b16 %v4041
  %v4214 = vunpack.c.l.b16 %v4042
  %v4215 = vunpack.c.h.b16 %v4042
  %v4216 = vunpack.c.l.b16 %v4043
  %v4217 = vunpack.c.h.b16 %v4043
  %v4218 = vunpack.c.l.b16 %v4044
  %v4219 = vunpack.c.h.b16 %v4044
  %v4220 = vunpack.c.l.b16 %v4045
  %v4221 = vunpack.c.h.b16 %v4045
  %v4222 = vunpack.c.l.b16 %v4046
  %v4223 = vunpack.c.h.b16 %v4046
  %v4224 = vunpack.c.l.b16 %v4047
  %v4225 = vunpack.c.h.b16 %v4047
  %v4226 = vunpack.c.l.b16 %v4048
  %v4227 = vunpack.c.h.b16 %v4048
  %v4228 = vunpack.c.l.b16 %v4049
  %v4229 = vunpack.c.h.b16 %v4049
  %v4230 = vunpack.c.l.b16 %v4050
  %v4231 = vunpack.c.h.b16 %v4050
  %v4232 = vunpack.c.l.b16 %v4051
  %v4233 = vunpack.c.h.b16 %v4051
  %v4234 = vunpack.c.l.b16 %v4052
  %v4235 = vunpack.c.h.b16 %v4052
  %v4236 = vunpack.c.l.b16 %v4053
  %v4237 = vunpack.c.h.b16 %v4053
  %v4238 = vunpack.c.l.b16 %v4054
  %v4239 = vunpack.c.h.b16 %v4054
  %v4240 = vunpack.c.l.b16 %v4055
  %v4241 = vunpack.c.h.b16 %v4055
  %v4242 = vunpack.c.l.b16 %v4056
  %v4243 = vunpack.c.h.b16 %v4056
  %v4244 = vunpack.c.l.b16 %v4057
  %v4245 = vunpack.c.h.b16 %v4057
  %v4246 = vunpack.c.l.b16 %v4058
  %v4247 = vunpack.c.h.b16 %v4058
  %v4248 = vunpack.c.l.b16 %v4059
  %v4249 = vunpack.c.h.b16 %v4059
  %v4250 = vunpack.c.l.b16 %v4060
  %v4251 = vunpack.c.h.b16 %v4060
  %v4252 = vunpack.c.l.b16 %v4061
  %v4253 = vunpack.c.h.b16 %v4061
  %v4254 = vunpack.c.l.b16 %v4062
  %v4255 = vunpack.c.h.b16 %v4062
  %v4256 = vunpack.c.l.b16 %v4063
  %v4257 = vunpack.c.h.b16 %v4063
  %v4258 = vunpack.c.l.b16 %v4064
  %v4259 = vunpack.c.h.b16 %v4064
  %v4260 = vunpack.c.l.b16 %v4065
  %v4261 = vunpack.c.h.b16 %v4065
  %v4262 = vunpack.c.l.b16 %v4066
  %v4263 = vunpack.c.h.b16 %v4066
  %v4264 = vunpack.c.l.b16 %v4067
  %v4265 = vunpack.c.h.b16 %v4067
  %v4266 = vpack.c.b16 %v4140, %v4138
  %v4267 = vpack.c.b16 %v4141, %v4139
  %v4268 = vpack.c.b16 %v4144, %v4142
  %v4269 = vpack.c.b16 %v4145, %v4143
  %v4270 = vpack.c.b16 %v4148, %v4146
  %v4271 = vpack.c.b16 %v4149, %v4147
  %v4272 = vpack.c.b16 %v4152, %v4150
  %v4273 = vpack.c.b16 %v4153, %v4151
  %v4274 = vpack.c.b16 %v4156, %v4154
  %v4275 = vpack.c.b16 %v4157, %v4155
  %v4276 = vpack.c.b16 %v4160, %v4158
  %v4277 = vpack.c.b16 %v4161, %v4159
  %v4278 = vpack.c.b16 %v4164, %v4162
  %v4279 = vpack.c.b16 %v4165, %v4163
  %v4280 = vpack.c.b16 %v4168, %v4166
  %v4281 = vpack.c.b16 %v4169, %v4167
  %v4282 = vpack.c.b16 %v4172, %v4170
  %v4283 = vpack.c.b16 %v4173, %v4171
  %v4284 = vpack.c.b16 %v4176, %v4174
  %v4285 = vpack.c.b16 %v4177, %v4175
  %v4286 = vpack.c.b16 %v4180, %v4178
  %v4287 = vpack.c.b16 %v4181, %v4179
  %v4288 = vpack.c.b16 %v4184, %v4182
  %v4289 = vpack.c.b16 %v4185, %v4183
  %v4290 = vpack.c.b16 %v4188, %v4186
  %v4291 = vpack.c.b16 %v4189, %v4187
  %v4292 = vpack.c.b16 %v4192, %v4190
  %v4293 = vpack.c.b16 %v4193, %v4191
  %v4294 = vpack.c.b16 %v4196, %v4194
  %v4295 = vpack.c.b16 %v4197, %v4195
  %v4296 = vpack.c.b16 %v4200, %v4198
  %v4297 = vpack.c.b16 %v4201, %v4199
  %v4298 = vpack.c.b16 %v4204, %v4202
  %v4299 = vpack.c.b16 %v4205, %v4203
  %v4300 = vpack.c.b16 %v4208, %v4206
  %v4301 = vpack.c.b16 %v4209, %v4207
  %v4302 = vpack.c.b16 %v4212, %v4210
  %v4303 = vpack.c.b16 %v4213, %v4211
  %v4304 = vpack.c.b16 %v4216, %v4214
  %v4305 = vpack.c.b16 %v4217, %v4215
  %v4306 = vpack.c.b16 %v4220, %v4218
  %v4307 = vpack.c.b16 %v4221, %v4219
  %v4308 = vpack.c.b16 %v4224, %v4222
  %v4309 = vpack.c.b16 %v4225, %v4223
  %v4310 = vpack.c.b16 %v4228, %v4226
  %v4311 = vpack.c.b16 %v4229, %v4227
  %v4312 = vpack.c.b16 %v4232, %v4230
  %v4313 = vpack.c.b16 %v4233, %v4231
  %v4314 = vpack.c.b16 %v4236, %v4234
  %v4315 = vpack.c.b16 %v4237, %v4235
  %v4316 = vpack.c.b16 %v4240, %v4238
  %v4317 = vpack.c.b16 %v4241, %v4239
  %v4318 = vpack.c.b16 %v4244, %v4242
  %v4319 = vpack.c.b16 %v4245, %v4243
  %v4320 = vpack.c.b16 %v4248, %v4246
  %v4321 = vpack.c.b16 %v4249, %v4247
  %v4322 = vpack.c.b16 %v4252, %v4250
  %v4323 = vpack.c.b16 %v4253, %v4251
  %v4324 = vpack.c.b16 %v4256, %v4254
  %v4325 = vpack.c.b16 %v4257, %v4255
  %v4326 = vpack.c.b16 %v4260, %v4258
  %v4327 = vpack.c.b16 %v4261, %v4259
  %v4328 = vpack.c.b16 %v4264, %v4262
  %v4329 = vpack.c.b16 %v4265, %v4263
  %4394 = vmatpush.bf16.msra.mxu0 %v4280
  %4395 = vmatpush.bf16.msra.mxu0 %v4278
  %4396 = vmatpush.bf16.msra.mxu0 %v4276
  %4397 = vmatpush.bf16.msra.mxu0 %v4274
  %4398 = vmatpush.bf16.msra.mxu0 %v4272
  %4399 = vmatpush.bf16.msra.mxu0 %v4270
  %4400 = vmatpush.bf16.msra.mxu0 %v4268
  %4401 = vmatpush.bf16.msra.mxu0 %v4266
  %4402 = vmatmul.bf16.gmra.mxu0 %v4000
  %v4403 = vpop.f32.mrf.mxu0
  %v4404 = vadd.f32 %v4070, %v4403
  %v4405 = vpop.f32.mrf.mxu0
  %4406 = vdwg.mxu0
  %4407 = vmatpush.bf16.msra.mxu0 %v4296
  %4408 = vmatpush.bf16.msra.mxu0 %v4294
  %4409 = vmatpush.bf16.msra.mxu0 %v4292
  %4410 = vmatpush.bf16.msra.mxu0 %v4290
  %4411 = vmatpush.bf16.msra.mxu0 %v4288
  %4412 = vmatpush.bf16.msra.mxu0 %v4286
  %4413 = vmatpush.bf16.msra.mxu0 %v4284
  %4414 = vmatpush.bf16.msra.mxu0 %v4282
  %4415 = vmatmul.bf16.gmra.mxu0 %v4001
  %v4416 = vpop.f32.mrf.mxu0
  %v4417 = vadd.f32 %v4404, %v4416
  %v4418 = vpop.f32.mrf.mxu0
  %4419 = vdwg.mxu0
  %4420 = vmatpush.bf16.msra.mxu0 %v4312
  %4421 = vmatpush.bf16.msra.mxu0 %v4310
  %4422 = vmatpush.bf16.msra.mxu0 %v4308
  %4423 = vmatpush.bf16.msra.mxu0 %v4306
  %4424 = vmatpush.bf16.msra.mxu0 %v4304
  %4425 = vmatpush.bf16.msra.mxu0 %v4302
  %4426 = vmatpush.bf16.msra.mxu0 %v4300
  %4427 = vmatpush.bf16.msra.mxu0 %v4298
  %4428 = vmatmul.bf16.gmra.mxu0 %v4002
  %v4429 = vpop.f32.mrf.mxu0
  %v4430 = vadd.f32 %v4417, %v4429
  %v4431 = vpop.f32.mrf.mxu0
  %4432 = vdwg.mxu0
  %4433 = vmatpush.bf16.msra.mxu0 %v4328
  %4434 = vmatpush.bf16.msra.mxu0 %v4326
  %4435 = vmatpush.bf16.msra.mxu0 %v4324
  %4436 = vmatpush.bf16.msra.mxu0 %v4322
  %4437 = vmatpush.bf16.msra.mxu0 %v4320
  %4438 = vmatpush.bf16.msra.mxu0 %v4318
  %4439 = vmatpush.bf16.msra.mxu0 %v4316
  %4440 = vmatpush.bf16.msra.mxu0 %v4314
  %4441 = vmatmul.bf16.gmra.mxu0 %v4003
  %v4442 = vpop.f32.mrf.mxu0
  %v4443 = vadd.f32 %v4430, %v4442
  %v4444 = vpop.f32.mrf.mxu0
  %4445 = vdwg.mxu0
  %4446 = vmatpush.bf16.msra.mxu0 %v4281
  %4447 = vmatpush.bf16.msra.mxu0 %v4279
  %4448 = vmatpush.bf16.msra.mxu0 %v4277
  %4449 = vmatpush.bf16.msra.mxu0 %v4275
  %4450 = vmatpush.bf16.msra.mxu0 %v4273
  %4451 = vmatpush.bf16.msra.mxu0 %v4271
  %4452 = vmatpush.bf16.msra.mxu0 %v4269
  %4453 = vmatpush.bf16.msra.mxu0 %v4267
  %4454 = vmatmul.bf16.gmra.mxu0 %v4000
  %v4455 = vpop.f32.mrf.mxu0
  %v4456 = vadd.f32 %v4071, %v4455
  %v4457 = vpop.f32.mrf.mxu0
  %4458 = vdwg.mxu0
  %4459 = vmatpush.bf16.msra.mxu0 %v4297
  %4460 = vmatpush.bf16.msra.mxu0 %v4295
  %4461 = vmatpush.bf16.msra.mxu0 %v4293
  %4462 = vmatpush.bf16.msra.mxu0 %v4291
  %4463 = vmatpush.bf16.msra.mxu0 %v4289
  %4464 = vmatpush.bf16.msra.mxu0 %v4287
  %4465 = vmatpush.bf16.msra.mxu0 %v4285
  %4466 = vmatpush.bf16.msra.mxu0 %v4283
  %4467 = vmatmul.bf16.gmra.mxu0 %v4001
  %v4468 = vpop.f32.mrf.mxu0
  %v4469 = vadd.f32 %v4456, %v4468
  %v4470 = vpop.f32.mrf.mxu0
  %4471 = vdwg.mxu0
  %4472 = vmatpush.bf16.msra.mxu0 %v4313
  %4473 = vmatpush.bf16.msra.mxu0 %v4311
  %4474 = vmatpush.bf16.msra.mxu0 %v4309
  %4475 = vmatpush.bf16.msra.mxu0 %v4307
  %4476 = vmatpush.bf16.msra.mxu0 %v4305
  %4477 = vmatpush.bf16.msra.mxu0 %v4303
  %4478 = vmatpush.bf16.msra.mxu0 %v4301
  %4479 = vmatpush.bf16.msra.mxu0 %v4299
  %4480 = vmatmul.bf16.gmra.mxu0 %v4002
  %v4481 = vpop.f32.mrf.mxu0
  %v4482 = vadd.f32 %v4469, %v4481
  %v4483 = vpop.f32.mrf.mxu0
  %4484 = vdwg.mxu0
  %4485 = vmatpush.bf16.msra.mxu0 %v4329
  %4486 = vmatpush.bf16.msra.mxu0 %v4327
  %4487 = vmatpush.bf16.msra.mxu0 %v4325
  %4488 = vmatpush.bf16.msra.mxu0 %v4323
  %4489 = vmatpush.bf16.msra.mxu0 %v4321
  %4490 = vmatpush.bf16.msra.mxu0 %v4319
  %4491 = vmatpush.bf16.msra.mxu0 %v4317
  %4492 = vmatpush.bf16.msra.mxu0 %v4315
  %4493 = vmatmul.bf16.gmra.mxu0 %v4003
  %v4494 = vpop.f32.mrf.mxu0
  %v4495 = vadd.f32 %v4482, %v4494
  %v4496 = vpop.f32.mrf.mxu0
  %4497 = vdwg.mxu0
  %v4498 = vmax.f32 %v4443, 0.0
  %v4499 = vmax.f32 %v4495, 0.0
  %v4500 = vpack.c.bf16 %v4498, %v4498
  %v4501 = vpack.c.bf16 %v4499, %v4499
  %v4502 = vld [vmem:[%s7] sm:$0xf]
  %v4503 = vld [vmem:[%s7 + $0x4] sm:$0xf]
  %v4504 = vld [vmem:[%s7 + $0x8] sm:$0xf]
  %v4505 = vld [vmem:[%s7 + $0xc] sm:$0xf]
  %v4506 = vld [vmem:[%s7 + $0x10] sm:$0xf]
  %v4507 = vld [vmem:[%s7 + $0x14] sm:$0xf]
  %v4508 = vld [vmem:[%s7 + $0x18] sm:$0xf]
  %v4509 = vld [vmem:[%s7 + $0x1c] sm:$0xf]
  %v4510 = vld [vmem:[%s7 + $0x20] sm:$0xf]
  %v4511 = vld [vmem:[%s7 + $0x24] sm:$0xf]
  %v4512 = vld [vmem:[%s7 + $0x28] sm:$0xf]
  %v4513 = vld [vmem:[%s7 + $0x2c] sm:$0xf]
  %v4514 = vld [vmem:[%s7 + $0x30] sm:$0xf]
  %v4515 = vld [vmem:[%s7 + $0x34] sm:$0xf]
  %v4516 = vld [vmem:[%s7 + $0x38] sm:$0xf]
  %v4517 = vld [vmem:[%s7 + $0x3c] sm:$0xf]
  %v4518 = vld [vmem:[%s7 + $0x40] sm:$0xf]
  %v4519 = vld [vmem:[%s7 + $0x44] sm:$0xf]
  %v4520 = vld [vmem:[%s7 + $0x48] sm:$0xf]
  %v4521 = vld [vmem:[%s7 + $0x4c] sm:$0xf]
  %v4522 = vld [vmem:[%s7 + $0x50] sm:$0xf]
  %v4523 = vld [vmem:[%s7 + $0x54] sm:$0xf]
  %v4524 = vld [vmem:[%s7 + $0x58] sm:$0xf]
  %v4525 = vld [vmem:[%s7 + $0x5c] sm:$0xf]
  %v4526 = vld [vmem:[%s7 + $0x60] sm:$0xf]
  %v4527 = vld [vmem:[%s7 + $0x64] sm:$0xf]
  %v4528 = vld [vmem:[%s7 + $0x68] sm:$0xf]
  %v4529 = vld [vmem:[%s7 + $0x6c] sm:$0xf]
  %v4530 = vld [vmem:[%s7 + $0x70] sm:$0xf]
  %v4531 = vld [vmem:[%s7 + $0x74] sm:$0xf]
  %v4532 = vld [vmem:[%s7 + $0x78] sm:$0xf]
  %v4533 = vld [vmem:[%s7 + $0x7c] sm:$0xf]
  %v4534 = vld [vmem:[%s8] sm:$0x1]
  %v4536 = vperm.slane %v4534, 0
  %v4570 = vunpack.c.l.b16 %v4502
  %v4571 = vunpack.c.l.b16 %v4503
  %v4572 = vunpack.c.l.b16 %v4504
  %v4573 = vunpack.c.l.b16 %v4505
  %v4574 = vunpack.c.l.b16 %v4506
  %v4575 = vunpack.c.l.b16 %v4507
  %v4576 = vunpack.c.l.b16 %v4508
  %v4577 = vunpack.c.l.b16 %v4509
  %v4578 = vunpack.c.l.b16 %v4510
  %v4579 = vunpack.c.l.b16 %v4511
  %v4580 = vunpack.c.l.b16 %v4512
  %v4581 = vunpack.c.l.b16 %v4513
  %v4582 = vunpack.c.l.b16 %v4514
  %v4583 = vunpack.c.l.b16 %v4515
  %v4584 = vunpack.c.l.b16 %v4516
  %v4585 = vunpack.c.l.b16 %v4517
  %v4586 = vunpack.c.l.b16 %v4518
  %v4587 = vunpack.c.l.b16 %v4519
  %v4588 = vunpack.c.l.b16 %v4520
  %v4589 = vunpack.c.l.b16 %v4521
  %v4590 = vunpack.c.l.b16 %v4522
  %v4591 = vunpack.c.l.b16 %v4523
  %v4592 = vunpack.c.l.b16 %v4524
  %v4593 = vunpack.c.l.b16 %v4525
  %v4594 = vunpack.c.l.b16 %v4526
  %v4595 = vunpack.c.l.b16 %v4527
  %v4596 = vunpack.c.l.b16 %v4528
  %v4597 = vunpack.c.l.b16 %v4529
  %v4598 = vunpack.c.l.b16 %v4530
  %v4599 = vunpack.c.l.b16 %v4531
  %v4600 = vunpack.c.l.b16 %v4532
  %v4601 = vunpack.c.l.b16 %v4533
  %v4602 = vpack.c.b16 %v4571, %v4570
  %v4603 = vpack.c.b16 %v4573, %v4572
  %v4604 = vpack.c.b16 %v4575, %v4574
  %v4605 = vpack.c.b16 %v4577, %v4576
  %v4606 = vpack.c.b16 %v4579, %v4578
  %v4607 = vpack.c.b16 %v4581, %v4580
  %v4608 = vpack.c.b16 %v4583, %v4582
  %v4609 = vpack.c.b16 %v4585, %v4584
  %v4610 = vpack.c.b16 %v4587, %v4586
  %v4611 = vpack.c.b16 %v4589, %v4588
  %v4612 = vpack.c.b16 %v4591, %v4590
  %v4613 = vpack.c.b16 %v4593, %v4592
  %v4614 = vpack.c.b16 %v4595, %v4594
  %v4615 = vpack.c.b16 %v4597, %v4596
  %v4616 = vpack.c.b16 %v4599, %v4598
  %v4617 = vpack.c.b16 %v4601, %v4600
  %4634 = vmatpush.bf16.msra.mxu0 %v4609
  %4635 = vmatpush.bf16.msra.mxu0 %v4608
  %4636 = vmatpush.bf16.msra.mxu0 %v4607
  %4637 = vmatpush.bf16.msra.mxu0 %v4606
  %4638 = vmatpush.bf16.msra.mxu0 %v4605
  %4639 = vmatpush.bf16.msra.mxu0 %v4604
  %4640 = vmatpush.bf16.msra.mxu0 %v4603
  %4641 = vmatpush.bf16.msra.mxu0 %v4602
  %4642 = vmatmul.bf16.gmra.mxu0 %v4500
  %v4643 = vpop.f32.mrf.mxu0
  %v4644 = vadd.f32 %v4536, %v4643
  %v4645 = vpop.f32.mrf.mxu0
  %4646 = vdwg.mxu0
  %4647 = vmatpush.bf16.msra.mxu0 %v4617
  %4648 = vmatpush.bf16.msra.mxu0 %v4616
  %4649 = vmatpush.bf16.msra.mxu0 %v4615
  %4650 = vmatpush.bf16.msra.mxu0 %v4614
  %4651 = vmatpush.bf16.msra.mxu0 %v4613
  %4652 = vmatpush.bf16.msra.mxu0 %v4612
  %4653 = vmatpush.bf16.msra.mxu0 %v4611
  %4654 = vmatpush.bf16.msra.mxu0 %v4610
  %4655 = vmatmul.bf16.gmra.mxu0 %v4501
  %v4656 = vpop.f32.mrf.mxu0
  %v4657 = vadd.f32 %v4644, %v4656
  %v4658 = vpop.f32.mrf.mxu0
  %4659 = vdwg.mxu0
  %v4660 = vlaneseq
  %v4661 = vand.u32 %v4660, 127
  %vm4662 = vcmp.lt.s32.totalorder %v4661, 10
  %v4663 = vsel %vm4662, %v4657, -1e+30
  %4664 = vmax.xlane.f32.xlu0 %v4663
  %v4665 = vpop.xlane.xlu0 %4664
  %v4666 = vsub.f32 %v4663, %v4665
  %v4667 = vmul.f32 %v4666, 1.442695
  %v4668 = vpow.pop %v4667
  %4669 = vadd.xlane.f32.xlu0 %v4668
  %v4670 = vpop.xlane.xlu0 %4669
  %v4671 = vlog2.pop %v4670
  %v4672 = vmul.f32 %v4671, 0.6931472
  %v4673 = vsub.f32 %v4666, %v4672
  %4674 = vst [vmem:[%s9] sm:$0xff] %v4673
  // Predicated region
  $region38: #{lenet_enhanced2_forward.11} parent=0 // pred_check
    _
  $region39: #{lenet_enhanced2_forward.11} parent=0 // pred_check_branch
    %4676 = sbr.rel (0) target = $region41
  $region40: #{lenet_enhanced2_forward.11} parent=0 // pred_region
    _
  $region41: #{lenet_enhanced2_forward.11} parent=0 // pred_fallthru
    _
  // Predicated region
  $region42: #{lenet_enhanced2_forward.11} parent=0 // pred_check
    _
  $region43: #{lenet_enhanced2_forward.11} parent=0 // pred_check_branch
    %4678 = sbr.rel (0) target = $region45
  $region44: #{lenet_enhanced2_forward.11} parent=0 // pred_region
    _
  $region45: #{lenet_enhanced2_forward.11} parent=0 // pred_fallthru
    _

</llo_original>
